<compile_context>
chip_gen: v6e
topology: v6e:2x2x1
jax: 0.10.0
libtpu: 0.0.40
codegen_flags: <defaults>
</compile_context>

<pallas_src>
import functools
import math

import numpy as np
import jax
import jax.numpy as jnp
from jax.experimental import pallas as pl
from jax.experimental.pallas import tpu as pltpu


# ----------------------------------------------------------------------------
# helpers
# ----------------------------------------------------------------------------
def _round_up(n, m):
    return (n + m - 1) // m * m


def _pad_axis(a, axis, new_size):
    if a.shape[axis] == new_size:
        return a
    pad = [(0, 0)] * a.ndim
    pad[axis] = (0, new_size - a.shape[axis])
    return jnp.pad(a, pad)


def _pad_gate_cols(w, h, hp):
    """Pad the last axis (4*h, gate order [i,f,g,o]) to 4*hp, zero-filled per gate."""
    if hp == h:
        return w
    lead = w.shape[:-1]
    w4 = w.reshape(lead + (4, h))
    w4 = jnp.pad(w4, [(0, 0)] * len(lead) + [(0, 0), (0, hp - h)])
    return w4.reshape(lead + (4 * hp,))


# ----------------------------------------------------------------------------
# fused kernel: LSTM layer 1 -> LSTM layer 2 -> Linear -> Tanh -> Linear
# ----------------------------------------------------------------------------
def fused_lstm_kernel(
    x_ref,
    wih1_ref, whh1_ref, bg1_ref,
    wih2_ref, whh2_ref, bg2_ref,
    w1_ref, b1_ref, w2_ref, b2_ref,
    out_ref,
    h1_sc, c1_sc, h2_sc, c2_sc, hbuf, gx_buf,
    *, unroll,
):
    # (h, c) of both layers live in VMEM scratch and are carried across the
    # "arbitrary" seq axis; re-init at the start of each batch block's sweep.
    @pl.when(pl.program_id(1) == 0)
    def _init():
        h1_sc[...] = jnp.zeros_like(h1_sc)
        c1_sc[...] = jnp.zeros_like(c1_sc)
        h2_sc[...] = jnp.zeros_like(h2_sc)
        c2_sc[...] = jnp.zeros_like(c2_sc)

    T, B, In = x_ref.shape           # seq block, batch tile, input width
    H = h1_sc.shape[1]               # padded hidden (lane-aligned)
    wd = whh1_ref.dtype              # matmul operand dtype (bf16 by default)

    def mm(a, w):
        # MXU matmul in the weights' dtype, f32 accumulate.
        return jnp.dot(a.astype(wd), w, preferred_element_type=jnp.float32)

    # ---- layer-1 input projection, hoisted off the serial path: one
    # (T*B, In) @ (In, 4H) block matmul instead of T tiny per-step matmuls.
    gx = mm(x_ref[...].reshape(T * B, In), wih1_ref[...]) + bg1_ref[...]
    gx_buf[...] = gx.reshape(T, B, 4 * H).astype(gx_buf.dtype)

    def lstm_cell(g, c):
        i_g = jax.nn.sigmoid(g[:, 0 * H:1 * H])
        f_g = jax.nn.sigmoid(g[:, 1 * H:2 * H])
        g_g = jnp.tanh(g[:, 2 * H:3 * H])
        o_g = jax.nn.sigmoid(g[:, 3 * H:4 * H])
        c = f_g * c + i_g * g_g
        h = o_g * jnp.tanh(c)
        return h, c

    # weight refs are read inside each step (not hoisted into one live value)
    def l1_step(t, h1, c1):
        g = gx_buf[t].astype(jnp.float32) + mm(h1, whh1_ref[...])
        return lstm_cell(g, c1)

    def l2_step(x2, h2, c2):
        g = mm(x2, wih2_ref[...]) + bg2_ref[...] + mm(h2, whh2_ref[...])
        return lstm_cell(g, c2)

    # ---- software-pipelined recurrence: layer-1 step t fused with layer-2
    # step t-1, so the two serial chains overlap on MXU/EUP.
    h1, c1 = l1_step(0, h1_sc[...], c1_sc[...])          # prologue: layer-1 step 0
    h2, c2 = h2_sc[...], c2_sc[...]

    def fused_body(t, carry):
        h1, c1, h2, c2 = carry
        h2n, c2n = l2_step(h1, h2, c2)      # layer-2 step t-1 (consumes h1_{t-1})
        hbuf[t - 1] = h2n.astype(hbuf.dtype)
        h1n, c1n = l1_step(t, h1, c1)       # layer-1 step t
        return h1n, c1n, h2n, c2n

    h1, c1, h2, c2 = jax.lax.fori_loop(1, T, fused_body, (h1, c1, h2, c2),
                                       unroll=unroll)

    h2, c2 = l2_step(h1, h2, c2)                         # epilogue: layer-2 step T-1
    hbuf[T - 1] = h2.astype(hbuf.dtype)

    h1_sc[...] = h1
    c1_sc[...] = c1
    h2_sc[...] = h2
    c2_sc[...] = c2

    # ---- fused MLP head on the block: Linear(H,H) -> Tanh -> Linear(H,O).
    h2all = hbuf[...].reshape(T * B, H)
    z = jnp.tanh(mm(h2all, w1_ref[...]) + b1_ref[...])
    y = mm(z, w2_ref[...]) + b2_ref[...]
    out_ref[...] = y.reshape(T, B, out_ref.shape[2]).astype(out_ref.dtype)


# ----------------------------------------------------------------------------
# module forward
# ----------------------------------------------------------------------------
def lstm_module_forward(x, params, *, seq_block=32, batch_block=128,
                        matmul_dtype=jnp.bfloat16):
    """x: (S, B, In) -> (S, B, output_size).

    matmul_dtype controls MXU operand precision (bf16 default, f32 for exact
    torch-like numerics); h/c state, gate math and biases are always float32.
    """
    assert len(params["lstm"]) == 2, "kernel is specialized to the 2-layer module"
    S, B, In = x.shape
    l1, l2 = params["lstm"]
    H = l1["w_hh"].shape[0]
    O = params["w2"].shape[1]

    Hp = _round_up(H, 128)   # lane-aligned gates: each gate slice = whole lane tiles
    Op = _round_up(O, 128)   # lane-dense head-output slab (sliced off below)

    # batch tiling: sublane-aligned tiles; leading "parallel" grid axis lets a
    # second TensorCore (v7x) take a batch slab. nB == 1 for small batches.
    Bp0 = _round_up(B, 8)
    nB = max(1, pl.cdiv(Bp0, _round_up(batch_block, 8)))
    Bb = _round_up(pl.cdiv(Bp0, nB), 8)
    Bp = Bb * nB

    # seq tiling: pad S up to a multiple of a near-target block (an awkward /
    # prime S no longer collapses to T == 1).
    nS = max(1, pl.cdiv(S, seq_block))
    T = pl.cdiv(S, nS)
    Sp = T * nS

    wd = matmul_dtype
    # zero-filled padding keeps padded lanes exactly zero through the recurrence
    wih1 = _pad_gate_cols(l1["w_ih"], H, Hp).astype(wd)                    # (In, 4Hp)
    whh1 = _pad_gate_cols(_pad_axis(l1["w_hh"], 0, Hp), H, Hp).astype(wd)  # (Hp, 4Hp)
    bg1 = _pad_gate_cols(l1["b"], H, Hp)                                   # (1, 4Hp)
    wih2 = _pad_gate_cols(_pad_axis(l2["w_ih"], 0, Hp), H, Hp).astype(wd)  # (Hp, 4Hp)
    whh2 = _pad_gate_cols(_pad_axis(l2["w_hh"], 0, Hp), H, Hp).astype(wd)  # (Hp, 4Hp)
    bg2 = _pad_gate_cols(l2["b"], H, Hp)                                   # (1, 4Hp)
    w1 = _pad_axis(_pad_axis(params["w1"], 0, Hp), 1, Hp).astype(wd)       # (Hp, Hp)
    b1 = _pad_axis(params["b1"], 1, Hp)                                    # (1, Hp)
    w2 = _pad_axis(_pad_axis(params["w2"], 0, Hp), 1, Op).astype(wd)       # (Hp, Op)
    b2 = _pad_axis(params["b2"], 1, Op)                                    # (1, Op)

    xp = _pad_axis(_pad_axis(x, 0, Sp), 1, Bp).astype(wd)                  # (Sp, Bp, In)

    # explicit VMEM budget (v7x has only 64 MiB physical; scoped default 32 MiB)
    itw = np.dtype(wd).itemsize
    weight_bytes = (math.prod((In, 4 * Hp)) * itw + 3 * math.prod((Hp, 4 * Hp)) * itw
                    + math.prod((Hp, Hp)) * itw + math.prod((Hp, Op)) * itw
                    + 2 * 4 * Hp * 4 + Hp * 4 + Op * 4)
    block_bytes = 2 * T * Bb * In * itw + 2 * T * Bb * Op * 4   # double-buffered x/out
    scratch_bytes = (4 * Bb * Hp * 4 + T * Bb * Hp * itw + T * Bb * 4 * Hp * itw)
    vmem_limit = int(1.25 * (weight_bytes + block_bytes + scratch_bytes)) + (4 << 20)
    vmem_limit = max(16 << 20, min(vmem_limit, 64 << 20))

    # full unroll for short blocks; partial unroll bounds vreg pressure at T=32
    unroll = True if (T - 1) <= 16 else 8

    def vmem_resident():
        # whole array resident in VMEM for the full kernel: single-buffered,
        # no per-grid-step weight DMA / double buffering.
        return pl.BlockSpec(memory_space=pltpu.MemorySpace.VMEM)

    kernel = functools.partial(fused_lstm_kernel, unroll=unroll)

    y = pl.pallas_call(
        kernel,
        out_shape=jax.ShapeDtypeStruct((Sp, Bp, Op), jnp.float32),
        grid_spec=pltpu.PrefetchScalarGridSpec(
            num_scalar_prefetch=0,
            grid=(nB, nS),
            in_specs=[
                pl.BlockSpec((T, Bb, In), lambda b, s: (s, b, 0)),    # x: seq/batch blocked
                vmem_resident(), vmem_resident(), vmem_resident(),    # layer-1 W_ih, W_hh, b
                vmem_resident(), vmem_resident(), vmem_resident(),    # layer-2 W_ih, W_hh, b
                vmem_resident(), vmem_resident(),                     # head W1, b1
                vmem_resident(), vmem_resident(),                     # head W2, b2
            ],
            out_specs=pl.BlockSpec((T, Bb, Op), lambda b, s: (s, b, 0)),
            scratch_shapes=[
                pltpu.VMEM((Bb, Hp), jnp.float32),        # h, layer 1
                pltpu.VMEM((Bb, Hp), jnp.float32),        # c, layer 1
                pltpu.VMEM((Bb, Hp), jnp.float32),        # h, layer 2
                pltpu.VMEM((Bb, Hp), jnp.float32),        # c, layer 2
                pltpu.VMEM((T, Bb, Hp), wd),              # per-block layer-2 h buffer
                pltpu.VMEM((T, Bb, 4 * Hp), wd),          # per-block layer-1 input-proj gates
            ],
        ),
        compiler_params=pltpu.CompilerParams(
            # batch blocks are independent (megacore); recurrence state is
            # carried across seq blocks -> seq axis must stay sequential.
            dimension_semantics=("parallel", "arbitrary"),
            vmem_limit_bytes=vmem_limit,
        ),
    )(xp, wih1, whh1, bg1, wih2, whh2, bg2, w1, b1, w2, b2)

    return y[:S, :B, :O]


# ----------------------------------------------------------------------------
# parameter init (PyTorch-equivalent layout, weights pre-transposed for x @ W)
# ----------------------------------------------------------------------------
def init_params(key, input_size, hidden_size, output_size, num_layers=2):
    params = {"lstm": []}
    bound = 1.0 / jnp.sqrt(hidden_size)
    in_dim = input_size
    for _ in range(num_layers):
        key, k1, k2, k3, k4 = jax.random.split(key, 5)
        w_ih = jax.random.uniform(k1, (in_dim, 4 * hidden_size), jnp.float32,
                                  -bound, bound)
        w_hh = jax.random.uniform(k2, (hidden_size, 4 * hidden_size),
                                  jnp.float32, -bound, bound)
        b_ih = jax.random.uniform(k3, (1, 4 * hidden_size), jnp.float32,
                                  -bound, bound)
        b_hh = jax.random.uniform(k4, (1, 4 * hidden_size), jnp.float32,
                                  -bound, bound)
        params["lstm"].append({"w_ih": w_ih, "w_hh": w_hh, "b": b_ih + b_hh})
        in_dim = hidden_size
    key, k1, k2, k3, k4 = jax.random.split(key, 5)
    params["w1"] = jax.random.uniform(k1, (hidden_size, hidden_size),
                                      jnp.float32, -bound, bound)
    params["b1"] = jax.random.uniform(k2, (1, hidden_size), jnp.float32,
                                      -bound, bound)
    params["w2"] = jax.random.uniform(k3, (hidden_size, output_size),
                                      jnp.float32, -bound, bound)
    params["b2"] = jax.random.uniform(k4, (1, output_size), jnp.float32,
                                      -bound, bound)
    return params


if __name__ == "__main__":
    # Small shapes consistent with the module (hidden=128 as in the spec,
    # input scaled down from 144, output_size=1, 2 LSTM layers).
    SEQ, BATCH, INPUT_SIZE, HIDDEN_SIZE, OUTPUT_SIZE, NUM_LAYERS = 8, 4, 16, 128, 1, 2

    key = jax.random.PRNGKey(0)
    key, kx = jax.random.split(key)
    x = jax.random.normal(kx, (SEQ, BATCH, INPUT_SIZE), jnp.float32)

    params = init_params(key, INPUT_SIZE, HIDDEN_SIZE, OUTPUT_SIZE, NUM_LAYERS)

    fwd = jax.jit(functools.partial(lstm_module_forward, params=params))
    out = fwd(x)
    jax.block_until_ready(out)
    assert out.shape == (SEQ, BATCH, OUTPUT_SIZE), out.shape
    assert bool(jnp.all(jnp.isfinite(out))), "non-finite output"
    print("KERNEL_OK")
</pallas_src>

<mosaic_0001>
module attributes {stable_mosaic.version = 11 : i64} {
  func.func @fused_lstm_kernel(%arg0: i32, %arg1: i32, %arg2: memref<8x8x16xbf16, #tpu.memory_space<vmem>>, %arg3: memref<16x512xbf16, #tpu.memory_space<vmem>>, %arg4: memref<128x512xbf16, #tpu.memory_space<vmem>>, %arg5: memref<1x512xf32, #tpu.memory_space<vmem>>, %arg6: memref<128x512xbf16, #tpu.memory_space<vmem>>, %arg7: memref<128x512xbf16, #tpu.memory_space<vmem>>, %arg8: memref<1x512xf32, #tpu.memory_space<vmem>>, %arg9: memref<128x128xbf16, #tpu.memory_space<vmem>>, %arg10: memref<1x128xf32, #tpu.memory_space<vmem>>, %arg11: memref<128x128xbf16, #tpu.memory_space<vmem>>, %arg12: memref<1x128xf32, #tpu.memory_space<vmem>>, %arg13: memref<8x8x128xf32, #tpu.memory_space<vmem>>, %arg14: memref<8x128xf32, #tpu.memory_space<vmem>>, %arg15: memref<8x128xf32, #tpu.memory_space<vmem>>, %arg16: memref<8x128xf32, #tpu.memory_space<vmem>>, %arg17: memref<8x128xf32, #tpu.memory_space<vmem>>, %arg18: memref<8x8x128xbf16, #tpu.memory_space<vmem>>, %arg19: memref<8x8x512xbf16, #tpu.memory_space<vmem>>) attributes {dimension_semantics = [#tpu.dimension_semantics<parallel>, #tpu.dimension_semantics<arbitrary>], iteration_bounds = array<i64: 1, 1>, scalar_prefetch = 0 : i64, scratch_operands = 6 : i64, tpu.core_type = #tpu.core_type<tc>, window_params = [{transform_indices = @transform_0, window_bounds = array<i64: 8, 8, 16>}, {pipeline_mode = #tpu.pipeline_mode<synchronous>, transform_indices = @transform_1, window_bounds = array<i64: 16, 512>}, {pipeline_mode = #tpu.pipeline_mode<synchronous>, transform_indices = @transform_2, window_bounds = array<i64: 128, 512>}, {pipeline_mode = #tpu.pipeline_mode<synchronous>, transform_indices = @transform_3, window_bounds = array<i64: 1, 512>}, {pipeline_mode = #tpu.pipeline_mode<synchronous>, transform_indices = @transform_4, window_bounds = array<i64: 128, 512>}, {pipeline_mode = #tpu.pipeline_mode<synchronous>, transform_indices = @transform_5, window_bounds = array<i64: 128, 512>}, {pipeline_mode = #tpu.pipeline_mode<synchronous>, transform_indices = @transform_6, window_bounds = array<i64: 1, 512>}, {pipeline_mode = #tpu.pipeline_mode<synchronous>, transform_indices = @transform_7, window_bounds = array<i64: 128, 128>}, {pipeline_mode = #tpu.pipeline_mode<synchronous>, transform_indices = @transform_8, window_bounds = array<i64: 1, 128>}, {pipeline_mode = #tpu.pipeline_mode<synchronous>, transform_indices = @transform_9, window_bounds = array<i64: 128, 128>}, {pipeline_mode = #tpu.pipeline_mode<synchronous>, transform_indices = @transform_10, window_bounds = array<i64: 1, 128>}, {transform_indices = @transform_11, window_bounds = array<i64: 8, 8, 128>}]} {
    %c0_i32 = arith.constant 0 : i32
    %0 = arith.cmpi eq, %arg1, %c0_i32 : i32
    %1 = arith.extui %0 : i1 to i32
    %c0_i32_0 = arith.constant 0 : i32
    %2 = arith.cmpi ne, %1, %c0_i32_0 : i32
    scf.if %2 {
      %cst_219 = arith.constant 0.000000e+00 : f32
      %626 = vector.broadcast %cst_219 : f32 to vector<8x128xf32>
      %c0_220 = arith.constant 0 : index
      %c0_221 = arith.constant 0 : index
      %627 = vector.load %arg14[%c0_220, %c0_221] : memref<8x128xf32, #tpu.memory_space<vmem>>, vector<8x128xf32>
      tpu.vector_store %arg14[%c0_220, %c0_221], %626 {strides = array<i32>} : memref<8x128xf32, #tpu.memory_space<vmem>>, vector<8x128xf32>,
      %cst_222 = arith.constant 0.000000e+00 : f32
      %628 = vector.broadcast %cst_222 : f32 to vector<8x128xf32>
      %c0_223 = arith.constant 0 : index
      %c0_224 = arith.constant 0 : index
      %629 = vector.load %arg15[%c0_223, %c0_224] : memref<8x128xf32, #tpu.memory_space<vmem>>, vector<8x128xf32>
      tpu.vector_store %arg15[%c0_223, %c0_224], %628 {strides = array<i32>} : memref<8x128xf32, #tpu.memory_space<vmem>>, vector<8x128xf32>,
      %cst_225 = arith.constant 0.000000e+00 : f32
      %630 = vector.broadcast %cst_225 : f32 to vector<8x128xf32>
      %c0_226 = arith.constant 0 : index
      %c0_227 = arith.constant 0 : index
      %631 = vector.load %arg16[%c0_226, %c0_227] : memref<8x128xf32, #tpu.memory_space<vmem>>, vector<8x128xf32>
      tpu.vector_store %arg16[%c0_226, %c0_227], %630 {strides = array<i32>} : memref<8x128xf32, #tpu.memory_space<vmem>>, vector<8x128xf32>,
      %cst_228 = arith.constant 0.000000e+00 : f32
      %632 = vector.broadcast %cst_228 : f32 to vector<8x128xf32>
      %c0_229 = arith.constant 0 : index
      %c0_230 = arith.constant 0 : index
      %633 = vector.load %arg17[%c0_229, %c0_230] : memref<8x128xf32, #tpu.memory_space<vmem>>, vector<8x128xf32>
      tpu.vector_store %arg17[%c0_229, %c0_230], %632 {strides = array<i32>} : memref<8x128xf32, #tpu.memory_space<vmem>>, vector<8x128xf32>,
    } else {
    }
    %c0 = arith.constant 0 : index
    %c0_1 = arith.constant 0 : index
    %c0_2 = arith.constant 0 : index
    %3 = vector.load %arg2[%c0, %c0_1, %c0_2] : memref<8x8x16xbf16, #tpu.memory_space<vmem>>, vector<8x8x16xbf16>
    %4 = vector.shape_cast %3 : vector<8x8x16xbf16> to vector<64x16xbf16>
    %c0_3 = arith.constant 0 : index
    %c0_4 = arith.constant 0 : index
    %5 = vector.load %arg3[%c0_3, %c0_4] : memref<16x512xbf16, #tpu.memory_space<vmem>>, vector<16x512xbf16>
    %cst = arith.constant dense<0.000000e+00> : vector<64x512xf32>
    %6 = tpu.matmul %4, %5, %cst {dimension_numbers = #tpu.dot_dimension_numbers<[1], [0], [0], [1], [0, 0, 1, 1], [], []>} : vector<64x16xbf16>, vector<16x512xbf16>, vector<64x512xf32> -> vector<64x512xf32>
    %c0_5 = arith.constant 0 : index
    %c0_6 = arith.constant 0 : index
    %7 = vector.load %arg5[%c0_5, %c0_6] : memref<1x512xf32, #tpu.memory_space<vmem>>, vector<1x512xf32>
    %8 = vector.broadcast %7 : vector<1x512xf32> to vector<64x512xf32>
    %9 = arith.addf %6, %8 : vector<64x512xf32>
    %10 = vector.shape_cast %9 : vector<64x512xf32> to vector<8x8x512xf32>
    %11 = arith.truncf %10 : vector<8x8x512xf32> to vector<8x8x512xbf16>
    %c0_7 = arith.constant 0 : index
    %c0_8 = arith.constant 0 : index
    %c0_9 = arith.constant 0 : index
    %12 = vector.load %arg19[%c0_7, %c0_8, %c0_9] : memref<8x8x512xbf16, #tpu.memory_space<vmem>>, vector<8x8x512xbf16>
    tpu.vector_store %arg19[%c0_7, %c0_8, %c0_9], %11 {strides = array<i32>} : memref<8x8x512xbf16, #tpu.memory_space<vmem>>, vector<8x8x512xbf16>,
    %c0_10 = arith.constant 0 : index
    %c0_11 = arith.constant 0 : index
    %13 = vector.load %arg14[%c0_10, %c0_11] : memref<8x128xf32, #tpu.memory_space<vmem>>, vector<8x128xf32>
    %c0_12 = arith.constant 0 : index
    %c0_13 = arith.constant 0 : index
    %14 = vector.load %arg15[%c0_12, %c0_13] : memref<8x128xf32, #tpu.memory_space<vmem>>, vector<8x128xf32>
    %c0_14 = arith.constant 0 : index
    %c0_15 = arith.constant 0 : index
    %c0_16 = arith.constant 0 : index
    %15 = vector.load %arg19[%c0_14, %c0_15, %c0_16] : memref<8x8x512xbf16, #tpu.memory_space<vmem>>, vector<1x8x512xbf16>
    %16 = vector.shape_cast %15 : vector<1x8x512xbf16> to vector<8x512xbf16>
    %17 = arith.extf %16 : vector<8x512xbf16> to vector<8x512xf32>
    %c0_17 = arith.constant 0 : index
    %c0_18 = arith.constant 0 : index
    %18 = vector.load %arg4[%c0_17, %c0_18] : memref<128x512xbf16, #tpu.memory_space<vmem>>, vector<128x512xbf16>
    %19 = arith.truncf %13 : vector<8x128xf32> to vector<8x128xbf16>
    %cst_19 = arith.constant dense<0.000000e+00> : vector<8x512xf32>
    %20 = tpu.matmul %19, %18, %cst_19 {dimension_numbers = #tpu.dot_dimension_numbers<[1], [0], [0], [1], [0, 0, 1, 1], [], []>} : vector<8x128xbf16>, vector<128x512xbf16>, vector<8x512xf32> -> vector<8x512xf32>
    %21 = arith.addf %17, %20 : vector<8x512xf32>
    %22 = vector.extract_strided_slice %21 {offsets = [0, 0], sizes = [8, 128], strides = [1, 1]} : vector<8x512xf32> to vector<8x128xf32>
    %23 = arith.negf %22 : vector<8x128xf32>
    %24 = math.exp %23 : vector<8x128xf32>
    %cst_20 = arith.constant 1.000000e+00 : f32
    %25 = vector.broadcast %cst_20 : f32 to vector<8x128xf32>
    %26 = arith.addf %25, %24 : vector<8x128xf32>
    %27 = arith.divf %25, %26 : vector<8x128xf32>
    %28 = vector.extract_strided_slice %21 {offsets = [0, 128], sizes = [8, 128], strides = [1, 1]} : vector<8x512xf32> to vector<8x128xf32>
    %29 = arith.negf %28 : vector<8x128xf32>
    %30 = math.exp %29 : vector<8x128xf32>
    %cst_21 = arith.constant 1.000000e+00 : f32
    %31 = vector.broadcast %cst_21 : f32 to vector<8x128xf32>
    %32 = arith.addf %31, %30 : vector<8x128xf32>
    %33 = arith.divf %31, %32 : vector<8x128xf32>
    %34 = vector.extract_strided_slice %21 {offsets = [0, 256], sizes = [8, 128], strides = [1, 1]} : vector<8x512xf32> to vector<8x128xf32>
    %35 = math.tanh %34 : vector<8x128xf32>
    %36 = vector.extract_strided_slice %21 {offsets = [0, 384], sizes = [8, 128], strides = [1, 1]} : vector<8x512xf32> to vector<8x128xf32>
    %37 = arith.negf %36 : vector<8x128xf32>
    %38 = math.exp %37 : vector<8x128xf32>
    %cst_22 = arith.constant 1.000000e+00 : f32
    %39 = vector.broadcast %cst_22 : f32 to vector<8x128xf32>
    %40 = arith.addf %39, %38 : vector<8x128xf32>
    %41 = arith.divf %39, %40 : vector<8x128xf32>
    %42 = arith.mulf %33, %14 : vector<8x128xf32>
    %43 = arith.mulf %27, %35 : vector<8x128xf32>
    %44 = arith.addf %42, %43 : vector<8x128xf32>
    %45 = math.tanh %44 : vector<8x128xf32>
    %46 = arith.mulf %41, %45 : vector<8x128xf32>
    %c0_23 = arith.constant 0 : index
    %c0_24 = arith.constant 0 : index
    %47 = vector.load %arg16[%c0_23, %c0_24] : memref<8x128xf32, #tpu.memory_space<vmem>>, vector<8x128xf32>
    %c0_25 = arith.constant 0 : index
    %c0_26 = arith.constant 0 : index
    %48 = vector.load %arg17[%c0_25, %c0_26] : memref<8x128xf32, #tpu.memory_space<vmem>>, vector<8x128xf32>
    %c1_i32 = arith.constant 1 : i32
    %c0_27 = arith.constant 0 : index
    %c0_28 = arith.constant 0 : index
    %49 = vector.load %arg6[%c0_27, %c0_28] : memref<128x512xbf16, #tpu.memory_space<vmem>>, vector<128x512xbf16>
    %50 = arith.truncf %46 : vector<8x128xf32> to vector<8x128xbf16>
    %cst_29 = arith.constant dense<0.000000e+00> : vector<8x512xf32>
    %51 = tpu.matmul %50, %49, %cst_29 {dimension_numbers = #tpu.dot_dimension_numbers<[1], [0], [0], [1], [0, 0, 1, 1], [], []>} : vector<8x128xbf16>, vector<128x512xbf16>, vector<8x512xf32> -> vector<8x512xf32>
    %c0_30 = arith.constant 0 : index
    %c0_31 = arith.constant 0 : index
    %52 = vector.load %arg8[%c0_30, %c0_31] : memref<1x512xf32, #tpu.memory_space<vmem>>, vector<1x512xf32>
    %53 = vector.broadcast %52 : vector<1x512xf32> to vector<8x512xf32>
    %54 = arith.addf %51, %53 : vector<8x512xf32>
    %c0_32 = arith.constant 0 : index
    %c0_33 = arith.constant 0 : index
    %55 = vector.load %arg7[%c0_32, %c0_33] : memref<128x512xbf16, #tpu.memory_space<vmem>>, vector<128x512xbf16>
    %56 = arith.truncf %47 : vector<8x128xf32> to vector<8x128xbf16>
    %cst_34 = arith.constant dense<0.000000e+00> : vector<8x512xf32>
    %57 = tpu.matmul %56, %55, %cst_34 {dimension_numbers = #tpu.dot_dimension_numbers<[1], [0], [0], [1], [0, 0, 1, 1], [], []>} : vector<8x128xbf16>, vector<128x512xbf16>, vector<8x512xf32> -> vector<8x512xf32>
    %58 = arith.addf %54, %57 : vector<8x512xf32>
    %59 = vector.extract_strided_slice %58 {offsets = [0, 0], sizes = [8, 128], strides = [1, 1]} : vector<8x512xf32> to vector<8x128xf32>
    %60 = arith.negf %59 : vector<8x128xf32>
    %61 = math.exp %60 : vector<8x128xf32>
    %cst_35 = arith.constant 1.000000e+00 : f32
    %62 = vector.broadcast %cst_35 : f32 to vector<8x128xf32>
    %63 = arith.addf %62, %61 : vector<8x128xf32>
    %64 = arith.divf %62, %63 : vector<8x128xf32>
    %65 = vector.extract_strided_slice %58 {offsets = [0, 128], sizes = [8, 128], strides = [1, 1]} : vector<8x512xf32> to vector<8x128xf32>
    %66 = arith.negf %65 : vector<8x128xf32>
    %67 = math.exp %66 : vector<8x128xf32>
    %cst_36 = arith.constant 1.000000e+00 : f32
    %68 = vector.broadcast %cst_36 : f32 to vector<8x128xf32>
    %69 = arith.addf %68, %67 : vector<8x128xf32>
    %70 = arith.divf %68, %69 : vector<8x128xf32>
    %71 = vector.extract_strided_slice %58 {offsets = [0, 256], sizes = [8, 128], strides = [1, 1]} : vector<8x512xf32> to vector<8x128xf32>
    %72 = math.tanh %71 : vector<8x128xf32>
    %73 = vector.extract_strided_slice %58 {offsets = [0, 384], sizes = [8, 128], strides = [1, 1]} : vector<8x512xf32> to vector<8x128xf32>
    %74 = arith.negf %73 : vector<8x128xf32>
    %75 = math.exp %74 : vector<8x128xf32>
    %cst_37 = arith.constant 1.000000e+00 : f32
    %76 = vector.broadcast %cst_37 : f32 to vector<8x128xf32>
    %77 = arith.addf %76, %75 : vector<8x128xf32>
    %78 = arith.divf %76, %77 : vector<8x128xf32>
    %79 = arith.mulf %70, %48 : vector<8x128xf32>
    %80 = arith.mulf %64, %72 : vector<8x128xf32>
    %81 = arith.addf %79, %80 : vector<8x128xf32>
    %82 = math.tanh %81 : vector<8x128xf32>
    %83 = arith.mulf %78, %82 : vector<8x128xf32>
    %84 = arith.truncf %83 : vector<8x128xf32> to vector<8x128xbf16>
    %c1_i32_38 = arith.constant 1 : i32
    %85 = arith.subi %c1_i32, %c1_i32_38 : i32
    %86 = arith.index_cast %85 : i32 to index
    %c0_39 = arith.constant 0 : index
    %c0_40 = arith.constant 0 : index
    %87 = vector.load %arg18[%86, %c0_39, %c0_40] : memref<8x8x128xbf16, #tpu.memory_space<vmem>>, vector<1x8x128xbf16>
    %88 = vector.shape_cast %87 : vector<1x8x128xbf16> to vector<8x128xbf16>
    %89 = vector.shape_cast %84 : vector<8x128xbf16> to vector<1x8x128xbf16>
    tpu.vector_store %arg18[%86, %c0_39, %c0_40], %89 {strides = array<i32>} : memref<8x8x128xbf16, #tpu.memory_space<vmem>>, vector<1x8x128xbf16>,
    %90 = arith.index_cast %c1_i32 : i32 to index
    %c0_41 = arith.constant 0 : index
    %c0_42 = arith.constant 0 : index
    %91 = vector.load %arg19[%90, %c0_41, %c0_42] : memref<8x8x512xbf16, #tpu.memory_space<vmem>>, vector<1x8x512xbf16>
    %92 = vector.shape_cast %91 : vector<1x8x512xbf16> to vector<8x512xbf16>
    %93 = arith.extf %92 : vector<8x512xbf16> to vector<8x512xf32>
    %c0_43 = arith.constant 0 : index
    %c0_44 = arith.constant 0 : index
    %94 = vector.load %arg4[%c0_43, %c0_44] : memref<128x512xbf16, #tpu.memory_space<vmem>>, vector<128x512xbf16>
    %95 = arith.truncf %46 : vector<8x128xf32> to vector<8x128xbf16>
    %cst_45 = arith.constant dense<0.000000e+00> : vector<8x512xf32>
    %96 = tpu.matmul %95, %94, %cst_45 {dimension_numbers = #tpu.dot_dimension_numbers<[1], [0], [0], [1], [0, 0, 1, 1], [], []>} : vector<8x128xbf16>, vector<128x512xbf16>, vector<8x512xf32> -> vector<8x512xf32>
    %97 = arith.addf %93, %96 : vector<8x512xf32>
    %98 = vector.extract_strided_slice %97 {offsets = [0, 0], sizes = [8, 128], strides = [1, 1]} : vector<8x512xf32> to vector<8x128xf32>
    %99 = arith.negf %98 : vector<8x128xf32>
    %100 = math.exp %99 : vector<8x128xf32>
    %cst_46 = arith.constant 1.000000e+00 : f32
    %101 = vector.broadcast %cst_46 : f32 to vector<8x128xf32>
    %102 = arith.addf %101, %100 : vector<8x128xf32>
    %103 = arith.divf %101, %102 : vector<8x128xf32>
    %104 = vector.extract_strided_slice %97 {offsets = [0, 128], sizes = [8, 128], strides = [1, 1]} : vector<8x512xf32> to vector<8x128xf32>
    %105 = arith.negf %104 : vector<8x128xf32>
    %106 = math.exp %105 : vector<8x128xf32>
    %cst_47 = arith.constant 1.000000e+00 : f32
    %107 = vector.broadcast %cst_47 : f32 to vector<8x128xf32>
    %108 = arith.addf %107, %106 : vector<8x128xf32>
    %109 = arith.divf %107, %108 : vector<8x128xf32>
    %110 = vector.extract_strided_slice %97 {offsets = [0, 256], sizes = [8, 128], strides = [1, 1]} : vector<8x512xf32> to vector<8x128xf32>
    %111 = math.tanh %110 : vector<8x128xf32>
    %112 = vector.extract_strided_slice %97 {offsets = [0, 384], sizes = [8, 128], strides = [1, 1]} : vector<8x512xf32> to vector<8x128xf32>
    %113 = arith.negf %112 : vector<8x128xf32>
    %114 = math.exp %113 : vector<8x128xf32>
    %cst_48 = arith.constant 1.000000e+00 : f32
    %115 = vector.broadcast %cst_48 : f32 to vector<8x128xf32>
    %116 = arith.addf %115, %114 : vector<8x128xf32>
    %117 = arith.divf %115, %116 : vector<8x128xf32>
    %118 = arith.mulf %109, %44 : vector<8x128xf32>
    %119 = arith.mulf %103, %111 : vector<8x128xf32>
    %120 = arith.addf %118, %119 : vector<8x128xf32>
    %121 = math.tanh %120 : vector<8x128xf32>
    %122 = arith.mulf %117, %121 : vector<8x128xf32>
    %c2_i32 = arith.constant 2 : i32
    %c0_49 = arith.constant 0 : index
    %c0_50 = arith.constant 0 : index
    %123 = vector.load %arg6[%c0_49, %c0_50] : memref<128x512xbf16, #tpu.memory_space<vmem>>, vector<128x512xbf16>
    %124 = arith.truncf %122 : vector<8x128xf32> to vector<8x128xbf16>
    %cst_51 = arith.constant dense<0.000000e+00> : vector<8x512xf32>
    %125 = tpu.matmul %124, %123, %cst_51 {dimension_numbers = #tpu.dot_dimension_numbers<[1], [0], [0], [1], [0, 0, 1, 1], [], []>} : vector<8x128xbf16>, vector<128x512xbf16>, vector<8x512xf32> -> vector<8x512xf32>
    %c0_52 = arith.constant 0 : index
    %c0_53 = arith.constant 0 : index
    %126 = vector.load %arg8[%c0_52, %c0_53] : memref<1x512xf32, #tpu.memory_space<vmem>>, vector<1x512xf32>
    %127 = vector.broadcast %126 : vector<1x512xf32> to vector<8x512xf32>
    %128 = arith.addf %125, %127 : vector<8x512xf32>
    %c0_54 = arith.constant 0 : index
    %c0_55 = arith.constant 0 : index
    %129 = vector.load %arg7[%c0_54, %c0_55] : memref<128x512xbf16, #tpu.memory_space<vmem>>, vector<128x512xbf16>
    %130 = arith.truncf %83 : vector<8x128xf32> to vector<8x128xbf16>
    %cst_56 = arith.constant dense<0.000000e+00> : vector<8x512xf32>
    %131 = tpu.matmul %130, %129, %cst_56 {dimension_numbers = #tpu.dot_dimension_numbers<[1], [0], [0], [1], [0, 0, 1, 1], [], []>} : vector<8x128xbf16>, vector<128x512xbf16>, vector<8x512xf32> -> vector<8x512xf32>
    %132 = arith.addf %128, %131 : vector<8x512xf32>
    %133 = vector.extract_strided_slice %132 {offsets = [0, 0], sizes = [8, 128], strides = [1, 1]} : vector<8x512xf32> to vector<8x128xf32>
    %134 = arith.negf %133 : vector<8x128xf32>
    %135 = math.exp %134 : vector<8x128xf32>
    %cst_57 = arith.constant 1.000000e+00 : f32
    %136 = vector.broadcast %cst_57 : f32 to vector<8x128xf32>
    %137 = arith.addf %136, %135 : vector<8x128xf32>
    %138 = arith.divf %136, %137 : vector<8x128xf32>
    %139 = vector.extract_strided_slice %132 {offsets = [0, 128], sizes = [8, 128], strides = [1, 1]} : vector<8x512xf32> to vector<8x128xf32>
    %140 = arith.negf %139 : vector<8x128xf32>
    %141 = math.exp %140 : vector<8x128xf32>
    %cst_58 = arith.constant 1.000000e+00 : f32
    %142 = vector.broadcast %cst_58 : f32 to vector<8x128xf32>
    %143 = arith.addf %142, %141 : vector<8x128xf32>
    %144 = arith.divf %142, %143 : vector<8x128xf32>
    %145 = vector.extract_strided_slice %132 {offsets = [0, 256], sizes = [8, 128], strides = [1, 1]} : vector<8x512xf32> to vector<8x128xf32>
    %146 = math.tanh %145 : vector<8x128xf32>
    %147 = vector.extract_strided_slice %132 {offsets = [0, 384], sizes = [8, 128], strides = [1, 1]} : vector<8x512xf32> to vector<8x128xf32>
    %148 = arith.negf %147 : vector<8x128xf32>
    %149 = math.exp %148 : vector<8x128xf32>
    %cst_59 = arith.constant 1.000000e+00 : f32
    %150 = vector.broadcast %cst_59 : f32 to vector<8x128xf32>
    %151 = arith.addf %150, %149 : vector<8x128xf32>
    %152 = arith.divf %150, %151 : vector<8x128xf32>
    %153 = arith.mulf %144, %81 : vector<8x128xf32>
    %154 = arith.mulf %138, %146 : vector<8x128xf32>
    %155 = arith.addf %153, %154 : vector<8x128xf32>
    %156 = math.tanh %155 : vector<8x128xf32>
    %157 = arith.mulf %152, %156 : vector<8x128xf32>
    %158 = arith.truncf %157 : vector<8x128xf32> to vector<8x128xbf16>
    %c1_i32_60 = arith.constant 1 : i32
    %159 = arith.subi %c2_i32, %c1_i32_60 : i32
    %160 = arith.index_cast %159 : i32 to index
    %c0_61 = arith.constant 0 : index
    %c0_62 = arith.constant 0 : index
    %161 = vector.load %arg18[%160, %c0_61, %c0_62] : memref<8x8x128xbf16, #tpu.memory_space<vmem>>, vector<1x8x128xbf16>
    %162 = vector.shape_cast %161 : vector<1x8x128xbf16> to vector<8x128xbf16>
    %163 = vector.shape_cast %158 : vector<8x128xbf16> to vector<1x8x128xbf16>
    tpu.vector_store %arg18[%160, %c0_61, %c0_62], %163 {strides = array<i32>} : memref<8x8x128xbf16, #tpu.memory_space<vmem>>, vector<1x8x128xbf16>,
    %164 = arith.index_cast %c2_i32 : i32 to index
    %c0_63 = arith.constant 0 : index
    %c0_64 = arith.constant 0 : index
    %165 = vector.load %arg19[%164, %c0_63, %c0_64] : memref<8x8x512xbf16, #tpu.memory_space<vmem>>, vector<1x8x512xbf16>
    %166 = vector.shape_cast %165 : vector<1x8x512xbf16> to vector<8x512xbf16>
    %167 = arith.extf %166 : vector<8x512xbf16> to vector<8x512xf32>
    %c0_65 = arith.constant 0 : index
    %c0_66 = arith.constant 0 : index
    %168 = vector.load %arg4[%c0_65, %c0_66] : memref<128x512xbf16, #tpu.memory_space<vmem>>, vector<128x512xbf16>
    %169 = arith.truncf %122 : vector<8x128xf32> to vector<8x128xbf16>
    %cst_67 = arith.constant dense<0.000000e+00> : vector<8x512xf32>
    %170 = tpu.matmul %169, %168, %cst_67 {dimension_numbers = #tpu.dot_dimension_numbers<[1], [0], [0], [1], [0, 0, 1, 1], [], []>} : vector<8x128xbf16>, vector<128x512xbf16>, vector<8x512xf32> -> vector<8x512xf32>
    %171 = arith.addf %167, %170 : vector<8x512xf32>
    %172 = vector.extract_strided_slice %171 {offsets = [0, 0], sizes = [8, 128], strides = [1, 1]} : vector<8x512xf32> to vector<8x128xf32>
    %173 = arith.negf %172 : vector<8x128xf32>
    %174 = math.exp %173 : vector<8x128xf32>
    %cst_68 = arith.constant 1.000000e+00 : f32
    %175 = vector.broadcast %cst_68 : f32 to vector<8x128xf32>
    %176 = arith.addf %175, %174 : vector<8x128xf32>
    %177 = arith.divf %175, %176 : vector<8x128xf32>
    %178 = vector.extract_strided_slice %171 {offsets = [0, 128], sizes = [8, 128], strides = [1, 1]} : vector<8x512xf32> to vector<8x128xf32>
    %179 = arith.negf %178 : vector<8x128xf32>
    %180 = math.exp %179 : vector<8x128xf32>
    %cst_69 = arith.constant 1.000000e+00 : f32
    %181 = vector.broadcast %cst_69 : f32 to vector<8x128xf32>
    %182 = arith.addf %181, %180 : vector<8x128xf32>
    %183 = arith.divf %181, %182 : vector<8x128xf32>
    %184 = vector.extract_strided_slice %171 {offsets = [0, 256], sizes = [8, 128], strides = [1, 1]} : vector<8x512xf32> to vector<8x128xf32>
    %185 = math.tanh %184 : vector<8x128xf32>
    %186 = vector.extract_strided_slice %171 {offsets = [0, 384], sizes = [8, 128], strides = [1, 1]} : vector<8x512xf32> to vector<8x128xf32>
    %187 = arith.negf %186 : vector<8x128xf32>
    %188 = math.exp %187 : vector<8x128xf32>
    %cst_70 = arith.constant 1.000000e+00 : f32
    %189 = vector.broadcast %cst_70 : f32 to vector<8x128xf32>
    %190 = arith.addf %189, %188 : vector<8x128xf32>
    %191 = arith.divf %189, %190 : vector<8x128xf32>
    %192 = arith.mulf %183, %120 : vector<8x128xf32>
    %193 = arith.mulf %177, %185 : vector<8x128xf32>
    %194 = arith.addf %192, %193 : vector<8x128xf32>
    %195 = math.tanh %194 : vector<8x128xf32>
    %196 = arith.mulf %191, %195 : vector<8x128xf32>
    %c3_i32 = arith.constant 3 : i32
    %c0_71 = arith.constant 0 : index
    %c0_72 = arith.constant 0 : index
    %197 = vector.load %arg6[%c0_71, %c0_72] : memref<128x512xbf16, #tpu.memory_space<vmem>>, vector<128x512xbf16>
    %198 = arith.truncf %196 : vector<8x128xf32> to vector<8x128xbf16>
    %cst_73 = arith.constant dense<0.000000e+00> : vector<8x512xf32>
    %199 = tpu.matmul %198, %197, %cst_73 {dimension_numbers = #tpu.dot_dimension_numbers<[1], [0], [0], [1], [0, 0, 1, 1], [], []>} : vector<8x128xbf16>, vector<128x512xbf16>, vector<8x512xf32> -> vector<8x512xf32>
    %c0_74 = arith.constant 0 : index
    %c0_75 = arith.constant 0 : index
    %200 = vector.load %arg8[%c0_74, %c0_75] : memref<1x512xf32, #tpu.memory_space<vmem>>, vector<1x512xf32>
    %201 = vector.broadcast %200 : vector<1x512xf32> to vector<8x512xf32>
    %202 = arith.addf %199, %201 : vector<8x512xf32>
    %c0_76 = arith.constant 0 : index
    %c0_77 = arith.constant 0 : index
    %203 = vector.load %arg7[%c0_76, %c0_77] : memref<128x512xbf16, #tpu.memory_space<vmem>>, vector<128x512xbf16>
    %204 = arith.truncf %157 : vector<8x128xf32> to vector<8x128xbf16>
    %cst_78 = arith.constant dense<0.000000e+00> : vector<8x512xf32>
    %205 = tpu.matmul %204, %203, %cst_78 {dimension_numbers = #tpu.dot_dimension_numbers<[1], [0], [0], [1], [0, 0, 1, 1], [], []>} : vector<8x128xbf16>, vector<128x512xbf16>, vector<8x512xf32> -> vector<8x512xf32>
    %206 = arith.addf %202, %205 : vector<8x512xf32>
    %207 = vector.extract_strided_slice %206 {offsets = [0, 0], sizes = [8, 128], strides = [1, 1]} : vector<8x512xf32> to vector<8x128xf32>
    %208 = arith.negf %207 : vector<8x128xf32>
    %209 = math.exp %208 : vector<8x128xf32>
    %cst_79 = arith.constant 1.000000e+00 : f32
    %210 = vector.broadcast %cst_79 : f32 to vector<8x128xf32>
    %211 = arith.addf %210, %209 : vector<8x128xf32>
    %212 = arith.divf %210, %211 : vector<8x128xf32>
    %213 = vector.extract_strided_slice %206 {offsets = [0, 128], sizes = [8, 128], strides = [1, 1]} : vector<8x512xf32> to vector<8x128xf32>
    %214 = arith.negf %213 : vector<8x128xf32>
    %215 = math.exp %214 : vector<8x128xf32>
    %cst_80 = arith.constant 1.000000e+00 : f32
    %216 = vector.broadcast %cst_80 : f32 to vector<8x128xf32>
    %217 = arith.addf %216, %215 : vector<8x128xf32>
    %218 = arith.divf %216, %217 : vector<8x128xf32>
    %219 = vector.extract_strided_slice %206 {offsets = [0, 256], sizes = [8, 128], strides = [1, 1]} : vector<8x512xf32> to vector<8x128xf32>
    %220 = math.tanh %219 : vector<8x128xf32>
    %221 = vector.extract_strided_slice %206 {offsets = [0, 384], sizes = [8, 128], strides = [1, 1]} : vector<8x512xf32> to vector<8x128xf32>
    %222 = arith.negf %221 : vector<8x128xf32>
    %223 = math.exp %222 : vector<8x128xf32>
    %cst_81 = arith.constant 1.000000e+00 : f32
    %224 = vector.broadcast %cst_81 : f32 to vector<8x128xf32>
    %225 = arith.addf %224, %223 : vector<8x128xf32>
    %226 = arith.divf %224, %225 : vector<8x128xf32>
    %227 = arith.mulf %218, %155 : vector<8x128xf32>
    %228 = arith.mulf %212, %220 : vector<8x128xf32>
    %229 = arith.addf %227, %228 : vector<8x128xf32>
    %230 = math.tanh %229 : vector<8x128xf32>
    %231 = arith.mulf %226, %230 : vector<8x128xf32>
    %232 = arith.truncf %231 : vector<8x128xf32> to vector<8x128xbf16>
    %c1_i32_82 = arith.constant 1 : i32
    %233 = arith.subi %c3_i32, %c1_i32_82 : i32
    %234 = arith.index_cast %233 : i32 to index
    %c0_83 = arith.constant 0 : index
    %c0_84 = arith.constant 0 : index
    %235 = vector.load %arg18[%234, %c0_83, %c0_84] : memref<8x8x128xbf16, #tpu.memory_space<vmem>>, vector<1x8x128xbf16>
    %236 = vector.shape_cast %235 : vector<1x8x128xbf16> to vector<8x128xbf16>
    %237 = vector.shape_cast %232 : vector<8x128xbf16> to vector<1x8x128xbf16>
    tpu.vector_store %arg18[%234, %c0_83, %c0_84], %237 {strides = array<i32>} : memref<8x8x128xbf16, #tpu.memory_space<vmem>>, vector<1x8x128xbf16>,
    %238 = arith.index_cast %c3_i32 : i32 to index
    %c0_85 = arith.constant 0 : index
    %c0_86 = arith.constant 0 : index
    %239 = vector.load %arg19[%238, %c0_85, %c0_86] : memref<8x8x512xbf16, #tpu.memory_space<vmem>>, vector<1x8x512xbf16>
    %240 = vector.shape_cast %239 : vector<1x8x512xbf16> to vector<8x512xbf16>
    %241 = arith.extf %240 : vector<8x512xbf16> to vector<8x512xf32>
    %c0_87 = arith.constant 0 : index
    %c0_88 = arith.constant 0 : index
    %242 = vector.load %arg4[%c0_87, %c0_88] : memref<128x512xbf16, #tpu.memory_space<vmem>>, vector<128x512xbf16>
    %243 = arith.truncf %196 : vector<8x128xf32> to vector<8x128xbf16>
    %cst_89 = arith.constant dense<0.000000e+00> : vector<8x512xf32>
    %244 = tpu.matmul %243, %242, %cst_89 {dimension_numbers = #tpu.dot_dimension_numbers<[1], [0], [0], [1], [0, 0, 1, 1], [], []>} : vector<8x128xbf16>, vector<128x512xbf16>, vector<8x512xf32> -> vector<8x512xf32>
    %245 = arith.addf %241, %244 : vector<8x512xf32>
    %246 = vector.extract_strided_slice %245 {offsets = [0, 0], sizes = [8, 128], strides = [1, 1]} : vector<8x512xf32> to vector<8x128xf32>
    %247 = arith.negf %246 : vector<8x128xf32>
    %248 = math.exp %247 : vector<8x128xf32>
    %cst_90 = arith.constant 1.000000e+00 : f32
    %249 = vector.broadcast %cst_90 : f32 to vector<8x128xf32>
    %250 = arith.addf %249, %248 : vector<8x128xf32>
    %251 = arith.divf %249, %250 : vector<8x128xf32>
    %252 = vector.extract_strided_slice %245 {offsets = [0, 128], sizes = [8, 128], strides = [1, 1]} : vector<8x512xf32> to vector<8x128xf32>
    %253 = arith.negf %252 : vector<8x128xf32>
    %254 = math.exp %253 : vector<8x128xf32>
    %cst_91 = arith.constant 1.000000e+00 : f32
    %255 = vector.broadcast %cst_91 : f32 to vector<8x128xf32>
    %256 = arith.addf %255, %254 : vector<8x128xf32>
    %257 = arith.divf %255, %256 : vector<8x128xf32>
    %258 = vector.extract_strided_slice %245 {offsets = [0, 256], sizes = [8, 128], strides = [1, 1]} : vector<8x512xf32> to vector<8x128xf32>
    %259 = math.tanh %258 : vector<8x128xf32>
    %260 = vector.extract_strided_slice %245 {offsets = [0, 384], sizes = [8, 128], strides = [1, 1]} : vector<8x512xf32> to vector<8x128xf32>
    %261 = arith.negf %260 : vector<8x128xf32>
    %262 = math.exp %261 : vector<8x128xf32>
    %cst_92 = arith.constant 1.000000e+00 : f32
    %263 = vector.broadcast %cst_92 : f32 to vector<8x128xf32>
    %264 = arith.addf %263, %262 : vector<8x128xf32>
    %265 = arith.divf %263, %264 : vector<8x128xf32>
    %266 = arith.mulf %257, %194 : vector<8x128xf32>
    %267 = arith.mulf %251, %259 : vector<8x128xf32>
    %268 = arith.addf %266, %267 : vector<8x128xf32>
    %269 = math.tanh %268 : vector<8x128xf32>
    %270 = arith.mulf %265, %269 : vector<8x128xf32>
    %c4_i32 = arith.constant 4 : i32
    %c0_93 = arith.constant 0 : index
    %c0_94 = arith.constant 0 : index
    %271 = vector.load %arg6[%c0_93, %c0_94] : memref<128x512xbf16, #tpu.memory_space<vmem>>, vector<128x512xbf16>
    %272 = arith.truncf %270 : vector<8x128xf32> to vector<8x128xbf16>
    %cst_95 = arith.constant dense<0.000000e+00> : vector<8x512xf32>
    %273 = tpu.matmul %272, %271, %cst_95 {dimension_numbers = #tpu.dot_dimension_numbers<[1], [0], [0], [1], [0, 0, 1, 1], [], []>} : vector<8x128xbf16>, vector<128x512xbf16>, vector<8x512xf32> -> vector<8x512xf32>
    %c0_96 = arith.constant 0 : index
    %c0_97 = arith.constant 0 : index
    %274 = vector.load %arg8[%c0_96, %c0_97] : memref<1x512xf32, #tpu.memory_space<vmem>>, vector<1x512xf32>
    %275 = vector.broadcast %274 : vector<1x512xf32> to vector<8x512xf32>
    %276 = arith.addf %273, %275 : vector<8x512xf32>
    %c0_98 = arith.constant 0 : index
    %c0_99 = arith.constant 0 : index
    %277 = vector.load %arg7[%c0_98, %c0_99] : memref<128x512xbf16, #tpu.memory_space<vmem>>, vector<128x512xbf16>
    %278 = arith.truncf %231 : vector<8x128xf32> to vector<8x128xbf16>
    %cst_100 = arith.constant dense<0.000000e+00> : vector<8x512xf32>
    %279 = tpu.matmul %278, %277, %cst_100 {dimension_numbers = #tpu.dot_dimension_numbers<[1], [0], [0], [1], [0, 0, 1, 1], [], []>} : vector<8x128xbf16>, vector<128x512xbf16>, vector<8x512xf32> -> vector<8x512xf32>
    %280 = arith.addf %276, %279 : vector<8x512xf32>
    %281 = vector.extract_strided_slice %280 {offsets = [0, 0], sizes = [8, 128], strides = [1, 1]} : vector<8x512xf32> to vector<8x128xf32>
    %282 = arith.negf %281 : vector<8x128xf32>
    %283 = math.exp %282 : vector<8x128xf32>
    %cst_101 = arith.constant 1.000000e+00 : f32
    %284 = vector.broadcast %cst_101 : f32 to vector<8x128xf32>
    %285 = arith.addf %284, %283 : vector<8x128xf32>
    %286 = arith.divf %284, %285 : vector<8x128xf32>
    %287 = vector.extract_strided_slice %280 {offsets = [0, 128], sizes = [8, 128], strides = [1, 1]} : vector<8x512xf32> to vector<8x128xf32>
    %288 = arith.negf %287 : vector<8x128xf32>
    %289 = math.exp %288 : vector<8x128xf32>
    %cst_102 = arith.constant 1.000000e+00 : f32
    %290 = vector.broadcast %cst_102 : f32 to vector<8x128xf32>
    %291 = arith.addf %290, %289 : vector<8x128xf32>
    %292 = arith.divf %290, %291 : vector<8x128xf32>
    %293 = vector.extract_strided_slice %280 {offsets = [0, 256], sizes = [8, 128], strides = [1, 1]} : vector<8x512xf32> to vector<8x128xf32>
    %294 = math.tanh %293 : vector<8x128xf32>
    %295 = vector.extract_strided_slice %280 {offsets = [0, 384], sizes = [8, 128], strides = [1, 1]} : vector<8x512xf32> to vector<8x128xf32>
    %296 = arith.negf %295 : vector<8x128xf32>
    %297 = math.exp %296 : vector<8x128xf32>
    %cst_103 = arith.constant 1.000000e+00 : f32
    %298 = vector.broadcast %cst_103 : f32 to vector<8x128xf32>
    %299 = arith.addf %298, %297 : vector<8x128xf32>
    %300 = arith.divf %298, %299 : vector<8x128xf32>
    %301 = arith.mulf %292, %229 : vector<8x128xf32>
    %302 = arith.mulf %286, %294 : vector<8x128xf32>
    %303 = arith.addf %301, %302 : vector<8x128xf32>
    %304 = math.tanh %303 : vector<8x128xf32>
    %305 = arith.mulf %300, %304 : vector<8x128xf32>
    %306 = arith.truncf %305 : vector<8x128xf32> to vector<8x128xbf16>
    %c1_i32_104 = arith.constant 1 : i32
    %307 = arith.subi %c4_i32, %c1_i32_104 : i32
    %308 = arith.index_cast %307 : i32 to index
    %c0_105 = arith.constant 0 : index
    %c0_106 = arith.constant 0 : index
    %309 = vector.load %arg18[%308, %c0_105, %c0_106] : memref<8x8x128xbf16, #tpu.memory_space<vmem>>, vector<1x8x128xbf16>
    %310 = vector.shape_cast %309 : vector<1x8x128xbf16> to vector<8x128xbf16>
    %311 = vector.shape_cast %306 : vector<8x128xbf16> to vector<1x8x128xbf16>
    tpu.vector_store %arg18[%308, %c0_105, %c0_106], %311 {strides = array<i32>} : memref<8x8x128xbf16, #tpu.memory_space<vmem>>, vector<1x8x128xbf16>,
    %312 = arith.index_cast %c4_i32 : i32 to index
    %c0_107 = arith.constant 0 : index
    %c0_108 = arith.constant 0 : index
    %313 = vector.load %arg19[%312, %c0_107, %c0_108] : memref<8x8x512xbf16, #tpu.memory_space<vmem>>, vector<1x8x512xbf16>
    %314 = vector.shape_cast %313 : vector<1x8x512xbf16> to vector<8x512xbf16>
    %315 = arith.extf %314 : vector<8x512xbf16> to vector<8x512xf32>
    %c0_109 = arith.constant 0 : index
    %c0_110 = arith.constant 0 : index
    %316 = vector.load %arg4[%c0_109, %c0_110] : memref<128x512xbf16, #tpu.memory_space<vmem>>, vector<128x512xbf16>
    %317 = arith.truncf %270 : vector<8x128xf32> to vector<8x128xbf16>
    %cst_111 = arith.constant dense<0.000000e+00> : vector<8x512xf32>
    %318 = tpu.matmul %317, %316, %cst_111 {dimension_numbers = #tpu.dot_dimension_numbers<[1], [0], [0], [1], [0, 0, 1, 1], [], []>} : vector<8x128xbf16>, vector<128x512xbf16>, vector<8x512xf32> -> vector<8x512xf32>
    %319 = arith.addf %315, %318 : vector<8x512xf32>
    %320 = vector.extract_strided_slice %319 {offsets = [0, 0], sizes = [8, 128], strides = [1, 1]} : vector<8x512xf32> to vector<8x128xf32>
    %321 = arith.negf %320 : vector<8x128xf32>
    %322 = math.exp %321 : vector<8x128xf32>
    %cst_112 = arith.constant 1.000000e+00 : f32
    %323 = vector.broadcast %cst_112 : f32 to vector<8x128xf32>
    %324 = arith.addf %323, %322 : vector<8x128xf32>
    %325 = arith.divf %323, %324 : vector<8x128xf32>
    %326 = vector.extract_strided_slice %319 {offsets = [0, 128], sizes = [8, 128], strides = [1, 1]} : vector<8x512xf32> to vector<8x128xf32>
    %327 = arith.negf %326 : vector<8x128xf32>
    %328 = math.exp %327 : vector<8x128xf32>
    %cst_113 = arith.constant 1.000000e+00 : f32
    %329 = vector.broadcast %cst_113 : f32 to vector<8x128xf32>
    %330 = arith.addf %329, %328 : vector<8x128xf32>
    %331 = arith.divf %329, %330 : vector<8x128xf32>
    %332 = vector.extract_strided_slice %319 {offsets = [0, 256], sizes = [8, 128], strides = [1, 1]} : vector<8x512xf32> to vector<8x128xf32>
    %333 = math.tanh %332 : vector<8x128xf32>
    %334 = vector.extract_strided_slice %319 {offsets = [0, 384], sizes = [8, 128], strides = [1, 1]} : vector<8x512xf32> to vector<8x128xf32>
    %335 = arith.negf %334 : vector<8x128xf32>
    %336 = math.exp %335 : vector<8x128xf32>
    %cst_114 = arith.constant 1.000000e+00 : f32
    %337 = vector.broadcast %cst_114 : f32 to vector<8x128xf32>
    %338 = arith.addf %337, %336 : vector<8x128xf32>
    %339 = arith.divf %337, %338 : vector<8x128xf32>
    %340 = arith.mulf %331, %268 : vector<8x128xf32>
    %341 = arith.mulf %325, %333 : vector<8x128xf32>
    %342 = arith.addf %340, %341 : vector<8x128xf32>
    %343 = math.tanh %342 : vector<8x128xf32>
    %344 = arith.mulf %339, %343 : vector<8x128xf32>
    %c5_i32 = arith.constant 5 : i32
    %c0_115 = arith.constant 0 : index
    %c0_116 = arith.constant 0 : index
    %345 = vector.load %arg6[%c0_115, %c0_116] : memref<128x512xbf16, #tpu.memory_space<vmem>>, vector<128x512xbf16>
    %346 = arith.truncf %344 : vector<8x128xf32> to vector<8x128xbf16>
    %cst_117 = arith.constant dense<0.000000e+00> : vector<8x512xf32>
    %347 = tpu.matmul %346, %345, %cst_117 {dimension_numbers = #tpu.dot_dimension_numbers<[1], [0], [0], [1], [0, 0, 1, 1], [], []>} : vector<8x128xbf16>, vector<128x512xbf16>, vector<8x512xf32> -> vector<8x512xf32>
    %c0_118 = arith.constant 0 : index
    %c0_119 = arith.constant 0 : index
    %348 = vector.load %arg8[%c0_118, %c0_119] : memref<1x512xf32, #tpu.memory_space<vmem>>, vector<1x512xf32>
    %349 = vector.broadcast %348 : vector<1x512xf32> to vector<8x512xf32>
    %350 = arith.addf %347, %349 : vector<8x512xf32>
    %c0_120 = arith.constant 0 : index
    %c0_121 = arith.constant 0 : index
    %351 = vector.load %arg7[%c0_120, %c0_121] : memref<128x512xbf16, #tpu.memory_space<vmem>>, vector<128x512xbf16>
    %352 = arith.truncf %305 : vector<8x128xf32> to vector<8x128xbf16>
    %cst_122 = arith.constant dense<0.000000e+00> : vector<8x512xf32>
    %353 = tpu.matmul %352, %351, %cst_122 {dimension_numbers = #tpu.dot_dimension_numbers<[1], [0], [0], [1], [0, 0, 1, 1], [], []>} : vector<8x128xbf16>, vector<128x512xbf16>, vector<8x512xf32> -> vector<8x512xf32>
    %354 = arith.addf %350, %353 : vector<8x512xf32>
    %355 = vector.extract_strided_slice %354 {offsets = [0, 0], sizes = [8, 128], strides = [1, 1]} : vector<8x512xf32> to vector<8x128xf32>
    %356 = arith.negf %355 : vector<8x128xf32>
    %357 = math.exp %356 : vector<8x128xf32>
    %cst_123 = arith.constant 1.000000e+00 : f32
    %358 = vector.broadcast %cst_123 : f32 to vector<8x128xf32>
    %359 = arith.addf %358, %357 : vector<8x128xf32>
    %360 = arith.divf %358, %359 : vector<8x128xf32>
    %361 = vector.extract_strided_slice %354 {offsets = [0, 128], sizes = [8, 128], strides = [1, 1]} : vector<8x512xf32> to vector<8x128xf32>
    %362 = arith.negf %361 : vector<8x128xf32>
    %363 = math.exp %362 : vector<8x128xf32>
    %cst_124 = arith.constant 1.000000e+00 : f32
    %364 = vector.broadcast %cst_124 : f32 to vector<8x128xf32>
    %365 = arith.addf %364, %363 : vector<8x128xf32>
    %366 = arith.divf %364, %365 : vector<8x128xf32>
    %367 = vector.extract_strided_slice %354 {offsets = [0, 256], sizes = [8, 128], strides = [1, 1]} : vector<8x512xf32> to vector<8x128xf32>
    %368 = math.tanh %367 : vector<8x128xf32>
    %369 = vector.extract_strided_slice %354 {offsets = [0, 384], sizes = [8, 128], strides = [1, 1]} : vector<8x512xf32> to vector<8x128xf32>
    %370 = arith.negf %369 : vector<8x128xf32>
    %371 = math.exp %370 : vector<8x128xf32>
    %cst_125 = arith.constant 1.000000e+00 : f32
    %372 = vector.broadcast %cst_125 : f32 to vector<8x128xf32>
    %373 = arith.addf %372, %371 : vector<8x128xf32>
    %374 = arith.divf %372, %373 : vector<8x128xf32>
    %375 = arith.mulf %366, %303 : vector<8x128xf32>
    %376 = arith.mulf %360, %368 : vector<8x128xf32>
    %377 = arith.addf %375, %376 : vector<8x128xf32>
    %378 = math.tanh %377 : vector<8x128xf32>
    %379 = arith.mulf %374, %378 : vector<8x128xf32>
    %380 = arith.truncf %379 : vector<8x128xf32> to vector<8x128xbf16>
    %c1_i32_126 = arith.constant 1 : i32
    %381 = arith.subi %c5_i32, %c1_i32_126 : i32
    %382 = arith.index_cast %381 : i32 to index
    %c0_127 = arith.constant 0 : index
    %c0_128 = arith.constant 0 : index
    %383 = vector.load %arg18[%382, %c0_127, %c0_128] : memref<8x8x128xbf16, #tpu.memory_space<vmem>>, vector<1x8x128xbf16>
    %384 = vector.shape_cast %383 : vector<1x8x128xbf16> to vector<8x128xbf16>
    %385 = vector.shape_cast %380 : vector<8x128xbf16> to vector<1x8x128xbf16>
    tpu.vector_store %arg18[%382, %c0_127, %c0_128], %385 {strides = array<i32>} : memref<8x8x128xbf16, #tpu.memory_space<vmem>>, vector<1x8x128xbf16>,
    %386 = arith.index_cast %c5_i32 : i32 to index
    %c0_129 = arith.constant 0 : index
    %c0_130 = arith.constant 0 : index
    %387 = vector.load %arg19[%386, %c0_129, %c0_130] : memref<8x8x512xbf16, #tpu.memory_space<vmem>>, vector<1x8x512xbf16>
    %388 = vector.shape_cast %387 : vector<1x8x512xbf16> to vector<8x512xbf16>
    %389 = arith.extf %388 : vector<8x512xbf16> to vector<8x512xf32>
    %c0_131 = arith.constant 0 : index
    %c0_132 = arith.constant 0 : index
    %390 = vector.load %arg4[%c0_131, %c0_132] : memref<128x512xbf16, #tpu.memory_space<vmem>>, vector<128x512xbf16>
    %391 = arith.truncf %344 : vector<8x128xf32> to vector<8x128xbf16>
    %cst_133 = arith.constant dense<0.000000e+00> : vector<8x512xf32>
    %392 = tpu.matmul %391, %390, %cst_133 {dimension_numbers = #tpu.dot_dimension_numbers<[1], [0], [0], [1], [0, 0, 1, 1], [], []>} : vector<8x128xbf16>, vector<128x512xbf16>, vector<8x512xf32> -> vector<8x512xf32>
    %393 = arith.addf %389, %392 : vector<8x512xf32>
    %394 = vector.extract_strided_slice %393 {offsets = [0, 0], sizes = [8, 128], strides = [1, 1]} : vector<8x512xf32> to vector<8x128xf32>
    %395 = arith.negf %394 : vector<8x128xf32>
    %396 = math.exp %395 : vector<8x128xf32>
    %cst_134 = arith.constant 1.000000e+00 : f32
    %397 = vector.broadcast %cst_134 : f32 to vector<8x128xf32>
    %398 = arith.addf %397, %396 : vector<8x128xf32>
    %399 = arith.divf %397, %398 : vector<8x128xf32>
    %400 = vector.extract_strided_slice %393 {offsets = [0, 128], sizes = [8, 128], strides = [1, 1]} : vector<8x512xf32> to vector<8x128xf32>
    %401 = arith.negf %400 : vector<8x128xf32>
    %402 = math.exp %401 : vector<8x128xf32>
    %cst_135 = arith.constant 1.000000e+00 : f32
    %403 = vector.broadcast %cst_135 : f32 to vector<8x128xf32>
    %404 = arith.addf %403, %402 : vector<8x128xf32>
    %405 = arith.divf %403, %404 : vector<8x128xf32>
    %406 = vector.extract_strided_slice %393 {offsets = [0, 256], sizes = [8, 128], strides = [1, 1]} : vector<8x512xf32> to vector<8x128xf32>
    %407 = math.tanh %406 : vector<8x128xf32>
    %408 = vector.extract_strided_slice %393 {offsets = [0, 384], sizes = [8, 128], strides = [1, 1]} : vector<8x512xf32> to vector<8x128xf32>
    %409 = arith.negf %408 : vector<8x128xf32>
    %410 = math.exp %409 : vector<8x128xf32>
    %cst_136 = arith.constant 1.000000e+00 : f32
    %411 = vector.broadcast %cst_136 : f32 to vector<8x128xf32>
    %412 = arith.addf %411, %410 : vector<8x128xf32>
    %413 = arith.divf %411, %412 : vector<8x128xf32>
    %414 = arith.mulf %405, %342 : vector<8x128xf32>
    %415 = arith.mulf %399, %407 : vector<8x128xf32>
    %416 = arith.addf %414, %415 : vector<8x128xf32>
    %417 = math.tanh %416 : vector<8x128xf32>
    %418 = arith.mulf %413, %417 : vector<8x128xf32>
    %c6_i32 = arith.constant 6 : i32
    %c0_137 = arith.constant 0 : index
    %c0_138 = arith.constant 0 : index
    %419 = vector.load %arg6[%c0_137, %c0_138] : memref<128x512xbf16, #tpu.memory_space<vmem>>, vector<128x512xbf16>
    %420 = arith.truncf %418 : vector<8x128xf32> to vector<8x128xbf16>
    %cst_139 = arith.constant dense<0.000000e+00> : vector<8x512xf32>
    %421 = tpu.matmul %420, %419, %cst_139 {dimension_numbers = #tpu.dot_dimension_numbers<[1], [0], [0], [1], [0, 0, 1, 1], [], []>} : vector<8x128xbf16>, vector<128x512xbf16>, vector<8x512xf32> -> vector<8x512xf32>
    %c0_140 = arith.constant 0 : index
    %c0_141 = arith.constant 0 : index
    %422 = vector.load %arg8[%c0_140, %c0_141] : memref<1x512xf32, #tpu.memory_space<vmem>>, vector<1x512xf32>
    %423 = vector.broadcast %422 : vector<1x512xf32> to vector<8x512xf32>
    %424 = arith.addf %421, %423 : vector<8x512xf32>
    %c0_142 = arith.constant 0 : index
    %c0_143 = arith.constant 0 : index
    %425 = vector.load %arg7[%c0_142, %c0_143] : memref<128x512xbf16, #tpu.memory_space<vmem>>, vector<128x512xbf16>
    %426 = arith.truncf %379 : vector<8x128xf32> to vector<8x128xbf16>
    %cst_144 = arith.constant dense<0.000000e+00> : vector<8x512xf32>
    %427 = tpu.matmul %426, %425, %cst_144 {dimension_numbers = #tpu.dot_dimension_numbers<[1], [0], [0], [1], [0, 0, 1, 1], [], []>} : vector<8x128xbf16>, vector<128x512xbf16>, vector<8x512xf32> -> vector<8x512xf32>
    %428 = arith.addf %424, %427 : vector<8x512xf32>
    %429 = vector.extract_strided_slice %428 {offsets = [0, 0], sizes = [8, 128], strides = [1, 1]} : vector<8x512xf32> to vector<8x128xf32>
    %430 = arith.negf %429 : vector<8x128xf32>
    %431 = math.exp %430 : vector<8x128xf32>
    %cst_145 = arith.constant 1.000000e+00 : f32
    %432 = vector.broadcast %cst_145 : f32 to vector<8x128xf32>
    %433 = arith.addf %432, %431 : vector<8x128xf32>
    %434 = arith.divf %432, %433 : vector<8x128xf32>
    %435 = vector.extract_strided_slice %428 {offsets = [0, 128], sizes = [8, 128], strides = [1, 1]} : vector<8x512xf32> to vector<8x128xf32>
    %436 = arith.negf %435 : vector<8x128xf32>
    %437 = math.exp %436 : vector<8x128xf32>
    %cst_146 = arith.constant 1.000000e+00 : f32
    %438 = vector.broadcast %cst_146 : f32 to vector<8x128xf32>
    %439 = arith.addf %438, %437 : vector<8x128xf32>
    %440 = arith.divf %438, %439 : vector<8x128xf32>
    %441 = vector.extract_strided_slice %428 {offsets = [0, 256], sizes = [8, 128], strides = [1, 1]} : vector<8x512xf32> to vector<8x128xf32>
    %442 = math.tanh %441 : vector<8x128xf32>
    %443 = vector.extract_strided_slice %428 {offsets = [0, 384], sizes = [8, 128], strides = [1, 1]} : vector<8x512xf32> to vector<8x128xf32>
    %444 = arith.negf %443 : vector<8x128xf32>
    %445 = math.exp %444 : vector<8x128xf32>
    %cst_147 = arith.constant 1.000000e+00 : f32
    %446 = vector.broadcast %cst_147 : f32 to vector<8x128xf32>
    %447 = arith.addf %446, %445 : vector<8x128xf32>
    %448 = arith.divf %446, %447 : vector<8x128xf32>
    %449 = arith.mulf %440, %377 : vector<8x128xf32>
    %450 = arith.mulf %434, %442 : vector<8x128xf32>
    %451 = arith.addf %449, %450 : vector<8x128xf32>
    %452 = math.tanh %451 : vector<8x128xf32>
    %453 = arith.mulf %448, %452 : vector<8x128xf32>
    %454 = arith.truncf %453 : vector<8x128xf32> to vector<8x128xbf16>
    %c1_i32_148 = arith.constant 1 : i32
    %455 = arith.subi %c6_i32, %c1_i32_148 : i32
    %456 = arith.index_cast %455 : i32 to index
    %c0_149 = arith.constant 0 : index
    %c0_150 = arith.constant 0 : index
    %457 = vector.load %arg18[%456, %c0_149, %c0_150] : memref<8x8x128xbf16, #tpu.memory_space<vmem>>, vector<1x8x128xbf16>
    %458 = vector.shape_cast %457 : vector<1x8x128xbf16> to vector<8x128xbf16>
    %459 = vector.shape_cast %454 : vector<8x128xbf16> to vector<1x8x128xbf16>
    tpu.vector_store %arg18[%456, %c0_149, %c0_150], %459 {strides = array<i32>} : memref<8x8x128xbf16, #tpu.memory_space<vmem>>, vector<1x8x128xbf16>,
    %460 = arith.index_cast %c6_i32 : i32 to index
    %c0_151 = arith.constant 0 : index
    %c0_152 = arith.constant 0 : index
    %461 = vector.load %arg19[%460, %c0_151, %c0_152] : memref<8x8x512xbf16, #tpu.memory_space<vmem>>, vector<1x8x512xbf16>
    %462 = vector.shape_cast %461 : vector<1x8x512xbf16> to vector<8x512xbf16>
    %463 = arith.extf %462 : vector<8x512xbf16> to vector<8x512xf32>
    %c0_153 = arith.constant 0 : index
    %c0_154 = arith.constant 0 : index
    %464 = vector.load %arg4[%c0_153, %c0_154] : memref<128x512xbf16, #tpu.memory_space<vmem>>, vector<128x512xbf16>
    %465 = arith.truncf %418 : vector<8x128xf32> to vector<8x128xbf16>
    %cst_155 = arith.constant dense<0.000000e+00> : vector<8x512xf32>
    %466 = tpu.matmul %465, %464, %cst_155 {dimension_numbers = #tpu.dot_dimension_numbers<[1], [0], [0], [1], [0, 0, 1, 1], [], []>} : vector<8x128xbf16>, vector<128x512xbf16>, vector<8x512xf32> -> vector<8x512xf32>
    %467 = arith.addf %463, %466 : vector<8x512xf32>
    %468 = vector.extract_strided_slice %467 {offsets = [0, 0], sizes = [8, 128], strides = [1, 1]} : vector<8x512xf32> to vector<8x128xf32>
    %469 = arith.negf %468 : vector<8x128xf32>
    %470 = math.exp %469 : vector<8x128xf32>
    %cst_156 = arith.constant 1.000000e+00 : f32
    %471 = vector.broadcast %cst_156 : f32 to vector<8x128xf32>
    %472 = arith.addf %471, %470 : vector<8x128xf32>
    %473 = arith.divf %471, %472 : vector<8x128xf32>
    %474 = vector.extract_strided_slice %467 {offsets = [0, 128], sizes = [8, 128], strides = [1, 1]} : vector<8x512xf32> to vector<8x128xf32>
    %475 = arith.negf %474 : vector<8x128xf32>
    %476 = math.exp %475 : vector<8x128xf32>
    %cst_157 = arith.constant 1.000000e+00 : f32
    %477 = vector.broadcast %cst_157 : f32 to vector<8x128xf32>
    %478 = arith.addf %477, %476 : vector<8x128xf32>
    %479 = arith.divf %477, %478 : vector<8x128xf32>
    %480 = vector.extract_strided_slice %467 {offsets = [0, 256], sizes = [8, 128], strides = [1, 1]} : vector<8x512xf32> to vector<8x128xf32>
    %481 = math.tanh %480 : vector<8x128xf32>
    %482 = vector.extract_strided_slice %467 {offsets = [0, 384], sizes = [8, 128], strides = [1, 1]} : vector<8x512xf32> to vector<8x128xf32>
    %483 = arith.negf %482 : vector<8x128xf32>
    %484 = math.exp %483 : vector<8x128xf32>
    %cst_158 = arith.constant 1.000000e+00 : f32
    %485 = vector.broadcast %cst_158 : f32 to vector<8x128xf32>
    %486 = arith.addf %485, %484 : vector<8x128xf32>
    %487 = arith.divf %485, %486 : vector<8x128xf32>
    %488 = arith.mulf %479, %416 : vector<8x128xf32>
    %489 = arith.mulf %473, %481 : vector<8x128xf32>
    %490 = arith.addf %488, %489 : vector<8x128xf32>
    %491 = math.tanh %490 : vector<8x128xf32>
    %492 = arith.mulf %487, %491 : vector<8x128xf32>
    %c7_i32 = arith.constant 7 : i32
    %c0_159 = arith.constant 0 : index
    %c0_160 = arith.constant 0 : index
    %493 = vector.load %arg6[%c0_159, %c0_160] : memref<128x512xbf16, #tpu.memory_space<vmem>>, vector<128x512xbf16>
    %494 = arith.truncf %492 : vector<8x128xf32> to vector<8x128xbf16>
    %cst_161 = arith.constant dense<0.000000e+00> : vector<8x512xf32>
    %495 = tpu.matmul %494, %493, %cst_161 {dimension_numbers = #tpu.dot_dimension_numbers<[1], [0], [0], [1], [0, 0, 1, 1], [], []>} : vector<8x128xbf16>, vector<128x512xbf16>, vector<8x512xf32> -> vector<8x512xf32>
    %c0_162 = arith.constant 0 : index
    %c0_163 = arith.constant 0 : index
    %496 = vector.load %arg8[%c0_162, %c0_163] : memref<1x512xf32, #tpu.memory_space<vmem>>, vector<1x512xf32>
    %497 = vector.broadcast %496 : vector<1x512xf32> to vector<8x512xf32>
    %498 = arith.addf %495, %497 : vector<8x512xf32>
    %c0_164 = arith.constant 0 : index
    %c0_165 = arith.constant 0 : index
    %499 = vector.load %arg7[%c0_164, %c0_165] : memref<128x512xbf16, #tpu.memory_space<vmem>>, vector<128x512xbf16>
    %500 = arith.truncf %453 : vector<8x128xf32> to vector<8x128xbf16>
    %cst_166 = arith.constant dense<0.000000e+00> : vector<8x512xf32>
    %501 = tpu.matmul %500, %499, %cst_166 {dimension_numbers = #tpu.dot_dimension_numbers<[1], [0], [0], [1], [0, 0, 1, 1], [], []>} : vector<8x128xbf16>, vector<128x512xbf16>, vector<8x512xf32> -> vector<8x512xf32>
    %502 = arith.addf %498, %501 : vector<8x512xf32>
    %503 = vector.extract_strided_slice %502 {offsets = [0, 0], sizes = [8, 128], strides = [1, 1]} : vector<8x512xf32> to vector<8x128xf32>
    %504 = arith.negf %503 : vector<8x128xf32>
    %505 = math.exp %504 : vector<8x128xf32>
    %cst_167 = arith.constant 1.000000e+00 : f32
    %506 = vector.broadcast %cst_167 : f32 to vector<8x128xf32>
    %507 = arith.addf %506, %505 : vector<8x128xf32>
    %508 = arith.divf %506, %507 : vector<8x128xf32>
    %509 = vector.extract_strided_slice %502 {offsets = [0, 128], sizes = [8, 128], strides = [1, 1]} : vector<8x512xf32> to vector<8x128xf32>
    %510 = arith.negf %509 : vector<8x128xf32>
    %511 = math.exp %510 : vector<8x128xf32>
    %cst_168 = arith.constant 1.000000e+00 : f32
    %512 = vector.broadcast %cst_168 : f32 to vector<8x128xf32>
    %513 = arith.addf %512, %511 : vector<8x128xf32>
    %514 = arith.divf %512, %513 : vector<8x128xf32>
    %515 = vector.extract_strided_slice %502 {offsets = [0, 256], sizes = [8, 128], strides = [1, 1]} : vector<8x512xf32> to vector<8x128xf32>
    %516 = math.tanh %515 : vector<8x128xf32>
    %517 = vector.extract_strided_slice %502 {offsets = [0, 384], sizes = [8, 128], strides = [1, 1]} : vector<8x512xf32> to vector<8x128xf32>
    %518 = arith.negf %517 : vector<8x128xf32>
    %519 = math.exp %518 : vector<8x128xf32>
    %cst_169 = arith.constant 1.000000e+00 : f32
    %520 = vector.broadcast %cst_169 : f32 to vector<8x128xf32>
    %521 = arith.addf %520, %519 : vector<8x128xf32>
    %522 = arith.divf %520, %521 : vector<8x128xf32>
    %523 = arith.mulf %514, %451 : vector<8x128xf32>
    %524 = arith.mulf %508, %516 : vector<8x128xf32>
    %525 = arith.addf %523, %524 : vector<8x128xf32>
    %526 = math.tanh %525 : vector<8x128xf32>
    %527 = arith.mulf %522, %526 : vector<8x128xf32>
    %528 = arith.truncf %527 : vector<8x128xf32> to vector<8x128xbf16>
    %c1_i32_170 = arith.constant 1 : i32
    %529 = arith.subi %c7_i32, %c1_i32_170 : i32
    %530 = arith.index_cast %529 : i32 to index
    %c0_171 = arith.constant 0 : index
    %c0_172 = arith.constant 0 : index
    %531 = vector.load %arg18[%530, %c0_171, %c0_172] : memref<8x8x128xbf16, #tpu.memory_space<vmem>>, vector<1x8x128xbf16>
    %532 = vector.shape_cast %531 : vector<1x8x128xbf16> to vector<8x128xbf16>
    %533 = vector.shape_cast %528 : vector<8x128xbf16> to vector<1x8x128xbf16>
    tpu.vector_store %arg18[%530, %c0_171, %c0_172], %533 {strides = array<i32>} : memref<8x8x128xbf16, #tpu.memory_space<vmem>>, vector<1x8x128xbf16>,
    %534 = arith.index_cast %c7_i32 : i32 to index
    %c0_173 = arith.constant 0 : index
    %c0_174 = arith.constant 0 : index
    %535 = vector.load %arg19[%534, %c0_173, %c0_174] : memref<8x8x512xbf16, #tpu.memory_space<vmem>>, vector<1x8x512xbf16>
    %536 = vector.shape_cast %535 : vector<1x8x512xbf16> to vector<8x512xbf16>
    %537 = arith.extf %536 : vector<8x512xbf16> to vector<8x512xf32>
    %c0_175 = arith.constant 0 : index
    %c0_176 = arith.constant 0 : index
    %538 = vector.load %arg4[%c0_175, %c0_176] : memref<128x512xbf16, #tpu.memory_space<vmem>>, vector<128x512xbf16>
    %539 = arith.truncf %492 : vector<8x128xf32> to vector<8x128xbf16>
    %cst_177 = arith.constant dense<0.000000e+00> : vector<8x512xf32>
    %540 = tpu.matmul %539, %538, %cst_177 {dimension_numbers = #tpu.dot_dimension_numbers<[1], [0], [0], [1], [0, 0, 1, 1], [], []>} : vector<8x128xbf16>, vector<128x512xbf16>, vector<8x512xf32> -> vector<8x512xf32>
    %541 = arith.addf %537, %540 : vector<8x512xf32>
    %542 = vector.extract_strided_slice %541 {offsets = [0, 0], sizes = [8, 128], strides = [1, 1]} : vector<8x512xf32> to vector<8x128xf32>
    %543 = arith.negf %542 : vector<8x128xf32>
    %544 = math.exp %543 : vector<8x128xf32>
    %cst_178 = arith.constant 1.000000e+00 : f32
    %545 = vector.broadcast %cst_178 : f32 to vector<8x128xf32>
    %546 = arith.addf %545, %544 : vector<8x128xf32>
    %547 = arith.divf %545, %546 : vector<8x128xf32>
    %548 = vector.extract_strided_slice %541 {offsets = [0, 128], sizes = [8, 128], strides = [1, 1]} : vector<8x512xf32> to vector<8x128xf32>
    %549 = arith.negf %548 : vector<8x128xf32>
    %550 = math.exp %549 : vector<8x128xf32>
    %cst_179 = arith.constant 1.000000e+00 : f32
    %551 = vector.broadcast %cst_179 : f32 to vector<8x128xf32>
    %552 = arith.addf %551, %550 : vector<8x128xf32>
    %553 = arith.divf %551, %552 : vector<8x128xf32>
    %554 = vector.extract_strided_slice %541 {offsets = [0, 256], sizes = [8, 128], strides = [1, 1]} : vector<8x512xf32> to vector<8x128xf32>
    %555 = math.tanh %554 : vector<8x128xf32>
    %556 = vector.extract_strided_slice %541 {offsets = [0, 384], sizes = [8, 128], strides = [1, 1]} : vector<8x512xf32> to vector<8x128xf32>
    %557 = arith.negf %556 : vector<8x128xf32>
    %558 = math.exp %557 : vector<8x128xf32>
    %cst_180 = arith.constant 1.000000e+00 : f32
    %559 = vector.broadcast %cst_180 : f32 to vector<8x128xf32>
    %560 = arith.addf %559, %558 : vector<8x128xf32>
    %561 = arith.divf %559, %560 : vector<8x128xf32>
    %562 = arith.mulf %553, %490 : vector<8x128xf32>
    %563 = arith.mulf %547, %555 : vector<8x128xf32>
    %564 = arith.addf %562, %563 : vector<8x128xf32>
    %565 = math.tanh %564 : vector<8x128xf32>
    %566 = arith.mulf %561, %565 : vector<8x128xf32>
    %c7_i32_181 = arith.constant 7 : i32
    %c0_182 = arith.constant 0 : index
    %c0_183 = arith.constant 0 : index
    %567 = vector.load %arg6[%c0_182, %c0_183] : memref<128x512xbf16, #tpu.memory_space<vmem>>, vector<128x512xbf16>
    %568 = arith.truncf %566 : vector<8x128xf32> to vector<8x128xbf16>
    %cst_184 = arith.constant dense<0.000000e+00> : vector<8x512xf32>
    %569 = tpu.matmul %568, %567, %cst_184 {dimension_numbers = #tpu.dot_dimension_numbers<[1], [0], [0], [1], [0, 0, 1, 1], [], []>} : vector<8x128xbf16>, vector<128x512xbf16>, vector<8x512xf32> -> vector<8x512xf32>
    %c0_185 = arith.constant 0 : index
    %c0_186 = arith.constant 0 : index
    %570 = vector.load %arg8[%c0_185, %c0_186] : memref<1x512xf32, #tpu.memory_space<vmem>>, vector<1x512xf32>
    %571 = vector.broadcast %570 : vector<1x512xf32> to vector<8x512xf32>
    %572 = arith.addf %569, %571 : vector<8x512xf32>
    %c0_187 = arith.constant 0 : index
    %c0_188 = arith.constant 0 : index
    %573 = vector.load %arg7[%c0_187, %c0_188] : memref<128x512xbf16, #tpu.memory_space<vmem>>, vector<128x512xbf16>
    %574 = arith.truncf %527 : vector<8x128xf32> to vector<8x128xbf16>
    %cst_189 = arith.constant dense<0.000000e+00> : vector<8x512xf32>
    %575 = tpu.matmul %574, %573, %cst_189 {dimension_numbers = #tpu.dot_dimension_numbers<[1], [0], [0], [1], [0, 0, 1, 1], [], []>} : vector<8x128xbf16>, vector<128x512xbf16>, vector<8x512xf32> -> vector<8x512xf32>
    %576 = arith.addf %572, %575 : vector<8x512xf32>
    %577 = vector.extract_strided_slice %576 {offsets = [0, 0], sizes = [8, 128], strides = [1, 1]} : vector<8x512xf32> to vector<8x128xf32>
    %578 = arith.negf %577 : vector<8x128xf32>
    %579 = math.exp %578 : vector<8x128xf32>
    %cst_190 = arith.constant 1.000000e+00 : f32
    %580 = vector.broadcast %cst_190 : f32 to vector<8x128xf32>
    %581 = arith.addf %580, %579 : vector<8x128xf32>
    %582 = arith.divf %580, %581 : vector<8x128xf32>
    %583 = vector.extract_strided_slice %576 {offsets = [0, 128], sizes = [8, 128], strides = [1, 1]} : vector<8x512xf32> to vector<8x128xf32>
    %584 = arith.negf %583 : vector<8x128xf32>
    %585 = math.exp %584 : vector<8x128xf32>
    %cst_191 = arith.constant 1.000000e+00 : f32
    %586 = vector.broadcast %cst_191 : f32 to vector<8x128xf32>
    %587 = arith.addf %586, %585 : vector<8x128xf32>
    %588 = arith.divf %586, %587 : vector<8x128xf32>
    %589 = vector.extract_strided_slice %576 {offsets = [0, 256], sizes = [8, 128], strides = [1, 1]} : vector<8x512xf32> to vector<8x128xf32>
    %590 = math.tanh %589 : vector<8x128xf32>
    %591 = vector.extract_strided_slice %576 {offsets = [0, 384], sizes = [8, 128], strides = [1, 1]} : vector<8x512xf32> to vector<8x128xf32>
    %592 = arith.negf %591 : vector<8x128xf32>
    %593 = math.exp %592 : vector<8x128xf32>
    %cst_192 = arith.constant 1.000000e+00 : f32
    %594 = vector.broadcast %cst_192 : f32 to vector<8x128xf32>
    %595 = arith.addf %594, %593 : vector<8x128xf32>
    %596 = arith.divf %594, %595 : vector<8x128xf32>
    %597 = arith.mulf %588, %525 : vector<8x128xf32>
    %598 = arith.mulf %582, %590 : vector<8x128xf32>
    %599 = arith.addf %597, %598 : vector<8x128xf32>
    %600 = math.tanh %599 : vector<8x128xf32>
    %601 = arith.mulf %596, %600 : vector<8x128xf32>
    %602 = arith.truncf %601 : vector<8x128xf32> to vector<8x128xbf16>
    %c7 = arith.constant 7 : index
    %c0_193 = arith.constant 0 : index
    %c0_194 = arith.constant 0 : index
    %603 = vector.load %arg18[%c7, %c0_193, %c0_194] : memref<8x8x128xbf16, #tpu.memory_space<vmem>>, vector<1x8x128xbf16>
    %604 = vector.shape_cast %603 : vector<1x8x128xbf16> to vector<8x128xbf16>
    %605 = vector.shape_cast %602 : vector<8x128xbf16> to vector<1x8x128xbf16>
    tpu.vector_store %arg18[%c7, %c0_193, %c0_194], %605 {strides = array<i32>} : memref<8x8x128xbf16, #tpu.memory_space<vmem>>, vector<1x8x128xbf16>,
    %c0_195 = arith.constant 0 : index
    %c0_196 = arith.constant 0 : index
    %606 = vector.load %arg14[%c0_195, %c0_196] : memref<8x128xf32, #tpu.memory_space<vmem>>, vector<8x128xf32>
    tpu.vector_store %arg14[%c0_195, %c0_196], %566 {strides = array<i32>} : memref<8x128xf32, #tpu.memory_space<vmem>>, vector<8x128xf32>,
    %c0_197 = arith.constant 0 : index
    %c0_198 = arith.constant 0 : index
    %607 = vector.load %arg15[%c0_197, %c0_198] : memref<8x128xf32, #tpu.memory_space<vmem>>, vector<8x128xf32>
    tpu.vector_store %arg15[%c0_197, %c0_198], %564 {strides = array<i32>} : memref<8x128xf32, #tpu.memory_space<vmem>>, vector<8x128xf32>,
    %c0_199 = arith.constant 0 : index
    %c0_200 = arith.constant 0 : index
    %608 = vector.load %arg16[%c0_199, %c0_200] : memref<8x128xf32, #tpu.memory_space<vmem>>, vector<8x128xf32>
    tpu.vector_store %arg16[%c0_199, %c0_200], %601 {strides = array<i32>} : memref<8x128xf32, #tpu.memory_space<vmem>>, vector<8x128xf32>,
    %c0_201 = arith.constant 0 : index
    %c0_202 = arith.constant 0 : index
    %609 = vector.load %arg17[%c0_201, %c0_202] : memref<8x128xf32, #tpu.memory_space<vmem>>, vector<8x128xf32>
    tpu.vector_store %arg17[%c0_201, %c0_202], %599 {strides = array<i32>} : memref<8x128xf32, #tpu.memory_space<vmem>>, vector<8x128xf32>,
    %c0_203 = arith.constant 0 : index
    %c0_204 = arith.constant 0 : index
    %c0_205 = arith.constant 0 : index
    %610 = vector.load %arg18[%c0_203, %c0_204, %c0_205] : memref<8x8x128xbf16, #tpu.memory_space<vmem>>, vector<8x8x128xbf16>
    %611 = vector.shape_cast %610 : vector<8x8x128xbf16> to vector<64x128xbf16>
    %c0_206 = arith.constant 0 : index
    %c0_207 = arith.constant 0 : index
    %612 = vector.load %arg9[%c0_206, %c0_207] : memref<128x128xbf16, #tpu.memory_space<vmem>>, vector<128x128xbf16>
    %cst_208 = arith.constant dense<0.000000e+00> : vector<64x128xf32>
    %613 = tpu.matmul %611, %612, %cst_208 {dimension_numbers = #tpu.dot_dimension_numbers<[1], [0], [0], [1], [0, 0, 1, 1], [], []>} : vector<64x128xbf16>, vector<128x128xbf16>, vector<64x128xf32> -> vector<64x128xf32>
    %c0_209 = arith.constant 0 : index
    %c0_210 = arith.constant 0 : index
    %614 = vector.load %arg10[%c0_209, %c0_210] : memref<1x128xf32, #tpu.memory_space<vmem>>, vector<1x128xf32>
    %615 = vector.broadcast %614 : vector<1x128xf32> to vector<64x128xf32>
    %616 = arith.addf %613, %615 : vector<64x128xf32>
    %617 = math.tanh %616 : vector<64x128xf32>
    %c0_211 = arith.constant 0 : index
    %c0_212 = arith.constant 0 : index
    %618 = vector.load %arg11[%c0_211, %c0_212] : memref<128x128xbf16, #tpu.memory_space<vmem>>, vector<128x128xbf16>
    %619 = arith.truncf %617 : vector<64x128xf32> to vector<64x128xbf16>
    %cst_213 = arith.constant dense<0.000000e+00> : vector<64x128xf32>
    %620 = tpu.matmul %619, %618, %cst_213 {dimension_numbers = #tpu.dot_dimension_numbers<[1], [0], [0], [1], [0, 0, 1, 1], [], []>} : vector<64x128xbf16>, vector<128x128xbf16>, vector<64x128xf32> -> vector<64x128xf32>
    %c0_214 = arith.constant 0 : index
    %c0_215 = arith.constant 0 : index
    %621 = vector.load %arg12[%c0_214, %c0_215] : memref<1x128xf32, #tpu.memory_space<vmem>>, vector<1x128xf32>
    %622 = vector.broadcast %621 : vector<1x128xf32> to vector<64x128xf32>
    %623 = arith.addf %620, %622 : vector<64x128xf32>
    %624 = vector.shape_cast %623 : vector<64x128xf32> to vector<8x8x128xf32>
    %c0_216 = arith.constant 0 : index
    %c0_217 = arith.constant 0 : index
    %c0_218 = arith.constant 0 : index
    %625 = vector.load %arg13[%c0_216, %c0_217, %c0_218] : memref<8x8x128xf32, #tpu.memory_space<vmem>>, vector<8x8x128xf32>
    tpu.vector_store %arg13[%c0_216, %c0_217, %c0_218], %624 {strides = array<i32>} : memref<8x8x128xf32, #tpu.memory_space<vmem>>, vector<8x8x128xf32>,
    return
  }
  func.func @transform_0(%arg0: i32, %arg1: i32) -> (i32, i32, i32) {
    %c0_i32 = arith.constant 0 : i32
    %c0_i32_0 = arith.constant 0 : i32
    return %arg1, %arg0, %c0_i32 : i32, i32, i32
  }
  func.func @transform_1(%arg0: i32, %arg1: i32) -> (i32, i32) {
    %c0_i32 = arith.constant 0 : i32
    %c0_i32_0 = arith.constant 0 : i32
    %c0_i32_1 = arith.constant 0 : i32
    return %c0_i32, %c0_i32_0 : i32, i32
  }
  func.func @transform_2(%arg0: i32, %arg1: i32) -> (i32, i32) {
    %c0_i32 = arith.constant 0 : i32
    %c0_i32_0 = arith.constant 0 : i32
    %c0_i32_1 = arith.constant 0 : i32
    return %c0_i32, %c0_i32_0 : i32, i32
  }
  func.func @transform_3(%arg0: i32, %arg1: i32) -> (i32, i32) {
    %c0_i32 = arith.constant 0 : i32
    %c0_i32_0 = arith.constant 0 : i32
    %c0_i32_1 = arith.constant 0 : i32
    return %c0_i32, %c0_i32_0 : i32, i32
  }
  func.func @transform_4(%arg0: i32, %arg1: i32) -> (i32, i32) {
    %c0_i32 = arith.constant 0 : i32
    %c0_i32_0 = arith.constant 0 : i32
    %c0_i32_1 = arith.constant 0 : i32
    return %c0_i32, %c0_i32_0 : i32, i32
  }
  func.func @transform_5(%arg0: i32, %arg1: i32) -> (i32, i32) {
    %c0_i32 = arith.constant 0 : i32
    %c0_i32_0 = arith.constant 0 : i32
    %c0_i32_1 = arith.constant 0 : i32
    return %c0_i32, %c0_i32_0 : i32, i32
  }
  func.func @transform_6(%arg0: i32, %arg1: i32) -> (i32, i32) {
    %c0_i32 = arith.constant 0 : i32
    %c0_i32_0 = arith.constant 0 : i32
    %c0_i32_1 = arith.constant 0 : i32
    return %c0_i32, %c0_i32_0 : i32, i32
  }
  func.func @transform_7(%arg0: i32, %arg1: i32) -> (i32, i32) {
    %c0_i32 = arith.constant 0 : i32
    %c0_i32_0 = arith.constant 0 : i32
    %c0_i32_1 = arith.constant 0 : i32
    return %c0_i32, %c0_i32_0 : i32, i32
  }
  func.func @transform_8(%arg0: i32, %arg1: i32) -> (i32, i32) {
    %c0_i32 = arith.constant 0 : i32
    %c0_i32_0 = arith.constant 0 : i32
    %c0_i32_1 = arith.constant 0 : i32
    return %c0_i32, %c0_i32_0 : i32, i32
  }
  func.func @transform_9(%arg0: i32, %arg1: i32) -> (i32, i32) {
    %c0_i32 = arith.constant 0 : i32
    %c0_i32_0 = arith.constant 0 : i32
    %c0_i32_1 = arith.constant 0 : i32
    return %c0_i32, %c0_i32_0 : i32, i32
  }
  func.func @transform_10(%arg0: i32, %arg1: i32) -> (i32, i32) {
    %c0_i32 = arith.constant 0 : i32
    %c0_i32_0 = arith.constant 0 : i32
    %c0_i32_1 = arith.constant 0 : i32
    return %c0_i32, %c0_i32_0 : i32, i32
  }
  func.func @transform_11(%arg0: i32, %arg1: i32) -> (i32, i32, i32) {
    %c0_i32 = arith.constant 0 : i32
    %c0_i32_0 = arith.constant 0 : i32
    return %arg1, %arg0, %c0_i32 : i32, i32, i32
  }
}

</mosaic_0001>

<llo_original>
// kernel: lstm_module_forward.1
$region0: #{lstm_module_forward.1}
  #allocation0 [shape = 'u32[]', space=smem, size = 0x4, offset = 0x4, fixed_abs, tag = 'smem constant byte address 0x4 - core index']
  #allocation1 [shape = 'u32[144,128]{1,0:T(1,128)}', space=vmem, size = 0x12000, scoped, tag = 'internal scratch']
  #allocation2 [shape = 'f32[8,128]{1,0:T(8,128)}', space=vmem, size = 0x1000, scoped, tag = 'scratch operand']
  #allocation3 [shape = 'f32[8,128]{1,0:T(8,128)}', space=vmem, size = 0x1000, scoped, tag = 'scratch operand']
  #allocation4 [shape = 'f32[8,128]{1,0:T(8,128)}', space=vmem, size = 0x1000, scoped, tag = 'scratch operand']
  #allocation5 [shape = 'f32[8,128]{1,0:T(8,128)}', space=vmem, size = 0x1000, scoped, tag = 'scratch operand']
  #allocation6 [shape = 'bf16[8,8,128]{2,1,0:T(8,128)(2,1)}', space=vmem, size = 0x4000, scoped, tag = 'scratch operand']
  #allocation7 [shape = 'bf16[8,8,512]{2,1,0:T(8,128)(2,1)}', space=vmem, size = 0x10000, scoped, tag = 'scratch operand']
  %s0 = inlined_call_operand.vmem [shape: bf16[8,8,16], index: 0, kind: input, shape index: {}]
  %s1 = inlined_call_operand.vmem [shape: bf16[16,512], index: 1, kind: input, shape index: {}]
  %s2 = inlined_call_operand.hbm [shape: bf16[128,512], index: 2, kind: input, shape index: {}]
  %s3 = inlined_call_operand.vmem [shape: f32[1,512], index: 3, kind: input, shape index: {}]
  %s4 = inlined_call_operand.hbm [shape: bf16[128,512], index: 4, kind: input, shape index: {}]
  %s5 = inlined_call_operand.hbm [shape: bf16[128,512], index: 5, kind: input, shape index: {}]
  %s6 = inlined_call_operand.vmem [shape: f32[1,512], index: 6, kind: input, shape index: {}]
  %s7 = inlined_call_operand.hbm [shape: bf16[128,128], index: 7, kind: input, shape index: {}]
  %s8 = inlined_call_operand.vmem [shape: f32[1,128], index: 8, kind: input, shape index: {}]
  %s9 = inlined_call_operand.vmem [shape: bf16[128,128], index: 9, kind: input, shape index: {}]
  %s10 = inlined_call_operand.vmem [shape: f32[1,128], index: 10, kind: input, shape index: {}]
  %s11 = inlined_call_operand.vmem [shape: f32[8,8,128], index: 11, kind: output, shape index: {}]
  %s12 = sld [smem:[#allocation0]]
  $region74: #{lstm_module_forward.1} parent=0
    _
  %s14 = ssub.s32 1, %s12
  %s15 = scalar_select 0, %s14, %s12
  $region1: #{lstm_module_forward.1} parent=0
    #allocation8 [shape = 'u8[131072]{0}', space=vmem, size = 0x20000, scoped, tag = 'input window, operand 2, single buffered']
    #allocation9 [shape = 's32[1]{0}', space=sflag, size = 0x4, scoped, tag = 'scoped memory for lstm_module_forward.1']
    #allocation10 [shape = 'u8[131072]{0}', space=vmem, size = 0x20000, scoped, tag = 'input window, operand 4, single buffered']
    #allocation11 [shape = 's32[1]{0}', space=sflag, size = 0x4, scoped, tag = 'scoped memory for lstm_module_forward.1']
    #allocation12 [shape = 'u8[131072]{0}', space=vmem, size = 0x20000, scoped, tag = 'input window, operand 5, single buffered']
    #allocation13 [shape = 'u8[32768]{0}', space=vmem, size = 0x8000, scoped, tag = 'input window, operand 7, single buffered']
    #allocation14 [shape = 's32[1]{0}', space=sflag, size = 0x4, scoped, tag = 'scoped memory for lstm_module_forward.1']
    %16 = vsyncpa [#allocation9], 0
    %17 = vsyncpa [#allocation11], 0
    %18 = vsyncpa [#allocation14], 0
    // Predicated region
    $region2: #{lstm_module_forward.1} parent=1 // pred_check
      _
    $region3: #{lstm_module_forward.1} parent=1 // pred_check_branch
      %20 = sbr.rel (0) target = $region5
    $region4: #{lstm_module_forward.1} parent=1 // pred_region
      _
    $region5: #{lstm_module_forward.1} parent=1 // pred_fallthru
      _
    // Predicated region
    $region6: #{lstm_module_forward.1} parent=1 // pred_check
      _
    $region7: #{lstm_module_forward.1} parent=1 // pred_check_branch
      %22 = sbr.rel (0) target = $region9
    $region8: #{lstm_module_forward.1} parent=1 // pred_region
      _
    $region9: #{lstm_module_forward.1} parent=1 // pred_fallthru
      _
    // Predicated region
    $region10: #{lstm_module_forward.1} parent=1 // pred_check
      _
    $region11: #{lstm_module_forward.1} parent=1 // pred_check_branch
      %24 = sbr.rel (0) target = $region13
    $region12: #{lstm_module_forward.1} parent=1 // pred_region
      %s26 = ssub.s32 4096, 4096
      %27 = vsyncadd [#allocation9], %s26
      %s28 = sshll.u32 [#allocation8], 4
      %s29 = int_to_ptr.vmem [resolvable:$true] %s28
      %34 = dma.hbm_to_vmem [thread:$0]  %s2, 4096, %s29, [#allocation9], 256, 256, 16
    $region13: #{lstm_module_forward.1} parent=1 // pred_fallthru
      _
    // Predicated region
    $region14: #{lstm_module_forward.1} parent=1 // pred_check
      _
    $region15: #{lstm_module_forward.1} parent=1 // pred_check_branch
      %36 = sbr.rel (0) target = $region17
    $region16: #{lstm_module_forward.1} parent=1 // pred_region
      _
    $region17: #{lstm_module_forward.1} parent=1 // pred_fallthru
      _
    // Predicated region
    $region18: #{lstm_module_forward.1} parent=1 // pred_check
      _
    $region19: #{lstm_module_forward.1} parent=1 // pred_check_branch
      %38 = sbr.rel (0) target = $region21
    $region20: #{lstm_module_forward.1} parent=1 // pred_region
      %s40 = ssub.s32 4096, 4096
      %41 = vsyncadd [#allocation11], %s40
      %s42 = sshll.u32 [#allocation10], 4
      %s43 = int_to_ptr.vmem [resolvable:$true] %s42
      %48 = dma.hbm_to_vmem [thread:$0]  %s4, 4096, %s43, [#allocation11], 256, 256, 16
    $region21: #{lstm_module_forward.1} parent=1 // pred_fallthru
      _
    // Predicated region
    $region22: #{lstm_module_forward.1} parent=1 // pred_check
      _
    $region23: #{lstm_module_forward.1} parent=1 // pred_check_branch
      %50 = sbr.rel (0) target = $region25
    $region24: #{lstm_module_forward.1} parent=1 // pred_region
      %s52 = ssub.s32 4096, 4096
      %53 = vsyncadd [#allocation11], %s52
      %s54 = sshll.u32 [#allocation12], 4
      %s55 = int_to_ptr.vmem [resolvable:$true] %s54
      %60 = dma.hbm_to_vmem [thread:$0]  %s5, 4096, %s55, [#allocation11], 256, 256, 16
    $region25: #{lstm_module_forward.1} parent=1 // pred_fallthru
      _
    // Predicated region
    $region26: #{lstm_module_forward.1} parent=1 // pred_check
      _
    $region27: #{lstm_module_forward.1} parent=1 // pred_check_branch
      %62 = sbr.rel (0) target = $region29
    $region28: #{lstm_module_forward.1} parent=1 // pred_region
      _
    $region29: #{lstm_module_forward.1} parent=1 // pred_fallthru
      _
    // Predicated region
    $region30: #{lstm_module_forward.1} parent=1 // pred_check
      _
    $region31: #{lstm_module_forward.1} parent=1 // pred_check_branch
      %64 = sbr.rel (0) target = $region33
    $region32: #{lstm_module_forward.1} parent=1 // pred_region
      %s66 = ssub.s32 1024, 1024
      %67 = vsyncadd [#allocation14], %s66
      %s68 = sshll.u32 [#allocation13], 4
      %s69 = int_to_ptr.vmem [resolvable:$true] %s68
      %74 = dma.hbm_to_vmem [thread:$0]  %s7, 1024, %s69, [#allocation14], 64, 64, 4
    $region33: #{lstm_module_forward.1} parent=1 // pred_fallthru
      _
    // Predicated region
    $region34: #{lstm_module_forward.1} parent=1 // pred_check
      _
    $region35: #{lstm_module_forward.1} parent=1 // pred_check_branch
      %76 = sbr.rel (0) target = $region37
    $region36: #{lstm_module_forward.1} parent=1 // pred_region
      _
    $region37: #{lstm_module_forward.1} parent=1 // pred_fallthru
      _
    // Predicated region
    $region38: #{lstm_module_forward.1} parent=1 // pred_check
      _
    $region39: #{lstm_module_forward.1} parent=1 // pred_check_branch
      %78 = sbr.rel (0) target = $region41
    $region40: #{lstm_module_forward.1} parent=1 // pred_region
      _
    $region41: #{lstm_module_forward.1} parent=1 // pred_fallthru
      _
    // Predicated region
    $region42: #{lstm_module_forward.1} parent=1 // pred_check
      _
    $region43: #{lstm_module_forward.1} parent=1 // pred_check_branch
      %80 = sbr.rel (0) target = $region45
    $region44: #{lstm_module_forward.1} parent=1 // pred_region
      _
    $region45: #{lstm_module_forward.1} parent=1 // pred_fallthru
      _
    // Predicated region
    $region46: #{lstm_module_forward.1} parent=1 // pred_check
      _
    $region47: #{lstm_module_forward.1} parent=1 // pred_check_branch
      %82 = sbr.rel (0) target = $region49
    $region48: #{lstm_module_forward.1} parent=1 // pred_region
      %83 = dma.done [#allocation9], 4096
    $region49: #{lstm_module_forward.1} parent=1 // pred_fallthru
      _
    // Predicated region
    $region50: #{lstm_module_forward.1} parent=1 // pred_check
      _
    $region51: #{lstm_module_forward.1} parent=1 // pred_check_branch
      %85 = sbr.rel (0) target = $region53
    $region52: #{lstm_module_forward.1} parent=1 // pred_region
      %86 = dma.done [#allocation11], 4096
    $region53: #{lstm_module_forward.1} parent=1 // pred_fallthru
      _
    // Predicated region
    $region54: #{lstm_module_forward.1} parent=1 // pred_check
      _
    $region55: #{lstm_module_forward.1} parent=1 // pred_check_branch
      %88 = sbr.rel (0) target = $region57
    $region56: #{lstm_module_forward.1} parent=1 // pred_region
      %89 = dma.done [#allocation11], 4096
    $region57: #{lstm_module_forward.1} parent=1 // pred_fallthru
      _
    // Predicated region
    $region58: #{lstm_module_forward.1} parent=1 // pred_check
      _
    $region59: #{lstm_module_forward.1} parent=1 // pred_check_branch
      %91 = sbr.rel (0) target = $region61
    $region60: #{lstm_module_forward.1} parent=1 // pred_region
      %92 = dma.done [#allocation14], 1024
    $region61: #{lstm_module_forward.1} parent=1 // pred_fallthru
      _
    %p94 = scmp.eq.s32.totalorder 0, 0
    // Predicated region
    $region62: #{lstm_module_forward.1} parent=1 // pred_check
      %p95 = pneg %p94
    $region63: #{lstm_module_forward.1} parent=1 // pred_check_branch
      %97 = sbr.rel (%p95) target = $region65
    $region64: #{lstm_module_forward.1} parent=1 // pred_region
      %98 = vst [vmem:[#allocation2] sm:$0xff] 0.0
      %99 = vst [vmem:[#allocation3] sm:$0xff] 0.0
      %100 = vst [vmem:[#allocation4] sm:$0xff] 0.0
      %101 = vst [vmem:[#allocation5] sm:$0xff] 0.0
    $region65: #{lstm_module_forward.1} parent=1 // pred_fallthru
      _
    %v102 = vld [vmem:[%s0] sm:$0xf]
    %v103 = vld [vmem:[%s0 + $0x4] sm:$0xf]
    %v104 = vld [vmem:[%s0 + $0x8] sm:$0xf]
    %v105 = vld [vmem:[%s0 + $0xc] sm:$0xf]
    %v106 = vld [vmem:[%s0 + $0x10] sm:$0xf]
    %v107 = vld [vmem:[%s0 + $0x14] sm:$0xf]
    %v108 = vld [vmem:[%s0 + $0x18] sm:$0xf]
    %v109 = vld [vmem:[%s0 + $0x1c] sm:$0xf]
    %v110 = vld [vmem:[%s1] sm:$0xff]
    %v111 = vld [vmem:[%s1 + $0x8] sm:$0xff]
    %v112 = vld [vmem:[%s1 + $0x10] sm:$0xff]
    %v113 = vld [vmem:[%s1 + $0x18] sm:$0xff]
    %v114 = vld [vmem:[%s3] sm:$0xf]
    %v116 = vlaneseq
    %v117 = vshrl.u32 %v116, 7
    %v118 = vsub.s32 0, %v117
    %v119 = vrot.slane %v114, %v118
    %v120 = vlaneseq
    %v121 = vshrl.u32 %v120, 7
    %v122 = vsub.s32 1, %v121
    %v123 = vrot.slane %v114, %v122
    %v124 = vlaneseq
    %v125 = vshrl.u32 %v124, 7
    %v126 = vsub.s32 2, %v125
    %v127 = vrot.slane %v114, %v126
    %v128 = vlaneseq
    %v129 = vshrl.u32 %v128, 7
    %v130 = vsub.s32 3, %v129
    %v131 = vrot.slane %v114, %v130
    %v144 = vunpack.c.l.b16 %v102
    %v145 = vunpack.c.l.b16 %v103
    %v146 = vunpack.c.l.b16 %v104
    %v147 = vunpack.c.l.b16 %v105
    %v148 = vunpack.c.l.b16 %v106
    %v149 = vunpack.c.l.b16 %v107
    %v150 = vunpack.c.l.b16 %v108
    %v151 = vunpack.c.l.b16 %v109
    %v152 = vpack.c.b16 %v145, %v144
    %v153 = vpack.c.b16 %v147, %v146
    %v154 = vpack.c.b16 %v149, %v148
    %v155 = vpack.c.b16 %v151, %v150
    %v160 = vunpack.c.l.b16 %v110
    %v161 = vunpack.c.h.b16 %v110
    %v162 = vunpack.c.l.b16 %v111
    %v163 = vunpack.c.h.b16 %v111
    %v164 = vunpack.c.l.b16 %v112
    %v165 = vunpack.c.h.b16 %v112
    %v166 = vunpack.c.l.b16 %v113
    %v167 = vunpack.c.h.b16 %v113
    %v168 = vpack.c.b16 %v164, %v160
    %v169 = vpack.c.b16 %v165, %v161
    %v170 = vpack.c.b16 %v166, %v162
    %v171 = vpack.c.b16 %v167, %v163
    %vm176 = vcmask 130048
    %v178 = vsel %vm176, %v152, 0
    %v181 = vsel %vm176, %v153, 0
    %v184 = vsel %vm176, %v154, 0
    %v187 = vsel %vm176, %v155, 0
    %189 = vmatprep.subr.bf16.mxu0 0
    %190 = vmatpush1.bf16.msra.mxu0 0
    %191 = vmatprep.subr.bf16.mxu0 0
    %192 = vmatpush1.bf16.msra.mxu0 0
    %193 = vmatprep.subr.bf16.mxu0 0
    %194 = vmatpush1.bf16.msra.mxu0 0
    %195 = vmatprep.subr.bf16.mxu0 0
    %196 = vmatpush1.bf16.msra.mxu0 0
    %197 = vmatprep.subr.bf16.mxu0 0
    %198 = vmatpush1.bf16.msra.mxu0 0
    %199 = vmatprep.subr.bf16.mxu0 0
    %200 = vmatpush1.bf16.msra.mxu0 0
    %201 = vmatprep.subr.bf16.mxu0 0
    %202 = vmatpush1.bf16.msra.mxu0 0
    %203 = vmatprep.subr.bf16.mxu0 %v169
    %204 = vmatpush1.bf16.msra.mxu0 %v168
    %205 = vmatprep.subr.bf16.mxu0 0
    %206 = vmatpush2.bf16.msra.mxu0 0
    %207 = vmatprep.subr.bf16.mxu0 0
    %208 = vmatpush2.bf16.msra.mxu0 0
    %209 = vmatprep.subr.bf16.mxu0 0
    %210 = vmatpush2.bf16.msra.mxu0 0
    %211 = vmatprep.subr.bf16.mxu0 0
    %212 = vmatpush2.bf16.msra.mxu0 0
    %213 = vmatprep.subr.bf16.mxu0 0
    %214 = vmatpush2.bf16.msra.mxu0 0
    %215 = vmatprep.subr.bf16.mxu0 0
    %216 = vmatpush2.bf16.msra.mxu0 0
    %217 = vmatprep.subr.bf16.mxu0 0
    %218 = vmatpush2.bf16.msra.mxu0 0
    %219 = vmatprep.subr.bf16.mxu0 0
    %220 = vmatpush2.bf16.msra.mxu0 0
    %221 = vmatprep.mubr.bf16.mxu0 0
    %222 = vmatmul.mubr.bf16.gmra.mxu0 %v178
    %v223 = vpop.f32.mrf.mxu0
    %v224 = vadd.f32 %v119, %v223
    %v225 = vpop.f32.mrf.mxu0
    %v226 = vadd.f32 %v123, %v225
    %v227 = vpop.f32.mrf.mxu0
    %v228 = vadd.f32 %v119, %v227
    %v229 = vpop.f32.mrf.mxu0
    %v230 = vadd.f32 %v123, %v229
    %231 = vmatprep.mubr.bf16.mxu0 0
    %232 = vmatmul.mubr.bf16.gmra.mxu0 %v181
    %v233 = vpop.f32.mrf.mxu0
    %v234 = vadd.f32 %v119, %v233
    %v235 = vpop.f32.mrf.mxu0
    %v236 = vadd.f32 %v123, %v235
    %v237 = vpop.f32.mrf.mxu0
    %v238 = vadd.f32 %v119, %v237
    %v239 = vpop.f32.mrf.mxu0
    %v240 = vadd.f32 %v123, %v239
    %241 = vmatprep.mubr.bf16.mxu0 0
    %242 = vmatmul.mubr.bf16.gmra.mxu0 %v184
    %v243 = vpop.f32.mrf.mxu0
    %v244 = vadd.f32 %v119, %v243
    %v245 = vpop.f32.mrf.mxu0
    %v246 = vadd.f32 %v123, %v245
    %v247 = vpop.f32.mrf.mxu0
    %v248 = vadd.f32 %v119, %v247
    %v249 = vpop.f32.mrf.mxu0
    %v250 = vadd.f32 %v123, %v249
    %251 = vmatprep.mubr.bf16.mxu0 0
    %252 = vmatmul.mubr.bf16.gmra.mxu0 %v187
    %v253 = vpop.f32.mrf.mxu0
    %v254 = vadd.f32 %v119, %v253
    %v255 = vpop.f32.mrf.mxu0
    %v256 = vadd.f32 %v123, %v255
    %v257 = vpop.f32.mrf.mxu0
    %v258 = vadd.f32 %v119, %v257
    %v259 = vpop.f32.mrf.mxu0
    %v260 = vadd.f32 %v123, %v259
    %261 = vdwg.mxu0
    %262 = vmatprep.subr.bf16.mxu0 0
    %263 = vmatpush1.bf16.msra.mxu0 0
    %264 = vmatprep.subr.bf16.mxu0 0
    %265 = vmatpush1.bf16.msra.mxu0 0
    %266 = vmatprep.subr.bf16.mxu0 0
    %267 = vmatpush1.bf16.msra.mxu0 0
    %268 = vmatprep.subr.bf16.mxu0 0
    %269 = vmatpush1.bf16.msra.mxu0 0
    %270 = vmatprep.subr.bf16.mxu0 0
    %271 = vmatpush1.bf16.msra.mxu0 0
    %272 = vmatprep.subr.bf16.mxu0 0
    %273 = vmatpush1.bf16.msra.mxu0 0
    %274 = vmatprep.subr.bf16.mxu0 0
    %275 = vmatpush1.bf16.msra.mxu0 0
    %276 = vmatprep.subr.bf16.mxu0 %v171
    %277 = vmatpush1.bf16.msra.mxu0 %v170
    %278 = vmatprep.subr.bf16.mxu0 0
    %279 = vmatpush2.bf16.msra.mxu0 0
    %280 = vmatprep.subr.bf16.mxu0 0
    %281 = vmatpush2.bf16.msra.mxu0 0
    %282 = vmatprep.subr.bf16.mxu0 0
    %283 = vmatpush2.bf16.msra.mxu0 0
    %284 = vmatprep.subr.bf16.mxu0 0
    %285 = vmatpush2.bf16.msra.mxu0 0
    %286 = vmatprep.subr.bf16.mxu0 0
    %287 = vmatpush2.bf16.msra.mxu0 0
    %288 = vmatprep.subr.bf16.mxu0 0
    %289 = vmatpush2.bf16.msra.mxu0 0
    %290 = vmatprep.subr.bf16.mxu0 0
    %291 = vmatpush2.bf16.msra.mxu0 0
    %292 = vmatprep.subr.bf16.mxu0 0
    %293 = vmatpush2.bf16.msra.mxu0 0
    %294 = vmatprep.mubr.bf16.mxu0 0
    %295 = vmatmul.mubr.bf16.gmra.mxu0 %v178
    %v296 = vpop.f32.mrf.mxu0
    %v297 = vadd.f32 %v127, %v296
    %v298 = vpop.f32.mrf.mxu0
    %v299 = vadd.f32 %v131, %v298
    %v300 = vpop.f32.mrf.mxu0
    %v301 = vadd.f32 %v127, %v300
    %v302 = vpop.f32.mrf.mxu0
    %v303 = vadd.f32 %v131, %v302
    %304 = vmatprep.mubr.bf16.mxu0 0
    %305 = vmatmul.mubr.bf16.gmra.mxu0 %v181
    %v306 = vpop.f32.mrf.mxu0
    %v307 = vadd.f32 %v127, %v306
    %v308 = vpop.f32.mrf.mxu0
    %v309 = vadd.f32 %v131, %v308
    %v310 = vpop.f32.mrf.mxu0
    %v311 = vadd.f32 %v127, %v310
    %v312 = vpop.f32.mrf.mxu0
    %v313 = vadd.f32 %v131, %v312
    %314 = vmatprep.mubr.bf16.mxu0 0
    %315 = vmatmul.mubr.bf16.gmra.mxu0 %v184
    %v316 = vpop.f32.mrf.mxu0
    %v317 = vadd.f32 %v127, %v316
    %v318 = vpop.f32.mrf.mxu0
    %v319 = vadd.f32 %v131, %v318
    %v320 = vpop.f32.mrf.mxu0
    %v321 = vadd.f32 %v127, %v320
    %v322 = vpop.f32.mrf.mxu0
    %v323 = vadd.f32 %v131, %v322
    %324 = vmatprep.mubr.bf16.mxu0 0
    %325 = vmatmul.mubr.bf16.gmra.mxu0 %v187
    %v326 = vpop.f32.mrf.mxu0
    %v327 = vadd.f32 %v127, %v326
    %v328 = vpop.f32.mrf.mxu0
    %v329 = vadd.f32 %v131, %v328
    %v330 = vpop.f32.mrf.mxu0
    %v331 = vadd.f32 %v127, %v330
    %v332 = vpop.f32.mrf.mxu0
    %v333 = vadd.f32 %v131, %v332
    %334 = vdwg.mxu0
    %v335 = vpack.c.bf16 %v224, %v224
    %v336 = vpack.c.bf16 %v226, %v226
    %v337 = vpack.c.bf16 %v297, %v297
    %v338 = vpack.c.bf16 %v299, %v299
    %v339 = vpack.c.bf16 %v228, %v228
    %v340 = vpack.c.bf16 %v230, %v230
    %v341 = vpack.c.bf16 %v301, %v301
    %v342 = vpack.c.bf16 %v303, %v303
    %v343 = vpack.c.bf16 %v234, %v234
    %v344 = vpack.c.bf16 %v236, %v236
    %v345 = vpack.c.bf16 %v307, %v307
    %v346 = vpack.c.bf16 %v309, %v309
    %v347 = vpack.c.bf16 %v238, %v238
    %v348 = vpack.c.bf16 %v240, %v240
    %v349 = vpack.c.bf16 %v311, %v311
    %v350 = vpack.c.bf16 %v313, %v313
    %v351 = vpack.c.bf16 %v244, %v244
    %v352 = vpack.c.bf16 %v246, %v246
    %v353 = vpack.c.bf16 %v317, %v317
    %v354 = vpack.c.bf16 %v319, %v319
    %v355 = vpack.c.bf16 %v248, %v248
    %v356 = vpack.c.bf16 %v250, %v250
    %v357 = vpack.c.bf16 %v321, %v321
    %v358 = vpack.c.bf16 %v323, %v323
    %v359 = vpack.c.bf16 %v254, %v254
    %v360 = vpack.c.bf16 %v256, %v256
    %v361 = vpack.c.bf16 %v327, %v327
    %v362 = vpack.c.bf16 %v329, %v329
    %v363 = vpack.c.bf16 %v258, %v258
    %v364 = vpack.c.bf16 %v260, %v260
    %v365 = vpack.c.bf16 %v331, %v331
    %v366 = vpack.c.bf16 %v333, %v333
    %v399 = vunpack.c.l.b16 %v335
    %v400 = vunpack.c.l.b16 %v336
    %v401 = vunpack.c.l.b16 %v337
    %v402 = vunpack.c.l.b16 %v338
    %v403 = vunpack.c.l.b16 %v339
    %v404 = vunpack.c.l.b16 %v340
    %v405 = vunpack.c.l.b16 %v341
    %v406 = vunpack.c.l.b16 %v342
    %v407 = vunpack.c.l.b16 %v343
    %v408 = vunpack.c.l.b16 %v344
    %v409 = vunpack.c.l.b16 %v345
    %v410 = vunpack.c.l.b16 %v346
    %v411 = vunpack.c.l.b16 %v347
    %v412 = vunpack.c.l.b16 %v348
    %v413 = vunpack.c.l.b16 %v349
    %v414 = vunpack.c.l.b16 %v350
    %v415 = vunpack.c.l.b16 %v351
    %v416 = vunpack.c.l.b16 %v352
    %v417 = vunpack.c.l.b16 %v353
    %v418 = vunpack.c.l.b16 %v354
    %v419 = vunpack.c.l.b16 %v355
    %v420 = vunpack.c.l.b16 %v356
    %v421 = vunpack.c.l.b16 %v357
    %v422 = vunpack.c.l.b16 %v358
    %v423 = vunpack.c.l.b16 %v359
    %v424 = vunpack.c.l.b16 %v360
    %v425 = vunpack.c.l.b16 %v361
    %v426 = vunpack.c.l.b16 %v362
    %v427 = vunpack.c.l.b16 %v363
    %v428 = vunpack.c.l.b16 %v364
    %v429 = vunpack.c.l.b16 %v365
    %v430 = vunpack.c.l.b16 %v366
    %v431 = vpack.c.b16 %v400, %v399
    %v432 = vpack.c.b16 %v402, %v401
    %v433 = vpack.c.b16 %v404, %v403
    %v434 = vpack.c.b16 %v406, %v405
    %v435 = vpack.c.b16 %v408, %v407
    %v436 = vpack.c.b16 %v410, %v409
    %v437 = vpack.c.b16 %v412, %v411
    %v438 = vpack.c.b16 %v414, %v413
    %v439 = vpack.c.b16 %v416, %v415
    %v440 = vpack.c.b16 %v418, %v417
    %v441 = vpack.c.b16 %v420, %v419
    %v442 = vpack.c.b16 %v422, %v421
    %v443 = vpack.c.b16 %v424, %v423
    %v444 = vpack.c.b16 %v426, %v425
    %v445 = vpack.c.b16 %v428, %v427
    %v446 = vpack.c.b16 %v430, %v429
    %463 = vst [vmem:[#allocation7] sm:$0xff] %v431
    %464 = vst [vmem:[#allocation7 + $0x8] sm:$0xff] %v432
    %465 = vst [vmem:[#allocation7 + $0x10] sm:$0xff] %v433
    %466 = vst [vmem:[#allocation7 + $0x18] sm:$0xff] %v434
    %467 = vst [vmem:[#allocation7 + $0x20] sm:$0xff] %v435
    %468 = vst [vmem:[#allocation7 + $0x28] sm:$0xff] %v436
    %469 = vst [vmem:[#allocation7 + $0x30] sm:$0xff] %v437
    %470 = vst [vmem:[#allocation7 + $0x38] sm:$0xff] %v438
    %471 = vst [vmem:[#allocation7 + $0x40] sm:$0xff] %v439
    %472 = vst [vmem:[#allocation7 + $0x48] sm:$0xff] %v440
    %473 = vst [vmem:[#allocation7 + $0x50] sm:$0xff] %v441
    %474 = vst [vmem:[#allocation7 + $0x58] sm:$0xff] %v442
    %475 = vst [vmem:[#allocation7 + $0x60] sm:$0xff] %v443
    %476 = vst [vmem:[#allocation7 + $0x68] sm:$0xff] %v444
    %477 = vst [vmem:[#allocation7 + $0x70] sm:$0xff] %v445
    %478 = vst [vmem:[#allocation7 + $0x78] sm:$0xff] %v446
    %v479 = vld [vmem:[#allocation2] sm:$0xff]
    %v480 = vld [vmem:[#allocation3] sm:$0xff]
    %v481 = vld [vmem:[#allocation7] sm:$0xff]
    %v482 = vld [vmem:[#allocation7 + $0x8] sm:$0xff]
    %v483 = vunpack.c.l.bf16 %v481
    %v484 = vunpack.c.h.bf16 %v481
    %v485 = vunpack.c.l.bf16 %v482
    %v486 = vunpack.c.h.bf16 %v482
    %v487 = vld [vmem:[#allocation8] sm:$0xff]
    %v488 = vld [vmem:[#allocation8 + $0x8] sm:$0xff]
    %v489 = vld [vmem:[#allocation8 + $0x10] sm:$0xff]
    %v490 = vld [vmem:[#allocation8 + $0x18] sm:$0xff]
    %v491 = vld [vmem:[#allocation8 + $0x20] sm:$0xff]
    %v492 = vld [vmem:[#allocation8 + $0x28] sm:$0xff]
    %v493 = vld [vmem:[#allocation8 + $0x30] sm:$0xff]
    %v494 = vld [vmem:[#allocation8 + $0x38] sm:$0xff]
    %v495 = vld [vmem:[#allocation8 + $0x40] sm:$0xff]
    %v496 = vld [vmem:[#allocation8 + $0x48] sm:$0xff]
    %v497 = vld [vmem:[#allocation8 + $0x50] sm:$0xff]
    %v498 = vld [vmem:[#allocation8 + $0x58] sm:$0xff]
    %v499 = vld [vmem:[#allocation8 + $0x60] sm:$0xff]
    %v500 = vld [vmem:[#allocation8 + $0x68] sm:$0xff]
    %v501 = vld [vmem:[#allocation8 + $0x70] sm:$0xff]
    %v502 = vld [vmem:[#allocation8 + $0x78] sm:$0xff]
    %v503 = vld [vmem:[#allocation8 + $0x80] sm:$0xff]
    %v504 = vld [vmem:[#allocation8 + $0x88] sm:$0xff]
    %v505 = vld [vmem:[#allocation8 + $0x90] sm:$0xff]
    %v506 = vld [vmem:[#allocation8 + $0x98] sm:$0xff]
    %v507 = vld [vmem:[#allocation8 + $0xa0] sm:$0xff]
    %v508 = vld [vmem:[#allocation8 + $0xa8] sm:$0xff]
    %v509 = vld [vmem:[#allocation8 + $0xb0] sm:$0xff]
    %v510 = vld [vmem:[#allocation8 + $0xb8] sm:$0xff]
    %v511 = vld [vmem:[#allocation8 + $0xc0] sm:$0xff]
    %v512 = vld [vmem:[#allocation8 + $0xc8] sm:$0xff]
    %v513 = vld [vmem:[#allocation8 + $0xd0] sm:$0xff]
    %v514 = vld [vmem:[#allocation8 + $0xd8] sm:$0xff]
    %v515 = vld [vmem:[#allocation8 + $0xe0] sm:$0xff]
    %v516 = vld [vmem:[#allocation8 + $0xe8] sm:$0xff]
    %v517 = vld [vmem:[#allocation8 + $0xf0] sm:$0xff]
    %v518 = vld [vmem:[#allocation8 + $0xf8] sm:$0xff]
    %v519 = vpack.c.bf16 %v479, %v479
    %v552 = vunpack.c.l.b16 %v487
    %v553 = vunpack.c.h.b16 %v487
    %v554 = vunpack.c.l.b16 %v488
    %v555 = vunpack.c.h.b16 %v488
    %v556 = vunpack.c.l.b16 %v489
    %v557 = vunpack.c.h.b16 %v489
    %v558 = vunpack.c.l.b16 %v490
    %v559 = vunpack.c.h.b16 %v490
    %v560 = vunpack.c.l.b16 %v491
    %v561 = vunpack.c.h.b16 %v491
    %v562 = vunpack.c.l.b16 %v492
    %v563 = vunpack.c.h.b16 %v492
    %v564 = vunpack.c.l.b16 %v493
    %v565 = vunpack.c.h.b16 %v493
    %v566 = vunpack.c.l.b16 %v494
    %v567 = vunpack.c.h.b16 %v494
    %v568 = vunpack.c.l.b16 %v495
    %v569 = vunpack.c.h.b16 %v495
    %v570 = vunpack.c.l.b16 %v496
    %v571 = vunpack.c.h.b16 %v496
    %v572 = vunpack.c.l.b16 %v497
    %v573 = vunpack.c.h.b16 %v497
    %v574 = vunpack.c.l.b16 %v498
    %v575 = vunpack.c.h.b16 %v498
    %v576 = vunpack.c.l.b16 %v499
    %v577 = vunpack.c.h.b16 %v499
    %v578 = vunpack.c.l.b16 %v500
    %v579 = vunpack.c.h.b16 %v500
    %v580 = vunpack.c.l.b16 %v501
    %v581 = vunpack.c.h.b16 %v501
    %v582 = vunpack.c.l.b16 %v502
    %v583 = vunpack.c.h.b16 %v502
    %v584 = vunpack.c.l.b16 %v503
    %v585 = vunpack.c.h.b16 %v503
    %v586 = vunpack.c.l.b16 %v504
    %v587 = vunpack.c.h.b16 %v504
    %v588 = vunpack.c.l.b16 %v505
    %v589 = vunpack.c.h.b16 %v505
    %v590 = vunpack.c.l.b16 %v506
    %v591 = vunpack.c.h.b16 %v506
    %v592 = vunpack.c.l.b16 %v507
    %v593 = vunpack.c.h.b16 %v507
    %v594 = vunpack.c.l.b16 %v508
    %v595 = vunpack.c.h.b16 %v508
    %v596 = vunpack.c.l.b16 %v509
    %v597 = vunpack.c.h.b16 %v509
    %v598 = vunpack.c.l.b16 %v510
    %v599 = vunpack.c.h.b16 %v510
    %v600 = vunpack.c.l.b16 %v511
    %v601 = vunpack.c.h.b16 %v511
    %v602 = vunpack.c.l.b16 %v512
    %v603 = vunpack.c.h.b16 %v512
    %v604 = vunpack.c.l.b16 %v513
    %v605 = vunpack.c.h.b16 %v513
    %v606 = vunpack.c.l.b16 %v514
    %v607 = vunpack.c.h.b16 %v514
    %v608 = vunpack.c.l.b16 %v515
    %v609 = vunpack.c.h.b16 %v515
    %v610 = vunpack.c.l.b16 %v516
    %v611 = vunpack.c.h.b16 %v516
    %v612 = vunpack.c.l.b16 %v517
    %v613 = vunpack.c.h.b16 %v517
    %v614 = vunpack.c.l.b16 %v518
    %v615 = vunpack.c.h.b16 %v518
    %v616 = vpack.c.b16 %v556, %v552
    %v617 = vpack.c.b16 %v557, %v553
    %v618 = vpack.c.b16 %v558, %v554
    %v619 = vpack.c.b16 %v559, %v555
    %v620 = vpack.c.b16 %v564, %v560
    %v621 = vpack.c.b16 %v565, %v561
    %v622 = vpack.c.b16 %v566, %v562
    %v623 = vpack.c.b16 %v567, %v563
    %v624 = vpack.c.b16 %v572, %v568
    %v625 = vpack.c.b16 %v573, %v569
    %v626 = vpack.c.b16 %v574, %v570
    %v627 = vpack.c.b16 %v575, %v571
    %v628 = vpack.c.b16 %v580, %v576
    %v629 = vpack.c.b16 %v581, %v577
    %v630 = vpack.c.b16 %v582, %v578
    %v631 = vpack.c.b16 %v583, %v579
    %v632 = vpack.c.b16 %v588, %v584
    %v633 = vpack.c.b16 %v589, %v585
    %v634 = vpack.c.b16 %v590, %v586
    %v635 = vpack.c.b16 %v591, %v587
    %v636 = vpack.c.b16 %v596, %v592
    %v637 = vpack.c.b16 %v597, %v593
    %v638 = vpack.c.b16 %v598, %v594
    %v639 = vpack.c.b16 %v599, %v595
    %v640 = vpack.c.b16 %v604, %v600
    %v641 = vpack.c.b16 %v605, %v601
    %v642 = vpack.c.b16 %v606, %v602
    %v643 = vpack.c.b16 %v607, %v603
    %v644 = vpack.c.b16 %v612, %v608
    %v645 = vpack.c.b16 %v613, %v609
    %v646 = vpack.c.b16 %v614, %v610
    %v647 = vpack.c.b16 %v615, %v611
    %680 = vmatprep.subr.bf16.mxu0 %v645
    %681 = vmatpush1.bf16.msra.mxu0 %v644
    %682 = vmatprep.subr.bf16.mxu0 %v641
    %683 = vmatpush1.bf16.msra.mxu0 %v640
    %684 = vmatprep.subr.bf16.mxu0 %v637
    %685 = vmatpush1.bf16.msra.mxu0 %v636
    %686 = vmatprep.subr.bf16.mxu0 %v633
    %687 = vmatpush1.bf16.msra.mxu0 %v632
    %688 = vmatprep.subr.bf16.mxu0 %v629
    %689 = vmatpush1.bf16.msra.mxu0 %v628
    %690 = vmatprep.subr.bf16.mxu0 %v625
    %691 = vmatpush1.bf16.msra.mxu0 %v624
    %692 = vmatprep.subr.bf16.mxu0 %v621
    %693 = vmatpush1.bf16.msra.mxu0 %v620
    %694 = vmatprep.subr.bf16.mxu0 %v617
    %695 = vmatpush1.bf16.msra.mxu0 %v616
    %696 = vmatprep.subr.bf16.mxu0 0
    %697 = vmatpush2.bf16.msra.mxu0 0
    %698 = vmatprep.subr.bf16.mxu0 0
    %699 = vmatpush2.bf16.msra.mxu0 0
    %700 = vmatprep.subr.bf16.mxu0 0
    %701 = vmatpush2.bf16.msra.mxu0 0
    %702 = vmatprep.subr.bf16.mxu0 0
    %703 = vmatpush2.bf16.msra.mxu0 0
    %704 = vmatprep.subr.bf16.mxu0 0
    %705 = vmatpush2.bf16.msra.mxu0 0
    %706 = vmatprep.subr.bf16.mxu0 0
    %707 = vmatpush2.bf16.msra.mxu0 0
    %708 = vmatprep.subr.bf16.mxu0 0
    %709 = vmatpush2.bf16.msra.mxu0 0
    %710 = vmatprep.subr.bf16.mxu0 0
    %711 = vmatpush2.bf16.msra.mxu0 0
    %712 = vmatprep.mubr.bf16.mxu0 0
    %713 = vmatmul.mubr.bf16.gmra.mxu0 %v519
    %v714 = vpop.f32.mrf.mxu0
    %v715 = vadd.f32 0.0, %v714
    %v716 = vpop.f32.mrf.mxu0
    %v717 = vadd.f32 0.0, %v716
    %v718 = vpop.f32.mrf.mxu0
    %v719 = vpop.f32.mrf.mxu0
    %720 = vdwg.mxu0
    %721 = vmatprep.subr.bf16.mxu0 %v647
    %722 = vmatpush1.bf16.msra.mxu0 %v646
    %723 = vmatprep.subr.bf16.mxu0 %v643
    %724 = vmatpush1.bf16.msra.mxu0 %v642
    %725 = vmatprep.subr.bf16.mxu0 %v639
    %726 = vmatpush1.bf16.msra.mxu0 %v638
    %727 = vmatprep.subr.bf16.mxu0 %v635
    %728 = vmatpush1.bf16.msra.mxu0 %v634
    %729 = vmatprep.subr.bf16.mxu0 %v631
    %730 = vmatpush1.bf16.msra.mxu0 %v630
    %731 = vmatprep.subr.bf16.mxu0 %v627
    %732 = vmatpush1.bf16.msra.mxu0 %v626
    %733 = vmatprep.subr.bf16.mxu0 %v623
    %734 = vmatpush1.bf16.msra.mxu0 %v622
    %735 = vmatprep.subr.bf16.mxu0 %v619
    %736 = vmatpush1.bf16.msra.mxu0 %v618
    %737 = vmatprep.subr.bf16.mxu0 0
    %738 = vmatpush2.bf16.msra.mxu0 0
    %739 = vmatprep.subr.bf16.mxu0 0
    %740 = vmatpush2.bf16.msra.mxu0 0
    %741 = vmatprep.subr.bf16.mxu0 0
    %742 = vmatpush2.bf16.msra.mxu0 0
    %743 = vmatprep.subr.bf16.mxu0 0
    %744 = vmatpush2.bf16.msra.mxu0 0
    %745 = vmatprep.subr.bf16.mxu0 0
    %746 = vmatpush2.bf16.msra.mxu0 0
    %747 = vmatprep.subr.bf16.mxu0 0
    %748 = vmatpush2.bf16.msra.mxu0 0
    %749 = vmatprep.subr.bf16.mxu0 0
    %750 = vmatpush2.bf16.msra.mxu0 0
    %751 = vmatprep.subr.bf16.mxu0 0
    %752 = vmatpush2.bf16.msra.mxu0 0
    %753 = vmatprep.mubr.bf16.mxu0 0
    %754 = vmatmul.mubr.bf16.gmra.mxu0 %v519
    %v755 = vpop.f32.mrf.mxu0
    %v756 = vadd.f32 0.0, %v755
    %v757 = vpop.f32.mrf.mxu0
    %v758 = vadd.f32 0.0, %v757
    %v759 = vpop.f32.mrf.mxu0
    %v760 = vpop.f32.mrf.mxu0
    %761 = vdwg.mxu0
    %v762 = vadd.f32 %v483, %v715
    %v763 = vadd.f32 %v484, %v717
    %v764 = vadd.f32 %v485, %v756
    %v765 = vadd.f32 %v486, %v758
    %v766 = vxor.u32 %v762, 2147483648
    %v767 = vmul.f32 %v766, 1.442695
    %v768 = vpow.pop %v767
    %v769 = vadd.f32 %v768, 1.0
    %v770 = vrcp.pop %v769
    %v771 = vmul.f32 1.0, %v770
    %v772 = vxor.u32 %v763, 2147483648
    %v773 = vmul.f32 %v772, 1.442695
    %v774 = vpow.pop %v773
    %v775 = vadd.f32 %v774, 1.0
    %v776 = vrcp.pop %v775
    %v777 = vmul.f32 1.0, %v776
    %v778 = vtanh.pop %v764
    %v779 = vxor.u32 %v765, 2147483648
    %v780 = vmul.f32 %v779, 1.442695
    %v781 = vpow.pop %v780
    %v782 = vadd.f32 %v781, 1.0
    %v783 = vrcp.pop %v782
    %v784 = vmul.f32 1.0, %v783
    %v785 = vmul.f32 %v777, %v480
    %v786 = vmul.f32 %v771, %v778
    %v787 = vadd.f32 %v785, %v786
    %v788 = vtanh.pop %v787
    %v789 = vmul.f32 %v784, %v788
    %v790 = vld [vmem:[#allocation4] sm:$0xff]
    %v791 = vld [vmem:[#allocation5] sm:$0xff]
    %v792 = vld [vmem:[#allocation10] sm:$0xff]
    %v793 = vld [vmem:[#allocation10 + $0x8] sm:$0xff]
    %v794 = vld [vmem:[#allocation10 + $0x10] sm:$0xff]
    %v795 = vld [vmem:[#allocation10 + $0x18] sm:$0xff]
    %v796 = vld [vmem:[#allocation10 + $0x20] sm:$0xff]
    %v797 = vld [vmem:[#allocation10 + $0x28] sm:$0xff]
    %v798 = vld [vmem:[#allocation10 + $0x30] sm:$0xff]
    %v799 = vld [vmem:[#allocation10 + $0x38] sm:$0xff]
    %v800 = vld [vmem:[#allocation10 + $0x40] sm:$0xff]
    %v801 = vld [vmem:[#allocation10 + $0x48] sm:$0xff]
    %v802 = vld [vmem:[#allocation10 + $0x50] sm:$0xff]
    %v803 = vld [vmem:[#allocation10 + $0x58] sm:$0xff]
    %v804 = vld [vmem:[#allocation10 + $0x60] sm:$0xff]
    %v805 = vld [vmem:[#allocation10 + $0x68] sm:$0xff]
    %v806 = vld [vmem:[#allocation10 + $0x70] sm:$0xff]
    %v807 = vld [vmem:[#allocation10 + $0x78] sm:$0xff]
    %v808 = vld [vmem:[#allocation10 + $0x80] sm:$0xff]
    %v809 = vld [vmem:[#allocation10 + $0x88] sm:$0xff]
    %v810 = vld [vmem:[#allocation10 + $0x90] sm:$0xff]
    %v811 = vld [vmem:[#allocation10 + $0x98] sm:$0xff]
    %v812 = vld [vmem:[#allocation10 + $0xa0] sm:$0xff]
    %v813 = vld [vmem:[#allocation10 + $0xa8] sm:$0xff]
    %v814 = vld [vmem:[#allocation10 + $0xb0] sm:$0xff]
    %v815 = vld [vmem:[#allocation10 + $0xb8] sm:$0xff]
    %v816 = vld [vmem:[#allocation10 + $0xc0] sm:$0xff]
    %v817 = vld [vmem:[#allocation10 + $0xc8] sm:$0xff]
    %v818 = vld [vmem:[#allocation10 + $0xd0] sm:$0xff]
    %v819 = vld [vmem:[#allocation10 + $0xd8] sm:$0xff]
    %v820 = vld [vmem:[#allocation10 + $0xe0] sm:$0xff]
    %v821 = vld [vmem:[#allocation10 + $0xe8] sm:$0xff]
    %v822 = vld [vmem:[#allocation10 + $0xf0] sm:$0xff]
    %v823 = vld [vmem:[#allocation10 + $0xf8] sm:$0xff]
    %v824 = vpack.c.bf16 %v789, %v789
    %v825 = vld [vmem:[%s6] sm:$0xf]
    %v827 = vlaneseq
    %v828 = vshrl.u32 %v827, 7
    %v829 = vsub.s32 0, %v828
    %v830 = vrot.slane %v825, %v829
    %v831 = vlaneseq
    %v832 = vshrl.u32 %v831, 7
    %v833 = vsub.s32 1, %v832
    %v834 = vrot.slane %v825, %v833
    %v835 = vlaneseq
    %v836 = vshrl.u32 %v835, 7
    %v837 = vsub.s32 2, %v836
    %v838 = vrot.slane %v825, %v837
    %v839 = vlaneseq
    %v840 = vshrl.u32 %v839, 7
    %v841 = vsub.s32 3, %v840
    %v842 = vrot.slane %v825, %v841
    %v879 = vunpack.c.l.b16 %v792
    %v880 = vunpack.c.h.b16 %v792
    %v881 = vunpack.c.l.b16 %v793
    %v882 = vunpack.c.h.b16 %v793
    %v883 = vunpack.c.l.b16 %v794
    %v884 = vunpack.c.h.b16 %v794
    %v885 = vunpack.c.l.b16 %v795
    %v886 = vunpack.c.h.b16 %v795
    %v887 = vunpack.c.l.b16 %v796
    %v888 = vunpack.c.h.b16 %v796
    %v889 = vunpack.c.l.b16 %v797
    %v890 = vunpack.c.h.b16 %v797
    %v891 = vunpack.c.l.b16 %v798
    %v892 = vunpack.c.h.b16 %v798
    %v893 = vunpack.c.l.b16 %v799
    %v894 = vunpack.c.h.b16 %v799
    %v895 = vunpack.c.l.b16 %v800
    %v896 = vunpack.c.h.b16 %v800
    %v897 = vunpack.c.l.b16 %v801
    %v898 = vunpack.c.h.b16 %v801
    %v899 = vunpack.c.l.b16 %v802
    %v900 = vunpack.c.h.b16 %v802
    %v901 = vunpack.c.l.b16 %v803
    %v902 = vunpack.c.h.b16 %v803
    %v903 = vunpack.c.l.b16 %v804
    %v904 = vunpack.c.h.b16 %v804
    %v905 = vunpack.c.l.b16 %v805
    %v906 = vunpack.c.h.b16 %v805
    %v907 = vunpack.c.l.b16 %v806
    %v908 = vunpack.c.h.b16 %v806
    %v909 = vunpack.c.l.b16 %v807
    %v910 = vunpack.c.h.b16 %v807
    %v911 = vunpack.c.l.b16 %v808
    %v912 = vunpack.c.h.b16 %v808
    %v913 = vunpack.c.l.b16 %v809
    %v914 = vunpack.c.h.b16 %v809
    %v915 = vunpack.c.l.b16 %v810
    %v916 = vunpack.c.h.b16 %v810
    %v917 = vunpack.c.l.b16 %v811
    %v918 = vunpack.c.h.b16 %v811
    %v919 = vunpack.c.l.b16 %v812
    %v920 = vunpack.c.h.b16 %v812
    %v921 = vunpack.c.l.b16 %v813
    %v922 = vunpack.c.h.b16 %v813
    %v923 = vunpack.c.l.b16 %v814
    %v924 = vunpack.c.h.b16 %v814
    %v925 = vunpack.c.l.b16 %v815
    %v926 = vunpack.c.h.b16 %v815
    %v927 = vunpack.c.l.b16 %v816
    %v928 = vunpack.c.h.b16 %v816
    %v929 = vunpack.c.l.b16 %v817
    %v930 = vunpack.c.h.b16 %v817
    %v931 = vunpack.c.l.b16 %v818
    %v932 = vunpack.c.h.b16 %v818
    %v933 = vunpack.c.l.b16 %v819
    %v934 = vunpack.c.h.b16 %v819
    %v935 = vunpack.c.l.b16 %v820
    %v936 = vunpack.c.h.b16 %v820
    %v937 = vunpack.c.l.b16 %v821
    %v938 = vunpack.c.h.b16 %v821
    %v939 = vunpack.c.l.b16 %v822
    %v940 = vunpack.c.h.b16 %v822
    %v941 = vunpack.c.l.b16 %v823
    %v942 = vunpack.c.h.b16 %v823
    %v943 = vpack.c.b16 %v883, %v879
    %v944 = vpack.c.b16 %v884, %v880
    %v945 = vpack.c.b16 %v885, %v881
    %v946 = vpack.c.b16 %v886, %v882
    %v947 = vpack.c.b16 %v891, %v887
    %v948 = vpack.c.b16 %v892, %v888
    %v949 = vpack.c.b16 %v893, %v889
    %v950 = vpack.c.b16 %v894, %v890
    %v951 = vpack.c.b16 %v899, %v895
    %v952 = vpack.c.b16 %v900, %v896
    %v953 = vpack.c.b16 %v901, %v897
    %v954 = vpack.c.b16 %v902, %v898
    %v955 = vpack.c.b16 %v907, %v903
    %v956 = vpack.c.b16 %v908, %v904
    %v957 = vpack.c.b16 %v909, %v905
    %v958 = vpack.c.b16 %v910, %v906
    %v959 = vpack.c.b16 %v915, %v911
    %v960 = vpack.c.b16 %v916, %v912
    %v961 = vpack.c.b16 %v917, %v913
    %v962 = vpack.c.b16 %v918, %v914
    %v963 = vpack.c.b16 %v923, %v919
    %v964 = vpack.c.b16 %v924, %v920
    %v965 = vpack.c.b16 %v925, %v921
    %v966 = vpack.c.b16 %v926, %v922
    %v967 = vpack.c.b16 %v931, %v927
    %v968 = vpack.c.b16 %v932, %v928
    %v969 = vpack.c.b16 %v933, %v929
    %v970 = vpack.c.b16 %v934, %v930
    %v971 = vpack.c.b16 %v939, %v935
    %v972 = vpack.c.b16 %v940, %v936
    %v973 = vpack.c.b16 %v941, %v937
    %v974 = vpack.c.b16 %v942, %v938
    %1007 = vmatprep.subr.bf16.mxu0 %v972
    %1008 = vmatpush1.bf16.msra.mxu0 %v971
    %1009 = vmatprep.subr.bf16.mxu0 %v968
    %1010 = vmatpush1.bf16.msra.mxu0 %v967
    %1011 = vmatprep.subr.bf16.mxu0 %v964
    %1012 = vmatpush1.bf16.msra.mxu0 %v963
    %1013 = vmatprep.subr.bf16.mxu0 %v960
    %1014 = vmatpush1.bf16.msra.mxu0 %v959
    %1015 = vmatprep.subr.bf16.mxu0 %v956
    %1016 = vmatpush1.bf16.msra.mxu0 %v955
    %1017 = vmatprep.subr.bf16.mxu0 %v952
    %1018 = vmatpush1.bf16.msra.mxu0 %v951
    %1019 = vmatprep.subr.bf16.mxu0 %v948
    %1020 = vmatpush1.bf16.msra.mxu0 %v947
    %1021 = vmatprep.subr.bf16.mxu0 %v944
    %1022 = vmatpush1.bf16.msra.mxu0 %v943
    %1023 = vmatprep.subr.bf16.mxu0 0
    %1024 = vmatpush2.bf16.msra.mxu0 0
    %1025 = vmatprep.subr.bf16.mxu0 0
    %1026 = vmatpush2.bf16.msra.mxu0 0
    %1027 = vmatprep.subr.bf16.mxu0 0
    %1028 = vmatpush2.bf16.msra.mxu0 0
    %1029 = vmatprep.subr.bf16.mxu0 0
    %1030 = vmatpush2.bf16.msra.mxu0 0
    %1031 = vmatprep.subr.bf16.mxu0 0
    %1032 = vmatpush2.bf16.msra.mxu0 0
    %1033 = vmatprep.subr.bf16.mxu0 0
    %1034 = vmatpush2.bf16.msra.mxu0 0
    %1035 = vmatprep.subr.bf16.mxu0 0
    %1036 = vmatpush2.bf16.msra.mxu0 0
    %1037 = vmatprep.subr.bf16.mxu0 0
    %1038 = vmatpush2.bf16.msra.mxu0 0
    %1039 = vmatprep.mubr.bf16.mxu0 0
    %1040 = vmatmul.mubr.bf16.gmra.mxu0 %v824
    %v1041 = vpop.f32.mrf.mxu0
    %v1042 = vadd.f32 %v830, %v1041
    %v1043 = vpop.f32.mrf.mxu0
    %v1044 = vadd.f32 %v834, %v1043
    %v1045 = vpop.f32.mrf.mxu0
    %v1046 = vpop.f32.mrf.mxu0
    %1047 = vdwg.mxu0
    %1048 = vmatprep.subr.bf16.mxu0 %v974
    %1049 = vmatpush1.bf16.msra.mxu0 %v973
    %1050 = vmatprep.subr.bf16.mxu0 %v970
    %1051 = vmatpush1.bf16.msra.mxu0 %v969
    %1052 = vmatprep.subr.bf16.mxu0 %v966
    %1053 = vmatpush1.bf16.msra.mxu0 %v965
    %1054 = vmatprep.subr.bf16.mxu0 %v962
    %1055 = vmatpush1.bf16.msra.mxu0 %v961
    %1056 = vmatprep.subr.bf16.mxu0 %v958
    %1057 = vmatpush1.bf16.msra.mxu0 %v957
    %1058 = vmatprep.subr.bf16.mxu0 %v954
    %1059 = vmatpush1.bf16.msra.mxu0 %v953
    %1060 = vmatprep.subr.bf16.mxu0 %v950
    %1061 = vmatpush1.bf16.msra.mxu0 %v949
    %1062 = vmatprep.subr.bf16.mxu0 %v946
    %1063 = vmatpush1.bf16.msra.mxu0 %v945
    %1064 = vmatprep.subr.bf16.mxu0 0
    %1065 = vmatpush2.bf16.msra.mxu0 0
    %1066 = vmatprep.subr.bf16.mxu0 0
    %1067 = vmatpush2.bf16.msra.mxu0 0
    %1068 = vmatprep.subr.bf16.mxu0 0
    %1069 = vmatpush2.bf16.msra.mxu0 0
    %1070 = vmatprep.subr.bf16.mxu0 0
    %1071 = vmatpush2.bf16.msra.mxu0 0
    %1072 = vmatprep.subr.bf16.mxu0 0
    %1073 = vmatpush2.bf16.msra.mxu0 0
    %1074 = vmatprep.subr.bf16.mxu0 0
    %1075 = vmatpush2.bf16.msra.mxu0 0
    %1076 = vmatprep.subr.bf16.mxu0 0
    %1077 = vmatpush2.bf16.msra.mxu0 0
    %1078 = vmatprep.subr.bf16.mxu0 0
    %1079 = vmatpush2.bf16.msra.mxu0 0
    %1080 = vmatprep.mubr.bf16.mxu0 0
    %1081 = vmatmul.mubr.bf16.gmra.mxu0 %v824
    %v1082 = vpop.f32.mrf.mxu0
    %v1083 = vadd.f32 %v838, %v1082
    %v1084 = vpop.f32.mrf.mxu0
    %v1085 = vadd.f32 %v842, %v1084
    %v1086 = vpop.f32.mrf.mxu0
    %v1087 = vpop.f32.mrf.mxu0
    %1088 = vdwg.mxu0
    %v1089 = vld [vmem:[#allocation12] sm:$0xff]
    %v1090 = vld [vmem:[#allocation12 + $0x8] sm:$0xff]
    %v1091 = vld [vmem:[#allocation12 + $0x10] sm:$0xff]
    %v1092 = vld [vmem:[#allocation12 + $0x18] sm:$0xff]
    %v1093 = vld [vmem:[#allocation12 + $0x20] sm:$0xff]
    %v1094 = vld [vmem:[#allocation12 + $0x28] sm:$0xff]
    %v1095 = vld [vmem:[#allocation12 + $0x30] sm:$0xff]
    %v1096 = vld [vmem:[#allocation12 + $0x38] sm:$0xff]
    %v1097 = vld [vmem:[#allocation12 + $0x40] sm:$0xff]
    %v1098 = vld [vmem:[#allocation12 + $0x48] sm:$0xff]
    %v1099 = vld [vmem:[#allocation12 + $0x50] sm:$0xff]
    %v1100 = vld [vmem:[#allocation12 + $0x58] sm:$0xff]
    %v1101 = vld [vmem:[#allocation12 + $0x60] sm:$0xff]
    %v1102 = vld [vmem:[#allocation12 + $0x68] sm:$0xff]
    %v1103 = vld [vmem:[#allocation12 + $0x70] sm:$0xff]
    %v1104 = vld [vmem:[#allocation12 + $0x78] sm:$0xff]
    %v1105 = vld [vmem:[#allocation12 + $0x80] sm:$0xff]
    %v1106 = vld [vmem:[#allocation12 + $0x88] sm:$0xff]
    %v1107 = vld [vmem:[#allocation12 + $0x90] sm:$0xff]
    %v1108 = vld [vmem:[#allocation12 + $0x98] sm:$0xff]
    %v1109 = vld [vmem:[#allocation12 + $0xa0] sm:$0xff]
    %v1110 = vld [vmem:[#allocation12 + $0xa8] sm:$0xff]
    %v1111 = vld [vmem:[#allocation12 + $0xb0] sm:$0xff]
    %v1112 = vld [vmem:[#allocation12 + $0xb8] sm:$0xff]
    %v1113 = vld [vmem:[#allocation12 + $0xc0] sm:$0xff]
    %v1114 = vld [vmem:[#allocation12 + $0xc8] sm:$0xff]
    %v1115 = vld [vmem:[#allocation12 + $0xd0] sm:$0xff]
    %v1116 = vld [vmem:[#allocation12 + $0xd8] sm:$0xff]
    %v1117 = vld [vmem:[#allocation12 + $0xe0] sm:$0xff]
    %v1118 = vld [vmem:[#allocation12 + $0xe8] sm:$0xff]
    %v1119 = vld [vmem:[#allocation12 + $0xf0] sm:$0xff]
    %v1120 = vld [vmem:[#allocation12 + $0xf8] sm:$0xff]
    %v1121 = vpack.c.bf16 %v790, %v790
    %v1154 = vunpack.c.l.b16 %v1089
    %v1155 = vunpack.c.h.b16 %v1089
    %v1156 = vunpack.c.l.b16 %v1090
    %v1157 = vunpack.c.h.b16 %v1090
    %v1158 = vunpack.c.l.b16 %v1091
    %v1159 = vunpack.c.h.b16 %v1091
    %v1160 = vunpack.c.l.b16 %v1092
    %v1161 = vunpack.c.h.b16 %v1092
    %v1162 = vunpack.c.l.b16 %v1093
    %v1163 = vunpack.c.h.b16 %v1093
    %v1164 = vunpack.c.l.b16 %v1094
    %v1165 = vunpack.c.h.b16 %v1094
    %v1166 = vunpack.c.l.b16 %v1095
    %v1167 = vunpack.c.h.b16 %v1095
    %v1168 = vunpack.c.l.b16 %v1096
    %v1169 = vunpack.c.h.b16 %v1096
    %v1170 = vunpack.c.l.b16 %v1097
    %v1171 = vunpack.c.h.b16 %v1097
    %v1172 = vunpack.c.l.b16 %v1098
    %v1173 = vunpack.c.h.b16 %v1098
    %v1174 = vunpack.c.l.b16 %v1099
    %v1175 = vunpack.c.h.b16 %v1099
    %v1176 = vunpack.c.l.b16 %v1100
    %v1177 = vunpack.c.h.b16 %v1100
    %v1178 = vunpack.c.l.b16 %v1101
    %v1179 = vunpack.c.h.b16 %v1101
    %v1180 = vunpack.c.l.b16 %v1102
    %v1181 = vunpack.c.h.b16 %v1102
    %v1182 = vunpack.c.l.b16 %v1103
    %v1183 = vunpack.c.h.b16 %v1103
    %v1184 = vunpack.c.l.b16 %v1104
    %v1185 = vunpack.c.h.b16 %v1104
    %v1186 = vunpack.c.l.b16 %v1105
    %v1187 = vunpack.c.h.b16 %v1105
    %v1188 = vunpack.c.l.b16 %v1106
    %v1189 = vunpack.c.h.b16 %v1106
    %v1190 = vunpack.c.l.b16 %v1107
    %v1191 = vunpack.c.h.b16 %v1107
    %v1192 = vunpack.c.l.b16 %v1108
    %v1193 = vunpack.c.h.b16 %v1108
    %v1194 = vunpack.c.l.b16 %v1109
    %v1195 = vunpack.c.h.b16 %v1109
    %v1196 = vunpack.c.l.b16 %v1110
    %v1197 = vunpack.c.h.b16 %v1110
    %v1198 = vunpack.c.l.b16 %v1111
    %v1199 = vunpack.c.h.b16 %v1111
    %v1200 = vunpack.c.l.b16 %v1112
    %v1201 = vunpack.c.h.b16 %v1112
    %v1202 = vunpack.c.l.b16 %v1113
    %v1203 = vunpack.c.h.b16 %v1113
    %v1204 = vunpack.c.l.b16 %v1114
    %v1205 = vunpack.c.h.b16 %v1114
    %v1206 = vunpack.c.l.b16 %v1115
    %v1207 = vunpack.c.h.b16 %v1115
    %v1208 = vunpack.c.l.b16 %v1116
    %v1209 = vunpack.c.h.b16 %v1116
    %v1210 = vunpack.c.l.b16 %v1117
    %v1211 = vunpack.c.h.b16 %v1117
    %v1212 = vunpack.c.l.b16 %v1118
    %v1213 = vunpack.c.h.b16 %v1118
    %v1214 = vunpack.c.l.b16 %v1119
    %v1215 = vunpack.c.h.b16 %v1119
    %v1216 = vunpack.c.l.b16 %v1120
    %v1217 = vunpack.c.h.b16 %v1120
    %v1218 = vpack.c.b16 %v1158, %v1154
    %v1219 = vpack.c.b16 %v1159, %v1155
    %v1220 = vpack.c.b16 %v1160, %v1156
    %v1221 = vpack.c.b16 %v1161, %v1157
    %v1222 = vpack.c.b16 %v1166, %v1162
    %v1223 = vpack.c.b16 %v1167, %v1163
    %v1224 = vpack.c.b16 %v1168, %v1164
    %v1225 = vpack.c.b16 %v1169, %v1165
    %v1226 = vpack.c.b16 %v1174, %v1170
    %v1227 = vpack.c.b16 %v1175, %v1171
    %v1228 = vpack.c.b16 %v1176, %v1172
    %v1229 = vpack.c.b16 %v1177, %v1173
    %v1230 = vpack.c.b16 %v1182, %v1178
    %v1231 = vpack.c.b16 %v1183, %v1179
    %v1232 = vpack.c.b16 %v1184, %v1180
    %v1233 = vpack.c.b16 %v1185, %v1181
    %v1234 = vpack.c.b16 %v1190, %v1186
    %v1235 = vpack.c.b16 %v1191, %v1187
    %v1236 = vpack.c.b16 %v1192, %v1188
    %v1237 = vpack.c.b16 %v1193, %v1189
    %v1238 = vpack.c.b16 %v1198, %v1194
    %v1239 = vpack.c.b16 %v1199, %v1195
    %v1240 = vpack.c.b16 %v1200, %v1196
    %v1241 = vpack.c.b16 %v1201, %v1197
    %v1242 = vpack.c.b16 %v1206, %v1202
    %v1243 = vpack.c.b16 %v1207, %v1203
    %v1244 = vpack.c.b16 %v1208, %v1204
    %v1245 = vpack.c.b16 %v1209, %v1205
    %v1246 = vpack.c.b16 %v1214, %v1210
    %v1247 = vpack.c.b16 %v1215, %v1211
    %v1248 = vpack.c.b16 %v1216, %v1212
    %v1249 = vpack.c.b16 %v1217, %v1213
    %1282 = vmatprep.subr.bf16.mxu0 %v1247
    %1283 = vmatpush1.bf16.msra.mxu0 %v1246
    %1284 = vmatprep.subr.bf16.mxu0 %v1243
    %1285 = vmatpush1.bf16.msra.mxu0 %v1242
    %1286 = vmatprep.subr.bf16.mxu0 %v1239
    %1287 = vmatpush1.bf16.msra.mxu0 %v1238
    %1288 = vmatprep.subr.bf16.mxu0 %v1235
    %1289 = vmatpush1.bf16.msra.mxu0 %v1234
    %1290 = vmatprep.subr.bf16.mxu0 %v1231
    %1291 = vmatpush1.bf16.msra.mxu0 %v1230
    %1292 = vmatprep.subr.bf16.mxu0 %v1227
    %1293 = vmatpush1.bf16.msra.mxu0 %v1226
    %1294 = vmatprep.subr.bf16.mxu0 %v1223
    %1295 = vmatpush1.bf16.msra.mxu0 %v1222
    %1296 = vmatprep.subr.bf16.mxu0 %v1219
    %1297 = vmatpush1.bf16.msra.mxu0 %v1218
    %1298 = vmatprep.subr.bf16.mxu0 0
    %1299 = vmatpush2.bf16.msra.mxu0 0
    %1300 = vmatprep.subr.bf16.mxu0 0
    %1301 = vmatpush2.bf16.msra.mxu0 0
    %1302 = vmatprep.subr.bf16.mxu0 0
    %1303 = vmatpush2.bf16.msra.mxu0 0
    %1304 = vmatprep.subr.bf16.mxu0 0
    %1305 = vmatpush2.bf16.msra.mxu0 0
    %1306 = vmatprep.subr.bf16.mxu0 0
    %1307 = vmatpush2.bf16.msra.mxu0 0
    %1308 = vmatprep.subr.bf16.mxu0 0
    %1309 = vmatpush2.bf16.msra.mxu0 0
    %1310 = vmatprep.subr.bf16.mxu0 0
    %1311 = vmatpush2.bf16.msra.mxu0 0
    %1312 = vmatprep.subr.bf16.mxu0 0
    %1313 = vmatpush2.bf16.msra.mxu0 0
    %1314 = vmatprep.mubr.bf16.mxu0 0
    %1315 = vmatmul.mubr.bf16.gmra.mxu0 %v1121
    %v1316 = vpop.f32.mrf.mxu0
    %v1317 = vadd.f32 0.0, %v1316
    %v1318 = vpop.f32.mrf.mxu0
    %v1319 = vadd.f32 0.0, %v1318
    %v1320 = vpop.f32.mrf.mxu0
    %v1321 = vpop.f32.mrf.mxu0
    %1322 = vdwg.mxu0
    %1323 = vmatprep.subr.bf16.mxu0 %v1249
    %1324 = vmatpush1.bf16.msra.mxu0 %v1248
    %1325 = vmatprep.subr.bf16.mxu0 %v1245
    %1326 = vmatpush1.bf16.msra.mxu0 %v1244
    %1327 = vmatprep.subr.bf16.mxu0 %v1241
    %1328 = vmatpush1.bf16.msra.mxu0 %v1240
    %1329 = vmatprep.subr.bf16.mxu0 %v1237
    %1330 = vmatpush1.bf16.msra.mxu0 %v1236
    %1331 = vmatprep.subr.bf16.mxu0 %v1233
    %1332 = vmatpush1.bf16.msra.mxu0 %v1232
    %1333 = vmatprep.subr.bf16.mxu0 %v1229
    %1334 = vmatpush1.bf16.msra.mxu0 %v1228
    %1335 = vmatprep.subr.bf16.mxu0 %v1225
    %1336 = vmatpush1.bf16.msra.mxu0 %v1224
    %1337 = vmatprep.subr.bf16.mxu0 %v1221
    %1338 = vmatpush1.bf16.msra.mxu0 %v1220
    %1339 = vmatprep.subr.bf16.mxu0 0
    %1340 = vmatpush2.bf16.msra.mxu0 0
    %1341 = vmatprep.subr.bf16.mxu0 0
    %1342 = vmatpush2.bf16.msra.mxu0 0
    %1343 = vmatprep.subr.bf16.mxu0 0
    %1344 = vmatpush2.bf16.msra.mxu0 0
    %1345 = vmatprep.subr.bf16.mxu0 0
    %1346 = vmatpush2.bf16.msra.mxu0 0
    %1347 = vmatprep.subr.bf16.mxu0 0
    %1348 = vmatpush2.bf16.msra.mxu0 0
    %1349 = vmatprep.subr.bf16.mxu0 0
    %1350 = vmatpush2.bf16.msra.mxu0 0
    %1351 = vmatprep.subr.bf16.mxu0 0
    %1352 = vmatpush2.bf16.msra.mxu0 0
    %1353 = vmatprep.subr.bf16.mxu0 0
    %1354 = vmatpush2.bf16.msra.mxu0 0
    %1355 = vmatprep.mubr.bf16.mxu0 0
    %1356 = vmatmul.mubr.bf16.gmra.mxu0 %v1121
    %v1357 = vpop.f32.mrf.mxu0
    %v1358 = vadd.f32 0.0, %v1357
    %v1359 = vpop.f32.mrf.mxu0
    %v1360 = vadd.f32 0.0, %v1359
    %v1361 = vpop.f32.mrf.mxu0
    %v1362 = vpop.f32.mrf.mxu0
    %1363 = vdwg.mxu0
    %v1364 = vadd.f32 %v1042, %v1317
    %v1365 = vadd.f32 %v1044, %v1319
    %v1366 = vadd.f32 %v1083, %v1358
    %v1367 = vadd.f32 %v1085, %v1360
    %v1368 = vxor.u32 %v1364, 2147483648
    %v1369 = vmul.f32 %v1368, 1.442695
    %v1370 = vpow.pop %v1369
    %v1371 = vadd.f32 %v1370, 1.0
    %v1372 = vrcp.pop %v1371
    %v1373 = vmul.f32 1.0, %v1372
    %v1374 = vxor.u32 %v1365, 2147483648
    %v1375 = vmul.f32 %v1374, 1.442695
    %v1376 = vpow.pop %v1375
    %v1377 = vadd.f32 %v1376, 1.0
    %v1378 = vrcp.pop %v1377
    %v1379 = vmul.f32 1.0, %v1378
    %v1380 = vtanh.pop %v1366
    %v1381 = vxor.u32 %v1367, 2147483648
    %v1382 = vmul.f32 %v1381, 1.442695
    %v1383 = vpow.pop %v1382
    %v1384 = vadd.f32 %v1383, 1.0
    %v1385 = vrcp.pop %v1384
    %v1386 = vmul.f32 1.0, %v1385
    %v1387 = vmul.f32 %v1379, %v791
    %v1388 = vmul.f32 %v1373, %v1380
    %v1389 = vadd.f32 %v1387, %v1388
    %v1390 = vtanh.pop %v1389
    %v1391 = vmul.f32 %v1386, %v1390
    %v1392 = vpack.c.bf16 %v1391, %v1391
    %1393 = vst [vmem:[#allocation6] sm:$0xf] %v1392
    %s1394 = scalar_lea.vmem [#allocation7], 16
    %v1395 = vld [vmem:[%s1394] sm:$0xff]
    %v1396 = vld [vmem:[%s1394 + $0x8] sm:$0xff]
    %v1397 = vunpack.c.l.bf16 %v1395
    %v1398 = vunpack.c.h.bf16 %v1395
    %v1399 = vunpack.c.l.bf16 %v1396
    %v1400 = vunpack.c.h.bf16 %v1396
    %v1401 = vld [vmem:[#allocation8] sm:$0xff]
    %v1402 = vld [vmem:[#allocation8 + $0x8] sm:$0xff]
    %v1403 = vld [vmem:[#allocation8 + $0x10] sm:$0xff]
    %v1404 = vld [vmem:[#allocation8 + $0x18] sm:$0xff]
    %v1405 = vld [vmem:[#allocation8 + $0x20] sm:$0xff]
    %v1406 = vld [vmem:[#allocation8 + $0x28] sm:$0xff]
    %v1407 = vld [vmem:[#allocation8 + $0x30] sm:$0xff]
    %v1408 = vld [vmem:[#allocation8 + $0x38] sm:$0xff]
    %v1409 = vld [vmem:[#allocation8 + $0x40] sm:$0xff]
    %v1410 = vld [vmem:[#allocation8 + $0x48] sm:$0xff]
    %v1411 = vld [vmem:[#allocation8 + $0x50] sm:$0xff]
    %v1412 = vld [vmem:[#allocation8 + $0x58] sm:$0xff]
    %v1413 = vld [vmem:[#allocation8 + $0x60] sm:$0xff]
    %v1414 = vld [vmem:[#allocation8 + $0x68] sm:$0xff]
    %v1415 = vld [vmem:[#allocation8 + $0x70] sm:$0xff]
    %v1416 = vld [vmem:[#allocation8 + $0x78] sm:$0xff]
    %v1417 = vld [vmem:[#allocation8 + $0x80] sm:$0xff]
    %v1418 = vld [vmem:[#allocation8 + $0x88] sm:$0xff]
    %v1419 = vld [vmem:[#allocation8 + $0x90] sm:$0xff]
    %v1420 = vld [vmem:[#allocation8 + $0x98] sm:$0xff]
    %v1421 = vld [vmem:[#allocation8 + $0xa0] sm:$0xff]
    %v1422 = vld [vmem:[#allocation8 + $0xa8] sm:$0xff]
    %v1423 = vld [vmem:[#allocation8 + $0xb0] sm:$0xff]
    %v1424 = vld [vmem:[#allocation8 + $0xb8] sm:$0xff]
    %v1425 = vld [vmem:[#allocation8 + $0xc0] sm:$0xff]
    %v1426 = vld [vmem:[#allocation8 + $0xc8] sm:$0xff]
    %v1427 = vld [vmem:[#allocation8 + $0xd0] sm:$0xff]
    %v1428 = vld [vmem:[#allocation8 + $0xd8] sm:$0xff]
    %v1429 = vld [vmem:[#allocation8 + $0xe0] sm:$0xff]
    %v1430 = vld [vmem:[#allocation8 + $0xe8] sm:$0xff]
    %v1431 = vld [vmem:[#allocation8 + $0xf0] sm:$0xff]
    %v1432 = vld [vmem:[#allocation8 + $0xf8] sm:$0xff]
    %v1465 = vunpack.c.l.b16 %v1401
    %v1466 = vunpack.c.h.b16 %v1401
    %v1467 = vunpack.c.l.b16 %v1402
    %v1468 = vunpack.c.h.b16 %v1402
    %v1469 = vunpack.c.l.b16 %v1403
    %v1470 = vunpack.c.h.b16 %v1403
    %v1471 = vunpack.c.l.b16 %v1404
    %v1472 = vunpack.c.h.b16 %v1404
    %v1473 = vunpack.c.l.b16 %v1405
    %v1474 = vunpack.c.h.b16 %v1405
    %v1475 = vunpack.c.l.b16 %v1406
    %v1476 = vunpack.c.h.b16 %v1406
    %v1477 = vunpack.c.l.b16 %v1407
    %v1478 = vunpack.c.h.b16 %v1407
    %v1479 = vunpack.c.l.b16 %v1408
    %v1480 = vunpack.c.h.b16 %v1408
    %v1481 = vunpack.c.l.b16 %v1409
    %v1482 = vunpack.c.h.b16 %v1409
    %v1483 = vunpack.c.l.b16 %v1410
    %v1484 = vunpack.c.h.b16 %v1410
    %v1485 = vunpack.c.l.b16 %v1411
    %v1486 = vunpack.c.h.b16 %v1411
    %v1487 = vunpack.c.l.b16 %v1412
    %v1488 = vunpack.c.h.b16 %v1412
    %v1489 = vunpack.c.l.b16 %v1413
    %v1490 = vunpack.c.h.b16 %v1413
    %v1491 = vunpack.c.l.b16 %v1414
    %v1492 = vunpack.c.h.b16 %v1414
    %v1493 = vunpack.c.l.b16 %v1415
    %v1494 = vunpack.c.h.b16 %v1415
    %v1495 = vunpack.c.l.b16 %v1416
    %v1496 = vunpack.c.h.b16 %v1416
    %v1497 = vunpack.c.l.b16 %v1417
    %v1498 = vunpack.c.h.b16 %v1417
    %v1499 = vunpack.c.l.b16 %v1418
    %v1500 = vunpack.c.h.b16 %v1418
    %v1501 = vunpack.c.l.b16 %v1419
    %v1502 = vunpack.c.h.b16 %v1419
    %v1503 = vunpack.c.l.b16 %v1420
    %v1504 = vunpack.c.h.b16 %v1420
    %v1505 = vunpack.c.l.b16 %v1421
    %v1506 = vunpack.c.h.b16 %v1421
    %v1507 = vunpack.c.l.b16 %v1422
    %v1508 = vunpack.c.h.b16 %v1422
    %v1509 = vunpack.c.l.b16 %v1423
    %v1510 = vunpack.c.h.b16 %v1423
    %v1511 = vunpack.c.l.b16 %v1424
    %v1512 = vunpack.c.h.b16 %v1424
    %v1513 = vunpack.c.l.b16 %v1425
    %v1514 = vunpack.c.h.b16 %v1425
    %v1515 = vunpack.c.l.b16 %v1426
    %v1516 = vunpack.c.h.b16 %v1426
    %v1517 = vunpack.c.l.b16 %v1427
    %v1518 = vunpack.c.h.b16 %v1427
    %v1519 = vunpack.c.l.b16 %v1428
    %v1520 = vunpack.c.h.b16 %v1428
    %v1521 = vunpack.c.l.b16 %v1429
    %v1522 = vunpack.c.h.b16 %v1429
    %v1523 = vunpack.c.l.b16 %v1430
    %v1524 = vunpack.c.h.b16 %v1430
    %v1525 = vunpack.c.l.b16 %v1431
    %v1526 = vunpack.c.h.b16 %v1431
    %v1527 = vunpack.c.l.b16 %v1432
    %v1528 = vunpack.c.h.b16 %v1432
    %v1529 = vpack.c.b16 %v1469, %v1465
    %v1530 = vpack.c.b16 %v1470, %v1466
    %v1531 = vpack.c.b16 %v1471, %v1467
    %v1532 = vpack.c.b16 %v1472, %v1468
    %v1533 = vpack.c.b16 %v1477, %v1473
    %v1534 = vpack.c.b16 %v1478, %v1474
    %v1535 = vpack.c.b16 %v1479, %v1475
    %v1536 = vpack.c.b16 %v1480, %v1476
    %v1537 = vpack.c.b16 %v1485, %v1481
    %v1538 = vpack.c.b16 %v1486, %v1482
    %v1539 = vpack.c.b16 %v1487, %v1483
    %v1540 = vpack.c.b16 %v1488, %v1484
    %v1541 = vpack.c.b16 %v1493, %v1489
    %v1542 = vpack.c.b16 %v1494, %v1490
    %v1543 = vpack.c.b16 %v1495, %v1491
    %v1544 = vpack.c.b16 %v1496, %v1492
    %v1545 = vpack.c.b16 %v1501, %v1497
    %v1546 = vpack.c.b16 %v1502, %v1498
    %v1547 = vpack.c.b16 %v1503, %v1499
    %v1548 = vpack.c.b16 %v1504, %v1500
    %v1549 = vpack.c.b16 %v1509, %v1505
    %v1550 = vpack.c.b16 %v1510, %v1506
    %v1551 = vpack.c.b16 %v1511, %v1507
    %v1552 = vpack.c.b16 %v1512, %v1508
    %v1553 = vpack.c.b16 %v1517, %v1513
    %v1554 = vpack.c.b16 %v1518, %v1514
    %v1555 = vpack.c.b16 %v1519, %v1515
    %v1556 = vpack.c.b16 %v1520, %v1516
    %v1557 = vpack.c.b16 %v1525, %v1521
    %v1558 = vpack.c.b16 %v1526, %v1522
    %v1559 = vpack.c.b16 %v1527, %v1523
    %v1560 = vpack.c.b16 %v1528, %v1524
    %1593 = vmatprep.subr.bf16.mxu0 %v1558
    %1594 = vmatpush1.bf16.msra.mxu0 %v1557
    %1595 = vmatprep.subr.bf16.mxu0 %v1554
    %1596 = vmatpush1.bf16.msra.mxu0 %v1553
    %1597 = vmatprep.subr.bf16.mxu0 %v1550
    %1598 = vmatpush1.bf16.msra.mxu0 %v1549
    %1599 = vmatprep.subr.bf16.mxu0 %v1546
    %1600 = vmatpush1.bf16.msra.mxu0 %v1545
    %1601 = vmatprep.subr.bf16.mxu0 %v1542
    %1602 = vmatpush1.bf16.msra.mxu0 %v1541
    %1603 = vmatprep.subr.bf16.mxu0 %v1538
    %1604 = vmatpush1.bf16.msra.mxu0 %v1537
    %1605 = vmatprep.subr.bf16.mxu0 %v1534
    %1606 = vmatpush1.bf16.msra.mxu0 %v1533
    %1607 = vmatprep.subr.bf16.mxu0 %v1530
    %1608 = vmatpush1.bf16.msra.mxu0 %v1529
    %1609 = vmatprep.subr.bf16.mxu0 0
    %1610 = vmatpush2.bf16.msra.mxu0 0
    %1611 = vmatprep.subr.bf16.mxu0 0
    %1612 = vmatpush2.bf16.msra.mxu0 0
    %1613 = vmatprep.subr.bf16.mxu0 0
    %1614 = vmatpush2.bf16.msra.mxu0 0
    %1615 = vmatprep.subr.bf16.mxu0 0
    %1616 = vmatpush2.bf16.msra.mxu0 0
    %1617 = vmatprep.subr.bf16.mxu0 0
    %1618 = vmatpush2.bf16.msra.mxu0 0
    %1619 = vmatprep.subr.bf16.mxu0 0
    %1620 = vmatpush2.bf16.msra.mxu0 0
    %1621 = vmatprep.subr.bf16.mxu0 0
    %1622 = vmatpush2.bf16.msra.mxu0 0
    %1623 = vmatprep.subr.bf16.mxu0 0
    %1624 = vmatpush2.bf16.msra.mxu0 0
    %1625 = vmatprep.mubr.bf16.mxu0 0
    %1626 = vmatmul.mubr.bf16.gmra.mxu0 %v824
    %v1627 = vpop.f32.mrf.mxu0
    %v1628 = vadd.f32 0.0, %v1627
    %v1629 = vpop.f32.mrf.mxu0
    %v1630 = vadd.f32 0.0, %v1629
    %v1631 = vpop.f32.mrf.mxu0
    %v1632 = vpop.f32.mrf.mxu0
    %1633 = vdwg.mxu0
    %1634 = vmatprep.subr.bf16.mxu0 %v1560
    %1635 = vmatpush1.bf16.msra.mxu0 %v1559
    %1636 = vmatprep.subr.bf16.mxu0 %v1556
    %1637 = vmatpush1.bf16.msra.mxu0 %v1555
    %1638 = vmatprep.subr.bf16.mxu0 %v1552
    %1639 = vmatpush1.bf16.msra.mxu0 %v1551
    %1640 = vmatprep.subr.bf16.mxu0 %v1548
    %1641 = vmatpush1.bf16.msra.mxu0 %v1547
    %1642 = vmatprep.subr.bf16.mxu0 %v1544
    %1643 = vmatpush1.bf16.msra.mxu0 %v1543
    %1644 = vmatprep.subr.bf16.mxu0 %v1540
    %1645 = vmatpush1.bf16.msra.mxu0 %v1539
    %1646 = vmatprep.subr.bf16.mxu0 %v1536
    %1647 = vmatpush1.bf16.msra.mxu0 %v1535
    %1648 = vmatprep.subr.bf16.mxu0 %v1532
    %1649 = vmatpush1.bf16.msra.mxu0 %v1531
    %1650 = vmatprep.subr.bf16.mxu0 0
    %1651 = vmatpush2.bf16.msra.mxu0 0
    %1652 = vmatprep.subr.bf16.mxu0 0
    %1653 = vmatpush2.bf16.msra.mxu0 0
    %1654 = vmatprep.subr.bf16.mxu0 0
    %1655 = vmatpush2.bf16.msra.mxu0 0
    %1656 = vmatprep.subr.bf16.mxu0 0
    %1657 = vmatpush2.bf16.msra.mxu0 0
    %1658 = vmatprep.subr.bf16.mxu0 0
    %1659 = vmatpush2.bf16.msra.mxu0 0
    %1660 = vmatprep.subr.bf16.mxu0 0
    %1661 = vmatpush2.bf16.msra.mxu0 0
    %1662 = vmatprep.subr.bf16.mxu0 0
    %1663 = vmatpush2.bf16.msra.mxu0 0
    %1664 = vmatprep.subr.bf16.mxu0 0
    %1665 = vmatpush2.bf16.msra.mxu0 0
    %1666 = vmatprep.mubr.bf16.mxu0 0
    %1667 = vmatmul.mubr.bf16.gmra.mxu0 %v824
    %v1668 = vpop.f32.mrf.mxu0
    %v1669 = vadd.f32 0.0, %v1668
    %v1670 = vpop.f32.mrf.mxu0
    %v1671 = vadd.f32 0.0, %v1670
    %v1672 = vpop.f32.mrf.mxu0
    %v1673 = vpop.f32.mrf.mxu0
    %1674 = vdwg.mxu0
    %v1675 = vadd.f32 %v1397, %v1628
    %v1676 = vadd.f32 %v1398, %v1630
    %v1677 = vadd.f32 %v1399, %v1669
    %v1678 = vadd.f32 %v1400, %v1671
    %v1679 = vxor.u32 %v1675, 2147483648
    %v1680 = vmul.f32 %v1679, 1.442695
    %v1681 = vpow.pop %v1680
    %v1682 = vadd.f32 %v1681, 1.0
    %v1683 = vrcp.pop %v1682
    %v1684 = vmul.f32 1.0, %v1683
    %v1685 = vxor.u32 %v1676, 2147483648
    %v1686 = vmul.f32 %v1685, 1.442695
    %v1687 = vpow.pop %v1686
    %v1688 = vadd.f32 %v1687, 1.0
    %v1689 = vrcp.pop %v1688
    %v1690 = vmul.f32 1.0, %v1689
    %v1691 = vtanh.pop %v1677
    %v1692 = vxor.u32 %v1678, 2147483648
    %v1693 = vmul.f32 %v1692, 1.442695
    %v1694 = vpow.pop %v1693
    %v1695 = vadd.f32 %v1694, 1.0
    %v1696 = vrcp.pop %v1695
    %v1697 = vmul.f32 1.0, %v1696
    %v1698 = vmul.f32 %v1690, %v787
    %v1699 = vmul.f32 %v1684, %v1691
    %v1700 = vadd.f32 %v1698, %v1699
    %v1701 = vtanh.pop %v1700
    %v1702 = vmul.f32 %v1697, %v1701
    %v1703 = vld [vmem:[#allocation10] sm:$0xff]
    %v1704 = vld [vmem:[#allocation10 + $0x8] sm:$0xff]
    %v1705 = vld [vmem:[#allocation10 + $0x10] sm:$0xff]
    %v1706 = vld [vmem:[#allocation10 + $0x18] sm:$0xff]
    %v1707 = vld [vmem:[#allocation10 + $0x20] sm:$0xff]
    %v1708 = vld [vmem:[#allocation10 + $0x28] sm:$0xff]
    %v1709 = vld [vmem:[#allocation10 + $0x30] sm:$0xff]
    %v1710 = vld [vmem:[#allocation10 + $0x38] sm:$0xff]
    %v1711 = vld [vmem:[#allocation10 + $0x40] sm:$0xff]
    %v1712 = vld [vmem:[#allocation10 + $0x48] sm:$0xff]
    %v1713 = vld [vmem:[#allocation10 + $0x50] sm:$0xff]
    %v1714 = vld [vmem:[#allocation10 + $0x58] sm:$0xff]
    %v1715 = vld [vmem:[#allocation10 + $0x60] sm:$0xff]
    %v1716 = vld [vmem:[#allocation10 + $0x68] sm:$0xff]
    %v1717 = vld [vmem:[#allocation10 + $0x70] sm:$0xff]
    %v1718 = vld [vmem:[#allocation10 + $0x78] sm:$0xff]
    %v1719 = vld [vmem:[#allocation10 + $0x80] sm:$0xff]
    %v1720 = vld [vmem:[#allocation10 + $0x88] sm:$0xff]
    %v1721 = vld [vmem:[#allocation10 + $0x90] sm:$0xff]
    %v1722 = vld [vmem:[#allocation10 + $0x98] sm:$0xff]
    %v1723 = vld [vmem:[#allocation10 + $0xa0] sm:$0xff]
    %v1724 = vld [vmem:[#allocation10 + $0xa8] sm:$0xff]
    %v1725 = vld [vmem:[#allocation10 + $0xb0] sm:$0xff]
    %v1726 = vld [vmem:[#allocation10 + $0xb8] sm:$0xff]
    %v1727 = vld [vmem:[#allocation10 + $0xc0] sm:$0xff]
    %v1728 = vld [vmem:[#allocation10 + $0xc8] sm:$0xff]
    %v1729 = vld [vmem:[#allocation10 + $0xd0] sm:$0xff]
    %v1730 = vld [vmem:[#allocation10 + $0xd8] sm:$0xff]
    %v1731 = vld [vmem:[#allocation10 + $0xe0] sm:$0xff]
    %v1732 = vld [vmem:[#allocation10 + $0xe8] sm:$0xff]
    %v1733 = vld [vmem:[#allocation10 + $0xf0] sm:$0xff]
    %v1734 = vld [vmem:[#allocation10 + $0xf8] sm:$0xff]
    %v1735 = vpack.c.bf16 %v1702, %v1702
    %v1736 = vld [vmem:[%s6] sm:$0xf]
    %v1738 = vlaneseq
    %v1739 = vshrl.u32 %v1738, 7
    %v1740 = vsub.s32 0, %v1739
    %v1741 = vrot.slane %v1736, %v1740
    %v1742 = vlaneseq
    %v1743 = vshrl.u32 %v1742, 7
    %v1744 = vsub.s32 1, %v1743
    %v1745 = vrot.slane %v1736, %v1744
    %v1746 = vlaneseq
    %v1747 = vshrl.u32 %v1746, 7
    %v1748 = vsub.s32 2, %v1747
    %v1749 = vrot.slane %v1736, %v1748
    %v1750 = vlaneseq
    %v1751 = vshrl.u32 %v1750, 7
    %v1752 = vsub.s32 3, %v1751
    %v1753 = vrot.slane %v1736, %v1752
    %v1790 = vunpack.c.l.b16 %v1703
    %v1791 = vunpack.c.h.b16 %v1703
    %v1792 = vunpack.c.l.b16 %v1704
    %v1793 = vunpack.c.h.b16 %v1704
    %v1794 = vunpack.c.l.b16 %v1705
    %v1795 = vunpack.c.h.b16 %v1705
    %v1796 = vunpack.c.l.b16 %v1706
    %v1797 = vunpack.c.h.b16 %v1706
    %v1798 = vunpack.c.l.b16 %v1707
    %v1799 = vunpack.c.h.b16 %v1707
    %v1800 = vunpack.c.l.b16 %v1708
    %v1801 = vunpack.c.h.b16 %v1708
    %v1802 = vunpack.c.l.b16 %v1709
    %v1803 = vunpack.c.h.b16 %v1709
    %v1804 = vunpack.c.l.b16 %v1710
    %v1805 = vunpack.c.h.b16 %v1710
    %v1806 = vunpack.c.l.b16 %v1711
    %v1807 = vunpack.c.h.b16 %v1711
    %v1808 = vunpack.c.l.b16 %v1712
    %v1809 = vunpack.c.h.b16 %v1712
    %v1810 = vunpack.c.l.b16 %v1713
    %v1811 = vunpack.c.h.b16 %v1713
    %v1812 = vunpack.c.l.b16 %v1714
    %v1813 = vunpack.c.h.b16 %v1714
    %v1814 = vunpack.c.l.b16 %v1715
    %v1815 = vunpack.c.h.b16 %v1715
    %v1816 = vunpack.c.l.b16 %v1716
    %v1817 = vunpack.c.h.b16 %v1716
    %v1818 = vunpack.c.l.b16 %v1717
    %v1819 = vunpack.c.h.b16 %v1717
    %v1820 = vunpack.c.l.b16 %v1718
    %v1821 = vunpack.c.h.b16 %v1718
    %v1822 = vunpack.c.l.b16 %v1719
    %v1823 = vunpack.c.h.b16 %v1719
    %v1824 = vunpack.c.l.b16 %v1720
    %v1825 = vunpack.c.h.b16 %v1720
    %v1826 = vunpack.c.l.b16 %v1721
    %v1827 = vunpack.c.h.b16 %v1721
    %v1828 = vunpack.c.l.b16 %v1722
    %v1829 = vunpack.c.h.b16 %v1722
    %v1830 = vunpack.c.l.b16 %v1723
    %v1831 = vunpack.c.h.b16 %v1723
    %v1832 = vunpack.c.l.b16 %v1724
    %v1833 = vunpack.c.h.b16 %v1724
    %v1834 = vunpack.c.l.b16 %v1725
    %v1835 = vunpack.c.h.b16 %v1725
    %v1836 = vunpack.c.l.b16 %v1726
    %v1837 = vunpack.c.h.b16 %v1726
    %v1838 = vunpack.c.l.b16 %v1727
    %v1839 = vunpack.c.h.b16 %v1727
    %v1840 = vunpack.c.l.b16 %v1728
    %v1841 = vunpack.c.h.b16 %v1728
    %v1842 = vunpack.c.l.b16 %v1729
    %v1843 = vunpack.c.h.b16 %v1729
    %v1844 = vunpack.c.l.b16 %v1730
    %v1845 = vunpack.c.h.b16 %v1730
    %v1846 = vunpack.c.l.b16 %v1731
    %v1847 = vunpack.c.h.b16 %v1731
    %v1848 = vunpack.c.l.b16 %v1732
    %v1849 = vunpack.c.h.b16 %v1732
    %v1850 = vunpack.c.l.b16 %v1733
    %v1851 = vunpack.c.h.b16 %v1733
    %v1852 = vunpack.c.l.b16 %v1734
    %v1853 = vunpack.c.h.b16 %v1734
    %v1854 = vpack.c.b16 %v1794, %v1790
    %v1855 = vpack.c.b16 %v1795, %v1791
    %v1856 = vpack.c.b16 %v1796, %v1792
    %v1857 = vpack.c.b16 %v1797, %v1793
    %v1858 = vpack.c.b16 %v1802, %v1798
    %v1859 = vpack.c.b16 %v1803, %v1799
    %v1860 = vpack.c.b16 %v1804, %v1800
    %v1861 = vpack.c.b16 %v1805, %v1801
    %v1862 = vpack.c.b16 %v1810, %v1806
    %v1863 = vpack.c.b16 %v1811, %v1807
    %v1864 = vpack.c.b16 %v1812, %v1808
    %v1865 = vpack.c.b16 %v1813, %v1809
    %v1866 = vpack.c.b16 %v1818, %v1814
    %v1867 = vpack.c.b16 %v1819, %v1815
    %v1868 = vpack.c.b16 %v1820, %v1816
    %v1869 = vpack.c.b16 %v1821, %v1817
    %v1870 = vpack.c.b16 %v1826, %v1822
    %v1871 = vpack.c.b16 %v1827, %v1823
    %v1872 = vpack.c.b16 %v1828, %v1824
    %v1873 = vpack.c.b16 %v1829, %v1825
    %v1874 = vpack.c.b16 %v1834, %v1830
    %v1875 = vpack.c.b16 %v1835, %v1831
    %v1876 = vpack.c.b16 %v1836, %v1832
    %v1877 = vpack.c.b16 %v1837, %v1833
    %v1878 = vpack.c.b16 %v1842, %v1838
    %v1879 = vpack.c.b16 %v1843, %v1839
    %v1880 = vpack.c.b16 %v1844, %v1840
    %v1881 = vpack.c.b16 %v1845, %v1841
    %v1882 = vpack.c.b16 %v1850, %v1846
    %v1883 = vpack.c.b16 %v1851, %v1847
    %v1884 = vpack.c.b16 %v1852, %v1848
    %v1885 = vpack.c.b16 %v1853, %v1849
    %1918 = vmatprep.subr.bf16.mxu0 %v1883
    %1919 = vmatpush1.bf16.msra.mxu0 %v1882
    %1920 = vmatprep.subr.bf16.mxu0 %v1879
    %1921 = vmatpush1.bf16.msra.mxu0 %v1878
    %1922 = vmatprep.subr.bf16.mxu0 %v1875
    %1923 = vmatpush1.bf16.msra.mxu0 %v1874
    %1924 = vmatprep.subr.bf16.mxu0 %v1871
    %1925 = vmatpush1.bf16.msra.mxu0 %v1870
    %1926 = vmatprep.subr.bf16.mxu0 %v1867
    %1927 = vmatpush1.bf16.msra.mxu0 %v1866
    %1928 = vmatprep.subr.bf16.mxu0 %v1863
    %1929 = vmatpush1.bf16.msra.mxu0 %v1862
    %1930 = vmatprep.subr.bf16.mxu0 %v1859
    %1931 = vmatpush1.bf16.msra.mxu0 %v1858
    %1932 = vmatprep.subr.bf16.mxu0 %v1855
    %1933 = vmatpush1.bf16.msra.mxu0 %v1854
    %1934 = vmatprep.subr.bf16.mxu0 0
    %1935 = vmatpush2.bf16.msra.mxu0 0
    %1936 = vmatprep.subr.bf16.mxu0 0
    %1937 = vmatpush2.bf16.msra.mxu0 0
    %1938 = vmatprep.subr.bf16.mxu0 0
    %1939 = vmatpush2.bf16.msra.mxu0 0
    %1940 = vmatprep.subr.bf16.mxu0 0
    %1941 = vmatpush2.bf16.msra.mxu0 0
    %1942 = vmatprep.subr.bf16.mxu0 0
    %1943 = vmatpush2.bf16.msra.mxu0 0
    %1944 = vmatprep.subr.bf16.mxu0 0
    %1945 = vmatpush2.bf16.msra.mxu0 0
    %1946 = vmatprep.subr.bf16.mxu0 0
    %1947 = vmatpush2.bf16.msra.mxu0 0
    %1948 = vmatprep.subr.bf16.mxu0 0
    %1949 = vmatpush2.bf16.msra.mxu0 0
    %1950 = vmatprep.mubr.bf16.mxu0 0
    %1951 = vmatmul.mubr.bf16.gmra.mxu0 %v1735
    %v1952 = vpop.f32.mrf.mxu0
    %v1953 = vadd.f32 %v1741, %v1952
    %v1954 = vpop.f32.mrf.mxu0
    %v1955 = vadd.f32 %v1745, %v1954
    %v1956 = vpop.f32.mrf.mxu0
    %v1957 = vpop.f32.mrf.mxu0
    %1958 = vdwg.mxu0
    %1959 = vmatprep.subr.bf16.mxu0 %v1885
    %1960 = vmatpush1.bf16.msra.mxu0 %v1884
    %1961 = vmatprep.subr.bf16.mxu0 %v1881
    %1962 = vmatpush1.bf16.msra.mxu0 %v1880
    %1963 = vmatprep.subr.bf16.mxu0 %v1877
    %1964 = vmatpush1.bf16.msra.mxu0 %v1876
    %1965 = vmatprep.subr.bf16.mxu0 %v1873
    %1966 = vmatpush1.bf16.msra.mxu0 %v1872
    %1967 = vmatprep.subr.bf16.mxu0 %v1869
    %1968 = vmatpush1.bf16.msra.mxu0 %v1868
    %1969 = vmatprep.subr.bf16.mxu0 %v1865
    %1970 = vmatpush1.bf16.msra.mxu0 %v1864
    %1971 = vmatprep.subr.bf16.mxu0 %v1861
    %1972 = vmatpush1.bf16.msra.mxu0 %v1860
    %1973 = vmatprep.subr.bf16.mxu0 %v1857
    %1974 = vmatpush1.bf16.msra.mxu0 %v1856
    %1975 = vmatprep.subr.bf16.mxu0 0
    %1976 = vmatpush2.bf16.msra.mxu0 0
    %1977 = vmatprep.subr.bf16.mxu0 0
    %1978 = vmatpush2.bf16.msra.mxu0 0
    %1979 = vmatprep.subr.bf16.mxu0 0
    %1980 = vmatpush2.bf16.msra.mxu0 0
    %1981 = vmatprep.subr.bf16.mxu0 0
    %1982 = vmatpush2.bf16.msra.mxu0 0
    %1983 = vmatprep.subr.bf16.mxu0 0
    %1984 = vmatpush2.bf16.msra.mxu0 0
    %1985 = vmatprep.subr.bf16.mxu0 0
    %1986 = vmatpush2.bf16.msra.mxu0 0
    %1987 = vmatprep.subr.bf16.mxu0 0
    %1988 = vmatpush2.bf16.msra.mxu0 0
    %1989 = vmatprep.subr.bf16.mxu0 0
    %1990 = vmatpush2.bf16.msra.mxu0 0
    %1991 = vmatprep.mubr.bf16.mxu0 0
    %1992 = vmatmul.mubr.bf16.gmra.mxu0 %v1735
    %v1993 = vpop.f32.mrf.mxu0
    %v1994 = vadd.f32 %v1749, %v1993
    %v1995 = vpop.f32.mrf.mxu0
    %v1996 = vadd.f32 %v1753, %v1995
    %v1997 = vpop.f32.mrf.mxu0
    %v1998 = vpop.f32.mrf.mxu0
    %1999 = vdwg.mxu0
    %v2000 = vld [vmem:[#allocation12] sm:$0xff]
    %v2001 = vld [vmem:[#allocation12 + $0x8] sm:$0xff]
    %v2002 = vld [vmem:[#allocation12 + $0x10] sm:$0xff]
    %v2003 = vld [vmem:[#allocation12 + $0x18] sm:$0xff]
    %v2004 = vld [vmem:[#allocation12 + $0x20] sm:$0xff]
    %v2005 = vld [vmem:[#allocation12 + $0x28] sm:$0xff]
    %v2006 = vld [vmem:[#allocation12 + $0x30] sm:$0xff]
    %v2007 = vld [vmem:[#allocation12 + $0x38] sm:$0xff]
    %v2008 = vld [vmem:[#allocation12 + $0x40] sm:$0xff]
    %v2009 = vld [vmem:[#allocation12 + $0x48] sm:$0xff]
    %v2010 = vld [vmem:[#allocation12 + $0x50] sm:$0xff]
    %v2011 = vld [vmem:[#allocation12 + $0x58] sm:$0xff]
    %v2012 = vld [vmem:[#allocation12 + $0x60] sm:$0xff]
    %v2013 = vld [vmem:[#allocation12 + $0x68] sm:$0xff]
    %v2014 = vld [vmem:[#allocation12 + $0x70] sm:$0xff]
    %v2015 = vld [vmem:[#allocation12 + $0x78] sm:$0xff]
    %v2016 = vld [vmem:[#allocation12 + $0x80] sm:$0xff]
    %v2017 = vld [vmem:[#allocation12 + $0x88] sm:$0xff]
    %v2018 = vld [vmem:[#allocation12 + $0x90] sm:$0xff]
    %v2019 = vld [vmem:[#allocation12 + $0x98] sm:$0xff]
    %v2020 = vld [vmem:[#allocation12 + $0xa0] sm:$0xff]
    %v2021 = vld [vmem:[#allocation12 + $0xa8] sm:$0xff]
    %v2022 = vld [vmem:[#allocation12 + $0xb0] sm:$0xff]
    %v2023 = vld [vmem:[#allocation12 + $0xb8] sm:$0xff]
    %v2024 = vld [vmem:[#allocation12 + $0xc0] sm:$0xff]
    %v2025 = vld [vmem:[#allocation12 + $0xc8] sm:$0xff]
    %v2026 = vld [vmem:[#allocation12 + $0xd0] sm:$0xff]
    %v2027 = vld [vmem:[#allocation12 + $0xd8] sm:$0xff]
    %v2028 = vld [vmem:[#allocation12 + $0xe0] sm:$0xff]
    %v2029 = vld [vmem:[#allocation12 + $0xe8] sm:$0xff]
    %v2030 = vld [vmem:[#allocation12 + $0xf0] sm:$0xff]
    %v2031 = vld [vmem:[#allocation12 + $0xf8] sm:$0xff]
    %v2064 = vunpack.c.l.b16 %v2000
    %v2065 = vunpack.c.h.b16 %v2000
    %v2066 = vunpack.c.l.b16 %v2001
    %v2067 = vunpack.c.h.b16 %v2001
    %v2068 = vunpack.c.l.b16 %v2002
    %v2069 = vunpack.c.h.b16 %v2002
    %v2070 = vunpack.c.l.b16 %v2003
    %v2071 = vunpack.c.h.b16 %v2003
    %v2072 = vunpack.c.l.b16 %v2004
    %v2073 = vunpack.c.h.b16 %v2004
    %v2074 = vunpack.c.l.b16 %v2005
    %v2075 = vunpack.c.h.b16 %v2005
    %v2076 = vunpack.c.l.b16 %v2006
    %v2077 = vunpack.c.h.b16 %v2006
    %v2078 = vunpack.c.l.b16 %v2007
    %v2079 = vunpack.c.h.b16 %v2007
    %v2080 = vunpack.c.l.b16 %v2008
    %v2081 = vunpack.c.h.b16 %v2008
    %v2082 = vunpack.c.l.b16 %v2009
    %v2083 = vunpack.c.h.b16 %v2009
    %v2084 = vunpack.c.l.b16 %v2010
    %v2085 = vunpack.c.h.b16 %v2010
    %v2086 = vunpack.c.l.b16 %v2011
    %v2087 = vunpack.c.h.b16 %v2011
    %v2088 = vunpack.c.l.b16 %v2012
    %v2089 = vunpack.c.h.b16 %v2012
    %v2090 = vunpack.c.l.b16 %v2013
    %v2091 = vunpack.c.h.b16 %v2013
    %v2092 = vunpack.c.l.b16 %v2014
    %v2093 = vunpack.c.h.b16 %v2014
    %v2094 = vunpack.c.l.b16 %v2015
    %v2095 = vunpack.c.h.b16 %v2015
    %v2096 = vunpack.c.l.b16 %v2016
    %v2097 = vunpack.c.h.b16 %v2016
    %v2098 = vunpack.c.l.b16 %v2017
    %v2099 = vunpack.c.h.b16 %v2017
    %v2100 = vunpack.c.l.b16 %v2018
    %v2101 = vunpack.c.h.b16 %v2018
    %v2102 = vunpack.c.l.b16 %v2019
    %v2103 = vunpack.c.h.b16 %v2019
    %v2104 = vunpack.c.l.b16 %v2020
    %v2105 = vunpack.c.h.b16 %v2020
    %v2106 = vunpack.c.l.b16 %v2021
    %v2107 = vunpack.c.h.b16 %v2021
    %v2108 = vunpack.c.l.b16 %v2022
    %v2109 = vunpack.c.h.b16 %v2022
    %v2110 = vunpack.c.l.b16 %v2023
    %v2111 = vunpack.c.h.b16 %v2023
    %v2112 = vunpack.c.l.b16 %v2024
    %v2113 = vunpack.c.h.b16 %v2024
    %v2114 = vunpack.c.l.b16 %v2025
    %v2115 = vunpack.c.h.b16 %v2025
    %v2116 = vunpack.c.l.b16 %v2026
    %v2117 = vunpack.c.h.b16 %v2026
    %v2118 = vunpack.c.l.b16 %v2027
    %v2119 = vunpack.c.h.b16 %v2027
    %v2120 = vunpack.c.l.b16 %v2028
    %v2121 = vunpack.c.h.b16 %v2028
    %v2122 = vunpack.c.l.b16 %v2029
    %v2123 = vunpack.c.h.b16 %v2029
    %v2124 = vunpack.c.l.b16 %v2030
    %v2125 = vunpack.c.h.b16 %v2030
    %v2126 = vunpack.c.l.b16 %v2031
    %v2127 = vunpack.c.h.b16 %v2031
    %v2128 = vpack.c.b16 %v2068, %v2064
    %v2129 = vpack.c.b16 %v2069, %v2065
    %v2130 = vpack.c.b16 %v2070, %v2066
    %v2131 = vpack.c.b16 %v2071, %v2067
    %v2132 = vpack.c.b16 %v2076, %v2072
    %v2133 = vpack.c.b16 %v2077, %v2073
    %v2134 = vpack.c.b16 %v2078, %v2074
    %v2135 = vpack.c.b16 %v2079, %v2075
    %v2136 = vpack.c.b16 %v2084, %v2080
    %v2137 = vpack.c.b16 %v2085, %v2081
    %v2138 = vpack.c.b16 %v2086, %v2082
    %v2139 = vpack.c.b16 %v2087, %v2083
    %v2140 = vpack.c.b16 %v2092, %v2088
    %v2141 = vpack.c.b16 %v2093, %v2089
    %v2142 = vpack.c.b16 %v2094, %v2090
    %v2143 = vpack.c.b16 %v2095, %v2091
    %v2144 = vpack.c.b16 %v2100, %v2096
    %v2145 = vpack.c.b16 %v2101, %v2097
    %v2146 = vpack.c.b16 %v2102, %v2098
    %v2147 = vpack.c.b16 %v2103, %v2099
    %v2148 = vpack.c.b16 %v2108, %v2104
    %v2149 = vpack.c.b16 %v2109, %v2105
    %v2150 = vpack.c.b16 %v2110, %v2106
    %v2151 = vpack.c.b16 %v2111, %v2107
    %v2152 = vpack.c.b16 %v2116, %v2112
    %v2153 = vpack.c.b16 %v2117, %v2113
    %v2154 = vpack.c.b16 %v2118, %v2114
    %v2155 = vpack.c.b16 %v2119, %v2115
    %v2156 = vpack.c.b16 %v2124, %v2120
    %v2157 = vpack.c.b16 %v2125, %v2121
    %v2158 = vpack.c.b16 %v2126, %v2122
    %v2159 = vpack.c.b16 %v2127, %v2123
    %2192 = vmatprep.subr.bf16.mxu0 %v2157
    %2193 = vmatpush1.bf16.msra.mxu0 %v2156
    %2194 = vmatprep.subr.bf16.mxu0 %v2153
    %2195 = vmatpush1.bf16.msra.mxu0 %v2152
    %2196 = vmatprep.subr.bf16.mxu0 %v2149
    %2197 = vmatpush1.bf16.msra.mxu0 %v2148
    %2198 = vmatprep.subr.bf16.mxu0 %v2145
    %2199 = vmatpush1.bf16.msra.mxu0 %v2144
    %2200 = vmatprep.subr.bf16.mxu0 %v2141
    %2201 = vmatpush1.bf16.msra.mxu0 %v2140
    %2202 = vmatprep.subr.bf16.mxu0 %v2137
    %2203 = vmatpush1.bf16.msra.mxu0 %v2136
    %2204 = vmatprep.subr.bf16.mxu0 %v2133
    %2205 = vmatpush1.bf16.msra.mxu0 %v2132
    %2206 = vmatprep.subr.bf16.mxu0 %v2129
    %2207 = vmatpush1.bf16.msra.mxu0 %v2128
    %2208 = vmatprep.subr.bf16.mxu0 0
    %2209 = vmatpush2.bf16.msra.mxu0 0
    %2210 = vmatprep.subr.bf16.mxu0 0
    %2211 = vmatpush2.bf16.msra.mxu0 0
    %2212 = vmatprep.subr.bf16.mxu0 0
    %2213 = vmatpush2.bf16.msra.mxu0 0
    %2214 = vmatprep.subr.bf16.mxu0 0
    %2215 = vmatpush2.bf16.msra.mxu0 0
    %2216 = vmatprep.subr.bf16.mxu0 0
    %2217 = vmatpush2.bf16.msra.mxu0 0
    %2218 = vmatprep.subr.bf16.mxu0 0
    %2219 = vmatpush2.bf16.msra.mxu0 0
    %2220 = vmatprep.subr.bf16.mxu0 0
    %2221 = vmatpush2.bf16.msra.mxu0 0
    %2222 = vmatprep.subr.bf16.mxu0 0
    %2223 = vmatpush2.bf16.msra.mxu0 0
    %2224 = vmatprep.mubr.bf16.mxu0 0
    %2225 = vmatmul.mubr.bf16.gmra.mxu0 %v1392
    %v2226 = vpop.f32.mrf.mxu0
    %v2227 = vadd.f32 0.0, %v2226
    %v2228 = vpop.f32.mrf.mxu0
    %v2229 = vadd.f32 0.0, %v2228
    %v2230 = vpop.f32.mrf.mxu0
    %v2231 = vpop.f32.mrf.mxu0
    %2232 = vdwg.mxu0
    %2233 = vmatprep.subr.bf16.mxu0 %v2159
    %2234 = vmatpush1.bf16.msra.mxu0 %v2158
    %2235 = vmatprep.subr.bf16.mxu0 %v2155
    %2236 = vmatpush1.bf16.msra.mxu0 %v2154
    %2237 = vmatprep.subr.bf16.mxu0 %v2151
    %2238 = vmatpush1.bf16.msra.mxu0 %v2150
    %2239 = vmatprep.subr.bf16.mxu0 %v2147
    %2240 = vmatpush1.bf16.msra.mxu0 %v2146
    %2241 = vmatprep.subr.bf16.mxu0 %v2143
    %2242 = vmatpush1.bf16.msra.mxu0 %v2142
    %2243 = vmatprep.subr.bf16.mxu0 %v2139
    %2244 = vmatpush1.bf16.msra.mxu0 %v2138
    %2245 = vmatprep.subr.bf16.mxu0 %v2135
    %2246 = vmatpush1.bf16.msra.mxu0 %v2134
    %2247 = vmatprep.subr.bf16.mxu0 %v2131
    %2248 = vmatpush1.bf16.msra.mxu0 %v2130
    %2249 = vmatprep.subr.bf16.mxu0 0
    %2250 = vmatpush2.bf16.msra.mxu0 0
    %2251 = vmatprep.subr.bf16.mxu0 0
    %2252 = vmatpush2.bf16.msra.mxu0 0
    %2253 = vmatprep.subr.bf16.mxu0 0
    %2254 = vmatpush2.bf16.msra.mxu0 0
    %2255 = vmatprep.subr.bf16.mxu0 0
    %2256 = vmatpush2.bf16.msra.mxu0 0
    %2257 = vmatprep.subr.bf16.mxu0 0
    %2258 = vmatpush2.bf16.msra.mxu0 0
    %2259 = vmatprep.subr.bf16.mxu0 0
    %2260 = vmatpush2.bf16.msra.mxu0 0
    %2261 = vmatprep.subr.bf16.mxu0 0
    %2262 = vmatpush2.bf16.msra.mxu0 0
    %2263 = vmatprep.subr.bf16.mxu0 0
    %2264 = vmatpush2.bf16.msra.mxu0 0
    %2265 = vmatprep.mubr.bf16.mxu0 0
    %2266 = vmatmul.mubr.bf16.gmra.mxu0 %v1392
    %v2267 = vpop.f32.mrf.mxu0
    %v2268 = vadd.f32 0.0, %v2267
    %v2269 = vpop.f32.mrf.mxu0
    %v2270 = vadd.f32 0.0, %v2269
    %v2271 = vpop.f32.mrf.mxu0
    %v2272 = vpop.f32.mrf.mxu0
    %2273 = vdwg.mxu0
    %v2274 = vadd.f32 %v1953, %v2227
    %v2275 = vadd.f32 %v1955, %v2229
    %v2276 = vadd.f32 %v1994, %v2268
    %v2277 = vadd.f32 %v1996, %v2270
    %v2278 = vxor.u32 %v2274, 2147483648
    %v2279 = vmul.f32 %v2278, 1.442695
    %v2280 = vpow.pop %v2279
    %v2281 = vadd.f32 %v2280, 1.0
    %v2282 = vrcp.pop %v2281
    %v2283 = vmul.f32 1.0, %v2282
    %v2284 = vxor.u32 %v2275, 2147483648
    %v2285 = vmul.f32 %v2284, 1.442695
    %v2286 = vpow.pop %v2285
    %v2287 = vadd.f32 %v2286, 1.0
    %v2288 = vrcp.pop %v2287
    %v2289 = vmul.f32 1.0, %v2288
    %v2290 = vtanh.pop %v2276
    %v2291 = vxor.u32 %v2277, 2147483648
    %v2292 = vmul.f32 %v2291, 1.442695
    %v2293 = vpow.pop %v2292
    %v2294 = vadd.f32 %v2293, 1.0
    %v2295 = vrcp.pop %v2294
    %v2296 = vmul.f32 1.0, %v2295
    %v2297 = vmul.f32 %v2289, %v1389
    %v2298 = vmul.f32 %v2283, %v2290
    %v2299 = vadd.f32 %v2297, %v2298
    %v2300 = vtanh.pop %v2299
    %v2301 = vmul.f32 %v2296, %v2300
    %v2302 = vpack.c.bf16 %v2301, %v2301
    %s2303 = scalar_lea.vmem [#allocation6], 4
    %2304 = vst [vmem:[%s2303] sm:$0xf] %v2302
    %s2305 = scalar_lea.vmem [#allocation7], 32
    %v2306 = vld [vmem:[%s2305] sm:$0xff]
    %v2307 = vld [vmem:[%s2305 + $0x8] sm:$0xff]
    %v2308 = vunpack.c.l.bf16 %v2306
    %v2309 = vunpack.c.h.bf16 %v2306
    %v2310 = vunpack.c.l.bf16 %v2307
    %v2311 = vunpack.c.h.bf16 %v2307
    %v2312 = vld [vmem:[#allocation8] sm:$0xff]
    %v2313 = vld [vmem:[#allocation8 + $0x8] sm:$0xff]
    %v2314 = vld [vmem:[#allocation8 + $0x10] sm:$0xff]
    %v2315 = vld [vmem:[#allocation8 + $0x18] sm:$0xff]
    %v2316 = vld [vmem:[#allocation8 + $0x20] sm:$0xff]
    %v2317 = vld [vmem:[#allocation8 + $0x28] sm:$0xff]
    %v2318 = vld [vmem:[#allocation8 + $0x30] sm:$0xff]
    %v2319 = vld [vmem:[#allocation8 + $0x38] sm:$0xff]
    %v2320 = vld [vmem:[#allocation8 + $0x40] sm:$0xff]
    %v2321 = vld [vmem:[#allocation8 + $0x48] sm:$0xff]
    %v2322 = vld [vmem:[#allocation8 + $0x50] sm:$0xff]
    %v2323 = vld [vmem:[#allocation8 + $0x58] sm:$0xff]
    %v2324 = vld [vmem:[#allocation8 + $0x60] sm:$0xff]
    %v2325 = vld [vmem:[#allocation8 + $0x68] sm:$0xff]
    %v2326 = vld [vmem:[#allocation8 + $0x70] sm:$0xff]
    %v2327 = vld [vmem:[#allocation8 + $0x78] sm:$0xff]
    %v2328 = vld [vmem:[#allocation8 + $0x80] sm:$0xff]
    %v2329 = vld [vmem:[#allocation8 + $0x88] sm:$0xff]
    %v2330 = vld [vmem:[#allocation8 + $0x90] sm:$0xff]
    %v2331 = vld [vmem:[#allocation8 + $0x98] sm:$0xff]
    %v2332 = vld [vmem:[#allocation8 + $0xa0] sm:$0xff]
    %v2333 = vld [vmem:[#allocation8 + $0xa8] sm:$0xff]
    %v2334 = vld [vmem:[#allocation8 + $0xb0] sm:$0xff]
    %v2335 = vld [vmem:[#allocation8 + $0xb8] sm:$0xff]
    %v2336 = vld [vmem:[#allocation8 + $0xc0] sm:$0xff]
    %v2337 = vld [vmem:[#allocation8 + $0xc8] sm:$0xff]
    %v2338 = vld [vmem:[#allocation8 + $0xd0] sm:$0xff]
    %v2339 = vld [vmem:[#allocation8 + $0xd8] sm:$0xff]
    %v2340 = vld [vmem:[#allocation8 + $0xe0] sm:$0xff]
    %v2341 = vld [vmem:[#allocation8 + $0xe8] sm:$0xff]
    %v2342 = vld [vmem:[#allocation8 + $0xf0] sm:$0xff]
    %v2343 = vld [vmem:[#allocation8 + $0xf8] sm:$0xff]
    %v2376 = vunpack.c.l.b16 %v2312
    %v2377 = vunpack.c.h.b16 %v2312
    %v2378 = vunpack.c.l.b16 %v2313
    %v2379 = vunpack.c.h.b16 %v2313
    %v2380 = vunpack.c.l.b16 %v2314
    %v2381 = vunpack.c.h.b16 %v2314
    %v2382 = vunpack.c.l.b16 %v2315
    %v2383 = vunpack.c.h.b16 %v2315
    %v2384 = vunpack.c.l.b16 %v2316
    %v2385 = vunpack.c.h.b16 %v2316
    %v2386 = vunpack.c.l.b16 %v2317
    %v2387 = vunpack.c.h.b16 %v2317
    %v2388 = vunpack.c.l.b16 %v2318
    %v2389 = vunpack.c.h.b16 %v2318
    %v2390 = vunpack.c.l.b16 %v2319
    %v2391 = vunpack.c.h.b16 %v2319
    %v2392 = vunpack.c.l.b16 %v2320
    %v2393 = vunpack.c.h.b16 %v2320
    %v2394 = vunpack.c.l.b16 %v2321
    %v2395 = vunpack.c.h.b16 %v2321
    %v2396 = vunpack.c.l.b16 %v2322
    %v2397 = vunpack.c.h.b16 %v2322
    %v2398 = vunpack.c.l.b16 %v2323
    %v2399 = vunpack.c.h.b16 %v2323
    %v2400 = vunpack.c.l.b16 %v2324
    %v2401 = vunpack.c.h.b16 %v2324
    %v2402 = vunpack.c.l.b16 %v2325
    %v2403 = vunpack.c.h.b16 %v2325
    %v2404 = vunpack.c.l.b16 %v2326
    %v2405 = vunpack.c.h.b16 %v2326
    %v2406 = vunpack.c.l.b16 %v2327
    %v2407 = vunpack.c.h.b16 %v2327
    %v2408 = vunpack.c.l.b16 %v2328
    %v2409 = vunpack.c.h.b16 %v2328
    %v2410 = vunpack.c.l.b16 %v2329
    %v2411 = vunpack.c.h.b16 %v2329
    %v2412 = vunpack.c.l.b16 %v2330
    %v2413 = vunpack.c.h.b16 %v2330
    %v2414 = vunpack.c.l.b16 %v2331
    %v2415 = vunpack.c.h.b16 %v2331
    %v2416 = vunpack.c.l.b16 %v2332
    %v2417 = vunpack.c.h.b16 %v2332
    %v2418 = vunpack.c.l.b16 %v2333
    %v2419 = vunpack.c.h.b16 %v2333
    %v2420 = vunpack.c.l.b16 %v2334
    %v2421 = vunpack.c.h.b16 %v2334
    %v2422 = vunpack.c.l.b16 %v2335
    %v2423 = vunpack.c.h.b16 %v2335
    %v2424 = vunpack.c.l.b16 %v2336
    %v2425 = vunpack.c.h.b16 %v2336
    %v2426 = vunpack.c.l.b16 %v2337
    %v2427 = vunpack.c.h.b16 %v2337
    %v2428 = vunpack.c.l.b16 %v2338
    %v2429 = vunpack.c.h.b16 %v2338
    %v2430 = vunpack.c.l.b16 %v2339
    %v2431 = vunpack.c.h.b16 %v2339
    %v2432 = vunpack.c.l.b16 %v2340
    %v2433 = vunpack.c.h.b16 %v2340
    %v2434 = vunpack.c.l.b16 %v2341
    %v2435 = vunpack.c.h.b16 %v2341
    %v2436 = vunpack.c.l.b16 %v2342
    %v2437 = vunpack.c.h.b16 %v2342
    %v2438 = vunpack.c.l.b16 %v2343
    %v2439 = vunpack.c.h.b16 %v2343
    %v2440 = vpack.c.b16 %v2380, %v2376
    %v2441 = vpack.c.b16 %v2381, %v2377
    %v2442 = vpack.c.b16 %v2382, %v2378
    %v2443 = vpack.c.b16 %v2383, %v2379
    %v2444 = vpack.c.b16 %v2388, %v2384
    %v2445 = vpack.c.b16 %v2389, %v2385
    %v2446 = vpack.c.b16 %v2390, %v2386
    %v2447 = vpack.c.b16 %v2391, %v2387
    %v2448 = vpack.c.b16 %v2396, %v2392
    %v2449 = vpack.c.b16 %v2397, %v2393
    %v2450 = vpack.c.b16 %v2398, %v2394
    %v2451 = vpack.c.b16 %v2399, %v2395
    %v2452 = vpack.c.b16 %v2404, %v2400
    %v2453 = vpack.c.b16 %v2405, %v2401
    %v2454 = vpack.c.b16 %v2406, %v2402
    %v2455 = vpack.c.b16 %v2407, %v2403
    %v2456 = vpack.c.b16 %v2412, %v2408
    %v2457 = vpack.c.b16 %v2413, %v2409
    %v2458 = vpack.c.b16 %v2414, %v2410
    %v2459 = vpack.c.b16 %v2415, %v2411
    %v2460 = vpack.c.b16 %v2420, %v2416
    %v2461 = vpack.c.b16 %v2421, %v2417
    %v2462 = vpack.c.b16 %v2422, %v2418
    %v2463 = vpack.c.b16 %v2423, %v2419
    %v2464 = vpack.c.b16 %v2428, %v2424
    %v2465 = vpack.c.b16 %v2429, %v2425
    %v2466 = vpack.c.b16 %v2430, %v2426
    %v2467 = vpack.c.b16 %v2431, %v2427
    %v2468 = vpack.c.b16 %v2436, %v2432
    %v2469 = vpack.c.b16 %v2437, %v2433
    %v2470 = vpack.c.b16 %v2438, %v2434
    %v2471 = vpack.c.b16 %v2439, %v2435
    %2504 = vmatprep.subr.bf16.mxu0 %v2469
    %2505 = vmatpush1.bf16.msra.mxu0 %v2468
    %2506 = vmatprep.subr.bf16.mxu0 %v2465
    %2507 = vmatpush1.bf16.msra.mxu0 %v2464
    %2508 = vmatprep.subr.bf16.mxu0 %v2461
    %2509 = vmatpush1.bf16.msra.mxu0 %v2460
    %2510 = vmatprep.subr.bf16.mxu0 %v2457
    %2511 = vmatpush1.bf16.msra.mxu0 %v2456
    %2512 = vmatprep.subr.bf16.mxu0 %v2453
    %2513 = vmatpush1.bf16.msra.mxu0 %v2452
    %2514 = vmatprep.subr.bf16.mxu0 %v2449
    %2515 = vmatpush1.bf16.msra.mxu0 %v2448
    %2516 = vmatprep.subr.bf16.mxu0 %v2445
    %2517 = vmatpush1.bf16.msra.mxu0 %v2444
    %2518 = vmatprep.subr.bf16.mxu0 %v2441
    %2519 = vmatpush1.bf16.msra.mxu0 %v2440
    %2520 = vmatprep.subr.bf16.mxu0 0
    %2521 = vmatpush2.bf16.msra.mxu0 0
    %2522 = vmatprep.subr.bf16.mxu0 0
    %2523 = vmatpush2.bf16.msra.mxu0 0
    %2524 = vmatprep.subr.bf16.mxu0 0
    %2525 = vmatpush2.bf16.msra.mxu0 0
    %2526 = vmatprep.subr.bf16.mxu0 0
    %2527 = vmatpush2.bf16.msra.mxu0 0
    %2528 = vmatprep.subr.bf16.mxu0 0
    %2529 = vmatpush2.bf16.msra.mxu0 0
    %2530 = vmatprep.subr.bf16.mxu0 0
    %2531 = vmatpush2.bf16.msra.mxu0 0
    %2532 = vmatprep.subr.bf16.mxu0 0
    %2533 = vmatpush2.bf16.msra.mxu0 0
    %2534 = vmatprep.subr.bf16.mxu0 0
    %2535 = vmatpush2.bf16.msra.mxu0 0
    %2536 = vmatprep.mubr.bf16.mxu0 0
    %2537 = vmatmul.mubr.bf16.gmra.mxu0 %v1735
    %v2538 = vpop.f32.mrf.mxu0
    %v2539 = vadd.f32 0.0, %v2538
    %v2540 = vpop.f32.mrf.mxu0
    %v2541 = vadd.f32 0.0, %v2540
    %v2542 = vpop.f32.mrf.mxu0
    %v2543 = vpop.f32.mrf.mxu0
    %2544 = vdwg.mxu0
    %2545 = vmatprep.subr.bf16.mxu0 %v2471
    %2546 = vmatpush1.bf16.msra.mxu0 %v2470
    %2547 = vmatprep.subr.bf16.mxu0 %v2467
    %2548 = vmatpush1.bf16.msra.mxu0 %v2466
    %2549 = vmatprep.subr.bf16.mxu0 %v2463
    %2550 = vmatpush1.bf16.msra.mxu0 %v2462
    %2551 = vmatprep.subr.bf16.mxu0 %v2459
    %2552 = vmatpush1.bf16.msra.mxu0 %v2458
    %2553 = vmatprep.subr.bf16.mxu0 %v2455
    %2554 = vmatpush1.bf16.msra.mxu0 %v2454
    %2555 = vmatprep.subr.bf16.mxu0 %v2451
    %2556 = vmatpush1.bf16.msra.mxu0 %v2450
    %2557 = vmatprep.subr.bf16.mxu0 %v2447
    %2558 = vmatpush1.bf16.msra.mxu0 %v2446
    %2559 = vmatprep.subr.bf16.mxu0 %v2443
    %2560 = vmatpush1.bf16.msra.mxu0 %v2442
    %2561 = vmatprep.subr.bf16.mxu0 0
    %2562 = vmatpush2.bf16.msra.mxu0 0
    %2563 = vmatprep.subr.bf16.mxu0 0
    %2564 = vmatpush2.bf16.msra.mxu0 0
    %2565 = vmatprep.subr.bf16.mxu0 0
    %2566 = vmatpush2.bf16.msra.mxu0 0
    %2567 = vmatprep.subr.bf16.mxu0 0
    %2568 = vmatpush2.bf16.msra.mxu0 0
    %2569 = vmatprep.subr.bf16.mxu0 0
    %2570 = vmatpush2.bf16.msra.mxu0 0
    %2571 = vmatprep.subr.bf16.mxu0 0
    %2572 = vmatpush2.bf16.msra.mxu0 0
    %2573 = vmatprep.subr.bf16.mxu0 0
    %2574 = vmatpush2.bf16.msra.mxu0 0
    %2575 = vmatprep.subr.bf16.mxu0 0
    %2576 = vmatpush2.bf16.msra.mxu0 0
    %2577 = vmatprep.mubr.bf16.mxu0 0
    %2578 = vmatmul.mubr.bf16.gmra.mxu0 %v1735
    %v2579 = vpop.f32.mrf.mxu0
    %v2580 = vadd.f32 0.0, %v2579
    %v2581 = vpop.f32.mrf.mxu0
    %v2582 = vadd.f32 0.0, %v2581
    %v2583 = vpop.f32.mrf.mxu0
    %v2584 = vpop.f32.mrf.mxu0
    %2585 = vdwg.mxu0
    %v2586 = vadd.f32 %v2308, %v2539
    %v2587 = vadd.f32 %v2309, %v2541
    %v2588 = vadd.f32 %v2310, %v2580
    %v2589 = vadd.f32 %v2311, %v2582
    %v2590 = vxor.u32 %v2586, 2147483648
    %v2591 = vmul.f32 %v2590, 1.442695
    %v2592 = vpow.pop %v2591
    %v2593 = vadd.f32 %v2592, 1.0
    %v2594 = vrcp.pop %v2593
    %v2595 = vmul.f32 1.0, %v2594
    %v2596 = vxor.u32 %v2587, 2147483648
    %v2597 = vmul.f32 %v2596, 1.442695
    %v2598 = vpow.pop %v2597
    %v2599 = vadd.f32 %v2598, 1.0
    %v2600 = vrcp.pop %v2599
    %v2601 = vmul.f32 1.0, %v2600
    %v2602 = vtanh.pop %v2588
    %v2603 = vxor.u32 %v2589, 2147483648
    %v2604 = vmul.f32 %v2603, 1.442695
    %v2605 = vpow.pop %v2604
    %v2606 = vadd.f32 %v2605, 1.0
    %v2607 = vrcp.pop %v2606
    %v2608 = vmul.f32 1.0, %v2607
    %v2609 = vmul.f32 %v2601, %v1700
    %v2610 = vmul.f32 %v2595, %v2602
    %v2611 = vadd.f32 %v2609, %v2610
    %v2612 = vtanh.pop %v2611
    %v2613 = vmul.f32 %v2608, %v2612
    %v2614 = vld [vmem:[#allocation10] sm:$0xff]
    %v2615 = vld [vmem:[#allocation10 + $0x8] sm:$0xff]
    %v2616 = vld [vmem:[#allocation10 + $0x10] sm:$0xff]
    %v2617 = vld [vmem:[#allocation10 + $0x18] sm:$0xff]
    %v2618 = vld [vmem:[#allocation10 + $0x20] sm:$0xff]
    %v2619 = vld [vmem:[#allocation10 + $0x28] sm:$0xff]
    %v2620 = vld [vmem:[#allocation10 + $0x30] sm:$0xff]
    %v2621 = vld [vmem:[#allocation10 + $0x38] sm:$0xff]
    %v2622 = vld [vmem:[#allocation10 + $0x40] sm:$0xff]
    %v2623 = vld [vmem:[#allocation10 + $0x48] sm:$0xff]
    %v2624 = vld [vmem:[#allocation10 + $0x50] sm:$0xff]
    %v2625 = vld [vmem:[#allocation10 + $0x58] sm:$0xff]
    %v2626 = vld [vmem:[#allocation10 + $0x60] sm:$0xff]
    %v2627 = vld [vmem:[#allocation10 + $0x68] sm:$0xff]
    %v2628 = vld [vmem:[#allocation10 + $0x70] sm:$0xff]
    %v2629 = vld [vmem:[#allocation10 + $0x78] sm:$0xff]
    %v2630 = vld [vmem:[#allocation10 + $0x80] sm:$0xff]
    %v2631 = vld [vmem:[#allocation10 + $0x88] sm:$0xff]
    %v2632 = vld [vmem:[#allocation10 + $0x90] sm:$0xff]
    %v2633 = vld [vmem:[#allocation10 + $0x98] sm:$0xff]
    %v2634 = vld [vmem:[#allocation10 + $0xa0] sm:$0xff]
    %v2635 = vld [vmem:[#allocation10 + $0xa8] sm:$0xff]
    %v2636 = vld [vmem:[#allocation10 + $0xb0] sm:$0xff]
    %v2637 = vld [vmem:[#allocation10 + $0xb8] sm:$0xff]
    %v2638 = vld [vmem:[#allocation10 + $0xc0] sm:$0xff]
    %v2639 = vld [vmem:[#allocation10 + $0xc8] sm:$0xff]
    %v2640 = vld [vmem:[#allocation10 + $0xd0] sm:$0xff]
    %v2641 = vld [vmem:[#allocation10 + $0xd8] sm:$0xff]
    %v2642 = vld [vmem:[#allocation10 + $0xe0] sm:$0xff]
    %v2643 = vld [vmem:[#allocation10 + $0xe8] sm:$0xff]
    %v2644 = vld [vmem:[#allocation10 + $0xf0] sm:$0xff]
    %v2645 = vld [vmem:[#allocation10 + $0xf8] sm:$0xff]
    %v2646 = vpack.c.bf16 %v2613, %v2613
    %v2647 = vld [vmem:[%s6] sm:$0xf]
    %v2649 = vlaneseq
    %v2650 = vshrl.u32 %v2649, 7
    %v2651 = vsub.s32 0, %v2650
    %v2652 = vrot.slane %v2647, %v2651
    %v2653 = vlaneseq
    %v2654 = vshrl.u32 %v2653, 7
    %v2655 = vsub.s32 1, %v2654
    %v2656 = vrot.slane %v2647, %v2655
    %v2657 = vlaneseq
    %v2658 = vshrl.u32 %v2657, 7
    %v2659 = vsub.s32 2, %v2658
    %v2660 = vrot.slane %v2647, %v2659
    %v2661 = vlaneseq
    %v2662 = vshrl.u32 %v2661, 7
    %v2663 = vsub.s32 3, %v2662
    %v2664 = vrot.slane %v2647, %v2663
    %v2701 = vunpack.c.l.b16 %v2614
    %v2702 = vunpack.c.h.b16 %v2614
    %v2703 = vunpack.c.l.b16 %v2615
    %v2704 = vunpack.c.h.b16 %v2615
    %v2705 = vunpack.c.l.b16 %v2616
    %v2706 = vunpack.c.h.b16 %v2616
    %v2707 = vunpack.c.l.b16 %v2617
    %v2708 = vunpack.c.h.b16 %v2617
    %v2709 = vunpack.c.l.b16 %v2618
    %v2710 = vunpack.c.h.b16 %v2618
    %v2711 = vunpack.c.l.b16 %v2619
    %v2712 = vunpack.c.h.b16 %v2619
    %v2713 = vunpack.c.l.b16 %v2620
    %v2714 = vunpack.c.h.b16 %v2620
    %v2715 = vunpack.c.l.b16 %v2621
    %v2716 = vunpack.c.h.b16 %v2621
    %v2717 = vunpack.c.l.b16 %v2622
    %v2718 = vunpack.c.h.b16 %v2622
    %v2719 = vunpack.c.l.b16 %v2623
    %v2720 = vunpack.c.h.b16 %v2623
    %v2721 = vunpack.c.l.b16 %v2624
    %v2722 = vunpack.c.h.b16 %v2624
    %v2723 = vunpack.c.l.b16 %v2625
    %v2724 = vunpack.c.h.b16 %v2625
    %v2725 = vunpack.c.l.b16 %v2626
    %v2726 = vunpack.c.h.b16 %v2626
    %v2727 = vunpack.c.l.b16 %v2627
    %v2728 = vunpack.c.h.b16 %v2627
    %v2729 = vunpack.c.l.b16 %v2628
    %v2730 = vunpack.c.h.b16 %v2628
    %v2731 = vunpack.c.l.b16 %v2629
    %v2732 = vunpack.c.h.b16 %v2629
    %v2733 = vunpack.c.l.b16 %v2630
    %v2734 = vunpack.c.h.b16 %v2630
    %v2735 = vunpack.c.l.b16 %v2631
    %v2736 = vunpack.c.h.b16 %v2631
    %v2737 = vunpack.c.l.b16 %v2632
    %v2738 = vunpack.c.h.b16 %v2632
    %v2739 = vunpack.c.l.b16 %v2633
    %v2740 = vunpack.c.h.b16 %v2633
    %v2741 = vunpack.c.l.b16 %v2634
    %v2742 = vunpack.c.h.b16 %v2634
    %v2743 = vunpack.c.l.b16 %v2635
    %v2744 = vunpack.c.h.b16 %v2635
    %v2745 = vunpack.c.l.b16 %v2636
    %v2746 = vunpack.c.h.b16 %v2636
    %v2747 = vunpack.c.l.b16 %v2637
    %v2748 = vunpack.c.h.b16 %v2637
    %v2749 = vunpack.c.l.b16 %v2638
    %v2750 = vunpack.c.h.b16 %v2638
    %v2751 = vunpack.c.l.b16 %v2639
    %v2752 = vunpack.c.h.b16 %v2639
    %v2753 = vunpack.c.l.b16 %v2640
    %v2754 = vunpack.c.h.b16 %v2640
    %v2755 = vunpack.c.l.b16 %v2641
    %v2756 = vunpack.c.h.b16 %v2641
    %v2757 = vunpack.c.l.b16 %v2642
    %v2758 = vunpack.c.h.b16 %v2642
    %v2759 = vunpack.c.l.b16 %v2643
    %v2760 = vunpack.c.h.b16 %v2643
    %v2761 = vunpack.c.l.b16 %v2644
    %v2762 = vunpack.c.h.b16 %v2644
    %v2763 = vunpack.c.l.b16 %v2645
    %v2764 = vunpack.c.h.b16 %v2645
    %v2765 = vpack.c.b16 %v2705, %v2701
    %v2766 = vpack.c.b16 %v2706, %v2702
    %v2767 = vpack.c.b16 %v2707, %v2703
    %v2768 = vpack.c.b16 %v2708, %v2704
    %v2769 = vpack.c.b16 %v2713, %v2709
    %v2770 = vpack.c.b16 %v2714, %v2710
    %v2771 = vpack.c.b16 %v2715, %v2711
    %v2772 = vpack.c.b16 %v2716, %v2712
    %v2773 = vpack.c.b16 %v2721, %v2717
    %v2774 = vpack.c.b16 %v2722, %v2718
    %v2775 = vpack.c.b16 %v2723, %v2719
    %v2776 = vpack.c.b16 %v2724, %v2720
    %v2777 = vpack.c.b16 %v2729, %v2725
    %v2778 = vpack.c.b16 %v2730, %v2726
    %v2779 = vpack.c.b16 %v2731, %v2727
    %v2780 = vpack.c.b16 %v2732, %v2728
    %v2781 = vpack.c.b16 %v2737, %v2733
    %v2782 = vpack.c.b16 %v2738, %v2734
    %v2783 = vpack.c.b16 %v2739, %v2735
    %v2784 = vpack.c.b16 %v2740, %v2736
    %v2785 = vpack.c.b16 %v2745, %v2741
    %v2786 = vpack.c.b16 %v2746, %v2742
    %v2787 = vpack.c.b16 %v2747, %v2743
    %v2788 = vpack.c.b16 %v2748, %v2744
    %v2789 = vpack.c.b16 %v2753, %v2749
    %v2790 = vpack.c.b16 %v2754, %v2750
    %v2791 = vpack.c.b16 %v2755, %v2751
    %v2792 = vpack.c.b16 %v2756, %v2752
    %v2793 = vpack.c.b16 %v2761, %v2757
    %v2794 = vpack.c.b16 %v2762, %v2758
    %v2795 = vpack.c.b16 %v2763, %v2759
    %v2796 = vpack.c.b16 %v2764, %v2760
    %2829 = vmatprep.subr.bf16.mxu0 %v2794
    %2830 = vmatpush1.bf16.msra.mxu0 %v2793
    %2831 = vmatprep.subr.bf16.mxu0 %v2790
    %2832 = vmatpush1.bf16.msra.mxu0 %v2789
    %2833 = vmatprep.subr.bf16.mxu0 %v2786
    %2834 = vmatpush1.bf16.msra.mxu0 %v2785
    %2835 = vmatprep.subr.bf16.mxu0 %v2782
    %2836 = vmatpush1.bf16.msra.mxu0 %v2781
    %2837 = vmatprep.subr.bf16.mxu0 %v2778
    %2838 = vmatpush1.bf16.msra.mxu0 %v2777
    %2839 = vmatprep.subr.bf16.mxu0 %v2774
    %2840 = vmatpush1.bf16.msra.mxu0 %v2773
    %2841 = vmatprep.subr.bf16.mxu0 %v2770
    %2842 = vmatpush1.bf16.msra.mxu0 %v2769
    %2843 = vmatprep.subr.bf16.mxu0 %v2766
    %2844 = vmatpush1.bf16.msra.mxu0 %v2765
    %2845 = vmatprep.subr.bf16.mxu0 0
    %2846 = vmatpush2.bf16.msra.mxu0 0
    %2847 = vmatprep.subr.bf16.mxu0 0
    %2848 = vmatpush2.bf16.msra.mxu0 0
    %2849 = vmatprep.subr.bf16.mxu0 0
    %2850 = vmatpush2.bf16.msra.mxu0 0
    %2851 = vmatprep.subr.bf16.mxu0 0
    %2852 = vmatpush2.bf16.msra.mxu0 0
    %2853 = vmatprep.subr.bf16.mxu0 0
    %2854 = vmatpush2.bf16.msra.mxu0 0
    %2855 = vmatprep.subr.bf16.mxu0 0
    %2856 = vmatpush2.bf16.msra.mxu0 0
    %2857 = vmatprep.subr.bf16.mxu0 0
    %2858 = vmatpush2.bf16.msra.mxu0 0
    %2859 = vmatprep.subr.bf16.mxu0 0
    %2860 = vmatpush2.bf16.msra.mxu0 0
    %2861 = vmatprep.mubr.bf16.mxu0 0
    %2862 = vmatmul.mubr.bf16.gmra.mxu0 %v2646
    %v2863 = vpop.f32.mrf.mxu0
    %v2864 = vadd.f32 %v2652, %v2863
    %v2865 = vpop.f32.mrf.mxu0
    %v2866 = vadd.f32 %v2656, %v2865
    %v2867 = vpop.f32.mrf.mxu0
    %v2868 = vpop.f32.mrf.mxu0
    %2869 = vdwg.mxu0
    %2870 = vmatprep.subr.bf16.mxu0 %v2796
    %2871 = vmatpush1.bf16.msra.mxu0 %v2795
    %2872 = vmatprep.subr.bf16.mxu0 %v2792
    %2873 = vmatpush1.bf16.msra.mxu0 %v2791
    %2874 = vmatprep.subr.bf16.mxu0 %v2788
    %2875 = vmatpush1.bf16.msra.mxu0 %v2787
    %2876 = vmatprep.subr.bf16.mxu0 %v2784
    %2877 = vmatpush1.bf16.msra.mxu0 %v2783
    %2878 = vmatprep.subr.bf16.mxu0 %v2780
    %2879 = vmatpush1.bf16.msra.mxu0 %v2779
    %2880 = vmatprep.subr.bf16.mxu0 %v2776
    %2881 = vmatpush1.bf16.msra.mxu0 %v2775
    %2882 = vmatprep.subr.bf16.mxu0 %v2772
    %2883 = vmatpush1.bf16.msra.mxu0 %v2771
    %2884 = vmatprep.subr.bf16.mxu0 %v2768
    %2885 = vmatpush1.bf16.msra.mxu0 %v2767
    %2886 = vmatprep.subr.bf16.mxu0 0
    %2887 = vmatpush2.bf16.msra.mxu0 0
    %2888 = vmatprep.subr.bf16.mxu0 0
    %2889 = vmatpush2.bf16.msra.mxu0 0
    %2890 = vmatprep.subr.bf16.mxu0 0
    %2891 = vmatpush2.bf16.msra.mxu0 0
    %2892 = vmatprep.subr.bf16.mxu0 0
    %2893 = vmatpush2.bf16.msra.mxu0 0
    %2894 = vmatprep.subr.bf16.mxu0 0
    %2895 = vmatpush2.bf16.msra.mxu0 0
    %2896 = vmatprep.subr.bf16.mxu0 0
    %2897 = vmatpush2.bf16.msra.mxu0 0
    %2898 = vmatprep.subr.bf16.mxu0 0
    %2899 = vmatpush2.bf16.msra.mxu0 0
    %2900 = vmatprep.subr.bf16.mxu0 0
    %2901 = vmatpush2.bf16.msra.mxu0 0
    %2902 = vmatprep.mubr.bf16.mxu0 0
    %2903 = vmatmul.mubr.bf16.gmra.mxu0 %v2646
    %v2904 = vpop.f32.mrf.mxu0
    %v2905 = vadd.f32 %v2660, %v2904
    %v2906 = vpop.f32.mrf.mxu0
    %v2907 = vadd.f32 %v2664, %v2906
    %v2908 = vpop.f32.mrf.mxu0
    %v2909 = vpop.f32.mrf.mxu0
    %2910 = vdwg.mxu0
    %v2911 = vld [vmem:[#allocation12] sm:$0xff]
    %v2912 = vld [vmem:[#allocation12 + $0x8] sm:$0xff]
    %v2913 = vld [vmem:[#allocation12 + $0x10] sm:$0xff]
    %v2914 = vld [vmem:[#allocation12 + $0x18] sm:$0xff]
    %v2915 = vld [vmem:[#allocation12 + $0x20] sm:$0xff]
    %v2916 = vld [vmem:[#allocation12 + $0x28] sm:$0xff]
    %v2917 = vld [vmem:[#allocation12 + $0x30] sm:$0xff]
    %v2918 = vld [vmem:[#allocation12 + $0x38] sm:$0xff]
    %v2919 = vld [vmem:[#allocation12 + $0x40] sm:$0xff]
    %v2920 = vld [vmem:[#allocation12 + $0x48] sm:$0xff]
    %v2921 = vld [vmem:[#allocation12 + $0x50] sm:$0xff]
    %v2922 = vld [vmem:[#allocation12 + $0x58] sm:$0xff]
    %v2923 = vld [vmem:[#allocation12 + $0x60] sm:$0xff]
    %v2924 = vld [vmem:[#allocation12 + $0x68] sm:$0xff]
    %v2925 = vld [vmem:[#allocation12 + $0x70] sm:$0xff]
    %v2926 = vld [vmem:[#allocation12 + $0x78] sm:$0xff]
    %v2927 = vld [vmem:[#allocation12 + $0x80] sm:$0xff]
    %v2928 = vld [vmem:[#allocation12 + $0x88] sm:$0xff]
    %v2929 = vld [vmem:[#allocation12 + $0x90] sm:$0xff]
    %v2930 = vld [vmem:[#allocation12 + $0x98] sm:$0xff]
    %v2931 = vld [vmem:[#allocation12 + $0xa0] sm:$0xff]
    %v2932 = vld [vmem:[#allocation12 + $0xa8] sm:$0xff]
    %v2933 = vld [vmem:[#allocation12 + $0xb0] sm:$0xff]
    %v2934 = vld [vmem:[#allocation12 + $0xb8] sm:$0xff]
    %v2935 = vld [vmem:[#allocation12 + $0xc0] sm:$0xff]
    %v2936 = vld [vmem:[#allocation12 + $0xc8] sm:$0xff]
    %v2937 = vld [vmem:[#allocation12 + $0xd0] sm:$0xff]
    %v2938 = vld [vmem:[#allocation12 + $0xd8] sm:$0xff]
    %v2939 = vld [vmem:[#allocation12 + $0xe0] sm:$0xff]
    %v2940 = vld [vmem:[#allocation12 + $0xe8] sm:$0xff]
    %v2941 = vld [vmem:[#allocation12 + $0xf0] sm:$0xff]
    %v2942 = vld [vmem:[#allocation12 + $0xf8] sm:$0xff]
    %v2975 = vunpack.c.l.b16 %v2911
    %v2976 = vunpack.c.h.b16 %v2911
    %v2977 = vunpack.c.l.b16 %v2912
    %v2978 = vunpack.c.h.b16 %v2912
    %v2979 = vunpack.c.l.b16 %v2913
    %v2980 = vunpack.c.h.b16 %v2913
    %v2981 = vunpack.c.l.b16 %v2914
    %v2982 = vunpack.c.h.b16 %v2914
    %v2983 = vunpack.c.l.b16 %v2915
    %v2984 = vunpack.c.h.b16 %v2915
    %v2985 = vunpack.c.l.b16 %v2916
    %v2986 = vunpack.c.h.b16 %v2916
    %v2987 = vunpack.c.l.b16 %v2917
    %v2988 = vunpack.c.h.b16 %v2917
    %v2989 = vunpack.c.l.b16 %v2918
    %v2990 = vunpack.c.h.b16 %v2918
    %v2991 = vunpack.c.l.b16 %v2919
    %v2992 = vunpack.c.h.b16 %v2919
    %v2993 = vunpack.c.l.b16 %v2920
    %v2994 = vunpack.c.h.b16 %v2920
    %v2995 = vunpack.c.l.b16 %v2921
    %v2996 = vunpack.c.h.b16 %v2921
    %v2997 = vunpack.c.l.b16 %v2922
    %v2998 = vunpack.c.h.b16 %v2922
    %v2999 = vunpack.c.l.b16 %v2923
    %v3000 = vunpack.c.h.b16 %v2923
    %v3001 = vunpack.c.l.b16 %v2924
    %v3002 = vunpack.c.h.b16 %v2924
    %v3003 = vunpack.c.l.b16 %v2925
    %v3004 = vunpack.c.h.b16 %v2925
    %v3005 = vunpack.c.l.b16 %v2926
    %v3006 = vunpack.c.h.b16 %v2926
    %v3007 = vunpack.c.l.b16 %v2927
    %v3008 = vunpack.c.h.b16 %v2927
    %v3009 = vunpack.c.l.b16 %v2928
    %v3010 = vunpack.c.h.b16 %v2928
    %v3011 = vunpack.c.l.b16 %v2929
    %v3012 = vunpack.c.h.b16 %v2929
    %v3013 = vunpack.c.l.b16 %v2930
    %v3014 = vunpack.c.h.b16 %v2930
    %v3015 = vunpack.c.l.b16 %v2931
    %v3016 = vunpack.c.h.b16 %v2931
    %v3017 = vunpack.c.l.b16 %v2932
    %v3018 = vunpack.c.h.b16 %v2932
    %v3019 = vunpack.c.l.b16 %v2933
    %v3020 = vunpack.c.h.b16 %v2933
    %v3021 = vunpack.c.l.b16 %v2934
    %v3022 = vunpack.c.h.b16 %v2934
    %v3023 = vunpack.c.l.b16 %v2935
    %v3024 = vunpack.c.h.b16 %v2935
    %v3025 = vunpack.c.l.b16 %v2936
    %v3026 = vunpack.c.h.b16 %v2936
    %v3027 = vunpack.c.l.b16 %v2937
    %v3028 = vunpack.c.h.b16 %v2937
    %v3029 = vunpack.c.l.b16 %v2938
    %v3030 = vunpack.c.h.b16 %v2938
    %v3031 = vunpack.c.l.b16 %v2939
    %v3032 = vunpack.c.h.b16 %v2939
    %v3033 = vunpack.c.l.b16 %v2940
    %v3034 = vunpack.c.h.b16 %v2940
    %v3035 = vunpack.c.l.b16 %v2941
    %v3036 = vunpack.c.h.b16 %v2941
    %v3037 = vunpack.c.l.b16 %v2942
    %v3038 = vunpack.c.h.b16 %v2942
    %v3039 = vpack.c.b16 %v2979, %v2975
    %v3040 = vpack.c.b16 %v2980, %v2976
    %v3041 = vpack.c.b16 %v2981, %v2977
    %v3042 = vpack.c.b16 %v2982, %v2978
    %v3043 = vpack.c.b16 %v2987, %v2983
    %v3044 = vpack.c.b16 %v2988, %v2984
    %v3045 = vpack.c.b16 %v2989, %v2985
    %v3046 = vpack.c.b16 %v2990, %v2986
    %v3047 = vpack.c.b16 %v2995, %v2991
    %v3048 = vpack.c.b16 %v2996, %v2992
    %v3049 = vpack.c.b16 %v2997, %v2993
    %v3050 = vpack.c.b16 %v2998, %v2994
    %v3051 = vpack.c.b16 %v3003, %v2999
    %v3052 = vpack.c.b16 %v3004, %v3000
    %v3053 = vpack.c.b16 %v3005, %v3001
    %v3054 = vpack.c.b16 %v3006, %v3002
    %v3055 = vpack.c.b16 %v3011, %v3007
    %v3056 = vpack.c.b16 %v3012, %v3008
    %v3057 = vpack.c.b16 %v3013, %v3009
    %v3058 = vpack.c.b16 %v3014, %v3010
    %v3059 = vpack.c.b16 %v3019, %v3015
    %v3060 = vpack.c.b16 %v3020, %v3016
    %v3061 = vpack.c.b16 %v3021, %v3017
    %v3062 = vpack.c.b16 %v3022, %v3018
    %v3063 = vpack.c.b16 %v3027, %v3023
    %v3064 = vpack.c.b16 %v3028, %v3024
    %v3065 = vpack.c.b16 %v3029, %v3025
    %v3066 = vpack.c.b16 %v3030, %v3026
    %v3067 = vpack.c.b16 %v3035, %v3031
    %v3068 = vpack.c.b16 %v3036, %v3032
    %v3069 = vpack.c.b16 %v3037, %v3033
    %v3070 = vpack.c.b16 %v3038, %v3034
    %3103 = vmatprep.subr.bf16.mxu0 %v3068
    %3104 = vmatpush1.bf16.msra.mxu0 %v3067
    %3105 = vmatprep.subr.bf16.mxu0 %v3064
    %3106 = vmatpush1.bf16.msra.mxu0 %v3063
    %3107 = vmatprep.subr.bf16.mxu0 %v3060
    %3108 = vmatpush1.bf16.msra.mxu0 %v3059
    %3109 = vmatprep.subr.bf16.mxu0 %v3056
    %3110 = vmatpush1.bf16.msra.mxu0 %v3055
    %3111 = vmatprep.subr.bf16.mxu0 %v3052
    %3112 = vmatpush1.bf16.msra.mxu0 %v3051
    %3113 = vmatprep.subr.bf16.mxu0 %v3048
    %3114 = vmatpush1.bf16.msra.mxu0 %v3047
    %3115 = vmatprep.subr.bf16.mxu0 %v3044
    %3116 = vmatpush1.bf16.msra.mxu0 %v3043
    %3117 = vmatprep.subr.bf16.mxu0 %v3040
    %3118 = vmatpush1.bf16.msra.mxu0 %v3039
    %3119 = vmatprep.subr.bf16.mxu0 0
    %3120 = vmatpush2.bf16.msra.mxu0 0
    %3121 = vmatprep.subr.bf16.mxu0 0
    %3122 = vmatpush2.bf16.msra.mxu0 0
    %3123 = vmatprep.subr.bf16.mxu0 0
    %3124 = vmatpush2.bf16.msra.mxu0 0
    %3125 = vmatprep.subr.bf16.mxu0 0
    %3126 = vmatpush2.bf16.msra.mxu0 0
    %3127 = vmatprep.subr.bf16.mxu0 0
    %3128 = vmatpush2.bf16.msra.mxu0 0
    %3129 = vmatprep.subr.bf16.mxu0 0
    %3130 = vmatpush2.bf16.msra.mxu0 0
    %3131 = vmatprep.subr.bf16.mxu0 0
    %3132 = vmatpush2.bf16.msra.mxu0 0
    %3133 = vmatprep.subr.bf16.mxu0 0
    %3134 = vmatpush2.bf16.msra.mxu0 0
    %3135 = vmatprep.mubr.bf16.mxu0 0
    %3136 = vmatmul.mubr.bf16.gmra.mxu0 %v2302
    %v3137 = vpop.f32.mrf.mxu0
    %v3138 = vadd.f32 0.0, %v3137
    %v3139 = vpop.f32.mrf.mxu0
    %v3140 = vadd.f32 0.0, %v3139
    %v3141 = vpop.f32.mrf.mxu0
    %v3142 = vpop.f32.mrf.mxu0
    %3143 = vdwg.mxu0
    %3144 = vmatprep.subr.bf16.mxu0 %v3070
    %3145 = vmatpush1.bf16.msra.mxu0 %v3069
    %3146 = vmatprep.subr.bf16.mxu0 %v3066
    %3147 = vmatpush1.bf16.msra.mxu0 %v3065
    %3148 = vmatprep.subr.bf16.mxu0 %v3062
    %3149 = vmatpush1.bf16.msra.mxu0 %v3061
    %3150 = vmatprep.subr.bf16.mxu0 %v3058
    %3151 = vmatpush1.bf16.msra.mxu0 %v3057
    %3152 = vmatprep.subr.bf16.mxu0 %v3054
    %3153 = vmatpush1.bf16.msra.mxu0 %v3053
    %3154 = vmatprep.subr.bf16.mxu0 %v3050
    %3155 = vmatpush1.bf16.msra.mxu0 %v3049
    %3156 = vmatprep.subr.bf16.mxu0 %v3046
    %3157 = vmatpush1.bf16.msra.mxu0 %v3045
    %3158 = vmatprep.subr.bf16.mxu0 %v3042
    %3159 = vmatpush1.bf16.msra.mxu0 %v3041
    %3160 = vmatprep.subr.bf16.mxu0 0
    %3161 = vmatpush2.bf16.msra.mxu0 0
    %3162 = vmatprep.subr.bf16.mxu0 0
    %3163 = vmatpush2.bf16.msra.mxu0 0
    %3164 = vmatprep.subr.bf16.mxu0 0
    %3165 = vmatpush2.bf16.msra.mxu0 0
    %3166 = vmatprep.subr.bf16.mxu0 0
    %3167 = vmatpush2.bf16.msra.mxu0 0
    %3168 = vmatprep.subr.bf16.mxu0 0
    %3169 = vmatpush2.bf16.msra.mxu0 0
    %3170 = vmatprep.subr.bf16.mxu0 0
    %3171 = vmatpush2.bf16.msra.mxu0 0
    %3172 = vmatprep.subr.bf16.mxu0 0
    %3173 = vmatpush2.bf16.msra.mxu0 0
    %3174 = vmatprep.subr.bf16.mxu0 0
    %3175 = vmatpush2.bf16.msra.mxu0 0
    %3176 = vmatprep.mubr.bf16.mxu0 0
    %3177 = vmatmul.mubr.bf16.gmra.mxu0 %v2302
    %v3178 = vpop.f32.mrf.mxu0
    %v3179 = vadd.f32 0.0, %v3178
    %v3180 = vpop.f32.mrf.mxu0
    %v3181 = vadd.f32 0.0, %v3180
    %v3182 = vpop.f32.mrf.mxu0
    %v3183 = vpop.f32.mrf.mxu0
    %3184 = vdwg.mxu0
    %v3185 = vadd.f32 %v2864, %v3138
    %v3186 = vadd.f32 %v2866, %v3140
    %v3187 = vadd.f32 %v2905, %v3179
    %v3188 = vadd.f32 %v2907, %v3181
    %v3189 = vxor.u32 %v3185, 2147483648
    %v3190 = vmul.f32 %v3189, 1.442695
    %v3191 = vpow.pop %v3190
    %v3192 = vadd.f32 %v3191, 1.0
    %v3193 = vrcp.pop %v3192
    %v3194 = vmul.f32 1.0, %v3193
    %v3195 = vxor.u32 %v3186, 2147483648
    %v3196 = vmul.f32 %v3195, 1.442695
    %v3197 = vpow.pop %v3196
    %v3198 = vadd.f32 %v3197, 1.0
    %v3199 = vrcp.pop %v3198
    %v3200 = vmul.f32 1.0, %v3199
    %v3201 = vtanh.pop %v3187
    %v3202 = vxor.u32 %v3188, 2147483648
    %v3203 = vmul.f32 %v3202, 1.442695
    %v3204 = vpow.pop %v3203
    %v3205 = vadd.f32 %v3204, 1.0
    %v3206 = vrcp.pop %v3205
    %v3207 = vmul.f32 1.0, %v3206
    %v3208 = vmul.f32 %v3200, %v2299
    %v3209 = vmul.f32 %v3194, %v3201
    %v3210 = vadd.f32 %v3208, %v3209
    %v3211 = vtanh.pop %v3210
    %v3212 = vmul.f32 %v3207, %v3211
    %v3213 = vpack.c.bf16 %v3212, %v3212
    %s3214 = scalar_lea.vmem [#allocation6], 8
    %3215 = vst [vmem:[%s3214] sm:$0xf] %v3213
    %s3216 = scalar_lea.vmem [#allocation7], 48
    %v3217 = vld [vmem:[%s3216] sm:$0xff]
    %v3218 = vld [vmem:[%s3216 + $0x8] sm:$0xff]
    %v3219 = vunpack.c.l.bf16 %v3217
    %v3220 = vunpack.c.h.bf16 %v3217
    %v3221 = vunpack.c.l.bf16 %v3218
    %v3222 = vunpack.c.h.bf16 %v3218
    %v3223 = vld [vmem:[#allocation8] sm:$0xff]
    %v3224 = vld [vmem:[#allocation8 + $0x8] sm:$0xff]
    %v3225 = vld [vmem:[#allocation8 + $0x10] sm:$0xff]
    %v3226 = vld [vmem:[#allocation8 + $0x18] sm:$0xff]
    %v3227 = vld [vmem:[#allocation8 + $0x20] sm:$0xff]
    %v3228 = vld [vmem:[#allocation8 + $0x28] sm:$0xff]
    %v3229 = vld [vmem:[#allocation8 + $0x30] sm:$0xff]
    %v3230 = vld [vmem:[#allocation8 + $0x38] sm:$0xff]
    %v3231 = vld [vmem:[#allocation8 + $0x40] sm:$0xff]
    %v3232 = vld [vmem:[#allocation8 + $0x48] sm:$0xff]
    %v3233 = vld [vmem:[#allocation8 + $0x50] sm:$0xff]
    %v3234 = vld [vmem:[#allocation8 + $0x58] sm:$0xff]
    %v3235 = vld [vmem:[#allocation8 + $0x60] sm:$0xff]
    %v3236 = vld [vmem:[#allocation8 + $0x68] sm:$0xff]
    %v3237 = vld [vmem:[#allocation8 + $0x70] sm:$0xff]
    %v3238 = vld [vmem:[#allocation8 + $0x78] sm:$0xff]
    %v3239 = vld [vmem:[#allocation8 + $0x80] sm:$0xff]
    %v3240 = vld [vmem:[#allocation8 + $0x88] sm:$0xff]
    %v3241 = vld [vmem:[#allocation8 + $0x90] sm:$0xff]
    %v3242 = vld [vmem:[#allocation8 + $0x98] sm:$0xff]
    %v3243 = vld [vmem:[#allocation8 + $0xa0] sm:$0xff]
    %v3244 = vld [vmem:[#allocation8 + $0xa8] sm:$0xff]
    %v3245 = vld [vmem:[#allocation8 + $0xb0] sm:$0xff]
    %v3246 = vld [vmem:[#allocation8 + $0xb8] sm:$0xff]
    %v3247 = vld [vmem:[#allocation8 + $0xc0] sm:$0xff]
    %v3248 = vld [vmem:[#allocation8 + $0xc8] sm:$0xff]
    %v3249 = vld [vmem:[#allocation8 + $0xd0] sm:$0xff]
    %v3250 = vld [vmem:[#allocation8 + $0xd8] sm:$0xff]
    %v3251 = vld [vmem:[#allocation8 + $0xe0] sm:$0xff]
    %v3252 = vld [vmem:[#allocation8 + $0xe8] sm:$0xff]
    %v3253 = vld [vmem:[#allocation8 + $0xf0] sm:$0xff]
    %v3254 = vld [vmem:[#allocation8 + $0xf8] sm:$0xff]
    %v3287 = vunpack.c.l.b16 %v3223
    %v3288 = vunpack.c.h.b16 %v3223
    %v3289 = vunpack.c.l.b16 %v3224
    %v3290 = vunpack.c.h.b16 %v3224
    %v3291 = vunpack.c.l.b16 %v3225
    %v3292 = vunpack.c.h.b16 %v3225
    %v3293 = vunpack.c.l.b16 %v3226
    %v3294 = vunpack.c.h.b16 %v3226
    %v3295 = vunpack.c.l.b16 %v3227
    %v3296 = vunpack.c.h.b16 %v3227
    %v3297 = vunpack.c.l.b16 %v3228
    %v3298 = vunpack.c.h.b16 %v3228
    %v3299 = vunpack.c.l.b16 %v3229
    %v3300 = vunpack.c.h.b16 %v3229
    %v3301 = vunpack.c.l.b16 %v3230
    %v3302 = vunpack.c.h.b16 %v3230
    %v3303 = vunpack.c.l.b16 %v3231
    %v3304 = vunpack.c.h.b16 %v3231
    %v3305 = vunpack.c.l.b16 %v3232
    %v3306 = vunpack.c.h.b16 %v3232
    %v3307 = vunpack.c.l.b16 %v3233
    %v3308 = vunpack.c.h.b16 %v3233
    %v3309 = vunpack.c.l.b16 %v3234
    %v3310 = vunpack.c.h.b16 %v3234
    %v3311 = vunpack.c.l.b16 %v3235
    %v3312 = vunpack.c.h.b16 %v3235
    %v3313 = vunpack.c.l.b16 %v3236
    %v3314 = vunpack.c.h.b16 %v3236
    %v3315 = vunpack.c.l.b16 %v3237
    %v3316 = vunpack.c.h.b16 %v3237
    %v3317 = vunpack.c.l.b16 %v3238
    %v3318 = vunpack.c.h.b16 %v3238
    %v3319 = vunpack.c.l.b16 %v3239
    %v3320 = vunpack.c.h.b16 %v3239
    %v3321 = vunpack.c.l.b16 %v3240
    %v3322 = vunpack.c.h.b16 %v3240
    %v3323 = vunpack.c.l.b16 %v3241
    %v3324 = vunpack.c.h.b16 %v3241
    %v3325 = vunpack.c.l.b16 %v3242
    %v3326 = vunpack.c.h.b16 %v3242
    %v3327 = vunpack.c.l.b16 %v3243
    %v3328 = vunpack.c.h.b16 %v3243
    %v3329 = vunpack.c.l.b16 %v3244
    %v3330 = vunpack.c.h.b16 %v3244
    %v3331 = vunpack.c.l.b16 %v3245
    %v3332 = vunpack.c.h.b16 %v3245
    %v3333 = vunpack.c.l.b16 %v3246
    %v3334 = vunpack.c.h.b16 %v3246
    %v3335 = vunpack.c.l.b16 %v3247
    %v3336 = vunpack.c.h.b16 %v3247
    %v3337 = vunpack.c.l.b16 %v3248
    %v3338 = vunpack.c.h.b16 %v3248
    %v3339 = vunpack.c.l.b16 %v3249
    %v3340 = vunpack.c.h.b16 %v3249
    %v3341 = vunpack.c.l.b16 %v3250
    %v3342 = vunpack.c.h.b16 %v3250
    %v3343 = vunpack.c.l.b16 %v3251
    %v3344 = vunpack.c.h.b16 %v3251
    %v3345 = vunpack.c.l.b16 %v3252
    %v3346 = vunpack.c.h.b16 %v3252
    %v3347 = vunpack.c.l.b16 %v3253
    %v3348 = vunpack.c.h.b16 %v3253
    %v3349 = vunpack.c.l.b16 %v3254
    %v3350 = vunpack.c.h.b16 %v3254
    %v3351 = vpack.c.b16 %v3291, %v3287
    %v3352 = vpack.c.b16 %v3292, %v3288
    %v3353 = vpack.c.b16 %v3293, %v3289
    %v3354 = vpack.c.b16 %v3294, %v3290
    %v3355 = vpack.c.b16 %v3299, %v3295
    %v3356 = vpack.c.b16 %v3300, %v3296
    %v3357 = vpack.c.b16 %v3301, %v3297
    %v3358 = vpack.c.b16 %v3302, %v3298
    %v3359 = vpack.c.b16 %v3307, %v3303
    %v3360 = vpack.c.b16 %v3308, %v3304
    %v3361 = vpack.c.b16 %v3309, %v3305
    %v3362 = vpack.c.b16 %v3310, %v3306
    %v3363 = vpack.c.b16 %v3315, %v3311
    %v3364 = vpack.c.b16 %v3316, %v3312
    %v3365 = vpack.c.b16 %v3317, %v3313
    %v3366 = vpack.c.b16 %v3318, %v3314
    %v3367 = vpack.c.b16 %v3323, %v3319
    %v3368 = vpack.c.b16 %v3324, %v3320
    %v3369 = vpack.c.b16 %v3325, %v3321
    %v3370 = vpack.c.b16 %v3326, %v3322
    %v3371 = vpack.c.b16 %v3331, %v3327
    %v3372 = vpack.c.b16 %v3332, %v3328
    %v3373 = vpack.c.b16 %v3333, %v3329
    %v3374 = vpack.c.b16 %v3334, %v3330
    %v3375 = vpack.c.b16 %v3339, %v3335
    %v3376 = vpack.c.b16 %v3340, %v3336
    %v3377 = vpack.c.b16 %v3341, %v3337
    %v3378 = vpack.c.b16 %v3342, %v3338
    %v3379 = vpack.c.b16 %v3347, %v3343
    %v3380 = vpack.c.b16 %v3348, %v3344
    %v3381 = vpack.c.b16 %v3349, %v3345
    %v3382 = vpack.c.b16 %v3350, %v3346
    %3415 = vmatprep.subr.bf16.mxu0 %v3380
    %3416 = vmatpush1.bf16.msra.mxu0 %v3379
    %3417 = vmatprep.subr.bf16.mxu0 %v3376
    %3418 = vmatpush1.bf16.msra.mxu0 %v3375
    %3419 = vmatprep.subr.bf16.mxu0 %v3372
    %3420 = vmatpush1.bf16.msra.mxu0 %v3371
    %3421 = vmatprep.subr.bf16.mxu0 %v3368
    %3422 = vmatpush1.bf16.msra.mxu0 %v3367
    %3423 = vmatprep.subr.bf16.mxu0 %v3364
    %3424 = vmatpush1.bf16.msra.mxu0 %v3363
    %3425 = vmatprep.subr.bf16.mxu0 %v3360
    %3426 = vmatpush1.bf16.msra.mxu0 %v3359
    %3427 = vmatprep.subr.bf16.mxu0 %v3356
    %3428 = vmatpush1.bf16.msra.mxu0 %v3355
    %3429 = vmatprep.subr.bf16.mxu0 %v3352
    %3430 = vmatpush1.bf16.msra.mxu0 %v3351
    %3431 = vmatprep.subr.bf16.mxu0 0
    %3432 = vmatpush2.bf16.msra.mxu0 0
    %3433 = vmatprep.subr.bf16.mxu0 0
    %3434 = vmatpush2.bf16.msra.mxu0 0
    %3435 = vmatprep.subr.bf16.mxu0 0
    %3436 = vmatpush2.bf16.msra.mxu0 0
    %3437 = vmatprep.subr.bf16.mxu0 0
    %3438 = vmatpush2.bf16.msra.mxu0 0
    %3439 = vmatprep.subr.bf16.mxu0 0
    %3440 = vmatpush2.bf16.msra.mxu0 0
    %3441 = vmatprep.subr.bf16.mxu0 0
    %3442 = vmatpush2.bf16.msra.mxu0 0
    %3443 = vmatprep.subr.bf16.mxu0 0
    %3444 = vmatpush2.bf16.msra.mxu0 0
    %3445 = vmatprep.subr.bf16.mxu0 0
    %3446 = vmatpush2.bf16.msra.mxu0 0
    %3447 = vmatprep.mubr.bf16.mxu0 0
    %3448 = vmatmul.mubr.bf16.gmra.mxu0 %v2646
    %v3449 = vpop.f32.mrf.mxu0
    %v3450 = vadd.f32 0.0, %v3449
    %v3451 = vpop.f32.mrf.mxu0
    %v3452 = vadd.f32 0.0, %v3451
    %v3453 = vpop.f32.mrf.mxu0
    %v3454 = vpop.f32.mrf.mxu0
    %3455 = vdwg.mxu0
    %3456 = vmatprep.subr.bf16.mxu0 %v3382
    %3457 = vmatpush1.bf16.msra.mxu0 %v3381
    %3458 = vmatprep.subr.bf16.mxu0 %v3378
    %3459 = vmatpush1.bf16.msra.mxu0 %v3377
    %3460 = vmatprep.subr.bf16.mxu0 %v3374
    %3461 = vmatpush1.bf16.msra.mxu0 %v3373
    %3462 = vmatprep.subr.bf16.mxu0 %v3370
    %3463 = vmatpush1.bf16.msra.mxu0 %v3369
    %3464 = vmatprep.subr.bf16.mxu0 %v3366
    %3465 = vmatpush1.bf16.msra.mxu0 %v3365
    %3466 = vmatprep.subr.bf16.mxu0 %v3362
    %3467 = vmatpush1.bf16.msra.mxu0 %v3361
    %3468 = vmatprep.subr.bf16.mxu0 %v3358
    %3469 = vmatpush1.bf16.msra.mxu0 %v3357
    %3470 = vmatprep.subr.bf16.mxu0 %v3354
    %3471 = vmatpush1.bf16.msra.mxu0 %v3353
    %3472 = vmatprep.subr.bf16.mxu0 0
    %3473 = vmatpush2.bf16.msra.mxu0 0
    %3474 = vmatprep.subr.bf16.mxu0 0
    %3475 = vmatpush2.bf16.msra.mxu0 0
    %3476 = vmatprep.subr.bf16.mxu0 0
    %3477 = vmatpush2.bf16.msra.mxu0 0
    %3478 = vmatprep.subr.bf16.mxu0 0
    %3479 = vmatpush2.bf16.msra.mxu0 0
    %3480 = vmatprep.subr.bf16.mxu0 0
    %3481 = vmatpush2.bf16.msra.mxu0 0
    %3482 = vmatprep.subr.bf16.mxu0 0
    %3483 = vmatpush2.bf16.msra.mxu0 0
    %3484 = vmatprep.subr.bf16.mxu0 0
    %3485 = vmatpush2.bf16.msra.mxu0 0
    %3486 = vmatprep.subr.bf16.mxu0 0
    %3487 = vmatpush2.bf16.msra.mxu0 0
    %3488 = vmatprep.mubr.bf16.mxu0 0
    %3489 = vmatmul.mubr.bf16.gmra.mxu0 %v2646
    %v3490 = vpop.f32.mrf.mxu0
    %v3491 = vadd.f32 0.0, %v3490
    %v3492 = vpop.f32.mrf.mxu0
    %v3493 = vadd.f32 0.0, %v3492
    %v3494 = vpop.f32.mrf.mxu0
    %v3495 = vpop.f32.mrf.mxu0
    %3496 = vdwg.mxu0
    %v3497 = vadd.f32 %v3219, %v3450
    %v3498 = vadd.f32 %v3220, %v3452
    %v3499 = vadd.f32 %v3221, %v3491
    %v3500 = vadd.f32 %v3222, %v3493
    %v3501 = vxor.u32 %v3497, 2147483648
    %v3502 = vmul.f32 %v3501, 1.442695
    %v3503 = vpow.pop %v3502
    %v3504 = vadd.f32 %v3503, 1.0
    %v3505 = vrcp.pop %v3504
    %v3506 = vmul.f32 1.0, %v3505
    %v3507 = vxor.u32 %v3498, 2147483648
    %v3508 = vmul.f32 %v3507, 1.442695
    %v3509 = vpow.pop %v3508
    %v3510 = vadd.f32 %v3509, 1.0
    %v3511 = vrcp.pop %v3510
    %v3512 = vmul.f32 1.0, %v3511
    %v3513 = vtanh.pop %v3499
    %v3514 = vxor.u32 %v3500, 2147483648
    %v3515 = vmul.f32 %v3514, 1.442695
    %v3516 = vpow.pop %v3515
    %v3517 = vadd.f32 %v3516, 1.0
    %v3518 = vrcp.pop %v3517
    %v3519 = vmul.f32 1.0, %v3518
    %v3520 = vmul.f32 %v3512, %v2611
    %v3521 = vmul.f32 %v3506, %v3513
    %v3522 = vadd.f32 %v3520, %v3521
    %v3523 = vtanh.pop %v3522
    %v3524 = vmul.f32 %v3519, %v3523
    %v3525 = vld [vmem:[#allocation10] sm:$0xff]
    %v3526 = vld [vmem:[#allocation10 + $0x8] sm:$0xff]
    %v3527 = vld [vmem:[#allocation10 + $0x10] sm:$0xff]
    %v3528 = vld [vmem:[#allocation10 + $0x18] sm:$0xff]
    %v3529 = vld [vmem:[#allocation10 + $0x20] sm:$0xff]
    %v3530 = vld [vmem:[#allocation10 + $0x28] sm:$0xff]
    %v3531 = vld [vmem:[#allocation10 + $0x30] sm:$0xff]
    %v3532 = vld [vmem:[#allocation10 + $0x38] sm:$0xff]
    %v3533 = vld [vmem:[#allocation10 + $0x40] sm:$0xff]
    %v3534 = vld [vmem:[#allocation10 + $0x48] sm:$0xff]
    %v3535 = vld [vmem:[#allocation10 + $0x50] sm:$0xff]
    %v3536 = vld [vmem:[#allocation10 + $0x58] sm:$0xff]
    %v3537 = vld [vmem:[#allocation10 + $0x60] sm:$0xff]
    %v3538 = vld [vmem:[#allocation10 + $0x68] sm:$0xff]
    %v3539 = vld [vmem:[#allocation10 + $0x70] sm:$0xff]
    %v3540 = vld [vmem:[#allocation10 + $0x78] sm:$0xff]
    %v3541 = vld [vmem:[#allocation10 + $0x80] sm:$0xff]
    %v3542 = vld [vmem:[#allocation10 + $0x88] sm:$0xff]
    %v3543 = vld [vmem:[#allocation10 + $0x90] sm:$0xff]
    %v3544 = vld [vmem:[#allocation10 + $0x98] sm:$0xff]
    %v3545 = vld [vmem:[#allocation10 + $0xa0] sm:$0xff]
    %v3546 = vld [vmem:[#allocation10 + $0xa8] sm:$0xff]
    %v3547 = vld [vmem:[#allocation10 + $0xb0] sm:$0xff]
    %v3548 = vld [vmem:[#allocation10 + $0xb8] sm:$0xff]
    %v3549 = vld [vmem:[#allocation10 + $0xc0] sm:$0xff]
    %v3550 = vld [vmem:[#allocation10 + $0xc8] sm:$0xff]
    %v3551 = vld [vmem:[#allocation10 + $0xd0] sm:$0xff]
    %v3552 = vld [vmem:[#allocation10 + $0xd8] sm:$0xff]
    %v3553 = vld [vmem:[#allocation10 + $0xe0] sm:$0xff]
    %v3554 = vld [vmem:[#allocation10 + $0xe8] sm:$0xff]
    %v3555 = vld [vmem:[#allocation10 + $0xf0] sm:$0xff]
    %v3556 = vld [vmem:[#allocation10 + $0xf8] sm:$0xff]
    %v3557 = vpack.c.bf16 %v3524, %v3524
    %v3558 = vld [vmem:[%s6] sm:$0xf]
    %v3560 = vlaneseq
    %v3561 = vshrl.u32 %v3560, 7
    %v3562 = vsub.s32 0, %v3561
    %v3563 = vrot.slane %v3558, %v3562
    %v3564 = vlaneseq
    %v3565 = vshrl.u32 %v3564, 7
    %v3566 = vsub.s32 1, %v3565
    %v3567 = vrot.slane %v3558, %v3566
    %v3568 = vlaneseq
    %v3569 = vshrl.u32 %v3568, 7
    %v3570 = vsub.s32 2, %v3569
    %v3571 = vrot.slane %v3558, %v3570
    %v3572 = vlaneseq
    %v3573 = vshrl.u32 %v3572, 7
    %v3574 = vsub.s32 3, %v3573
    %v3575 = vrot.slane %v3558, %v3574
    %v3612 = vunpack.c.l.b16 %v3525
    %v3613 = vunpack.c.h.b16 %v3525
    %v3614 = vunpack.c.l.b16 %v3526
    %v3615 = vunpack.c.h.b16 %v3526
    %v3616 = vunpack.c.l.b16 %v3527
    %v3617 = vunpack.c.h.b16 %v3527
    %v3618 = vunpack.c.l.b16 %v3528
    %v3619 = vunpack.c.h.b16 %v3528
    %v3620 = vunpack.c.l.b16 %v3529
    %v3621 = vunpack.c.h.b16 %v3529
    %v3622 = vunpack.c.l.b16 %v3530
    %v3623 = vunpack.c.h.b16 %v3530
    %v3624 = vunpack.c.l.b16 %v3531
    %v3625 = vunpack.c.h.b16 %v3531
    %v3626 = vunpack.c.l.b16 %v3532
    %v3627 = vunpack.c.h.b16 %v3532
    %v3628 = vunpack.c.l.b16 %v3533
    %v3629 = vunpack.c.h.b16 %v3533
    %v3630 = vunpack.c.l.b16 %v3534
    %v3631 = vunpack.c.h.b16 %v3534
    %v3632 = vunpack.c.l.b16 %v3535
    %v3633 = vunpack.c.h.b16 %v3535
    %v3634 = vunpack.c.l.b16 %v3536
    %v3635 = vunpack.c.h.b16 %v3536
    %v3636 = vunpack.c.l.b16 %v3537
    %v3637 = vunpack.c.h.b16 %v3537
    %v3638 = vunpack.c.l.b16 %v3538
    %v3639 = vunpack.c.h.b16 %v3538
    %v3640 = vunpack.c.l.b16 %v3539
    %v3641 = vunpack.c.h.b16 %v3539
    %v3642 = vunpack.c.l.b16 %v3540
    %v3643 = vunpack.c.h.b16 %v3540
    %v3644 = vunpack.c.l.b16 %v3541
    %v3645 = vunpack.c.h.b16 %v3541
    %v3646 = vunpack.c.l.b16 %v3542
    %v3647 = vunpack.c.h.b16 %v3542
    %v3648 = vunpack.c.l.b16 %v3543
    %v3649 = vunpack.c.h.b16 %v3543
    %v3650 = vunpack.c.l.b16 %v3544
    %v3651 = vunpack.c.h.b16 %v3544
    %v3652 = vunpack.c.l.b16 %v3545
    %v3653 = vunpack.c.h.b16 %v3545
    %v3654 = vunpack.c.l.b16 %v3546
    %v3655 = vunpack.c.h.b16 %v3546
    %v3656 = vunpack.c.l.b16 %v3547
    %v3657 = vunpack.c.h.b16 %v3547
    %v3658 = vunpack.c.l.b16 %v3548
    %v3659 = vunpack.c.h.b16 %v3548
    %v3660 = vunpack.c.l.b16 %v3549
    %v3661 = vunpack.c.h.b16 %v3549
    %v3662 = vunpack.c.l.b16 %v3550
    %v3663 = vunpack.c.h.b16 %v3550
    %v3664 = vunpack.c.l.b16 %v3551
    %v3665 = vunpack.c.h.b16 %v3551
    %v3666 = vunpack.c.l.b16 %v3552
    %v3667 = vunpack.c.h.b16 %v3552
    %v3668 = vunpack.c.l.b16 %v3553
    %v3669 = vunpack.c.h.b16 %v3553
    %v3670 = vunpack.c.l.b16 %v3554
    %v3671 = vunpack.c.h.b16 %v3554
    %v3672 = vunpack.c.l.b16 %v3555
    %v3673 = vunpack.c.h.b16 %v3555
    %v3674 = vunpack.c.l.b16 %v3556
    %v3675 = vunpack.c.h.b16 %v3556
    %v3676 = vpack.c.b16 %v3616, %v3612
    %v3677 = vpack.c.b16 %v3617, %v3613
    %v3678 = vpack.c.b16 %v3618, %v3614
    %v3679 = vpack.c.b16 %v3619, %v3615
    %v3680 = vpack.c.b16 %v3624, %v3620
    %v3681 = vpack.c.b16 %v3625, %v3621
    %v3682 = vpack.c.b16 %v3626, %v3622
    %v3683 = vpack.c.b16 %v3627, %v3623
    %v3684 = vpack.c.b16 %v3632, %v3628
    %v3685 = vpack.c.b16 %v3633, %v3629
    %v3686 = vpack.c.b16 %v3634, %v3630
    %v3687 = vpack.c.b16 %v3635, %v3631
    %v3688 = vpack.c.b16 %v3640, %v3636
    %v3689 = vpack.c.b16 %v3641, %v3637
    %v3690 = vpack.c.b16 %v3642, %v3638
    %v3691 = vpack.c.b16 %v3643, %v3639
    %v3692 = vpack.c.b16 %v3648, %v3644
    %v3693 = vpack.c.b16 %v3649, %v3645
    %v3694 = vpack.c.b16 %v3650, %v3646
    %v3695 = vpack.c.b16 %v3651, %v3647
    %v3696 = vpack.c.b16 %v3656, %v3652
    %v3697 = vpack.c.b16 %v3657, %v3653
    %v3698 = vpack.c.b16 %v3658, %v3654
    %v3699 = vpack.c.b16 %v3659, %v3655
    %v3700 = vpack.c.b16 %v3664, %v3660
    %v3701 = vpack.c.b16 %v3665, %v3661
    %v3702 = vpack.c.b16 %v3666, %v3662
    %v3703 = vpack.c.b16 %v3667, %v3663
    %v3704 = vpack.c.b16 %v3672, %v3668
    %v3705 = vpack.c.b16 %v3673, %v3669
    %v3706 = vpack.c.b16 %v3674, %v3670
    %v3707 = vpack.c.b16 %v3675, %v3671
    %3740 = vmatprep.subr.bf16.mxu0 %v3705
    %3741 = vmatpush1.bf16.msra.mxu0 %v3704
    %3742 = vmatprep.subr.bf16.mxu0 %v3701
    %3743 = vmatpush1.bf16.msra.mxu0 %v3700
    %3744 = vmatprep.subr.bf16.mxu0 %v3697
    %3745 = vmatpush1.bf16.msra.mxu0 %v3696
    %3746 = vmatprep.subr.bf16.mxu0 %v3693
    %3747 = vmatpush1.bf16.msra.mxu0 %v3692
    %3748 = vmatprep.subr.bf16.mxu0 %v3689
    %3749 = vmatpush1.bf16.msra.mxu0 %v3688
    %3750 = vmatprep.subr.bf16.mxu0 %v3685
    %3751 = vmatpush1.bf16.msra.mxu0 %v3684
    %3752 = vmatprep.subr.bf16.mxu0 %v3681
    %3753 = vmatpush1.bf16.msra.mxu0 %v3680
    %3754 = vmatprep.subr.bf16.mxu0 %v3677
    %3755 = vmatpush1.bf16.msra.mxu0 %v3676
    %3756 = vmatprep.subr.bf16.mxu0 0
    %3757 = vmatpush2.bf16.msra.mxu0 0
    %3758 = vmatprep.subr.bf16.mxu0 0
    %3759 = vmatpush2.bf16.msra.mxu0 0
    %3760 = vmatprep.subr.bf16.mxu0 0
    %3761 = vmatpush2.bf16.msra.mxu0 0
    %3762 = vmatprep.subr.bf16.mxu0 0
    %3763 = vmatpush2.bf16.msra.mxu0 0
    %3764 = vmatprep.subr.bf16.mxu0 0
    %3765 = vmatpush2.bf16.msra.mxu0 0
    %3766 = vmatprep.subr.bf16.mxu0 0
    %3767 = vmatpush2.bf16.msra.mxu0 0
    %3768 = vmatprep.subr.bf16.mxu0 0
    %3769 = vmatpush2.bf16.msra.mxu0 0
    %3770 = vmatprep.subr.bf16.mxu0 0
    %3771 = vmatpush2.bf16.msra.mxu0 0
    %3772 = vmatprep.mubr.bf16.mxu0 0
    %3773 = vmatmul.mubr.bf16.gmra.mxu0 %v3557
    %v3774 = vpop.f32.mrf.mxu0
    %v3775 = vadd.f32 %v3563, %v3774
    %v3776 = vpop.f32.mrf.mxu0
    %v3777 = vadd.f32 %v3567, %v3776
    %v3778 = vpop.f32.mrf.mxu0
    %v3779 = vpop.f32.mrf.mxu0
    %3780 = vdwg.mxu0
    %3781 = vmatprep.subr.bf16.mxu0 %v3707
    %3782 = vmatpush1.bf16.msra.mxu0 %v3706
    %3783 = vmatprep.subr.bf16.mxu0 %v3703
    %3784 = vmatpush1.bf16.msra.mxu0 %v3702
    %3785 = vmatprep.subr.bf16.mxu0 %v3699
    %3786 = vmatpush1.bf16.msra.mxu0 %v3698
    %3787 = vmatprep.subr.bf16.mxu0 %v3695
    %3788 = vmatpush1.bf16.msra.mxu0 %v3694
    %3789 = vmatprep.subr.bf16.mxu0 %v3691
    %3790 = vmatpush1.bf16.msra.mxu0 %v3690
    %3791 = vmatprep.subr.bf16.mxu0 %v3687
    %3792 = vmatpush1.bf16.msra.mxu0 %v3686
    %3793 = vmatprep.subr.bf16.mxu0 %v3683
    %3794 = vmatpush1.bf16.msra.mxu0 %v3682
    %3795 = vmatprep.subr.bf16.mxu0 %v3679
    %3796 = vmatpush1.bf16.msra.mxu0 %v3678
    %3797 = vmatprep.subr.bf16.mxu0 0
    %3798 = vmatpush2.bf16.msra.mxu0 0
    %3799 = vmatprep.subr.bf16.mxu0 0
    %3800 = vmatpush2.bf16.msra.mxu0 0
    %3801 = vmatprep.subr.bf16.mxu0 0
    %3802 = vmatpush2.bf16.msra.mxu0 0
    %3803 = vmatprep.subr.bf16.mxu0 0
    %3804 = vmatpush2.bf16.msra.mxu0 0
    %3805 = vmatprep.subr.bf16.mxu0 0
    %3806 = vmatpush2.bf16.msra.mxu0 0
    %3807 = vmatprep.subr.bf16.mxu0 0
    %3808 = vmatpush2.bf16.msra.mxu0 0
    %3809 = vmatprep.subr.bf16.mxu0 0
    %3810 = vmatpush2.bf16.msra.mxu0 0
    %3811 = vmatprep.subr.bf16.mxu0 0
    %3812 = vmatpush2.bf16.msra.mxu0 0
    %3813 = vmatprep.mubr.bf16.mxu0 0
    %3814 = vmatmul.mubr.bf16.gmra.mxu0 %v3557
    %v3815 = vpop.f32.mrf.mxu0
    %v3816 = vadd.f32 %v3571, %v3815
    %v3817 = vpop.f32.mrf.mxu0
    %v3818 = vadd.f32 %v3575, %v3817
    %v3819 = vpop.f32.mrf.mxu0
    %v3820 = vpop.f32.mrf.mxu0
    %3821 = vdwg.mxu0
    %v3822 = vld [vmem:[#allocation12] sm:$0xff]
    %v3823 = vld [vmem:[#allocation12 + $0x8] sm:$0xff]
    %v3824 = vld [vmem:[#allocation12 + $0x10] sm:$0xff]
    %v3825 = vld [vmem:[#allocation12 + $0x18] sm:$0xff]
    %v3826 = vld [vmem:[#allocation12 + $0x20] sm:$0xff]
    %v3827 = vld [vmem:[#allocation12 + $0x28] sm:$0xff]
    %v3828 = vld [vmem:[#allocation12 + $0x30] sm:$0xff]
    %v3829 = vld [vmem:[#allocation12 + $0x38] sm:$0xff]
    %v3830 = vld [vmem:[#allocation12 + $0x40] sm:$0xff]
    %v3831 = vld [vmem:[#allocation12 + $0x48] sm:$0xff]
    %v3832 = vld [vmem:[#allocation12 + $0x50] sm:$0xff]
    %v3833 = vld [vmem:[#allocation12 + $0x58] sm:$0xff]
    %v3834 = vld [vmem:[#allocation12 + $0x60] sm:$0xff]
    %v3835 = vld [vmem:[#allocation12 + $0x68] sm:$0xff]
    %v3836 = vld [vmem:[#allocation12 + $0x70] sm:$0xff]
    %v3837 = vld [vmem:[#allocation12 + $0x78] sm:$0xff]
    %v3838 = vld [vmem:[#allocation12 + $0x80] sm:$0xff]
    %v3839 = vld [vmem:[#allocation12 + $0x88] sm:$0xff]
    %v3840 = vld [vmem:[#allocation12 + $0x90] sm:$0xff]
    %v3841 = vld [vmem:[#allocation12 + $0x98] sm:$0xff]
    %v3842 = vld [vmem:[#allocation12 + $0xa0] sm:$0xff]
    %v3843 = vld [vmem:[#allocation12 + $0xa8] sm:$0xff]
    %v3844 = vld [vmem:[#allocation12 + $0xb0] sm:$0xff]
    %v3845 = vld [vmem:[#allocation12 + $0xb8] sm:$0xff]
    %v3846 = vld [vmem:[#allocation12 + $0xc0] sm:$0xff]
    %v3847 = vld [vmem:[#allocation12 + $0xc8] sm:$0xff]
    %v3848 = vld [vmem:[#allocation12 + $0xd0] sm:$0xff]
    %v3849 = vld [vmem:[#allocation12 + $0xd8] sm:$0xff]
    %v3850 = vld [vmem:[#allocation12 + $0xe0] sm:$0xff]
    %v3851 = vld [vmem:[#allocation12 + $0xe8] sm:$0xff]
    %v3852 = vld [vmem:[#allocation12 + $0xf0] sm:$0xff]
    %v3853 = vld [vmem:[#allocation12 + $0xf8] sm:$0xff]
    %v3886 = vunpack.c.l.b16 %v3822
    %v3887 = vunpack.c.h.b16 %v3822
    %v3888 = vunpack.c.l.b16 %v3823
    %v3889 = vunpack.c.h.b16 %v3823
    %v3890 = vunpack.c.l.b16 %v3824
    %v3891 = vunpack.c.h.b16 %v3824
    %v3892 = vunpack.c.l.b16 %v3825
    %v3893 = vunpack.c.h.b16 %v3825
    %v3894 = vunpack.c.l.b16 %v3826
    %v3895 = vunpack.c.h.b16 %v3826
    %v3896 = vunpack.c.l.b16 %v3827
    %v3897 = vunpack.c.h.b16 %v3827
    %v3898 = vunpack.c.l.b16 %v3828
    %v3899 = vunpack.c.h.b16 %v3828
    %v3900 = vunpack.c.l.b16 %v3829
    %v3901 = vunpack.c.h.b16 %v3829
    %v3902 = vunpack.c.l.b16 %v3830
    %v3903 = vunpack.c.h.b16 %v3830
    %v3904 = vunpack.c.l.b16 %v3831
    %v3905 = vunpack.c.h.b16 %v3831
    %v3906 = vunpack.c.l.b16 %v3832
    %v3907 = vunpack.c.h.b16 %v3832
    %v3908 = vunpack.c.l.b16 %v3833
    %v3909 = vunpack.c.h.b16 %v3833
    %v3910 = vunpack.c.l.b16 %v3834
    %v3911 = vunpack.c.h.b16 %v3834
    %v3912 = vunpack.c.l.b16 %v3835
    %v3913 = vunpack.c.h.b16 %v3835
    %v3914 = vunpack.c.l.b16 %v3836
    %v3915 = vunpack.c.h.b16 %v3836
    %v3916 = vunpack.c.l.b16 %v3837
    %v3917 = vunpack.c.h.b16 %v3837
    %v3918 = vunpack.c.l.b16 %v3838
    %v3919 = vunpack.c.h.b16 %v3838
    %v3920 = vunpack.c.l.b16 %v3839
    %v3921 = vunpack.c.h.b16 %v3839
    %v3922 = vunpack.c.l.b16 %v3840
    %v3923 = vunpack.c.h.b16 %v3840
    %v3924 = vunpack.c.l.b16 %v3841
    %v3925 = vunpack.c.h.b16 %v3841
    %v3926 = vunpack.c.l.b16 %v3842
    %v3927 = vunpack.c.h.b16 %v3842
    %v3928 = vunpack.c.l.b16 %v3843
    %v3929 = vunpack.c.h.b16 %v3843
    %v3930 = vunpack.c.l.b16 %v3844
    %v3931 = vunpack.c.h.b16 %v3844
    %v3932 = vunpack.c.l.b16 %v3845
    %v3933 = vunpack.c.h.b16 %v3845
    %v3934 = vunpack.c.l.b16 %v3846
    %v3935 = vunpack.c.h.b16 %v3846
    %v3936 = vunpack.c.l.b16 %v3847
    %v3937 = vunpack.c.h.b16 %v3847
    %v3938 = vunpack.c.l.b16 %v3848
    %v3939 = vunpack.c.h.b16 %v3848
    %v3940 = vunpack.c.l.b16 %v3849
    %v3941 = vunpack.c.h.b16 %v3849
    %v3942 = vunpack.c.l.b16 %v3850
    %v3943 = vunpack.c.h.b16 %v3850
    %v3944 = vunpack.c.l.b16 %v3851
    %v3945 = vunpack.c.h.b16 %v3851
    %v3946 = vunpack.c.l.b16 %v3852
    %v3947 = vunpack.c.h.b16 %v3852
    %v3948 = vunpack.c.l.b16 %v3853
    %v3949 = vunpack.c.h.b16 %v3853
    %v3950 = vpack.c.b16 %v3890, %v3886
    %v3951 = vpack.c.b16 %v3891, %v3887
    %v3952 = vpack.c.b16 %v3892, %v3888
    %v3953 = vpack.c.b16 %v3893, %v3889
    %v3954 = vpack.c.b16 %v3898, %v3894
    %v3955 = vpack.c.b16 %v3899, %v3895
    %v3956 = vpack.c.b16 %v3900, %v3896
    %v3957 = vpack.c.b16 %v3901, %v3897
    %v3958 = vpack.c.b16 %v3906, %v3902
    %v3959 = vpack.c.b16 %v3907, %v3903
    %v3960 = vpack.c.b16 %v3908, %v3904
    %v3961 = vpack.c.b16 %v3909, %v3905
    %v3962 = vpack.c.b16 %v3914, %v3910
    %v3963 = vpack.c.b16 %v3915, %v3911
    %v3964 = vpack.c.b16 %v3916, %v3912
    %v3965 = vpack.c.b16 %v3917, %v3913
    %v3966 = vpack.c.b16 %v3922, %v3918
    %v3967 = vpack.c.b16 %v3923, %v3919
    %v3968 = vpack.c.b16 %v3924, %v3920
    %v3969 = vpack.c.b16 %v3925, %v3921
    %v3970 = vpack.c.b16 %v3930, %v3926
    %v3971 = vpack.c.b16 %v3931, %v3927
    %v3972 = vpack.c.b16 %v3932, %v3928
    %v3973 = vpack.c.b16 %v3933, %v3929
    %v3974 = vpack.c.b16 %v3938, %v3934
    %v3975 = vpack.c.b16 %v3939, %v3935
    %v3976 = vpack.c.b16 %v3940, %v3936
    %v3977 = vpack.c.b16 %v3941, %v3937
    %v3978 = vpack.c.b16 %v3946, %v3942
    %v3979 = vpack.c.b16 %v3947, %v3943
    %v3980 = vpack.c.b16 %v3948, %v3944
    %v3981 = vpack.c.b16 %v3949, %v3945
    %4014 = vmatprep.subr.bf16.mxu0 %v3979
    %4015 = vmatpush1.bf16.msra.mxu0 %v3978
    %4016 = vmatprep.subr.bf16.mxu0 %v3975
    %4017 = vmatpush1.bf16.msra.mxu0 %v3974
    %4018 = vmatprep.subr.bf16.mxu0 %v3971
    %4019 = vmatpush1.bf16.msra.mxu0 %v3970
    %4020 = vmatprep.subr.bf16.mxu0 %v3967
    %4021 = vmatpush1.bf16.msra.mxu0 %v3966
    %4022 = vmatprep.subr.bf16.mxu0 %v3963
    %4023 = vmatpush1.bf16.msra.mxu0 %v3962
    %4024 = vmatprep.subr.bf16.mxu0 %v3959
    %4025 = vmatpush1.bf16.msra.mxu0 %v3958
    %4026 = vmatprep.subr.bf16.mxu0 %v3955
    %4027 = vmatpush1.bf16.msra.mxu0 %v3954
    %4028 = vmatprep.subr.bf16.mxu0 %v3951
    %4029 = vmatpush1.bf16.msra.mxu0 %v3950
    %4030 = vmatprep.subr.bf16.mxu0 0
    %4031 = vmatpush2.bf16.msra.mxu0 0
    %4032 = vmatprep.subr.bf16.mxu0 0
    %4033 = vmatpush2.bf16.msra.mxu0 0
    %4034 = vmatprep.subr.bf16.mxu0 0
    %4035 = vmatpush2.bf16.msra.mxu0 0
    %4036 = vmatprep.subr.bf16.mxu0 0
    %4037 = vmatpush2.bf16.msra.mxu0 0
    %4038 = vmatprep.subr.bf16.mxu0 0
    %4039 = vmatpush2.bf16.msra.mxu0 0
    %4040 = vmatprep.subr.bf16.mxu0 0
    %4041 = vmatpush2.bf16.msra.mxu0 0
    %4042 = vmatprep.subr.bf16.mxu0 0
    %4043 = vmatpush2.bf16.msra.mxu0 0
    %4044 = vmatprep.subr.bf16.mxu0 0
    %4045 = vmatpush2.bf16.msra.mxu0 0
    %4046 = vmatprep.mubr.bf16.mxu0 0
    %4047 = vmatmul.mubr.bf16.gmra.mxu0 %v3213
    %v4048 = vpop.f32.mrf.mxu0
    %v4049 = vadd.f32 0.0, %v4048
    %v4050 = vpop.f32.mrf.mxu0
    %v4051 = vadd.f32 0.0, %v4050
    %v4052 = vpop.f32.mrf.mxu0
    %v4053 = vpop.f32.mrf.mxu0
    %4054 = vdwg.mxu0
    %4055 = vmatprep.subr.bf16.mxu0 %v3981
    %4056 = vmatpush1.bf16.msra.mxu0 %v3980
    %4057 = vmatprep.subr.bf16.mxu0 %v3977
    %4058 = vmatpush1.bf16.msra.mxu0 %v3976
    %4059 = vmatprep.subr.bf16.mxu0 %v3973
    %4060 = vmatpush1.bf16.msra.mxu0 %v3972
    %4061 = vmatprep.subr.bf16.mxu0 %v3969
    %4062 = vmatpush1.bf16.msra.mxu0 %v3968
    %4063 = vmatprep.subr.bf16.mxu0 %v3965
    %4064 = vmatpush1.bf16.msra.mxu0 %v3964
    %4065 = vmatprep.subr.bf16.mxu0 %v3961
    %4066 = vmatpush1.bf16.msra.mxu0 %v3960
    %4067 = vmatprep.subr.bf16.mxu0 %v3957
    %4068 = vmatpush1.bf16.msra.mxu0 %v3956
    %4069 = vmatprep.subr.bf16.mxu0 %v3953
    %4070 = vmatpush1.bf16.msra.mxu0 %v3952
    %4071 = vmatprep.subr.bf16.mxu0 0
    %4072 = vmatpush2.bf16.msra.mxu0 0
    %4073 = vmatprep.subr.bf16.mxu0 0
    %4074 = vmatpush2.bf16.msra.mxu0 0
    %4075 = vmatprep.subr.bf16.mxu0 0
    %4076 = vmatpush2.bf16.msra.mxu0 0
    %4077 = vmatprep.subr.bf16.mxu0 0
    %4078 = vmatpush2.bf16.msra.mxu0 0
    %4079 = vmatprep.subr.bf16.mxu0 0
    %4080 = vmatpush2.bf16.msra.mxu0 0
    %4081 = vmatprep.subr.bf16.mxu0 0
    %4082 = vmatpush2.bf16.msra.mxu0 0
    %4083 = vmatprep.subr.bf16.mxu0 0
    %4084 = vmatpush2.bf16.msra.mxu0 0
    %4085 = vmatprep.subr.bf16.mxu0 0
    %4086 = vmatpush2.bf16.msra.mxu0 0
    %4087 = vmatprep.mubr.bf16.mxu0 0
    %4088 = vmatmul.mubr.bf16.gmra.mxu0 %v3213
    %v4089 = vpop.f32.mrf.mxu0
    %v4090 = vadd.f32 0.0, %v4089
    %v4091 = vpop.f32.mrf.mxu0
    %v4092 = vadd.f32 0.0, %v4091
    %v4093 = vpop.f32.mrf.mxu0
    %v4094 = vpop.f32.mrf.mxu0
    %4095 = vdwg.mxu0
    %v4096 = vadd.f32 %v3775, %v4049
    %v4097 = vadd.f32 %v3777, %v4051
    %v4098 = vadd.f32 %v3816, %v4090
    %v4099 = vadd.f32 %v3818, %v4092
    %v4100 = vxor.u32 %v4096, 2147483648
    %v4101 = vmul.f32 %v4100, 1.442695
    %v4102 = vpow.pop %v4101
    %v4103 = vadd.f32 %v4102, 1.0
    %v4104 = vrcp.pop %v4103
    %v4105 = vmul.f32 1.0, %v4104
    %v4106 = vxor.u32 %v4097, 2147483648
    %v4107 = vmul.f32 %v4106, 1.442695
    %v4108 = vpow.pop %v4107
    %v4109 = vadd.f32 %v4108, 1.0
    %v4110 = vrcp.pop %v4109
    %v4111 = vmul.f32 1.0, %v4110
    %v4112 = vtanh.pop %v4098
    %v4113 = vxor.u32 %v4099, 2147483648
    %v4114 = vmul.f32 %v4113, 1.442695
    %v4115 = vpow.pop %v4114
    %v4116 = vadd.f32 %v4115, 1.0
    %v4117 = vrcp.pop %v4116
    %v4118 = vmul.f32 1.0, %v4117
    %v4119 = vmul.f32 %v4111, %v3210
    %v4120 = vmul.f32 %v4105, %v4112
    %v4121 = vadd.f32 %v4119, %v4120
    %v4122 = vtanh.pop %v4121
    %v4123 = vmul.f32 %v4118, %v4122
    %v4124 = vpack.c.bf16 %v4123, %v4123
    %s4125 = scalar_lea.vmem [#allocation6], 12
    %4126 = vst [vmem:[%s4125] sm:$0xf] %v4124
    %s4127 = scalar_lea.vmem [#allocation7], 64
    %v4128 = vld [vmem:[%s4127] sm:$0xff]
    %v4129 = vld [vmem:[%s4127 + $0x8] sm:$0xff]
    %v4130 = vunpack.c.l.bf16 %v4128
    %v4131 = vunpack.c.h.bf16 %v4128
    %v4132 = vunpack.c.l.bf16 %v4129
    %v4133 = vunpack.c.h.bf16 %v4129
    %v4134 = vld [vmem:[#allocation8] sm:$0xff]
    %v4135 = vld [vmem:[#allocation8 + $0x8] sm:$0xff]
    %v4136 = vld [vmem:[#allocation8 + $0x10] sm:$0xff]
    %v4137 = vld [vmem:[#allocation8 + $0x18] sm:$0xff]
    %v4138 = vld [vmem:[#allocation8 + $0x20] sm:$0xff]
    %v4139 = vld [vmem:[#allocation8 + $0x28] sm:$0xff]
    %v4140 = vld [vmem:[#allocation8 + $0x30] sm:$0xff]
    %v4141 = vld [vmem:[#allocation8 + $0x38] sm:$0xff]
    %v4142 = vld [vmem:[#allocation8 + $0x40] sm:$0xff]
    %v4143 = vld [vmem:[#allocation8 + $0x48] sm:$0xff]
    %v4144 = vld [vmem:[#allocation8 + $0x50] sm:$0xff]
    %v4145 = vld [vmem:[#allocation8 + $0x58] sm:$0xff]
    %v4146 = vld [vmem:[#allocation8 + $0x60] sm:$0xff]
    %v4147 = vld [vmem:[#allocation8 + $0x68] sm:$0xff]
    %v4148 = vld [vmem:[#allocation8 + $0x70] sm:$0xff]
    %v4149 = vld [vmem:[#allocation8 + $0x78] sm:$0xff]
    %v4150 = vld [vmem:[#allocation8 + $0x80] sm:$0xff]
    %v4151 = vld [vmem:[#allocation8 + $0x88] sm:$0xff]
    %v4152 = vld [vmem:[#allocation8 + $0x90] sm:$0xff]
    %v4153 = vld [vmem:[#allocation8 + $0x98] sm:$0xff]
    %v4154 = vld [vmem:[#allocation8 + $0xa0] sm:$0xff]
    %v4155 = vld [vmem:[#allocation8 + $0xa8] sm:$0xff]
    %v4156 = vld [vmem:[#allocation8 + $0xb0] sm:$0xff]
    %v4157 = vld [vmem:[#allocation8 + $0xb8] sm:$0xff]
    %v4158 = vld [vmem:[#allocation8 + $0xc0] sm:$0xff]
    %v4159 = vld [vmem:[#allocation8 + $0xc8] sm:$0xff]
    %v4160 = vld [vmem:[#allocation8 + $0xd0] sm:$0xff]
    %v4161 = vld [vmem:[#allocation8 + $0xd8] sm:$0xff]
    %v4162 = vld [vmem:[#allocation8 + $0xe0] sm:$0xff]
    %v4163 = vld [vmem:[#allocation8 + $0xe8] sm:$0xff]
    %v4164 = vld [vmem:[#allocation8 + $0xf0] sm:$0xff]
    %v4165 = vld [vmem:[#allocation8 + $0xf8] sm:$0xff]
    %v4198 = vunpack.c.l.b16 %v4134
    %v4199 = vunpack.c.h.b16 %v4134
    %v4200 = vunpack.c.l.b16 %v4135
    %v4201 = vunpack.c.h.b16 %v4135
    %v4202 = vunpack.c.l.b16 %v4136
    %v4203 = vunpack.c.h.b16 %v4136
    %v4204 = vunpack.c.l.b16 %v4137
    %v4205 = vunpack.c.h.b16 %v4137
    %v4206 = vunpack.c.l.b16 %v4138
    %v4207 = vunpack.c.h.b16 %v4138
    %v4208 = vunpack.c.l.b16 %v4139
    %v4209 = vunpack.c.h.b16 %v4139
    %v4210 = vunpack.c.l.b16 %v4140
    %v4211 = vunpack.c.h.b16 %v4140
    %v4212 = vunpack.c.l.b16 %v4141
    %v4213 = vunpack.c.h.b16 %v4141
    %v4214 = vunpack.c.l.b16 %v4142
    %v4215 = vunpack.c.h.b16 %v4142
    %v4216 = vunpack.c.l.b16 %v4143
    %v4217 = vunpack.c.h.b16 %v4143
    %v4218 = vunpack.c.l.b16 %v4144
    %v4219 = vunpack.c.h.b16 %v4144
    %v4220 = vunpack.c.l.b16 %v4145
    %v4221 = vunpack.c.h.b16 %v4145
    %v4222 = vunpack.c.l.b16 %v4146
    %v4223 = vunpack.c.h.b16 %v4146
    %v4224 = vunpack.c.l.b16 %v4147
    %v4225 = vunpack.c.h.b16 %v4147
    %v4226 = vunpack.c.l.b16 %v4148
    %v4227 = vunpack.c.h.b16 %v4148
    %v4228 = vunpack.c.l.b16 %v4149
    %v4229 = vunpack.c.h.b16 %v4149
    %v4230 = vunpack.c.l.b16 %v4150
    %v4231 = vunpack.c.h.b16 %v4150
    %v4232 = vunpack.c.l.b16 %v4151
    %v4233 = vunpack.c.h.b16 %v4151
    %v4234 = vunpack.c.l.b16 %v4152
    %v4235 = vunpack.c.h.b16 %v4152
    %v4236 = vunpack.c.l.b16 %v4153
    %v4237 = vunpack.c.h.b16 %v4153
    %v4238 = vunpack.c.l.b16 %v4154
    %v4239 = vunpack.c.h.b16 %v4154
    %v4240 = vunpack.c.l.b16 %v4155
    %v4241 = vunpack.c.h.b16 %v4155
    %v4242 = vunpack.c.l.b16 %v4156
    %v4243 = vunpack.c.h.b16 %v4156
    %v4244 = vunpack.c.l.b16 %v4157
    %v4245 = vunpack.c.h.b16 %v4157
    %v4246 = vunpack.c.l.b16 %v4158
    %v4247 = vunpack.c.h.b16 %v4158
    %v4248 = vunpack.c.l.b16 %v4159
    %v4249 = vunpack.c.h.b16 %v4159
    %v4250 = vunpack.c.l.b16 %v4160
    %v4251 = vunpack.c.h.b16 %v4160
    %v4252 = vunpack.c.l.b16 %v4161
    %v4253 = vunpack.c.h.b16 %v4161
    %v4254 = vunpack.c.l.b16 %v4162
    %v4255 = vunpack.c.h.b16 %v4162
    %v4256 = vunpack.c.l.b16 %v4163
    %v4257 = vunpack.c.h.b16 %v4163
    %v4258 = vunpack.c.l.b16 %v4164
    %v4259 = vunpack.c.h.b16 %v4164
    %v4260 = vunpack.c.l.b16 %v4165
    %v4261 = vunpack.c.h.b16 %v4165
    %v4262 = vpack.c.b16 %v4202, %v4198
    %v4263 = vpack.c.b16 %v4203, %v4199
    %v4264 = vpack.c.b16 %v4204, %v4200
    %v4265 = vpack.c.b16 %v4205, %v4201
    %v4266 = vpack.c.b16 %v4210, %v4206
    %v4267 = vpack.c.b16 %v4211, %v4207
    %v4268 = vpack.c.b16 %v4212, %v4208
    %v4269 = vpack.c.b16 %v4213, %v4209
    %v4270 = vpack.c.b16 %v4218, %v4214
    %v4271 = vpack.c.b16 %v4219, %v4215
    %v4272 = vpack.c.b16 %v4220, %v4216
    %v4273 = vpack.c.b16 %v4221, %v4217
    %v4274 = vpack.c.b16 %v4226, %v4222
    %v4275 = vpack.c.b16 %v4227, %v4223
    %v4276 = vpack.c.b16 %v4228, %v4224
    %v4277 = vpack.c.b16 %v4229, %v4225
    %v4278 = vpack.c.b16 %v4234, %v4230
    %v4279 = vpack.c.b16 %v4235, %v4231
    %v4280 = vpack.c.b16 %v4236, %v4232
    %v4281 = vpack.c.b16 %v4237, %v4233
    %v4282 = vpack.c.b16 %v4242, %v4238
    %v4283 = vpack.c.b16 %v4243, %v4239
    %v4284 = vpack.c.b16 %v4244, %v4240
    %v4285 = vpack.c.b16 %v4245, %v4241
    %v4286 = vpack.c.b16 %v4250, %v4246
    %v4287 = vpack.c.b16 %v4251, %v4247
    %v4288 = vpack.c.b16 %v4252, %v4248
    %v4289 = vpack.c.b16 %v4253, %v4249
    %v4290 = vpack.c.b16 %v4258, %v4254
    %v4291 = vpack.c.b16 %v4259, %v4255
    %v4292 = vpack.c.b16 %v4260, %v4256
    %v4293 = vpack.c.b16 %v4261, %v4257
    %4326 = vmatprep.subr.bf16.mxu0 %v4291
    %4327 = vmatpush1.bf16.msra.mxu0 %v4290
    %4328 = vmatprep.subr.bf16.mxu0 %v4287
    %4329 = vmatpush1.bf16.msra.mxu0 %v4286
    %4330 = vmatprep.subr.bf16.mxu0 %v4283
    %4331 = vmatpush1.bf16.msra.mxu0 %v4282
    %4332 = vmatprep.subr.bf16.mxu0 %v4279
    %4333 = vmatpush1.bf16.msra.mxu0 %v4278
    %4334 = vmatprep.subr.bf16.mxu0 %v4275
    %4335 = vmatpush1.bf16.msra.mxu0 %v4274
    %4336 = vmatprep.subr.bf16.mxu0 %v4271
    %4337 = vmatpush1.bf16.msra.mxu0 %v4270
    %4338 = vmatprep.subr.bf16.mxu0 %v4267
    %4339 = vmatpush1.bf16.msra.mxu0 %v4266
    %4340 = vmatprep.subr.bf16.mxu0 %v4263
    %4341 = vmatpush1.bf16.msra.mxu0 %v4262
    %4342 = vmatprep.subr.bf16.mxu0 0
    %4343 = vmatpush2.bf16.msra.mxu0 0
    %4344 = vmatprep.subr.bf16.mxu0 0
    %4345 = vmatpush2.bf16.msra.mxu0 0
    %4346 = vmatprep.subr.bf16.mxu0 0
    %4347 = vmatpush2.bf16.msra.mxu0 0
    %4348 = vmatprep.subr.bf16.mxu0 0
    %4349 = vmatpush2.bf16.msra.mxu0 0
    %4350 = vmatprep.subr.bf16.mxu0 0
    %4351 = vmatpush2.bf16.msra.mxu0 0
    %4352 = vmatprep.subr.bf16.mxu0 0
    %4353 = vmatpush2.bf16.msra.mxu0 0
    %4354 = vmatprep.subr.bf16.mxu0 0
    %4355 = vmatpush2.bf16.msra.mxu0 0
    %4356 = vmatprep.subr.bf16.mxu0 0
    %4357 = vmatpush2.bf16.msra.mxu0 0
    %4358 = vmatprep.mubr.bf16.mxu0 0
    %4359 = vmatmul.mubr.bf16.gmra.mxu0 %v3557
    %v4360 = vpop.f32.mrf.mxu0
    %v4361 = vadd.f32 0.0, %v4360
    %v4362 = vpop.f32.mrf.mxu0
    %v4363 = vadd.f32 0.0, %v4362
    %v4364 = vpop.f32.mrf.mxu0
    %v4365 = vpop.f32.mrf.mxu0
    %4366 = vdwg.mxu0
    %4367 = vmatprep.subr.bf16.mxu0 %v4293
    %4368 = vmatpush1.bf16.msra.mxu0 %v4292
    %4369 = vmatprep.subr.bf16.mxu0 %v4289
    %4370 = vmatpush1.bf16.msra.mxu0 %v4288
    %4371 = vmatprep.subr.bf16.mxu0 %v4285
    %4372 = vmatpush1.bf16.msra.mxu0 %v4284
    %4373 = vmatprep.subr.bf16.mxu0 %v4281
    %4374 = vmatpush1.bf16.msra.mxu0 %v4280
    %4375 = vmatprep.subr.bf16.mxu0 %v4277
    %4376 = vmatpush1.bf16.msra.mxu0 %v4276
    %4377 = vmatprep.subr.bf16.mxu0 %v4273
    %4378 = vmatpush1.bf16.msra.mxu0 %v4272
    %4379 = vmatprep.subr.bf16.mxu0 %v4269
    %4380 = vmatpush1.bf16.msra.mxu0 %v4268
    %4381 = vmatprep.subr.bf16.mxu0 %v4265
    %4382 = vmatpush1.bf16.msra.mxu0 %v4264
    %4383 = vmatprep.subr.bf16.mxu0 0
    %4384 = vmatpush2.bf16.msra.mxu0 0
    %4385 = vmatprep.subr.bf16.mxu0 0
    %4386 = vmatpush2.bf16.msra.mxu0 0
    %4387 = vmatprep.subr.bf16.mxu0 0
    %4388 = vmatpush2.bf16.msra.mxu0 0
    %4389 = vmatprep.subr.bf16.mxu0 0
    %4390 = vmatpush2.bf16.msra.mxu0 0
    %4391 = vmatprep.subr.bf16.mxu0 0
    %4392 = vmatpush2.bf16.msra.mxu0 0
    %4393 = vmatprep.subr.bf16.mxu0 0
    %4394 = vmatpush2.bf16.msra.mxu0 0
    %4395 = vmatprep.subr.bf16.mxu0 0
    %4396 = vmatpush2.bf16.msra.mxu0 0
    %4397 = vmatprep.subr.bf16.mxu0 0
    %4398 = vmatpush2.bf16.msra.mxu0 0
    %4399 = vmatprep.mubr.bf16.mxu0 0
    %4400 = vmatmul.mubr.bf16.gmra.mxu0 %v3557
    %v4401 = vpop.f32.mrf.mxu0
    %v4402 = vadd.f32 0.0, %v4401
    %v4403 = vpop.f32.mrf.mxu0
    %v4404 = vadd.f32 0.0, %v4403
    %v4405 = vpop.f32.mrf.mxu0
    %v4406 = vpop.f32.mrf.mxu0
    %4407 = vdwg.mxu0
    %v4408 = vadd.f32 %v4130, %v4361
    %v4409 = vadd.f32 %v4131, %v4363
    %v4410 = vadd.f32 %v4132, %v4402
    %v4411 = vadd.f32 %v4133, %v4404
    %v4412 = vxor.u32 %v4408, 2147483648
    %v4413 = vmul.f32 %v4412, 1.442695
    %v4414 = vpow.pop %v4413
    %v4415 = vadd.f32 %v4414, 1.0
    %v4416 = vrcp.pop %v4415
    %v4417 = vmul.f32 1.0, %v4416
    %v4418 = vxor.u32 %v4409, 2147483648
    %v4419 = vmul.f32 %v4418, 1.442695
    %v4420 = vpow.pop %v4419
    %v4421 = vadd.f32 %v4420, 1.0
    %v4422 = vrcp.pop %v4421
    %v4423 = vmul.f32 1.0, %v4422
    %v4424 = vtanh.pop %v4410
    %v4425 = vxor.u32 %v4411, 2147483648
    %v4426 = vmul.f32 %v4425, 1.442695
    %v4427 = vpow.pop %v4426
    %v4428 = vadd.f32 %v4427, 1.0
    %v4429 = vrcp.pop %v4428
    %v4430 = vmul.f32 1.0, %v4429
    %v4431 = vmul.f32 %v4423, %v3522
    %v4432 = vmul.f32 %v4417, %v4424
    %v4433 = vadd.f32 %v4431, %v4432
    %v4434 = vtanh.pop %v4433
    %v4435 = vmul.f32 %v4430, %v4434
    %v4436 = vld [vmem:[#allocation10] sm:$0xff]
    %v4437 = vld [vmem:[#allocation10 + $0x8] sm:$0xff]
    %v4438 = vld [vmem:[#allocation10 + $0x10] sm:$0xff]
    %v4439 = vld [vmem:[#allocation10 + $0x18] sm:$0xff]
    %v4440 = vld [vmem:[#allocation10 + $0x20] sm:$0xff]
    %v4441 = vld [vmem:[#allocation10 + $0x28] sm:$0xff]
    %v4442 = vld [vmem:[#allocation10 + $0x30] sm:$0xff]
    %v4443 = vld [vmem:[#allocation10 + $0x38] sm:$0xff]
    %v4444 = vld [vmem:[#allocation10 + $0x40] sm:$0xff]
    %v4445 = vld [vmem:[#allocation10 + $0x48] sm:$0xff]
    %v4446 = vld [vmem:[#allocation10 + $0x50] sm:$0xff]
    %v4447 = vld [vmem:[#allocation10 + $0x58] sm:$0xff]
    %v4448 = vld [vmem:[#allocation10 + $0x60] sm:$0xff]
    %v4449 = vld [vmem:[#allocation10 + $0x68] sm:$0xff]
    %v4450 = vld [vmem:[#allocation10 + $0x70] sm:$0xff]
    %v4451 = vld [vmem:[#allocation10 + $0x78] sm:$0xff]
    %v4452 = vld [vmem:[#allocation10 + $0x80] sm:$0xff]
    %v4453 = vld [vmem:[#allocation10 + $0x88] sm:$0xff]
    %v4454 = vld [vmem:[#allocation10 + $0x90] sm:$0xff]
    %v4455 = vld [vmem:[#allocation10 + $0x98] sm:$0xff]
    %v4456 = vld [vmem:[#allocation10 + $0xa0] sm:$0xff]
    %v4457 = vld [vmem:[#allocation10 + $0xa8] sm:$0xff]
    %v4458 = vld [vmem:[#allocation10 + $0xb0] sm:$0xff]
    %v4459 = vld [vmem:[#allocation10 + $0xb8] sm:$0xff]
    %v4460 = vld [vmem:[#allocation10 + $0xc0] sm:$0xff]
    %v4461 = vld [vmem:[#allocation10 + $0xc8] sm:$0xff]
    %v4462 = vld [vmem:[#allocation10 + $0xd0] sm:$0xff]
    %v4463 = vld [vmem:[#allocation10 + $0xd8] sm:$0xff]
    %v4464 = vld [vmem:[#allocation10 + $0xe0] sm:$0xff]
    %v4465 = vld [vmem:[#allocation10 + $0xe8] sm:$0xff]
    %v4466 = vld [vmem:[#allocation10 + $0xf0] sm:$0xff]
    %v4467 = vld [vmem:[#allocation10 + $0xf8] sm:$0xff]
    %v4468 = vpack.c.bf16 %v4435, %v4435
    %v4469 = vld [vmem:[%s6] sm:$0xf]
    %v4471 = vlaneseq
    %v4472 = vshrl.u32 %v4471, 7
    %v4473 = vsub.s32 0, %v4472
    %v4474 = vrot.slane %v4469, %v4473
    %v4475 = vlaneseq
    %v4476 = vshrl.u32 %v4475, 7
    %v4477 = vsub.s32 1, %v4476
    %v4478 = vrot.slane %v4469, %v4477
    %v4479 = vlaneseq
    %v4480 = vshrl.u32 %v4479, 7
    %v4481 = vsub.s32 2, %v4480
    %v4482 = vrot.slane %v4469, %v4481
    %v4483 = vlaneseq
    %v4484 = vshrl.u32 %v4483, 7
    %v4485 = vsub.s32 3, %v4484
    %v4486 = vrot.slane %v4469, %v4485
    %v4523 = vunpack.c.l.b16 %v4436
    %v4524 = vunpack.c.h.b16 %v4436
    %v4525 = vunpack.c.l.b16 %v4437
    %v4526 = vunpack.c.h.b16 %v4437
    %v4527 = vunpack.c.l.b16 %v4438
    %v4528 = vunpack.c.h.b16 %v4438
    %v4529 = vunpack.c.l.b16 %v4439
    %v4530 = vunpack.c.h.b16 %v4439
    %v4531 = vunpack.c.l.b16 %v4440
    %v4532 = vunpack.c.h.b16 %v4440
    %v4533 = vunpack.c.l.b16 %v4441
    %v4534 = vunpack.c.h.b16 %v4441
    %v4535 = vunpack.c.l.b16 %v4442
    %v4536 = vunpack.c.h.b16 %v4442
    %v4537 = vunpack.c.l.b16 %v4443
    %v4538 = vunpack.c.h.b16 %v4443
    %v4539 = vunpack.c.l.b16 %v4444
    %v4540 = vunpack.c.h.b16 %v4444
    %v4541 = vunpack.c.l.b16 %v4445
    %v4542 = vunpack.c.h.b16 %v4445
    %v4543 = vunpack.c.l.b16 %v4446
    %v4544 = vunpack.c.h.b16 %v4446
    %v4545 = vunpack.c.l.b16 %v4447
    %v4546 = vunpack.c.h.b16 %v4447
    %v4547 = vunpack.c.l.b16 %v4448
    %v4548 = vunpack.c.h.b16 %v4448
    %v4549 = vunpack.c.l.b16 %v4449
    %v4550 = vunpack.c.h.b16 %v4449
    %v4551 = vunpack.c.l.b16 %v4450
    %v4552 = vunpack.c.h.b16 %v4450
    %v4553 = vunpack.c.l.b16 %v4451
    %v4554 = vunpack.c.h.b16 %v4451
    %v4555 = vunpack.c.l.b16 %v4452
    %v4556 = vunpack.c.h.b16 %v4452
    %v4557 = vunpack.c.l.b16 %v4453
    %v4558 = vunpack.c.h.b16 %v4453
    %v4559 = vunpack.c.l.b16 %v4454
    %v4560 = vunpack.c.h.b16 %v4454
    %v4561 = vunpack.c.l.b16 %v4455
    %v4562 = vunpack.c.h.b16 %v4455
    %v4563 = vunpack.c.l.b16 %v4456
    %v4564 = vunpack.c.h.b16 %v4456
    %v4565 = vunpack.c.l.b16 %v4457
    %v4566 = vunpack.c.h.b16 %v4457
    %v4567 = vunpack.c.l.b16 %v4458
    %v4568 = vunpack.c.h.b16 %v4458
    %v4569 = vunpack.c.l.b16 %v4459
    %v4570 = vunpack.c.h.b16 %v4459
    %v4571 = vunpack.c.l.b16 %v4460
    %v4572 = vunpack.c.h.b16 %v4460
    %v4573 = vunpack.c.l.b16 %v4461
    %v4574 = vunpack.c.h.b16 %v4461
    %v4575 = vunpack.c.l.b16 %v4462
    %v4576 = vunpack.c.h.b16 %v4462
    %v4577 = vunpack.c.l.b16 %v4463
    %v4578 = vunpack.c.h.b16 %v4463
    %v4579 = vunpack.c.l.b16 %v4464
    %v4580 = vunpack.c.h.b16 %v4464
    %v4581 = vunpack.c.l.b16 %v4465
    %v4582 = vunpack.c.h.b16 %v4465
    %v4583 = vunpack.c.l.b16 %v4466
    %v4584 = vunpack.c.h.b16 %v4466
    %v4585 = vunpack.c.l.b16 %v4467
    %v4586 = vunpack.c.h.b16 %v4467
    %v4587 = vpack.c.b16 %v4527, %v4523
    %v4588 = vpack.c.b16 %v4528, %v4524
    %v4589 = vpack.c.b16 %v4529, %v4525
    %v4590 = vpack.c.b16 %v4530, %v4526
    %v4591 = vpack.c.b16 %v4535, %v4531
    %v4592 = vpack.c.b16 %v4536, %v4532
    %v4593 = vpack.c.b16 %v4537, %v4533
    %v4594 = vpack.c.b16 %v4538, %v4534
    %v4595 = vpack.c.b16 %v4543, %v4539
    %v4596 = vpack.c.b16 %v4544, %v4540
    %v4597 = vpack.c.b16 %v4545, %v4541
    %v4598 = vpack.c.b16 %v4546, %v4542
    %v4599 = vpack.c.b16 %v4551, %v4547
    %v4600 = vpack.c.b16 %v4552, %v4548
    %v4601 = vpack.c.b16 %v4553, %v4549
    %v4602 = vpack.c.b16 %v4554, %v4550
    %v4603 = vpack.c.b16 %v4559, %v4555
    %v4604 = vpack.c.b16 %v4560, %v4556
    %v4605 = vpack.c.b16 %v4561, %v4557
    %v4606 = vpack.c.b16 %v4562, %v4558
    %v4607 = vpack.c.b16 %v4567, %v4563
    %v4608 = vpack.c.b16 %v4568, %v4564
    %v4609 = vpack.c.b16 %v4569, %v4565
    %v4610 = vpack.c.b16 %v4570, %v4566
    %v4611 = vpack.c.b16 %v4575, %v4571
    %v4612 = vpack.c.b16 %v4576, %v4572
    %v4613 = vpack.c.b16 %v4577, %v4573
    %v4614 = vpack.c.b16 %v4578, %v4574
    %v4615 = vpack.c.b16 %v4583, %v4579
    %v4616 = vpack.c.b16 %v4584, %v4580
    %v4617 = vpack.c.b16 %v4585, %v4581
    %v4618 = vpack.c.b16 %v4586, %v4582
    %4651 = vmatprep.subr.bf16.mxu0 %v4616
    %4652 = vmatpush1.bf16.msra.mxu0 %v4615
    %4653 = vmatprep.subr.bf16.mxu0 %v4612
    %4654 = vmatpush1.bf16.msra.mxu0 %v4611
    %4655 = vmatprep.subr.bf16.mxu0 %v4608
    %4656 = vmatpush1.bf16.msra.mxu0 %v4607
    %4657 = vmatprep.subr.bf16.mxu0 %v4604
    %4658 = vmatpush1.bf16.msra.mxu0 %v4603
    %4659 = vmatprep.subr.bf16.mxu0 %v4600
    %4660 = vmatpush1.bf16.msra.mxu0 %v4599
    %4661 = vmatprep.subr.bf16.mxu0 %v4596
    %4662 = vmatpush1.bf16.msra.mxu0 %v4595
    %4663 = vmatprep.subr.bf16.mxu0 %v4592
    %4664 = vmatpush1.bf16.msra.mxu0 %v4591
    %4665 = vmatprep.subr.bf16.mxu0 %v4588
    %4666 = vmatpush1.bf16.msra.mxu0 %v4587
    %4667 = vmatprep.subr.bf16.mxu0 0
    %4668 = vmatpush2.bf16.msra.mxu0 0
    %4669 = vmatprep.subr.bf16.mxu0 0
    %4670 = vmatpush2.bf16.msra.mxu0 0
    %4671 = vmatprep.subr.bf16.mxu0 0
    %4672 = vmatpush2.bf16.msra.mxu0 0
    %4673 = vmatprep.subr.bf16.mxu0 0
    %4674 = vmatpush2.bf16.msra.mxu0 0
    %4675 = vmatprep.subr.bf16.mxu0 0
    %4676 = vmatpush2.bf16.msra.mxu0 0
    %4677 = vmatprep.subr.bf16.mxu0 0
    %4678 = vmatpush2.bf16.msra.mxu0 0
    %4679 = vmatprep.subr.bf16.mxu0 0
    %4680 = vmatpush2.bf16.msra.mxu0 0
    %4681 = vmatprep.subr.bf16.mxu0 0
    %4682 = vmatpush2.bf16.msra.mxu0 0
    %4683 = vmatprep.mubr.bf16.mxu0 0
    %4684 = vmatmul.mubr.bf16.gmra.mxu0 %v4468
    %v4685 = vpop.f32.mrf.mxu0
    %v4686 = vadd.f32 %v4474, %v4685
    %v4687 = vpop.f32.mrf.mxu0
    %v4688 = vadd.f32 %v4478, %v4687
    %v4689 = vpop.f32.mrf.mxu0
    %v4690 = vpop.f32.mrf.mxu0
    %4691 = vdwg.mxu0
    %4692 = vmatprep.subr.bf16.mxu0 %v4618
    %4693 = vmatpush1.bf16.msra.mxu0 %v4617
    %4694 = vmatprep.subr.bf16.mxu0 %v4614
    %4695 = vmatpush1.bf16.msra.mxu0 %v4613
    %4696 = vmatprep.subr.bf16.mxu0 %v4610
    %4697 = vmatpush1.bf16.msra.mxu0 %v4609
    %4698 = vmatprep.subr.bf16.mxu0 %v4606
    %4699 = vmatpush1.bf16.msra.mxu0 %v4605
    %4700 = vmatprep.subr.bf16.mxu0 %v4602
    %4701 = vmatpush1.bf16.msra.mxu0 %v4601
    %4702 = vmatprep.subr.bf16.mxu0 %v4598
    %4703 = vmatpush1.bf16.msra.mxu0 %v4597
    %4704 = vmatprep.subr.bf16.mxu0 %v4594
    %4705 = vmatpush1.bf16.msra.mxu0 %v4593
    %4706 = vmatprep.subr.bf16.mxu0 %v4590
    %4707 = vmatpush1.bf16.msra.mxu0 %v4589
    %4708 = vmatprep.subr.bf16.mxu0 0
    %4709 = vmatpush2.bf16.msra.mxu0 0
    %4710 = vmatprep.subr.bf16.mxu0 0
    %4711 = vmatpush2.bf16.msra.mxu0 0
    %4712 = vmatprep.subr.bf16.mxu0 0
    %4713 = vmatpush2.bf16.msra.mxu0 0
    %4714 = vmatprep.subr.bf16.mxu0 0
    %4715 = vmatpush2.bf16.msra.mxu0 0
    %4716 = vmatprep.subr.bf16.mxu0 0
    %4717 = vmatpush2.bf16.msra.mxu0 0
    %4718 = vmatprep.subr.bf16.mxu0 0
    %4719 = vmatpush2.bf16.msra.mxu0 0
    %4720 = vmatprep.subr.bf16.mxu0 0
    %4721 = vmatpush2.bf16.msra.mxu0 0
    %4722 = vmatprep.subr.bf16.mxu0 0
    %4723 = vmatpush2.bf16.msra.mxu0 0
    %4724 = vmatprep.mubr.bf16.mxu0 0
    %4725 = vmatmul.mubr.bf16.gmra.mxu0 %v4468
    %v4726 = vpop.f32.mrf.mxu0
    %v4727 = vadd.f32 %v4482, %v4726
    %v4728 = vpop.f32.mrf.mxu0
    %v4729 = vadd.f32 %v4486, %v4728
    %v4730 = vpop.f32.mrf.mxu0
    %v4731 = vpop.f32.mrf.mxu0
    %4732 = vdwg.mxu0
    %v4733 = vld [vmem:[#allocation12] sm:$0xff]
    %v4734 = vld [vmem:[#allocation12 + $0x8] sm:$0xff]
    %v4735 = vld [vmem:[#allocation12 + $0x10] sm:$0xff]
    %v4736 = vld [vmem:[#allocation12 + $0x18] sm:$0xff]
    %v4737 = vld [vmem:[#allocation12 + $0x20] sm:$0xff]
    %v4738 = vld [vmem:[#allocation12 + $0x28] sm:$0xff]
    %v4739 = vld [vmem:[#allocation12 + $0x30] sm:$0xff]
    %v4740 = vld [vmem:[#allocation12 + $0x38] sm:$0xff]
    %v4741 = vld [vmem:[#allocation12 + $0x40] sm:$0xff]
    %v4742 = vld [vmem:[#allocation12 + $0x48] sm:$0xff]
    %v4743 = vld [vmem:[#allocation12 + $0x50] sm:$0xff]
    %v4744 = vld [vmem:[#allocation12 + $0x58] sm:$0xff]
    %v4745 = vld [vmem:[#allocation12 + $0x60] sm:$0xff]
    %v4746 = vld [vmem:[#allocation12 + $0x68] sm:$0xff]
    %v4747 = vld [vmem:[#allocation12 + $0x70] sm:$0xff]
    %v4748 = vld [vmem:[#allocation12 + $0x78] sm:$0xff]
    %v4749 = vld [vmem:[#allocation12 + $0x80] sm:$0xff]
    %v4750 = vld [vmem:[#allocation12 + $0x88] sm:$0xff]
    %v4751 = vld [vmem:[#allocation12 + $0x90] sm:$0xff]
    %v4752 = vld [vmem:[#allocation12 + $0x98] sm:$0xff]
    %v4753 = vld [vmem:[#allocation12 + $0xa0] sm:$0xff]
    %v4754 = vld [vmem:[#allocation12 + $0xa8] sm:$0xff]
    %v4755 = vld [vmem:[#allocation12 + $0xb0] sm:$0xff]
    %v4756 = vld [vmem:[#allocation12 + $0xb8] sm:$0xff]
    %v4757 = vld [vmem:[#allocation12 + $0xc0] sm:$0xff]
    %v4758 = vld [vmem:[#allocation12 + $0xc8] sm:$0xff]
    %v4759 = vld [vmem:[#allocation12 + $0xd0] sm:$0xff]
    %v4760 = vld [vmem:[#allocation12 + $0xd8] sm:$0xff]
    %v4761 = vld [vmem:[#allocation12 + $0xe0] sm:$0xff]
    %v4762 = vld [vmem:[#allocation12 + $0xe8] sm:$0xff]
    %v4763 = vld [vmem:[#allocation12 + $0xf0] sm:$0xff]
    %v4764 = vld [vmem:[#allocation12 + $0xf8] sm:$0xff]
    %v4797 = vunpack.c.l.b16 %v4733
    %v4798 = vunpack.c.h.b16 %v4733
    %v4799 = vunpack.c.l.b16 %v4734
    %v4800 = vunpack.c.h.b16 %v4734
    %v4801 = vunpack.c.l.b16 %v4735
    %v4802 = vunpack.c.h.b16 %v4735
    %v4803 = vunpack.c.l.b16 %v4736
    %v4804 = vunpack.c.h.b16 %v4736
    %v4805 = vunpack.c.l.b16 %v4737
    %v4806 = vunpack.c.h.b16 %v4737
    %v4807 = vunpack.c.l.b16 %v4738
    %v4808 = vunpack.c.h.b16 %v4738
    %v4809 = vunpack.c.l.b16 %v4739
    %v4810 = vunpack.c.h.b16 %v4739
    %v4811 = vunpack.c.l.b16 %v4740
    %v4812 = vunpack.c.h.b16 %v4740
    %v4813 = vunpack.c.l.b16 %v4741
    %v4814 = vunpack.c.h.b16 %v4741
    %v4815 = vunpack.c.l.b16 %v4742
    %v4816 = vunpack.c.h.b16 %v4742
    %v4817 = vunpack.c.l.b16 %v4743
    %v4818 = vunpack.c.h.b16 %v4743
    %v4819 = vunpack.c.l.b16 %v4744
    %v4820 = vunpack.c.h.b16 %v4744
    %v4821 = vunpack.c.l.b16 %v4745
    %v4822 = vunpack.c.h.b16 %v4745
    %v4823 = vunpack.c.l.b16 %v4746
    %v4824 = vunpack.c.h.b16 %v4746
    %v4825 = vunpack.c.l.b16 %v4747
    %v4826 = vunpack.c.h.b16 %v4747
    %v4827 = vunpack.c.l.b16 %v4748
    %v4828 = vunpack.c.h.b16 %v4748
    %v4829 = vunpack.c.l.b16 %v4749
    %v4830 = vunpack.c.h.b16 %v4749
    %v4831 = vunpack.c.l.b16 %v4750
    %v4832 = vunpack.c.h.b16 %v4750
    %v4833 = vunpack.c.l.b16 %v4751
    %v4834 = vunpack.c.h.b16 %v4751
    %v4835 = vunpack.c.l.b16 %v4752
    %v4836 = vunpack.c.h.b16 %v4752
    %v4837 = vunpack.c.l.b16 %v4753
    %v4838 = vunpack.c.h.b16 %v4753
    %v4839 = vunpack.c.l.b16 %v4754
    %v4840 = vunpack.c.h.b16 %v4754
    %v4841 = vunpack.c.l.b16 %v4755
    %v4842 = vunpack.c.h.b16 %v4755
    %v4843 = vunpack.c.l.b16 %v4756
    %v4844 = vunpack.c.h.b16 %v4756
    %v4845 = vunpack.c.l.b16 %v4757
    %v4846 = vunpack.c.h.b16 %v4757
    %v4847 = vunpack.c.l.b16 %v4758
    %v4848 = vunpack.c.h.b16 %v4758
    %v4849 = vunpack.c.l.b16 %v4759
    %v4850 = vunpack.c.h.b16 %v4759
    %v4851 = vunpack.c.l.b16 %v4760
    %v4852 = vunpack.c.h.b16 %v4760
    %v4853 = vunpack.c.l.b16 %v4761
    %v4854 = vunpack.c.h.b16 %v4761
    %v4855 = vunpack.c.l.b16 %v4762
    %v4856 = vunpack.c.h.b16 %v4762
    %v4857 = vunpack.c.l.b16 %v4763
    %v4858 = vunpack.c.h.b16 %v4763
    %v4859 = vunpack.c.l.b16 %v4764
    %v4860 = vunpack.c.h.b16 %v4764
    %v4861 = vpack.c.b16 %v4801, %v4797
    %v4862 = vpack.c.b16 %v4802, %v4798
    %v4863 = vpack.c.b16 %v4803, %v4799
    %v4864 = vpack.c.b16 %v4804, %v4800
    %v4865 = vpack.c.b16 %v4809, %v4805
    %v4866 = vpack.c.b16 %v4810, %v4806
    %v4867 = vpack.c.b16 %v4811, %v4807
    %v4868 = vpack.c.b16 %v4812, %v4808
    %v4869 = vpack.c.b16 %v4817, %v4813
    %v4870 = vpack.c.b16 %v4818, %v4814
    %v4871 = vpack.c.b16 %v4819, %v4815
    %v4872 = vpack.c.b16 %v4820, %v4816
    %v4873 = vpack.c.b16 %v4825, %v4821
    %v4874 = vpack.c.b16 %v4826, %v4822
    %v4875 = vpack.c.b16 %v4827, %v4823
    %v4876 = vpack.c.b16 %v4828, %v4824
    %v4877 = vpack.c.b16 %v4833, %v4829
    %v4878 = vpack.c.b16 %v4834, %v4830
    %v4879 = vpack.c.b16 %v4835, %v4831
    %v4880 = vpack.c.b16 %v4836, %v4832
    %v4881 = vpack.c.b16 %v4841, %v4837
    %v4882 = vpack.c.b16 %v4842, %v4838
    %v4883 = vpack.c.b16 %v4843, %v4839
    %v4884 = vpack.c.b16 %v4844, %v4840
    %v4885 = vpack.c.b16 %v4849, %v4845
    %v4886 = vpack.c.b16 %v4850, %v4846
    %v4887 = vpack.c.b16 %v4851, %v4847
    %v4888 = vpack.c.b16 %v4852, %v4848
    %v4889 = vpack.c.b16 %v4857, %v4853
    %v4890 = vpack.c.b16 %v4858, %v4854
    %v4891 = vpack.c.b16 %v4859, %v4855
    %v4892 = vpack.c.b16 %v4860, %v4856
    %4925 = vmatprep.subr.bf16.mxu0 %v4890
    %4926 = vmatpush1.bf16.msra.mxu0 %v4889
    %4927 = vmatprep.subr.bf16.mxu0 %v4886
    %4928 = vmatpush1.bf16.msra.mxu0 %v4885
    %4929 = vmatprep.subr.bf16.mxu0 %v4882
    %4930 = vmatpush1.bf16.msra.mxu0 %v4881
    %4931 = vmatprep.subr.bf16.mxu0 %v4878
    %4932 = vmatpush1.bf16.msra.mxu0 %v4877
    %4933 = vmatprep.subr.bf16.mxu0 %v4874
    %4934 = vmatpush1.bf16.msra.mxu0 %v4873
    %4935 = vmatprep.subr.bf16.mxu0 %v4870
    %4936 = vmatpush1.bf16.msra.mxu0 %v4869
    %4937 = vmatprep.subr.bf16.mxu0 %v4866
    %4938 = vmatpush1.bf16.msra.mxu0 %v4865
    %4939 = vmatprep.subr.bf16.mxu0 %v4862
    %4940 = vmatpush1.bf16.msra.mxu0 %v4861
    %4941 = vmatprep.subr.bf16.mxu0 0
    %4942 = vmatpush2.bf16.msra.mxu0 0
    %4943 = vmatprep.subr.bf16.mxu0 0
    %4944 = vmatpush2.bf16.msra.mxu0 0
    %4945 = vmatprep.subr.bf16.mxu0 0
    %4946 = vmatpush2.bf16.msra.mxu0 0
    %4947 = vmatprep.subr.bf16.mxu0 0
    %4948 = vmatpush2.bf16.msra.mxu0 0
    %4949 = vmatprep.subr.bf16.mxu0 0
    %4950 = vmatpush2.bf16.msra.mxu0 0
    %4951 = vmatprep.subr.bf16.mxu0 0
    %4952 = vmatpush2.bf16.msra.mxu0 0
    %4953 = vmatprep.subr.bf16.mxu0 0
    %4954 = vmatpush2.bf16.msra.mxu0 0
    %4955 = vmatprep.subr.bf16.mxu0 0
    %4956 = vmatpush2.bf16.msra.mxu0 0
    %4957 = vmatprep.mubr.bf16.mxu0 0
    %4958 = vmatmul.mubr.bf16.gmra.mxu0 %v4124
    %v4959 = vpop.f32.mrf.mxu0
    %v4960 = vadd.f32 0.0, %v4959
    %v4961 = vpop.f32.mrf.mxu0
    %v4962 = vadd.f32 0.0, %v4961
    %v4963 = vpop.f32.mrf.mxu0
    %v4964 = vpop.f32.mrf.mxu0
    %4965 = vdwg.mxu0
    %4966 = vmatprep.subr.bf16.mxu0 %v4892
    %4967 = vmatpush1.bf16.msra.mxu0 %v4891
    %4968 = vmatprep.subr.bf16.mxu0 %v4888
    %4969 = vmatpush1.bf16.msra.mxu0 %v4887
    %4970 = vmatprep.subr.bf16.mxu0 %v4884
    %4971 = vmatpush1.bf16.msra.mxu0 %v4883
    %4972 = vmatprep.subr.bf16.mxu0 %v4880
    %4973 = vmatpush1.bf16.msra.mxu0 %v4879
    %4974 = vmatprep.subr.bf16.mxu0 %v4876
    %4975 = vmatpush1.bf16.msra.mxu0 %v4875
    %4976 = vmatprep.subr.bf16.mxu0 %v4872
    %4977 = vmatpush1.bf16.msra.mxu0 %v4871
    %4978 = vmatprep.subr.bf16.mxu0 %v4868
    %4979 = vmatpush1.bf16.msra.mxu0 %v4867
    %4980 = vmatprep.subr.bf16.mxu0 %v4864
    %4981 = vmatpush1.bf16.msra.mxu0 %v4863
    %4982 = vmatprep.subr.bf16.mxu0 0
    %4983 = vmatpush2.bf16.msra.mxu0 0
    %4984 = vmatprep.subr.bf16.mxu0 0
    %4985 = vmatpush2.bf16.msra.mxu0 0
    %4986 = vmatprep.subr.bf16.mxu0 0
    %4987 = vmatpush2.bf16.msra.mxu0 0
    %4988 = vmatprep.subr.bf16.mxu0 0
    %4989 = vmatpush2.bf16.msra.mxu0 0
    %4990 = vmatprep.subr.bf16.mxu0 0
    %4991 = vmatpush2.bf16.msra.mxu0 0
    %4992 = vmatprep.subr.bf16.mxu0 0
    %4993 = vmatpush2.bf16.msra.mxu0 0
    %4994 = vmatprep.subr.bf16.mxu0 0
    %4995 = vmatpush2.bf16.msra.mxu0 0
    %4996 = vmatprep.subr.bf16.mxu0 0
    %4997 = vmatpush2.bf16.msra.mxu0 0
    %4998 = vmatprep.mubr.bf16.mxu0 0
    %4999 = vmatmul.mubr.bf16.gmra.mxu0 %v4124
    %v5000 = vpop.f32.mrf.mxu0
    %v5001 = vadd.f32 0.0, %v5000
    %v5002 = vpop.f32.mrf.mxu0
    %v5003 = vadd.f32 0.0, %v5002
    %v5004 = vpop.f32.mrf.mxu0
    %v5005 = vpop.f32.mrf.mxu0
    %5006 = vdwg.mxu0
    %v5007 = vadd.f32 %v4686, %v4960
    %v5008 = vadd.f32 %v4688, %v4962
    %v5009 = vadd.f32 %v4727, %v5001
    %v5010 = vadd.f32 %v4729, %v5003
    %v5011 = vxor.u32 %v5007, 2147483648
    %v5012 = vmul.f32 %v5011, 1.442695
    %v5013 = vpow.pop %v5012
    %v5014 = vadd.f32 %v5013, 1.0
    %v5015 = vrcp.pop %v5014
    %v5016 = vmul.f32 1.0, %v5015
    %v5017 = vxor.u32 %v5008, 2147483648
    %v5018 = vmul.f32 %v5017, 1.442695
    %v5019 = vpow.pop %v5018
    %v5020 = vadd.f32 %v5019, 1.0
    %v5021 = vrcp.pop %v5020
    %v5022 = vmul.f32 1.0, %v5021
    %v5023 = vtanh.pop %v5009
    %v5024 = vxor.u32 %v5010, 2147483648
    %v5025 = vmul.f32 %v5024, 1.442695
    %v5026 = vpow.pop %v5025
    %v5027 = vadd.f32 %v5026, 1.0
    %v5028 = vrcp.pop %v5027
    %v5029 = vmul.f32 1.0, %v5028
    %v5030 = vmul.f32 %v5022, %v4121
    %v5031 = vmul.f32 %v5016, %v5023
    %v5032 = vadd.f32 %v5030, %v5031
    %v5033 = vtanh.pop %v5032
    %v5034 = vmul.f32 %v5029, %v5033
    %v5035 = vpack.c.bf16 %v5034, %v5034
    %s5036 = scalar_lea.vmem [#allocation6], 16
    %5037 = vst [vmem:[%s5036] sm:$0xf] %v5035
    %s5038 = scalar_lea.vmem [#allocation7], 80
    %v5039 = vld [vmem:[%s5038] sm:$0xff]
    %v5040 = vld [vmem:[%s5038 + $0x8] sm:$0xff]
    %v5041 = vunpack.c.l.bf16 %v5039
    %v5042 = vunpack.c.h.bf16 %v5039
    %v5043 = vunpack.c.l.bf16 %v5040
    %v5044 = vunpack.c.h.bf16 %v5040
    %v5045 = vld [vmem:[#allocation8] sm:$0xff]
    %v5046 = vld [vmem:[#allocation8 + $0x8] sm:$0xff]
    %v5047 = vld [vmem:[#allocation8 + $0x10] sm:$0xff]
    %v5048 = vld [vmem:[#allocation8 + $0x18] sm:$0xff]
    %v5049 = vld [vmem:[#allocation8 + $0x20] sm:$0xff]
    %v5050 = vld [vmem:[#allocation8 + $0x28] sm:$0xff]
    %v5051 = vld [vmem:[#allocation8 + $0x30] sm:$0xff]
    %v5052 = vld [vmem:[#allocation8 + $0x38] sm:$0xff]
    %v5053 = vld [vmem:[#allocation8 + $0x40] sm:$0xff]
    %v5054 = vld [vmem:[#allocation8 + $0x48] sm:$0xff]
    %v5055 = vld [vmem:[#allocation8 + $0x50] sm:$0xff]
    %v5056 = vld [vmem:[#allocation8 + $0x58] sm:$0xff]
    %v5057 = vld [vmem:[#allocation8 + $0x60] sm:$0xff]
    %v5058 = vld [vmem:[#allocation8 + $0x68] sm:$0xff]
    %v5059 = vld [vmem:[#allocation8 + $0x70] sm:$0xff]
    %v5060 = vld [vmem:[#allocation8 + $0x78] sm:$0xff]
    %v5061 = vld [vmem:[#allocation8 + $0x80] sm:$0xff]
    %v5062 = vld [vmem:[#allocation8 + $0x88] sm:$0xff]
    %v5063 = vld [vmem:[#allocation8 + $0x90] sm:$0xff]
    %v5064 = vld [vmem:[#allocation8 + $0x98] sm:$0xff]
    %v5065 = vld [vmem:[#allocation8 + $0xa0] sm:$0xff]
    %v5066 = vld [vmem:[#allocation8 + $0xa8] sm:$0xff]
    %v5067 = vld [vmem:[#allocation8 + $0xb0] sm:$0xff]
    %v5068 = vld [vmem:[#allocation8 + $0xb8] sm:$0xff]
    %v5069 = vld [vmem:[#allocation8 + $0xc0] sm:$0xff]
    %v5070 = vld [vmem:[#allocation8 + $0xc8] sm:$0xff]
    %v5071 = vld [vmem:[#allocation8 + $0xd0] sm:$0xff]
    %v5072 = vld [vmem:[#allocation8 + $0xd8] sm:$0xff]
    %v5073 = vld [vmem:[#allocation8 + $0xe0] sm:$0xff]
    %v5074 = vld [vmem:[#allocation8 + $0xe8] sm:$0xff]
    %v5075 = vld [vmem:[#allocation8 + $0xf0] sm:$0xff]
    %v5076 = vld [vmem:[#allocation8 + $0xf8] sm:$0xff]
    %v5109 = vunpack.c.l.b16 %v5045
    %v5110 = vunpack.c.h.b16 %v5045
    %v5111 = vunpack.c.l.b16 %v5046
    %v5112 = vunpack.c.h.b16 %v5046
    %v5113 = vunpack.c.l.b16 %v5047
    %v5114 = vunpack.c.h.b16 %v5047
    %v5115 = vunpack.c.l.b16 %v5048
    %v5116 = vunpack.c.h.b16 %v5048
    %v5117 = vunpack.c.l.b16 %v5049
    %v5118 = vunpack.c.h.b16 %v5049
    %v5119 = vunpack.c.l.b16 %v5050
    %v5120 = vunpack.c.h.b16 %v5050
    %v5121 = vunpack.c.l.b16 %v5051
    %v5122 = vunpack.c.h.b16 %v5051
    %v5123 = vunpack.c.l.b16 %v5052
    %v5124 = vunpack.c.h.b16 %v5052
    %v5125 = vunpack.c.l.b16 %v5053
    %v5126 = vunpack.c.h.b16 %v5053
    %v5127 = vunpack.c.l.b16 %v5054
    %v5128 = vunpack.c.h.b16 %v5054
    %v5129 = vunpack.c.l.b16 %v5055
    %v5130 = vunpack.c.h.b16 %v5055
    %v5131 = vunpack.c.l.b16 %v5056
    %v5132 = vunpack.c.h.b16 %v5056
    %v5133 = vunpack.c.l.b16 %v5057
    %v5134 = vunpack.c.h.b16 %v5057
    %v5135 = vunpack.c.l.b16 %v5058
    %v5136 = vunpack.c.h.b16 %v5058
    %v5137 = vunpack.c.l.b16 %v5059
    %v5138 = vunpack.c.h.b16 %v5059
    %v5139 = vunpack.c.l.b16 %v5060
    %v5140 = vunpack.c.h.b16 %v5060
    %v5141 = vunpack.c.l.b16 %v5061
    %v5142 = vunpack.c.h.b16 %v5061
    %v5143 = vunpack.c.l.b16 %v5062
    %v5144 = vunpack.c.h.b16 %v5062
    %v5145 = vunpack.c.l.b16 %v5063
    %v5146 = vunpack.c.h.b16 %v5063
    %v5147 = vunpack.c.l.b16 %v5064
    %v5148 = vunpack.c.h.b16 %v5064
    %v5149 = vunpack.c.l.b16 %v5065
    %v5150 = vunpack.c.h.b16 %v5065
    %v5151 = vunpack.c.l.b16 %v5066
    %v5152 = vunpack.c.h.b16 %v5066
    %v5153 = vunpack.c.l.b16 %v5067
    %v5154 = vunpack.c.h.b16 %v5067
    %v5155 = vunpack.c.l.b16 %v5068
    %v5156 = vunpack.c.h.b16 %v5068
    %v5157 = vunpack.c.l.b16 %v5069
    %v5158 = vunpack.c.h.b16 %v5069
    %v5159 = vunpack.c.l.b16 %v5070
    %v5160 = vunpack.c.h.b16 %v5070
    %v5161 = vunpack.c.l.b16 %v5071
    %v5162 = vunpack.c.h.b16 %v5071
    %v5163 = vunpack.c.l.b16 %v5072
    %v5164 = vunpack.c.h.b16 %v5072
    %v5165 = vunpack.c.l.b16 %v5073
    %v5166 = vunpack.c.h.b16 %v5073
    %v5167 = vunpack.c.l.b16 %v5074
    %v5168 = vunpack.c.h.b16 %v5074
    %v5169 = vunpack.c.l.b16 %v5075
    %v5170 = vunpack.c.h.b16 %v5075
    %v5171 = vunpack.c.l.b16 %v5076
    %v5172 = vunpack.c.h.b16 %v5076
    %v5173 = vpack.c.b16 %v5113, %v5109
    %v5174 = vpack.c.b16 %v5114, %v5110
    %v5175 = vpack.c.b16 %v5115, %v5111
    %v5176 = vpack.c.b16 %v5116, %v5112
    %v5177 = vpack.c.b16 %v5121, %v5117
    %v5178 = vpack.c.b16 %v5122, %v5118
    %v5179 = vpack.c.b16 %v5123, %v5119
    %v5180 = vpack.c.b16 %v5124, %v5120
    %v5181 = vpack.c.b16 %v5129, %v5125
    %v5182 = vpack.c.b16 %v5130, %v5126
    %v5183 = vpack.c.b16 %v5131, %v5127
    %v5184 = vpack.c.b16 %v5132, %v5128
    %v5185 = vpack.c.b16 %v5137, %v5133
    %v5186 = vpack.c.b16 %v5138, %v5134
    %v5187 = vpack.c.b16 %v5139, %v5135
    %v5188 = vpack.c.b16 %v5140, %v5136
    %v5189 = vpack.c.b16 %v5145, %v5141
    %v5190 = vpack.c.b16 %v5146, %v5142
    %v5191 = vpack.c.b16 %v5147, %v5143
    %v5192 = vpack.c.b16 %v5148, %v5144
    %v5193 = vpack.c.b16 %v5153, %v5149
    %v5194 = vpack.c.b16 %v5154, %v5150
    %v5195 = vpack.c.b16 %v5155, %v5151
    %v5196 = vpack.c.b16 %v5156, %v5152
    %v5197 = vpack.c.b16 %v5161, %v5157
    %v5198 = vpack.c.b16 %v5162, %v5158
    %v5199 = vpack.c.b16 %v5163, %v5159
    %v5200 = vpack.c.b16 %v5164, %v5160
    %v5201 = vpack.c.b16 %v5169, %v5165
    %v5202 = vpack.c.b16 %v5170, %v5166
    %v5203 = vpack.c.b16 %v5171, %v5167
    %v5204 = vpack.c.b16 %v5172, %v5168
    %5237 = vmatprep.subr.bf16.mxu0 %v5202
    %5238 = vmatpush1.bf16.msra.mxu0 %v5201
    %5239 = vmatprep.subr.bf16.mxu0 %v5198
    %5240 = vmatpush1.bf16.msra.mxu0 %v5197
    %5241 = vmatprep.subr.bf16.mxu0 %v5194
    %5242 = vmatpush1.bf16.msra.mxu0 %v5193
    %5243 = vmatprep.subr.bf16.mxu0 %v5190
    %5244 = vmatpush1.bf16.msra.mxu0 %v5189
    %5245 = vmatprep.subr.bf16.mxu0 %v5186
    %5246 = vmatpush1.bf16.msra.mxu0 %v5185
    %5247 = vmatprep.subr.bf16.mxu0 %v5182
    %5248 = vmatpush1.bf16.msra.mxu0 %v5181
    %5249 = vmatprep.subr.bf16.mxu0 %v5178
    %5250 = vmatpush1.bf16.msra.mxu0 %v5177
    %5251 = vmatprep.subr.bf16.mxu0 %v5174
    %5252 = vmatpush1.bf16.msra.mxu0 %v5173
    %5253 = vmatprep.subr.bf16.mxu0 0
    %5254 = vmatpush2.bf16.msra.mxu0 0
    %5255 = vmatprep.subr.bf16.mxu0 0
    %5256 = vmatpush2.bf16.msra.mxu0 0
    %5257 = vmatprep.subr.bf16.mxu0 0
    %5258 = vmatpush2.bf16.msra.mxu0 0
    %5259 = vmatprep.subr.bf16.mxu0 0
    %5260 = vmatpush2.bf16.msra.mxu0 0
    %5261 = vmatprep.subr.bf16.mxu0 0
    %5262 = vmatpush2.bf16.msra.mxu0 0
    %5263 = vmatprep.subr.bf16.mxu0 0
    %5264 = vmatpush2.bf16.msra.mxu0 0
    %5265 = vmatprep.subr.bf16.mxu0 0
    %5266 = vmatpush2.bf16.msra.mxu0 0
    %5267 = vmatprep.subr.bf16.mxu0 0
    %5268 = vmatpush2.bf16.msra.mxu0 0
    %5269 = vmatprep.mubr.bf16.mxu0 0
    %5270 = vmatmul.mubr.bf16.gmra.mxu0 %v4468
    %v5271 = vpop.f32.mrf.mxu0
    %v5272 = vadd.f32 0.0, %v5271
    %v5273 = vpop.f32.mrf.mxu0
    %v5274 = vadd.f32 0.0, %v5273
    %v5275 = vpop.f32.mrf.mxu0
    %v5276 = vpop.f32.mrf.mxu0
    %5277 = vdwg.mxu0
    %5278 = vmatprep.subr.bf16.mxu0 %v5204
    %5279 = vmatpush1.bf16.msra.mxu0 %v5203
    %5280 = vmatprep.subr.bf16.mxu0 %v5200
    %5281 = vmatpush1.bf16.msra.mxu0 %v5199
    %5282 = vmatprep.subr.bf16.mxu0 %v5196
    %5283 = vmatpush1.bf16.msra.mxu0 %v5195
    %5284 = vmatprep.subr.bf16.mxu0 %v5192
    %5285 = vmatpush1.bf16.msra.mxu0 %v5191
    %5286 = vmatprep.subr.bf16.mxu0 %v5188
    %5287 = vmatpush1.bf16.msra.mxu0 %v5187
    %5288 = vmatprep.subr.bf16.mxu0 %v5184
    %5289 = vmatpush1.bf16.msra.mxu0 %v5183
    %5290 = vmatprep.subr.bf16.mxu0 %v5180
    %5291 = vmatpush1.bf16.msra.mxu0 %v5179
    %5292 = vmatprep.subr.bf16.mxu0 %v5176
    %5293 = vmatpush1.bf16.msra.mxu0 %v5175
    %5294 = vmatprep.subr.bf16.mxu0 0
    %5295 = vmatpush2.bf16.msra.mxu0 0
    %5296 = vmatprep.subr.bf16.mxu0 0
    %5297 = vmatpush2.bf16.msra.mxu0 0
    %5298 = vmatprep.subr.bf16.mxu0 0
    %5299 = vmatpush2.bf16.msra.mxu0 0
    %5300 = vmatprep.subr.bf16.mxu0 0
    %5301 = vmatpush2.bf16.msra.mxu0 0
    %5302 = vmatprep.subr.bf16.mxu0 0
    %5303 = vmatpush2.bf16.msra.mxu0 0
    %5304 = vmatprep.subr.bf16.mxu0 0
    %5305 = vmatpush2.bf16.msra.mxu0 0
    %5306 = vmatprep.subr.bf16.mxu0 0
    %5307 = vmatpush2.bf16.msra.mxu0 0
    %5308 = vmatprep.subr.bf16.mxu0 0
    %5309 = vmatpush2.bf16.msra.mxu0 0
    %5310 = vmatprep.mubr.bf16.mxu0 0
    %5311 = vmatmul.mubr.bf16.gmra.mxu0 %v4468
    %v5312 = vpop.f32.mrf.mxu0
    %v5313 = vadd.f32 0.0, %v5312
    %v5314 = vpop.f32.mrf.mxu0
    %v5315 = vadd.f32 0.0, %v5314
    %v5316 = vpop.f32.mrf.mxu0
    %v5317 = vpop.f32.mrf.mxu0
    %5318 = vdwg.mxu0
    %v5319 = vadd.f32 %v5041, %v5272
    %v5320 = vadd.f32 %v5042, %v5274
    %v5321 = vadd.f32 %v5043, %v5313
    %v5322 = vadd.f32 %v5044, %v5315
    %v5323 = vxor.u32 %v5319, 2147483648
    %v5324 = vmul.f32 %v5323, 1.442695
    %v5325 = vpow.pop %v5324
    %v5326 = vadd.f32 %v5325, 1.0
    %v5327 = vrcp.pop %v5326
    %v5328 = vmul.f32 1.0, %v5327
    %v5329 = vxor.u32 %v5320, 2147483648
    %v5330 = vmul.f32 %v5329, 1.442695
    %v5331 = vpow.pop %v5330
    %v5332 = vadd.f32 %v5331, 1.0
    %v5333 = vrcp.pop %v5332
    %v5334 = vmul.f32 1.0, %v5333
    %v5335 = vtanh.pop %v5321
    %v5336 = vxor.u32 %v5322, 2147483648
    %v5337 = vmul.f32 %v5336, 1.442695
    %v5338 = vpow.pop %v5337
    %v5339 = vadd.f32 %v5338, 1.0
    %v5340 = vrcp.pop %v5339
    %v5341 = vmul.f32 1.0, %v5340
    %v5342 = vmul.f32 %v5334, %v4433
    %v5343 = vmul.f32 %v5328, %v5335
    %v5344 = vadd.f32 %v5342, %v5343
    %v5345 = vtanh.pop %v5344
    %v5346 = vmul.f32 %v5341, %v5345
    %v5347 = vld [vmem:[#allocation10] sm:$0xff]
    %v5348 = vld [vmem:[#allocation10 + $0x8] sm:$0xff]
    %v5349 = vld [vmem:[#allocation10 + $0x10] sm:$0xff]
    %v5350 = vld [vmem:[#allocation10 + $0x18] sm:$0xff]
    %v5351 = vld [vmem:[#allocation10 + $0x20] sm:$0xff]
    %v5352 = vld [vmem:[#allocation10 + $0x28] sm:$0xff]
    %v5353 = vld [vmem:[#allocation10 + $0x30] sm:$0xff]
    %v5354 = vld [vmem:[#allocation10 + $0x38] sm:$0xff]
    %v5355 = vld [vmem:[#allocation10 + $0x40] sm:$0xff]
    %v5356 = vld [vmem:[#allocation10 + $0x48] sm:$0xff]
    %v5357 = vld [vmem:[#allocation10 + $0x50] sm:$0xff]
    %v5358 = vld [vmem:[#allocation10 + $0x58] sm:$0xff]
    %v5359 = vld [vmem:[#allocation10 + $0x60] sm:$0xff]
    %v5360 = vld [vmem:[#allocation10 + $0x68] sm:$0xff]
    %v5361 = vld [vmem:[#allocation10 + $0x70] sm:$0xff]
    %v5362 = vld [vmem:[#allocation10 + $0x78] sm:$0xff]
    %v5363 = vld [vmem:[#allocation10 + $0x80] sm:$0xff]
    %v5364 = vld [vmem:[#allocation10 + $0x88] sm:$0xff]
    %v5365 = vld [vmem:[#allocation10 + $0x90] sm:$0xff]
    %v5366 = vld [vmem:[#allocation10 + $0x98] sm:$0xff]
    %v5367 = vld [vmem:[#allocation10 + $0xa0] sm:$0xff]
    %v5368 = vld [vmem:[#allocation10 + $0xa8] sm:$0xff]
    %v5369 = vld [vmem:[#allocation10 + $0xb0] sm:$0xff]
    %v5370 = vld [vmem:[#allocation10 + $0xb8] sm:$0xff]
    %v5371 = vld [vmem:[#allocation10 + $0xc0] sm:$0xff]
    %v5372 = vld [vmem:[#allocation10 + $0xc8] sm:$0xff]
    %v5373 = vld [vmem:[#allocation10 + $0xd0] sm:$0xff]
    %v5374 = vld [vmem:[#allocation10 + $0xd8] sm:$0xff]
    %v5375 = vld [vmem:[#allocation10 + $0xe0] sm:$0xff]
    %v5376 = vld [vmem:[#allocation10 + $0xe8] sm:$0xff]
    %v5377 = vld [vmem:[#allocation10 + $0xf0] sm:$0xff]
    %v5378 = vld [vmem:[#allocation10 + $0xf8] sm:$0xff]
    %v5379 = vpack.c.bf16 %v5346, %v5346
    %v5380 = vld [vmem:[%s6] sm:$0xf]
    %v5382 = vlaneseq
    %v5383 = vshrl.u32 %v5382, 7
    %v5384 = vsub.s32 0, %v5383
    %v5385 = vrot.slane %v5380, %v5384
    %v5386 = vlaneseq
    %v5387 = vshrl.u32 %v5386, 7
    %v5388 = vsub.s32 1, %v5387
    %v5389 = vrot.slane %v5380, %v5388
    %v5390 = vlaneseq
    %v5391 = vshrl.u32 %v5390, 7
    %v5392 = vsub.s32 2, %v5391
    %v5393 = vrot.slane %v5380, %v5392
    %v5394 = vlaneseq
    %v5395 = vshrl.u32 %v5394, 7
    %v5396 = vsub.s32 3, %v5395
    %v5397 = vrot.slane %v5380, %v5396
    %v5434 = vunpack.c.l.b16 %v5347
    %v5435 = vunpack.c.h.b16 %v5347
    %v5436 = vunpack.c.l.b16 %v5348
    %v5437 = vunpack.c.h.b16 %v5348
    %v5438 = vunpack.c.l.b16 %v5349
    %v5439 = vunpack.c.h.b16 %v5349
    %v5440 = vunpack.c.l.b16 %v5350
    %v5441 = vunpack.c.h.b16 %v5350
    %v5442 = vunpack.c.l.b16 %v5351
    %v5443 = vunpack.c.h.b16 %v5351
    %v5444 = vunpack.c.l.b16 %v5352
    %v5445 = vunpack.c.h.b16 %v5352
    %v5446 = vunpack.c.l.b16 %v5353
    %v5447 = vunpack.c.h.b16 %v5353
    %v5448 = vunpack.c.l.b16 %v5354
    %v5449 = vunpack.c.h.b16 %v5354
    %v5450 = vunpack.c.l.b16 %v5355
    %v5451 = vunpack.c.h.b16 %v5355
    %v5452 = vunpack.c.l.b16 %v5356
    %v5453 = vunpack.c.h.b16 %v5356
    %v5454 = vunpack.c.l.b16 %v5357
    %v5455 = vunpack.c.h.b16 %v5357
    %v5456 = vunpack.c.l.b16 %v5358
    %v5457 = vunpack.c.h.b16 %v5358
    %v5458 = vunpack.c.l.b16 %v5359
    %v5459 = vunpack.c.h.b16 %v5359
    %v5460 = vunpack.c.l.b16 %v5360
    %v5461 = vunpack.c.h.b16 %v5360
    %v5462 = vunpack.c.l.b16 %v5361
    %v5463 = vunpack.c.h.b16 %v5361
    %v5464 = vunpack.c.l.b16 %v5362
    %v5465 = vunpack.c.h.b16 %v5362
    %v5466 = vunpack.c.l.b16 %v5363
    %v5467 = vunpack.c.h.b16 %v5363
    %v5468 = vunpack.c.l.b16 %v5364
    %v5469 = vunpack.c.h.b16 %v5364
    %v5470 = vunpack.c.l.b16 %v5365
    %v5471 = vunpack.c.h.b16 %v5365
    %v5472 = vunpack.c.l.b16 %v5366
    %v5473 = vunpack.c.h.b16 %v5366
    %v5474 = vunpack.c.l.b16 %v5367
    %v5475 = vunpack.c.h.b16 %v5367
    %v5476 = vunpack.c.l.b16 %v5368
    %v5477 = vunpack.c.h.b16 %v5368
    %v5478 = vunpack.c.l.b16 %v5369
    %v5479 = vunpack.c.h.b16 %v5369
    %v5480 = vunpack.c.l.b16 %v5370
    %v5481 = vunpack.c.h.b16 %v5370
    %v5482 = vunpack.c.l.b16 %v5371
    %v5483 = vunpack.c.h.b16 %v5371
    %v5484 = vunpack.c.l.b16 %v5372
    %v5485 = vunpack.c.h.b16 %v5372
    %v5486 = vunpack.c.l.b16 %v5373
    %v5487 = vunpack.c.h.b16 %v5373
    %v5488 = vunpack.c.l.b16 %v5374
    %v5489 = vunpack.c.h.b16 %v5374
    %v5490 = vunpack.c.l.b16 %v5375
    %v5491 = vunpack.c.h.b16 %v5375
    %v5492 = vunpack.c.l.b16 %v5376
    %v5493 = vunpack.c.h.b16 %v5376
    %v5494 = vunpack.c.l.b16 %v5377
    %v5495 = vunpack.c.h.b16 %v5377
    %v5496 = vunpack.c.l.b16 %v5378
    %v5497 = vunpack.c.h.b16 %v5378
    %v5498 = vpack.c.b16 %v5438, %v5434
    %v5499 = vpack.c.b16 %v5439, %v5435
    %v5500 = vpack.c.b16 %v5440, %v5436
    %v5501 = vpack.c.b16 %v5441, %v5437
    %v5502 = vpack.c.b16 %v5446, %v5442
    %v5503 = vpack.c.b16 %v5447, %v5443
    %v5504 = vpack.c.b16 %v5448, %v5444
    %v5505 = vpack.c.b16 %v5449, %v5445
    %v5506 = vpack.c.b16 %v5454, %v5450
    %v5507 = vpack.c.b16 %v5455, %v5451
    %v5508 = vpack.c.b16 %v5456, %v5452
    %v5509 = vpack.c.b16 %v5457, %v5453
    %v5510 = vpack.c.b16 %v5462, %v5458
    %v5511 = vpack.c.b16 %v5463, %v5459
    %v5512 = vpack.c.b16 %v5464, %v5460
    %v5513 = vpack.c.b16 %v5465, %v5461
    %v5514 = vpack.c.b16 %v5470, %v5466
    %v5515 = vpack.c.b16 %v5471, %v5467
    %v5516 = vpack.c.b16 %v5472, %v5468
    %v5517 = vpack.c.b16 %v5473, %v5469
    %v5518 = vpack.c.b16 %v5478, %v5474
    %v5519 = vpack.c.b16 %v5479, %v5475
    %v5520 = vpack.c.b16 %v5480, %v5476
    %v5521 = vpack.c.b16 %v5481, %v5477
    %v5522 = vpack.c.b16 %v5486, %v5482
    %v5523 = vpack.c.b16 %v5487, %v5483
    %v5524 = vpack.c.b16 %v5488, %v5484
    %v5525 = vpack.c.b16 %v5489, %v5485
    %v5526 = vpack.c.b16 %v5494, %v5490
    %v5527 = vpack.c.b16 %v5495, %v5491
    %v5528 = vpack.c.b16 %v5496, %v5492
    %v5529 = vpack.c.b16 %v5497, %v5493
    %5562 = vmatprep.subr.bf16.mxu0 %v5527
    %5563 = vmatpush1.bf16.msra.mxu0 %v5526
    %5564 = vmatprep.subr.bf16.mxu0 %v5523
    %5565 = vmatpush1.bf16.msra.mxu0 %v5522
    %5566 = vmatprep.subr.bf16.mxu0 %v5519
    %5567 = vmatpush1.bf16.msra.mxu0 %v5518
    %5568 = vmatprep.subr.bf16.mxu0 %v5515
    %5569 = vmatpush1.bf16.msra.mxu0 %v5514
    %5570 = vmatprep.subr.bf16.mxu0 %v5511
    %5571 = vmatpush1.bf16.msra.mxu0 %v5510
    %5572 = vmatprep.subr.bf16.mxu0 %v5507
    %5573 = vmatpush1.bf16.msra.mxu0 %v5506
    %5574 = vmatprep.subr.bf16.mxu0 %v5503
    %5575 = vmatpush1.bf16.msra.mxu0 %v5502
    %5576 = vmatprep.subr.bf16.mxu0 %v5499
    %5577 = vmatpush1.bf16.msra.mxu0 %v5498
    %5578 = vmatprep.subr.bf16.mxu0 0
    %5579 = vmatpush2.bf16.msra.mxu0 0
    %5580 = vmatprep.subr.bf16.mxu0 0
    %5581 = vmatpush2.bf16.msra.mxu0 0
    %5582 = vmatprep.subr.bf16.mxu0 0
    %5583 = vmatpush2.bf16.msra.mxu0 0
    %5584 = vmatprep.subr.bf16.mxu0 0
    %5585 = vmatpush2.bf16.msra.mxu0 0
    %5586 = vmatprep.subr.bf16.mxu0 0
    %5587 = vmatpush2.bf16.msra.mxu0 0
    %5588 = vmatprep.subr.bf16.mxu0 0
    %5589 = vmatpush2.bf16.msra.mxu0 0
    %5590 = vmatprep.subr.bf16.mxu0 0
    %5591 = vmatpush2.bf16.msra.mxu0 0
    %5592 = vmatprep.subr.bf16.mxu0 0
    %5593 = vmatpush2.bf16.msra.mxu0 0
    %5594 = vmatprep.mubr.bf16.mxu0 0
    %5595 = vmatmul.mubr.bf16.gmra.mxu0 %v5379
    %v5596 = vpop.f32.mrf.mxu0
    %v5597 = vadd.f32 %v5385, %v5596
    %v5598 = vpop.f32.mrf.mxu0
    %v5599 = vadd.f32 %v5389, %v5598
    %v5600 = vpop.f32.mrf.mxu0
    %v5601 = vpop.f32.mrf.mxu0
    %5602 = vdwg.mxu0
    %5603 = vmatprep.subr.bf16.mxu0 %v5529
    %5604 = vmatpush1.bf16.msra.mxu0 %v5528
    %5605 = vmatprep.subr.bf16.mxu0 %v5525
    %5606 = vmatpush1.bf16.msra.mxu0 %v5524
    %5607 = vmatprep.subr.bf16.mxu0 %v5521
    %5608 = vmatpush1.bf16.msra.mxu0 %v5520
    %5609 = vmatprep.subr.bf16.mxu0 %v5517
    %5610 = vmatpush1.bf16.msra.mxu0 %v5516
    %5611 = vmatprep.subr.bf16.mxu0 %v5513
    %5612 = vmatpush1.bf16.msra.mxu0 %v5512
    %5613 = vmatprep.subr.bf16.mxu0 %v5509
    %5614 = vmatpush1.bf16.msra.mxu0 %v5508
    %5615 = vmatprep.subr.bf16.mxu0 %v5505
    %5616 = vmatpush1.bf16.msra.mxu0 %v5504
    %5617 = vmatprep.subr.bf16.mxu0 %v5501
    %5618 = vmatpush1.bf16.msra.mxu0 %v5500
    %5619 = vmatprep.subr.bf16.mxu0 0
    %5620 = vmatpush2.bf16.msra.mxu0 0
    %5621 = vmatprep.subr.bf16.mxu0 0
    %5622 = vmatpush2.bf16.msra.mxu0 0
    %5623 = vmatprep.subr.bf16.mxu0 0
    %5624 = vmatpush2.bf16.msra.mxu0 0
    %5625 = vmatprep.subr.bf16.mxu0 0
    %5626 = vmatpush2.bf16.msra.mxu0 0
    %5627 = vmatprep.subr.bf16.mxu0 0
    %5628 = vmatpush2.bf16.msra.mxu0 0
    %5629 = vmatprep.subr.bf16.mxu0 0
    %5630 = vmatpush2.bf16.msra.mxu0 0
    %5631 = vmatprep.subr.bf16.mxu0 0
    %5632 = vmatpush2.bf16.msra.mxu0 0
    %5633 = vmatprep.subr.bf16.mxu0 0
    %5634 = vmatpush2.bf16.msra.mxu0 0
    %5635 = vmatprep.mubr.bf16.mxu0 0
    %5636 = vmatmul.mubr.bf16.gmra.mxu0 %v5379
    %v5637 = vpop.f32.mrf.mxu0
    %v5638 = vadd.f32 %v5393, %v5637
    %v5639 = vpop.f32.mrf.mxu0
    %v5640 = vadd.f32 %v5397, %v5639
    %v5641 = vpop.f32.mrf.mxu0
    %v5642 = vpop.f32.mrf.mxu0
    %5643 = vdwg.mxu0
    %v5644 = vld [vmem:[#allocation12] sm:$0xff]
    %v5645 = vld [vmem:[#allocation12 + $0x8] sm:$0xff]
    %v5646 = vld [vmem:[#allocation12 + $0x10] sm:$0xff]
    %v5647 = vld [vmem:[#allocation12 + $0x18] sm:$0xff]
    %v5648 = vld [vmem:[#allocation12 + $0x20] sm:$0xff]
    %v5649 = vld [vmem:[#allocation12 + $0x28] sm:$0xff]
    %v5650 = vld [vmem:[#allocation12 + $0x30] sm:$0xff]
    %v5651 = vld [vmem:[#allocation12 + $0x38] sm:$0xff]
    %v5652 = vld [vmem:[#allocation12 + $0x40] sm:$0xff]
    %v5653 = vld [vmem:[#allocation12 + $0x48] sm:$0xff]
    %v5654 = vld [vmem:[#allocation12 + $0x50] sm:$0xff]
    %v5655 = vld [vmem:[#allocation12 + $0x58] sm:$0xff]
    %v5656 = vld [vmem:[#allocation12 + $0x60] sm:$0xff]
    %v5657 = vld [vmem:[#allocation12 + $0x68] sm:$0xff]
    %v5658 = vld [vmem:[#allocation12 + $0x70] sm:$0xff]
    %v5659 = vld [vmem:[#allocation12 + $0x78] sm:$0xff]
    %v5660 = vld [vmem:[#allocation12 + $0x80] sm:$0xff]
    %v5661 = vld [vmem:[#allocation12 + $0x88] sm:$0xff]
    %v5662 = vld [vmem:[#allocation12 + $0x90] sm:$0xff]
    %v5663 = vld [vmem:[#allocation12 + $0x98] sm:$0xff]
    %v5664 = vld [vmem:[#allocation12 + $0xa0] sm:$0xff]
    %v5665 = vld [vmem:[#allocation12 + $0xa8] sm:$0xff]
    %v5666 = vld [vmem:[#allocation12 + $0xb0] sm:$0xff]
    %v5667 = vld [vmem:[#allocation12 + $0xb8] sm:$0xff]
    %v5668 = vld [vmem:[#allocation12 + $0xc0] sm:$0xff]
    %v5669 = vld [vmem:[#allocation12 + $0xc8] sm:$0xff]
    %v5670 = vld [vmem:[#allocation12 + $0xd0] sm:$0xff]
    %v5671 = vld [vmem:[#allocation12 + $0xd8] sm:$0xff]
    %v5672 = vld [vmem:[#allocation12 + $0xe0] sm:$0xff]
    %v5673 = vld [vmem:[#allocation12 + $0xe8] sm:$0xff]
    %v5674 = vld [vmem:[#allocation12 + $0xf0] sm:$0xff]
    %v5675 = vld [vmem:[#allocation12 + $0xf8] sm:$0xff]
    %v5708 = vunpack.c.l.b16 %v5644
    %v5709 = vunpack.c.h.b16 %v5644
    %v5710 = vunpack.c.l.b16 %v5645
    %v5711 = vunpack.c.h.b16 %v5645
    %v5712 = vunpack.c.l.b16 %v5646
    %v5713 = vunpack.c.h.b16 %v5646
    %v5714 = vunpack.c.l.b16 %v5647
    %v5715 = vunpack.c.h.b16 %v5647
    %v5716 = vunpack.c.l.b16 %v5648
    %v5717 = vunpack.c.h.b16 %v5648
    %v5718 = vunpack.c.l.b16 %v5649
    %v5719 = vunpack.c.h.b16 %v5649
    %v5720 = vunpack.c.l.b16 %v5650
    %v5721 = vunpack.c.h.b16 %v5650
    %v5722 = vunpack.c.l.b16 %v5651
    %v5723 = vunpack.c.h.b16 %v5651
    %v5724 = vunpack.c.l.b16 %v5652
    %v5725 = vunpack.c.h.b16 %v5652
    %v5726 = vunpack.c.l.b16 %v5653
    %v5727 = vunpack.c.h.b16 %v5653
    %v5728 = vunpack.c.l.b16 %v5654
    %v5729 = vunpack.c.h.b16 %v5654
    %v5730 = vunpack.c.l.b16 %v5655
    %v5731 = vunpack.c.h.b16 %v5655
    %v5732 = vunpack.c.l.b16 %v5656
    %v5733 = vunpack.c.h.b16 %v5656
    %v5734 = vunpack.c.l.b16 %v5657
    %v5735 = vunpack.c.h.b16 %v5657
    %v5736 = vunpack.c.l.b16 %v5658
    %v5737 = vunpack.c.h.b16 %v5658
    %v5738 = vunpack.c.l.b16 %v5659
    %v5739 = vunpack.c.h.b16 %v5659
    %v5740 = vunpack.c.l.b16 %v5660
    %v5741 = vunpack.c.h.b16 %v5660
    %v5742 = vunpack.c.l.b16 %v5661
    %v5743 = vunpack.c.h.b16 %v5661
    %v5744 = vunpack.c.l.b16 %v5662
    %v5745 = vunpack.c.h.b16 %v5662
    %v5746 = vunpack.c.l.b16 %v5663
    %v5747 = vunpack.c.h.b16 %v5663
    %v5748 = vunpack.c.l.b16 %v5664
    %v5749 = vunpack.c.h.b16 %v5664
    %v5750 = vunpack.c.l.b16 %v5665
    %v5751 = vunpack.c.h.b16 %v5665
    %v5752 = vunpack.c.l.b16 %v5666
    %v5753 = vunpack.c.h.b16 %v5666
    %v5754 = vunpack.c.l.b16 %v5667
    %v5755 = vunpack.c.h.b16 %v5667
    %v5756 = vunpack.c.l.b16 %v5668
    %v5757 = vunpack.c.h.b16 %v5668
    %v5758 = vunpack.c.l.b16 %v5669
    %v5759 = vunpack.c.h.b16 %v5669
    %v5760 = vunpack.c.l.b16 %v5670
    %v5761 = vunpack.c.h.b16 %v5670
    %v5762 = vunpack.c.l.b16 %v5671
    %v5763 = vunpack.c.h.b16 %v5671
    %v5764 = vunpack.c.l.b16 %v5672
    %v5765 = vunpack.c.h.b16 %v5672
    %v5766 = vunpack.c.l.b16 %v5673
    %v5767 = vunpack.c.h.b16 %v5673
    %v5768 = vunpack.c.l.b16 %v5674
    %v5769 = vunpack.c.h.b16 %v5674
    %v5770 = vunpack.c.l.b16 %v5675
    %v5771 = vunpack.c.h.b16 %v5675
    %v5772 = vpack.c.b16 %v5712, %v5708
    %v5773 = vpack.c.b16 %v5713, %v5709
    %v5774 = vpack.c.b16 %v5714, %v5710
    %v5775 = vpack.c.b16 %v5715, %v5711
    %v5776 = vpack.c.b16 %v5720, %v5716
    %v5777 = vpack.c.b16 %v5721, %v5717
    %v5778 = vpack.c.b16 %v5722, %v5718
    %v5779 = vpack.c.b16 %v5723, %v5719
    %v5780 = vpack.c.b16 %v5728, %v5724
    %v5781 = vpack.c.b16 %v5729, %v5725
    %v5782 = vpack.c.b16 %v5730, %v5726
    %v5783 = vpack.c.b16 %v5731, %v5727
    %v5784 = vpack.c.b16 %v5736, %v5732
    %v5785 = vpack.c.b16 %v5737, %v5733
    %v5786 = vpack.c.b16 %v5738, %v5734
    %v5787 = vpack.c.b16 %v5739, %v5735
    %v5788 = vpack.c.b16 %v5744, %v5740
    %v5789 = vpack.c.b16 %v5745, %v5741
    %v5790 = vpack.c.b16 %v5746, %v5742
    %v5791 = vpack.c.b16 %v5747, %v5743
    %v5792 = vpack.c.b16 %v5752, %v5748
    %v5793 = vpack.c.b16 %v5753, %v5749
    %v5794 = vpack.c.b16 %v5754, %v5750
    %v5795 = vpack.c.b16 %v5755, %v5751
    %v5796 = vpack.c.b16 %v5760, %v5756
    %v5797 = vpack.c.b16 %v5761, %v5757
    %v5798 = vpack.c.b16 %v5762, %v5758
    %v5799 = vpack.c.b16 %v5763, %v5759
    %v5800 = vpack.c.b16 %v5768, %v5764
    %v5801 = vpack.c.b16 %v5769, %v5765
    %v5802 = vpack.c.b16 %v5770, %v5766
    %v5803 = vpack.c.b16 %v5771, %v5767
    %5836 = vmatprep.subr.bf16.mxu0 %v5801
    %5837 = vmatpush1.bf16.msra.mxu0 %v5800
    %5838 = vmatprep.subr.bf16.mxu0 %v5797
    %5839 = vmatpush1.bf16.msra.mxu0 %v5796
    %5840 = vmatprep.subr.bf16.mxu0 %v5793
    %5841 = vmatpush1.bf16.msra.mxu0 %v5792
    %5842 = vmatprep.subr.bf16.mxu0 %v5789
    %5843 = vmatpush1.bf16.msra.mxu0 %v5788
    %5844 = vmatprep.subr.bf16.mxu0 %v5785
    %5845 = vmatpush1.bf16.msra.mxu0 %v5784
    %5846 = vmatprep.subr.bf16.mxu0 %v5781
    %5847 = vmatpush1.bf16.msra.mxu0 %v5780
    %5848 = vmatprep.subr.bf16.mxu0 %v5777
    %5849 = vmatpush1.bf16.msra.mxu0 %v5776
    %5850 = vmatprep.subr.bf16.mxu0 %v5773
    %5851 = vmatpush1.bf16.msra.mxu0 %v5772
    %5852 = vmatprep.subr.bf16.mxu0 0
    %5853 = vmatpush2.bf16.msra.mxu0 0
    %5854 = vmatprep.subr.bf16.mxu0 0
    %5855 = vmatpush2.bf16.msra.mxu0 0
    %5856 = vmatprep.subr.bf16.mxu0 0
    %5857 = vmatpush2.bf16.msra.mxu0 0
    %5858 = vmatprep.subr.bf16.mxu0 0
    %5859 = vmatpush2.bf16.msra.mxu0 0
    %5860 = vmatprep.subr.bf16.mxu0 0
    %5861 = vmatpush2.bf16.msra.mxu0 0
    %5862 = vmatprep.subr.bf16.mxu0 0
    %5863 = vmatpush2.bf16.msra.mxu0 0
    %5864 = vmatprep.subr.bf16.mxu0 0
    %5865 = vmatpush2.bf16.msra.mxu0 0
    %5866 = vmatprep.subr.bf16.mxu0 0
    %5867 = vmatpush2.bf16.msra.mxu0 0
    %5868 = vmatprep.mubr.bf16.mxu0 0
    %5869 = vmatmul.mubr.bf16.gmra.mxu0 %v5035
    %v5870 = vpop.f32.mrf.mxu0
    %v5871 = vadd.f32 0.0, %v5870
    %v5872 = vpop.f32.mrf.mxu0
    %v5873 = vadd.f32 0.0, %v5872
    %v5874 = vpop.f32.mrf.mxu0
    %v5875 = vpop.f32.mrf.mxu0
    %5876 = vdwg.mxu0
    %5877 = vmatprep.subr.bf16.mxu0 %v5803
    %5878 = vmatpush1.bf16.msra.mxu0 %v5802
    %5879 = vmatprep.subr.bf16.mxu0 %v5799
    %5880 = vmatpush1.bf16.msra.mxu0 %v5798
    %5881 = vmatprep.subr.bf16.mxu0 %v5795
    %5882 = vmatpush1.bf16.msra.mxu0 %v5794
    %5883 = vmatprep.subr.bf16.mxu0 %v5791
    %5884 = vmatpush1.bf16.msra.mxu0 %v5790
    %5885 = vmatprep.subr.bf16.mxu0 %v5787
    %5886 = vmatpush1.bf16.msra.mxu0 %v5786
    %5887 = vmatprep.subr.bf16.mxu0 %v5783
    %5888 = vmatpush1.bf16.msra.mxu0 %v5782
    %5889 = vmatprep.subr.bf16.mxu0 %v5779
    %5890 = vmatpush1.bf16.msra.mxu0 %v5778
    %5891 = vmatprep.subr.bf16.mxu0 %v5775
    %5892 = vmatpush1.bf16.msra.mxu0 %v5774
    %5893 = vmatprep.subr.bf16.mxu0 0
    %5894 = vmatpush2.bf16.msra.mxu0 0
    %5895 = vmatprep.subr.bf16.mxu0 0
    %5896 = vmatpush2.bf16.msra.mxu0 0
    %5897 = vmatprep.subr.bf16.mxu0 0
    %5898 = vmatpush2.bf16.msra.mxu0 0
    %5899 = vmatprep.subr.bf16.mxu0 0
    %5900 = vmatpush2.bf16.msra.mxu0 0
    %5901 = vmatprep.subr.bf16.mxu0 0
    %5902 = vmatpush2.bf16.msra.mxu0 0
    %5903 = vmatprep.subr.bf16.mxu0 0
    %5904 = vmatpush2.bf16.msra.mxu0 0
    %5905 = vmatprep.subr.bf16.mxu0 0
    %5906 = vmatpush2.bf16.msra.mxu0 0
    %5907 = vmatprep.subr.bf16.mxu0 0
    %5908 = vmatpush2.bf16.msra.mxu0 0
    %5909 = vmatprep.mubr.bf16.mxu0 0
    %5910 = vmatmul.mubr.bf16.gmra.mxu0 %v5035
    %v5911 = vpop.f32.mrf.mxu0
    %v5912 = vadd.f32 0.0, %v5911
    %v5913 = vpop.f32.mrf.mxu0
    %v5914 = vadd.f32 0.0, %v5913
    %v5915 = vpop.f32.mrf.mxu0
    %v5916 = vpop.f32.mrf.mxu0
    %5917 = vdwg.mxu0
    %v5918 = vadd.f32 %v5597, %v5871
    %v5919 = vadd.f32 %v5599, %v5873
    %v5920 = vadd.f32 %v5638, %v5912
    %v5921 = vadd.f32 %v5640, %v5914
    %v5922 = vxor.u32 %v5918, 2147483648
    %v5923 = vmul.f32 %v5922, 1.442695
    %v5924 = vpow.pop %v5923
    %v5925 = vadd.f32 %v5924, 1.0
    %v5926 = vrcp.pop %v5925
    %v5927 = vmul.f32 1.0, %v5926
    %v5928 = vxor.u32 %v5919, 2147483648
    %v5929 = vmul.f32 %v5928, 1.442695
    %v5930 = vpow.pop %v5929
    %v5931 = vadd.f32 %v5930, 1.0
    %v5932 = vrcp.pop %v5931
    %v5933 = vmul.f32 1.0, %v5932
    %v5934 = vtanh.pop %v5920
    %v5935 = vxor.u32 %v5921, 2147483648
    %v5936 = vmul.f32 %v5935, 1.442695
    %v5937 = vpow.pop %v5936
    %v5938 = vadd.f32 %v5937, 1.0
    %v5939 = vrcp.pop %v5938
    %v5940 = vmul.f32 1.0, %v5939
    %v5941 = vmul.f32 %v5933, %v5032
    %v5942 = vmul.f32 %v5927, %v5934
    %v5943 = vadd.f32 %v5941, %v5942
    %v5944 = vtanh.pop %v5943
    %v5945 = vmul.f32 %v5940, %v5944
    %v5946 = vpack.c.bf16 %v5945, %v5945
    %s5947 = scalar_lea.vmem [#allocation6], 20
    %5948 = vst [vmem:[%s5947] sm:$0xf] %v5946
    %s5949 = scalar_lea.vmem [#allocation7], 96
    %v5950 = vld [vmem:[%s5949] sm:$0xff]
    %v5951 = vld [vmem:[%s5949 + $0x8] sm:$0xff]
    %v5952 = vunpack.c.l.bf16 %v5950
    %v5953 = vunpack.c.h.bf16 %v5950
    %v5954 = vunpack.c.l.bf16 %v5951
    %v5955 = vunpack.c.h.bf16 %v5951
    %v5956 = vld [vmem:[#allocation8] sm:$0xff]
    %v5957 = vld [vmem:[#allocation8 + $0x8] sm:$0xff]
    %v5958 = vld [vmem:[#allocation8 + $0x10] sm:$0xff]
    %v5959 = vld [vmem:[#allocation8 + $0x18] sm:$0xff]
    %v5960 = vld [vmem:[#allocation8 + $0x20] sm:$0xff]
    %v5961 = vld [vmem:[#allocation8 + $0x28] sm:$0xff]
    %v5962 = vld [vmem:[#allocation8 + $0x30] sm:$0xff]
    %v5963 = vld [vmem:[#allocation8 + $0x38] sm:$0xff]
    %v5964 = vld [vmem:[#allocation8 + $0x40] sm:$0xff]
    %v5965 = vld [vmem:[#allocation8 + $0x48] sm:$0xff]
    %v5966 = vld [vmem:[#allocation8 + $0x50] sm:$0xff]
    %v5967 = vld [vmem:[#allocation8 + $0x58] sm:$0xff]
    %v5968 = vld [vmem:[#allocation8 + $0x60] sm:$0xff]
    %v5969 = vld [vmem:[#allocation8 + $0x68] sm:$0xff]
    %v5970 = vld [vmem:[#allocation8 + $0x70] sm:$0xff]
    %v5971 = vld [vmem:[#allocation8 + $0x78] sm:$0xff]
    %v5972 = vld [vmem:[#allocation8 + $0x80] sm:$0xff]
    %v5973 = vld [vmem:[#allocation8 + $0x88] sm:$0xff]
    %v5974 = vld [vmem:[#allocation8 + $0x90] sm:$0xff]
    %v5975 = vld [vmem:[#allocation8 + $0x98] sm:$0xff]
    %v5976 = vld [vmem:[#allocation8 + $0xa0] sm:$0xff]
    %v5977 = vld [vmem:[#allocation8 + $0xa8] sm:$0xff]
    %v5978 = vld [vmem:[#allocation8 + $0xb0] sm:$0xff]
    %v5979 = vld [vmem:[#allocation8 + $0xb8] sm:$0xff]
    %v5980 = vld [vmem:[#allocation8 + $0xc0] sm:$0xff]
    %v5981 = vld [vmem:[#allocation8 + $0xc8] sm:$0xff]
    %v5982 = vld [vmem:[#allocation8 + $0xd0] sm:$0xff]
    %v5983 = vld [vmem:[#allocation8 + $0xd8] sm:$0xff]
    %v5984 = vld [vmem:[#allocation8 + $0xe0] sm:$0xff]
    %v5985 = vld [vmem:[#allocation8 + $0xe8] sm:$0xff]
    %v5986 = vld [vmem:[#allocation8 + $0xf0] sm:$0xff]
    %v5987 = vld [vmem:[#allocation8 + $0xf8] sm:$0xff]
    %v6020 = vunpack.c.l.b16 %v5956
    %v6021 = vunpack.c.h.b16 %v5956
    %v6022 = vunpack.c.l.b16 %v5957
    %v6023 = vunpack.c.h.b16 %v5957
    %v6024 = vunpack.c.l.b16 %v5958
    %v6025 = vunpack.c.h.b16 %v5958
    %v6026 = vunpack.c.l.b16 %v5959
    %v6027 = vunpack.c.h.b16 %v5959
    %v6028 = vunpack.c.l.b16 %v5960
    %v6029 = vunpack.c.h.b16 %v5960
    %v6030 = vunpack.c.l.b16 %v5961
    %v6031 = vunpack.c.h.b16 %v5961
    %v6032 = vunpack.c.l.b16 %v5962
    %v6033 = vunpack.c.h.b16 %v5962
    %v6034 = vunpack.c.l.b16 %v5963
    %v6035 = vunpack.c.h.b16 %v5963
    %v6036 = vunpack.c.l.b16 %v5964
    %v6037 = vunpack.c.h.b16 %v5964
    %v6038 = vunpack.c.l.b16 %v5965
    %v6039 = vunpack.c.h.b16 %v5965
    %v6040 = vunpack.c.l.b16 %v5966
    %v6041 = vunpack.c.h.b16 %v5966
    %v6042 = vunpack.c.l.b16 %v5967
    %v6043 = vunpack.c.h.b16 %v5967
    %v6044 = vunpack.c.l.b16 %v5968
    %v6045 = vunpack.c.h.b16 %v5968
    %v6046 = vunpack.c.l.b16 %v5969
    %v6047 = vunpack.c.h.b16 %v5969
    %v6048 = vunpack.c.l.b16 %v5970
    %v6049 = vunpack.c.h.b16 %v5970
    %v6050 = vunpack.c.l.b16 %v5971
    %v6051 = vunpack.c.h.b16 %v5971
    %v6052 = vunpack.c.l.b16 %v5972
    %v6053 = vunpack.c.h.b16 %v5972
    %v6054 = vunpack.c.l.b16 %v5973
    %v6055 = vunpack.c.h.b16 %v5973
    %v6056 = vunpack.c.l.b16 %v5974
    %v6057 = vunpack.c.h.b16 %v5974
    %v6058 = vunpack.c.l.b16 %v5975
    %v6059 = vunpack.c.h.b16 %v5975
    %v6060 = vunpack.c.l.b16 %v5976
    %v6061 = vunpack.c.h.b16 %v5976
    %v6062 = vunpack.c.l.b16 %v5977
    %v6063 = vunpack.c.h.b16 %v5977
    %v6064 = vunpack.c.l.b16 %v5978
    %v6065 = vunpack.c.h.b16 %v5978
    %v6066 = vunpack.c.l.b16 %v5979
    %v6067 = vunpack.c.h.b16 %v5979
    %v6068 = vunpack.c.l.b16 %v5980
    %v6069 = vunpack.c.h.b16 %v5980
    %v6070 = vunpack.c.l.b16 %v5981
    %v6071 = vunpack.c.h.b16 %v5981
    %v6072 = vunpack.c.l.b16 %v5982
    %v6073 = vunpack.c.h.b16 %v5982
    %v6074 = vunpack.c.l.b16 %v5983
    %v6075 = vunpack.c.h.b16 %v5983
    %v6076 = vunpack.c.l.b16 %v5984
    %v6077 = vunpack.c.h.b16 %v5984
    %v6078 = vunpack.c.l.b16 %v5985
    %v6079 = vunpack.c.h.b16 %v5985
    %v6080 = vunpack.c.l.b16 %v5986
    %v6081 = vunpack.c.h.b16 %v5986
    %v6082 = vunpack.c.l.b16 %v5987
    %v6083 = vunpack.c.h.b16 %v5987
    %v6084 = vpack.c.b16 %v6024, %v6020
    %v6085 = vpack.c.b16 %v6025, %v6021
    %v6086 = vpack.c.b16 %v6026, %v6022
    %v6087 = vpack.c.b16 %v6027, %v6023
    %v6088 = vpack.c.b16 %v6032, %v6028
    %v6089 = vpack.c.b16 %v6033, %v6029
    %v6090 = vpack.c.b16 %v6034, %v6030
    %v6091 = vpack.c.b16 %v6035, %v6031
    %v6092 = vpack.c.b16 %v6040, %v6036
    %v6093 = vpack.c.b16 %v6041, %v6037
    %v6094 = vpack.c.b16 %v6042, %v6038
    %v6095 = vpack.c.b16 %v6043, %v6039
    %v6096 = vpack.c.b16 %v6048, %v6044
    %v6097 = vpack.c.b16 %v6049, %v6045
    %v6098 = vpack.c.b16 %v6050, %v6046
    %v6099 = vpack.c.b16 %v6051, %v6047
    %v6100 = vpack.c.b16 %v6056, %v6052
    %v6101 = vpack.c.b16 %v6057, %v6053
    %v6102 = vpack.c.b16 %v6058, %v6054
    %v6103 = vpack.c.b16 %v6059, %v6055
    %v6104 = vpack.c.b16 %v6064, %v6060
    %v6105 = vpack.c.b16 %v6065, %v6061
    %v6106 = vpack.c.b16 %v6066, %v6062
    %v6107 = vpack.c.b16 %v6067, %v6063
    %v6108 = vpack.c.b16 %v6072, %v6068
    %v6109 = vpack.c.b16 %v6073, %v6069
    %v6110 = vpack.c.b16 %v6074, %v6070
    %v6111 = vpack.c.b16 %v6075, %v6071
    %v6112 = vpack.c.b16 %v6080, %v6076
    %v6113 = vpack.c.b16 %v6081, %v6077
    %v6114 = vpack.c.b16 %v6082, %v6078
    %v6115 = vpack.c.b16 %v6083, %v6079
    %6148 = vmatprep.subr.bf16.mxu0 %v6113
    %6149 = vmatpush1.bf16.msra.mxu0 %v6112
    %6150 = vmatprep.subr.bf16.mxu0 %v6109
    %6151 = vmatpush1.bf16.msra.mxu0 %v6108
    %6152 = vmatprep.subr.bf16.mxu0 %v6105
    %6153 = vmatpush1.bf16.msra.mxu0 %v6104
    %6154 = vmatprep.subr.bf16.mxu0 %v6101
    %6155 = vmatpush1.bf16.msra.mxu0 %v6100
    %6156 = vmatprep.subr.bf16.mxu0 %v6097
    %6157 = vmatpush1.bf16.msra.mxu0 %v6096
    %6158 = vmatprep.subr.bf16.mxu0 %v6093
    %6159 = vmatpush1.bf16.msra.mxu0 %v6092
    %6160 = vmatprep.subr.bf16.mxu0 %v6089
    %6161 = vmatpush1.bf16.msra.mxu0 %v6088
    %6162 = vmatprep.subr.bf16.mxu0 %v6085
    %6163 = vmatpush1.bf16.msra.mxu0 %v6084
    %6164 = vmatprep.subr.bf16.mxu0 0
    %6165 = vmatpush2.bf16.msra.mxu0 0
    %6166 = vmatprep.subr.bf16.mxu0 0
    %6167 = vmatpush2.bf16.msra.mxu0 0
    %6168 = vmatprep.subr.bf16.mxu0 0
    %6169 = vmatpush2.bf16.msra.mxu0 0
    %6170 = vmatprep.subr.bf16.mxu0 0
    %6171 = vmatpush2.bf16.msra.mxu0 0
    %6172 = vmatprep.subr.bf16.mxu0 0
    %6173 = vmatpush2.bf16.msra.mxu0 0
    %6174 = vmatprep.subr.bf16.mxu0 0
    %6175 = vmatpush2.bf16.msra.mxu0 0
    %6176 = vmatprep.subr.bf16.mxu0 0
    %6177 = vmatpush2.bf16.msra.mxu0 0
    %6178 = vmatprep.subr.bf16.mxu0 0
    %6179 = vmatpush2.bf16.msra.mxu0 0
    %6180 = vmatprep.mubr.bf16.mxu0 0
    %6181 = vmatmul.mubr.bf16.gmra.mxu0 %v5379
    %v6182 = vpop.f32.mrf.mxu0
    %v6183 = vadd.f32 0.0, %v6182
    %v6184 = vpop.f32.mrf.mxu0
    %v6185 = vadd.f32 0.0, %v6184
    %v6186 = vpop.f32.mrf.mxu0
    %v6187 = vpop.f32.mrf.mxu0
    %6188 = vdwg.mxu0
    %6189 = vmatprep.subr.bf16.mxu0 %v6115
    %6190 = vmatpush1.bf16.msra.mxu0 %v6114
    %6191 = vmatprep.subr.bf16.mxu0 %v6111
    %6192 = vmatpush1.bf16.msra.mxu0 %v6110
    %6193 = vmatprep.subr.bf16.mxu0 %v6107
    %6194 = vmatpush1.bf16.msra.mxu0 %v6106
    %6195 = vmatprep.subr.bf16.mxu0 %v6103
    %6196 = vmatpush1.bf16.msra.mxu0 %v6102
    %6197 = vmatprep.subr.bf16.mxu0 %v6099
    %6198 = vmatpush1.bf16.msra.mxu0 %v6098
    %6199 = vmatprep.subr.bf16.mxu0 %v6095
    %6200 = vmatpush1.bf16.msra.mxu0 %v6094
    %6201 = vmatprep.subr.bf16.mxu0 %v6091
    %6202 = vmatpush1.bf16.msra.mxu0 %v6090
    %6203 = vmatprep.subr.bf16.mxu0 %v6087
    %6204 = vmatpush1.bf16.msra.mxu0 %v6086
    %6205 = vmatprep.subr.bf16.mxu0 0
    %6206 = vmatpush2.bf16.msra.mxu0 0
    %6207 = vmatprep.subr.bf16.mxu0 0
    %6208 = vmatpush2.bf16.msra.mxu0 0
    %6209 = vmatprep.subr.bf16.mxu0 0
    %6210 = vmatpush2.bf16.msra.mxu0 0
    %6211 = vmatprep.subr.bf16.mxu0 0
    %6212 = vmatpush2.bf16.msra.mxu0 0
    %6213 = vmatprep.subr.bf16.mxu0 0
    %6214 = vmatpush2.bf16.msra.mxu0 0
    %6215 = vmatprep.subr.bf16.mxu0 0
    %6216 = vmatpush2.bf16.msra.mxu0 0
    %6217 = vmatprep.subr.bf16.mxu0 0
    %6218 = vmatpush2.bf16.msra.mxu0 0
    %6219 = vmatprep.subr.bf16.mxu0 0
    %6220 = vmatpush2.bf16.msra.mxu0 0
    %6221 = vmatprep.mubr.bf16.mxu0 0
    %6222 = vmatmul.mubr.bf16.gmra.mxu0 %v5379
    %v6223 = vpop.f32.mrf.mxu0
    %v6224 = vadd.f32 0.0, %v6223
    %v6225 = vpop.f32.mrf.mxu0
    %v6226 = vadd.f32 0.0, %v6225
    %v6227 = vpop.f32.mrf.mxu0
    %v6228 = vpop.f32.mrf.mxu0
    %6229 = vdwg.mxu0
    %v6230 = vadd.f32 %v5952, %v6183
    %v6231 = vadd.f32 %v5953, %v6185
    %v6232 = vadd.f32 %v5954, %v6224
    %v6233 = vadd.f32 %v5955, %v6226
    %v6234 = vxor.u32 %v6230, 2147483648
    %v6235 = vmul.f32 %v6234, 1.442695
    %v6236 = vpow.pop %v6235
    %v6237 = vadd.f32 %v6236, 1.0
    %v6238 = vrcp.pop %v6237
    %v6239 = vmul.f32 1.0, %v6238
    %v6240 = vxor.u32 %v6231, 2147483648
    %v6241 = vmul.f32 %v6240, 1.442695
    %v6242 = vpow.pop %v6241
    %v6243 = vadd.f32 %v6242, 1.0
    %v6244 = vrcp.pop %v6243
    %v6245 = vmul.f32 1.0, %v6244
    %v6246 = vtanh.pop %v6232
    %v6247 = vxor.u32 %v6233, 2147483648
    %v6248 = vmul.f32 %v6247, 1.442695
    %v6249 = vpow.pop %v6248
    %v6250 = vadd.f32 %v6249, 1.0
    %v6251 = vrcp.pop %v6250
    %v6252 = vmul.f32 1.0, %v6251
    %v6253 = vmul.f32 %v6245, %v5344
    %v6254 = vmul.f32 %v6239, %v6246
    %v6255 = vadd.f32 %v6253, %v6254
    %v6256 = vtanh.pop %v6255
    %v6257 = vmul.f32 %v6252, %v6256
    %v6258 = vld [vmem:[#allocation10] sm:$0xff]
    %v6259 = vld [vmem:[#allocation10 + $0x8] sm:$0xff]
    %v6260 = vld [vmem:[#allocation10 + $0x10] sm:$0xff]
    %v6261 = vld [vmem:[#allocation10 + $0x18] sm:$0xff]
    %v6262 = vld [vmem:[#allocation10 + $0x20] sm:$0xff]
    %v6263 = vld [vmem:[#allocation10 + $0x28] sm:$0xff]
    %v6264 = vld [vmem:[#allocation10 + $0x30] sm:$0xff]
    %v6265 = vld [vmem:[#allocation10 + $0x38] sm:$0xff]
    %v6266 = vld [vmem:[#allocation10 + $0x40] sm:$0xff]
    %v6267 = vld [vmem:[#allocation10 + $0x48] sm:$0xff]
    %v6268 = vld [vmem:[#allocation10 + $0x50] sm:$0xff]
    %v6269 = vld [vmem:[#allocation10 + $0x58] sm:$0xff]
    %v6270 = vld [vmem:[#allocation10 + $0x60] sm:$0xff]
    %v6271 = vld [vmem:[#allocation10 + $0x68] sm:$0xff]
    %v6272 = vld [vmem:[#allocation10 + $0x70] sm:$0xff]
    %v6273 = vld [vmem:[#allocation10 + $0x78] sm:$0xff]
    %v6274 = vld [vmem:[#allocation10 + $0x80] sm:$0xff]
    %v6275 = vld [vmem:[#allocation10 + $0x88] sm:$0xff]
    %v6276 = vld [vmem:[#allocation10 + $0x90] sm:$0xff]
    %v6277 = vld [vmem:[#allocation10 + $0x98] sm:$0xff]
    %v6278 = vld [vmem:[#allocation10 + $0xa0] sm:$0xff]
    %v6279 = vld [vmem:[#allocation10 + $0xa8] sm:$0xff]
    %v6280 = vld [vmem:[#allocation10 + $0xb0] sm:$0xff]
    %v6281 = vld [vmem:[#allocation10 + $0xb8] sm:$0xff]
    %v6282 = vld [vmem:[#allocation10 + $0xc0] sm:$0xff]
    %v6283 = vld [vmem:[#allocation10 + $0xc8] sm:$0xff]
    %v6284 = vld [vmem:[#allocation10 + $0xd0] sm:$0xff]
    %v6285 = vld [vmem:[#allocation10 + $0xd8] sm:$0xff]
    %v6286 = vld [vmem:[#allocation10 + $0xe0] sm:$0xff]
    %v6287 = vld [vmem:[#allocation10 + $0xe8] sm:$0xff]
    %v6288 = vld [vmem:[#allocation10 + $0xf0] sm:$0xff]
    %v6289 = vld [vmem:[#allocation10 + $0xf8] sm:$0xff]
    %v6290 = vpack.c.bf16 %v6257, %v6257
    %v6291 = vld [vmem:[%s6] sm:$0xf]
    %v6293 = vlaneseq
    %v6294 = vshrl.u32 %v6293, 7
    %v6295 = vsub.s32 0, %v6294
    %v6296 = vrot.slane %v6291, %v6295
    %v6297 = vlaneseq
    %v6298 = vshrl.u32 %v6297, 7
    %v6299 = vsub.s32 1, %v6298
    %v6300 = vrot.slane %v6291, %v6299
    %v6301 = vlaneseq
    %v6302 = vshrl.u32 %v6301, 7
    %v6303 = vsub.s32 2, %v6302
    %v6304 = vrot.slane %v6291, %v6303
    %v6305 = vlaneseq
    %v6306 = vshrl.u32 %v6305, 7
    %v6307 = vsub.s32 3, %v6306
    %v6308 = vrot.slane %v6291, %v6307
    %v6345 = vunpack.c.l.b16 %v6258
    %v6346 = vunpack.c.h.b16 %v6258
    %v6347 = vunpack.c.l.b16 %v6259
    %v6348 = vunpack.c.h.b16 %v6259
    %v6349 = vunpack.c.l.b16 %v6260
    %v6350 = vunpack.c.h.b16 %v6260
    %v6351 = vunpack.c.l.b16 %v6261
    %v6352 = vunpack.c.h.b16 %v6261
    %v6353 = vunpack.c.l.b16 %v6262
    %v6354 = vunpack.c.h.b16 %v6262
    %v6355 = vunpack.c.l.b16 %v6263
    %v6356 = vunpack.c.h.b16 %v6263
    %v6357 = vunpack.c.l.b16 %v6264
    %v6358 = vunpack.c.h.b16 %v6264
    %v6359 = vunpack.c.l.b16 %v6265
    %v6360 = vunpack.c.h.b16 %v6265
    %v6361 = vunpack.c.l.b16 %v6266
    %v6362 = vunpack.c.h.b16 %v6266
    %v6363 = vunpack.c.l.b16 %v6267
    %v6364 = vunpack.c.h.b16 %v6267
    %v6365 = vunpack.c.l.b16 %v6268
    %v6366 = vunpack.c.h.b16 %v6268
    %v6367 = vunpack.c.l.b16 %v6269
    %v6368 = vunpack.c.h.b16 %v6269
    %v6369 = vunpack.c.l.b16 %v6270
    %v6370 = vunpack.c.h.b16 %v6270
    %v6371 = vunpack.c.l.b16 %v6271
    %v6372 = vunpack.c.h.b16 %v6271
    %v6373 = vunpack.c.l.b16 %v6272
    %v6374 = vunpack.c.h.b16 %v6272
    %v6375 = vunpack.c.l.b16 %v6273
    %v6376 = vunpack.c.h.b16 %v6273
    %v6377 = vunpack.c.l.b16 %v6274
    %v6378 = vunpack.c.h.b16 %v6274
    %v6379 = vunpack.c.l.b16 %v6275
    %v6380 = vunpack.c.h.b16 %v6275
    %v6381 = vunpack.c.l.b16 %v6276
    %v6382 = vunpack.c.h.b16 %v6276
    %v6383 = vunpack.c.l.b16 %v6277
    %v6384 = vunpack.c.h.b16 %v6277
    %v6385 = vunpack.c.l.b16 %v6278
    %v6386 = vunpack.c.h.b16 %v6278
    %v6387 = vunpack.c.l.b16 %v6279
    %v6388 = vunpack.c.h.b16 %v6279
    %v6389 = vunpack.c.l.b16 %v6280
    %v6390 = vunpack.c.h.b16 %v6280
    %v6391 = vunpack.c.l.b16 %v6281
    %v6392 = vunpack.c.h.b16 %v6281
    %v6393 = vunpack.c.l.b16 %v6282
    %v6394 = vunpack.c.h.b16 %v6282
    %v6395 = vunpack.c.l.b16 %v6283
    %v6396 = vunpack.c.h.b16 %v6283
    %v6397 = vunpack.c.l.b16 %v6284
    %v6398 = vunpack.c.h.b16 %v6284
    %v6399 = vunpack.c.l.b16 %v6285
    %v6400 = vunpack.c.h.b16 %v6285
    %v6401 = vunpack.c.l.b16 %v6286
    %v6402 = vunpack.c.h.b16 %v6286
    %v6403 = vunpack.c.l.b16 %v6287
    %v6404 = vunpack.c.h.b16 %v6287
    %v6405 = vunpack.c.l.b16 %v6288
    %v6406 = vunpack.c.h.b16 %v6288
    %v6407 = vunpack.c.l.b16 %v6289
    %v6408 = vunpack.c.h.b16 %v6289
    %v6409 = vpack.c.b16 %v6349, %v6345
    %v6410 = vpack.c.b16 %v6350, %v6346
    %v6411 = vpack.c.b16 %v6351, %v6347
    %v6412 = vpack.c.b16 %v6352, %v6348
    %v6413 = vpack.c.b16 %v6357, %v6353
    %v6414 = vpack.c.b16 %v6358, %v6354
    %v6415 = vpack.c.b16 %v6359, %v6355
    %v6416 = vpack.c.b16 %v6360, %v6356
    %v6417 = vpack.c.b16 %v6365, %v6361
    %v6418 = vpack.c.b16 %v6366, %v6362
    %v6419 = vpack.c.b16 %v6367, %v6363
    %v6420 = vpack.c.b16 %v6368, %v6364
    %v6421 = vpack.c.b16 %v6373, %v6369
    %v6422 = vpack.c.b16 %v6374, %v6370
    %v6423 = vpack.c.b16 %v6375, %v6371
    %v6424 = vpack.c.b16 %v6376, %v6372
    %v6425 = vpack.c.b16 %v6381, %v6377
    %v6426 = vpack.c.b16 %v6382, %v6378
    %v6427 = vpack.c.b16 %v6383, %v6379
    %v6428 = vpack.c.b16 %v6384, %v6380
    %v6429 = vpack.c.b16 %v6389, %v6385
    %v6430 = vpack.c.b16 %v6390, %v6386
    %v6431 = vpack.c.b16 %v6391, %v6387
    %v6432 = vpack.c.b16 %v6392, %v6388
    %v6433 = vpack.c.b16 %v6397, %v6393
    %v6434 = vpack.c.b16 %v6398, %v6394
    %v6435 = vpack.c.b16 %v6399, %v6395
    %v6436 = vpack.c.b16 %v6400, %v6396
    %v6437 = vpack.c.b16 %v6405, %v6401
    %v6438 = vpack.c.b16 %v6406, %v6402
    %v6439 = vpack.c.b16 %v6407, %v6403
    %v6440 = vpack.c.b16 %v6408, %v6404
    %6473 = vmatprep.subr.bf16.mxu0 %v6438
    %6474 = vmatpush1.bf16.msra.mxu0 %v6437
    %6475 = vmatprep.subr.bf16.mxu0 %v6434
    %6476 = vmatpush1.bf16.msra.mxu0 %v6433
    %6477 = vmatprep.subr.bf16.mxu0 %v6430
    %6478 = vmatpush1.bf16.msra.mxu0 %v6429
    %6479 = vmatprep.subr.bf16.mxu0 %v6426
    %6480 = vmatpush1.bf16.msra.mxu0 %v6425
    %6481 = vmatprep.subr.bf16.mxu0 %v6422
    %6482 = vmatpush1.bf16.msra.mxu0 %v6421
    %6483 = vmatprep.subr.bf16.mxu0 %v6418
    %6484 = vmatpush1.bf16.msra.mxu0 %v6417
    %6485 = vmatprep.subr.bf16.mxu0 %v6414
    %6486 = vmatpush1.bf16.msra.mxu0 %v6413
    %6487 = vmatprep.subr.bf16.mxu0 %v6410
    %6488 = vmatpush1.bf16.msra.mxu0 %v6409
    %6489 = vmatprep.subr.bf16.mxu0 0
    %6490 = vmatpush2.bf16.msra.mxu0 0
    %6491 = vmatprep.subr.bf16.mxu0 0
    %6492 = vmatpush2.bf16.msra.mxu0 0
    %6493 = vmatprep.subr.bf16.mxu0 0
    %6494 = vmatpush2.bf16.msra.mxu0 0
    %6495 = vmatprep.subr.bf16.mxu0 0
    %6496 = vmatpush2.bf16.msra.mxu0 0
    %6497 = vmatprep.subr.bf16.mxu0 0
    %6498 = vmatpush2.bf16.msra.mxu0 0
    %6499 = vmatprep.subr.bf16.mxu0 0
    %6500 = vmatpush2.bf16.msra.mxu0 0
    %6501 = vmatprep.subr.bf16.mxu0 0
    %6502 = vmatpush2.bf16.msra.mxu0 0
    %6503 = vmatprep.subr.bf16.mxu0 0
    %6504 = vmatpush2.bf16.msra.mxu0 0
    %6505 = vmatprep.mubr.bf16.mxu0 0
    %6506 = vmatmul.mubr.bf16.gmra.mxu0 %v6290
    %v6507 = vpop.f32.mrf.mxu0
    %v6508 = vadd.f32 %v6296, %v6507
    %v6509 = vpop.f32.mrf.mxu0
    %v6510 = vadd.f32 %v6300, %v6509
    %v6511 = vpop.f32.mrf.mxu0
    %v6512 = vpop.f32.mrf.mxu0
    %6513 = vdwg.mxu0
    %6514 = vmatprep.subr.bf16.mxu0 %v6440
    %6515 = vmatpush1.bf16.msra.mxu0 %v6439
    %6516 = vmatprep.subr.bf16.mxu0 %v6436
    %6517 = vmatpush1.bf16.msra.mxu0 %v6435
    %6518 = vmatprep.subr.bf16.mxu0 %v6432
    %6519 = vmatpush1.bf16.msra.mxu0 %v6431
    %6520 = vmatprep.subr.bf16.mxu0 %v6428
    %6521 = vmatpush1.bf16.msra.mxu0 %v6427
    %6522 = vmatprep.subr.bf16.mxu0 %v6424
    %6523 = vmatpush1.bf16.msra.mxu0 %v6423
    %6524 = vmatprep.subr.bf16.mxu0 %v6420
    %6525 = vmatpush1.bf16.msra.mxu0 %v6419
    %6526 = vmatprep.subr.bf16.mxu0 %v6416
    %6527 = vmatpush1.bf16.msra.mxu0 %v6415
    %6528 = vmatprep.subr.bf16.mxu0 %v6412
    %6529 = vmatpush1.bf16.msra.mxu0 %v6411
    %6530 = vmatprep.subr.bf16.mxu0 0
    %6531 = vmatpush2.bf16.msra.mxu0 0
    %6532 = vmatprep.subr.bf16.mxu0 0
    %6533 = vmatpush2.bf16.msra.mxu0 0
    %6534 = vmatprep.subr.bf16.mxu0 0
    %6535 = vmatpush2.bf16.msra.mxu0 0
    %6536 = vmatprep.subr.bf16.mxu0 0
    %6537 = vmatpush2.bf16.msra.mxu0 0
    %6538 = vmatprep.subr.bf16.mxu0 0
    %6539 = vmatpush2.bf16.msra.mxu0 0
    %6540 = vmatprep.subr.bf16.mxu0 0
    %6541 = vmatpush2.bf16.msra.mxu0 0
    %6542 = vmatprep.subr.bf16.mxu0 0
    %6543 = vmatpush2.bf16.msra.mxu0 0
    %6544 = vmatprep.subr.bf16.mxu0 0
    %6545 = vmatpush2.bf16.msra.mxu0 0
    %6546 = vmatprep.mubr.bf16.mxu0 0
    %6547 = vmatmul.mubr.bf16.gmra.mxu0 %v6290
    %v6548 = vpop.f32.mrf.mxu0
    %v6549 = vadd.f32 %v6304, %v6548
    %v6550 = vpop.f32.mrf.mxu0
    %v6551 = vadd.f32 %v6308, %v6550
    %v6552 = vpop.f32.mrf.mxu0
    %v6553 = vpop.f32.mrf.mxu0
    %6554 = vdwg.mxu0
    %v6555 = vld [vmem:[#allocation12] sm:$0xff]
    %v6556 = vld [vmem:[#allocation12 + $0x8] sm:$0xff]
    %v6557 = vld [vmem:[#allocation12 + $0x10] sm:$0xff]
    %v6558 = vld [vmem:[#allocation12 + $0x18] sm:$0xff]
    %v6559 = vld [vmem:[#allocation12 + $0x20] sm:$0xff]
    %v6560 = vld [vmem:[#allocation12 + $0x28] sm:$0xff]
    %v6561 = vld [vmem:[#allocation12 + $0x30] sm:$0xff]
    %v6562 = vld [vmem:[#allocation12 + $0x38] sm:$0xff]
    %v6563 = vld [vmem:[#allocation12 + $0x40] sm:$0xff]
    %v6564 = vld [vmem:[#allocation12 + $0x48] sm:$0xff]
    %v6565 = vld [vmem:[#allocation12 + $0x50] sm:$0xff]
    %v6566 = vld [vmem:[#allocation12 + $0x58] sm:$0xff]
    %v6567 = vld [vmem:[#allocation12 + $0x60] sm:$0xff]
    %v6568 = vld [vmem:[#allocation12 + $0x68] sm:$0xff]
    %v6569 = vld [vmem:[#allocation12 + $0x70] sm:$0xff]
    %v6570 = vld [vmem:[#allocation12 + $0x78] sm:$0xff]
    %v6571 = vld [vmem:[#allocation12 + $0x80] sm:$0xff]
    %v6572 = vld [vmem:[#allocation12 + $0x88] sm:$0xff]
    %v6573 = vld [vmem:[#allocation12 + $0x90] sm:$0xff]
    %v6574 = vld [vmem:[#allocation12 + $0x98] sm:$0xff]
    %v6575 = vld [vmem:[#allocation12 + $0xa0] sm:$0xff]
    %v6576 = vld [vmem:[#allocation12 + $0xa8] sm:$0xff]
    %v6577 = vld [vmem:[#allocation12 + $0xb0] sm:$0xff]
    %v6578 = vld [vmem:[#allocation12 + $0xb8] sm:$0xff]
    %v6579 = vld [vmem:[#allocation12 + $0xc0] sm:$0xff]
    %v6580 = vld [vmem:[#allocation12 + $0xc8] sm:$0xff]
    %v6581 = vld [vmem:[#allocation12 + $0xd0] sm:$0xff]
    %v6582 = vld [vmem:[#allocation12 + $0xd8] sm:$0xff]
    %v6583 = vld [vmem:[#allocation12 + $0xe0] sm:$0xff]
    %v6584 = vld [vmem:[#allocation12 + $0xe8] sm:$0xff]
    %v6585 = vld [vmem:[#allocation12 + $0xf0] sm:$0xff]
    %v6586 = vld [vmem:[#allocation12 + $0xf8] sm:$0xff]
    %v6619 = vunpack.c.l.b16 %v6555
    %v6620 = vunpack.c.h.b16 %v6555
    %v6621 = vunpack.c.l.b16 %v6556
    %v6622 = vunpack.c.h.b16 %v6556
    %v6623 = vunpack.c.l.b16 %v6557
    %v6624 = vunpack.c.h.b16 %v6557
    %v6625 = vunpack.c.l.b16 %v6558
    %v6626 = vunpack.c.h.b16 %v6558
    %v6627 = vunpack.c.l.b16 %v6559
    %v6628 = vunpack.c.h.b16 %v6559
    %v6629 = vunpack.c.l.b16 %v6560
    %v6630 = vunpack.c.h.b16 %v6560
    %v6631 = vunpack.c.l.b16 %v6561
    %v6632 = vunpack.c.h.b16 %v6561
    %v6633 = vunpack.c.l.b16 %v6562
    %v6634 = vunpack.c.h.b16 %v6562
    %v6635 = vunpack.c.l.b16 %v6563
    %v6636 = vunpack.c.h.b16 %v6563
    %v6637 = vunpack.c.l.b16 %v6564
    %v6638 = vunpack.c.h.b16 %v6564
    %v6639 = vunpack.c.l.b16 %v6565
    %v6640 = vunpack.c.h.b16 %v6565
    %v6641 = vunpack.c.l.b16 %v6566
    %v6642 = vunpack.c.h.b16 %v6566
    %v6643 = vunpack.c.l.b16 %v6567
    %v6644 = vunpack.c.h.b16 %v6567
    %v6645 = vunpack.c.l.b16 %v6568
    %v6646 = vunpack.c.h.b16 %v6568
    %v6647 = vunpack.c.l.b16 %v6569
    %v6648 = vunpack.c.h.b16 %v6569
    %v6649 = vunpack.c.l.b16 %v6570
    %v6650 = vunpack.c.h.b16 %v6570
    %v6651 = vunpack.c.l.b16 %v6571
    %v6652 = vunpack.c.h.b16 %v6571
    %v6653 = vunpack.c.l.b16 %v6572
    %v6654 = vunpack.c.h.b16 %v6572
    %v6655 = vunpack.c.l.b16 %v6573
    %v6656 = vunpack.c.h.b16 %v6573
    %v6657 = vunpack.c.l.b16 %v6574
    %v6658 = vunpack.c.h.b16 %v6574
    %v6659 = vunpack.c.l.b16 %v6575
    %v6660 = vunpack.c.h.b16 %v6575
    %v6661 = vunpack.c.l.b16 %v6576
    %v6662 = vunpack.c.h.b16 %v6576
    %v6663 = vunpack.c.l.b16 %v6577
    %v6664 = vunpack.c.h.b16 %v6577
    %v6665 = vunpack.c.l.b16 %v6578
    %v6666 = vunpack.c.h.b16 %v6578
    %v6667 = vunpack.c.l.b16 %v6579
    %v6668 = vunpack.c.h.b16 %v6579
    %v6669 = vunpack.c.l.b16 %v6580
    %v6670 = vunpack.c.h.b16 %v6580
    %v6671 = vunpack.c.l.b16 %v6581
    %v6672 = vunpack.c.h.b16 %v6581
    %v6673 = vunpack.c.l.b16 %v6582
    %v6674 = vunpack.c.h.b16 %v6582
    %v6675 = vunpack.c.l.b16 %v6583
    %v6676 = vunpack.c.h.b16 %v6583
    %v6677 = vunpack.c.l.b16 %v6584
    %v6678 = vunpack.c.h.b16 %v6584
    %v6679 = vunpack.c.l.b16 %v6585
    %v6680 = vunpack.c.h.b16 %v6585
    %v6681 = vunpack.c.l.b16 %v6586
    %v6682 = vunpack.c.h.b16 %v6586
    %v6683 = vpack.c.b16 %v6623, %v6619
    %v6684 = vpack.c.b16 %v6624, %v6620
    %v6685 = vpack.c.b16 %v6625, %v6621
    %v6686 = vpack.c.b16 %v6626, %v6622
    %v6687 = vpack.c.b16 %v6631, %v6627
    %v6688 = vpack.c.b16 %v6632, %v6628
    %v6689 = vpack.c.b16 %v6633, %v6629
    %v6690 = vpack.c.b16 %v6634, %v6630
    %v6691 = vpack.c.b16 %v6639, %v6635
    %v6692 = vpack.c.b16 %v6640, %v6636
    %v6693 = vpack.c.b16 %v6641, %v6637
    %v6694 = vpack.c.b16 %v6642, %v6638
    %v6695 = vpack.c.b16 %v6647, %v6643
    %v6696 = vpack.c.b16 %v6648, %v6644
    %v6697 = vpack.c.b16 %v6649, %v6645
    %v6698 = vpack.c.b16 %v6650, %v6646
    %v6699 = vpack.c.b16 %v6655, %v6651
    %v6700 = vpack.c.b16 %v6656, %v6652
    %v6701 = vpack.c.b16 %v6657, %v6653
    %v6702 = vpack.c.b16 %v6658, %v6654
    %v6703 = vpack.c.b16 %v6663, %v6659
    %v6704 = vpack.c.b16 %v6664, %v6660
    %v6705 = vpack.c.b16 %v6665, %v6661
    %v6706 = vpack.c.b16 %v6666, %v6662
    %v6707 = vpack.c.b16 %v6671, %v6667
    %v6708 = vpack.c.b16 %v6672, %v6668
    %v6709 = vpack.c.b16 %v6673, %v6669
    %v6710 = vpack.c.b16 %v6674, %v6670
    %v6711 = vpack.c.b16 %v6679, %v6675
    %v6712 = vpack.c.b16 %v6680, %v6676
    %v6713 = vpack.c.b16 %v6681, %v6677
    %v6714 = vpack.c.b16 %v6682, %v6678
    %6747 = vmatprep.subr.bf16.mxu0 %v6712
    %6748 = vmatpush1.bf16.msra.mxu0 %v6711
    %6749 = vmatprep.subr.bf16.mxu0 %v6708
    %6750 = vmatpush1.bf16.msra.mxu0 %v6707
    %6751 = vmatprep.subr.bf16.mxu0 %v6704
    %6752 = vmatpush1.bf16.msra.mxu0 %v6703
    %6753 = vmatprep.subr.bf16.mxu0 %v6700
    %6754 = vmatpush1.bf16.msra.mxu0 %v6699
    %6755 = vmatprep.subr.bf16.mxu0 %v6696
    %6756 = vmatpush1.bf16.msra.mxu0 %v6695
    %6757 = vmatprep.subr.bf16.mxu0 %v6692
    %6758 = vmatpush1.bf16.msra.mxu0 %v6691
    %6759 = vmatprep.subr.bf16.mxu0 %v6688
    %6760 = vmatpush1.bf16.msra.mxu0 %v6687
    %6761 = vmatprep.subr.bf16.mxu0 %v6684
    %6762 = vmatpush1.bf16.msra.mxu0 %v6683
    %6763 = vmatprep.subr.bf16.mxu0 0
    %6764 = vmatpush2.bf16.msra.mxu0 0
    %6765 = vmatprep.subr.bf16.mxu0 0
    %6766 = vmatpush2.bf16.msra.mxu0 0
    %6767 = vmatprep.subr.bf16.mxu0 0
    %6768 = vmatpush2.bf16.msra.mxu0 0
    %6769 = vmatprep.subr.bf16.mxu0 0
    %6770 = vmatpush2.bf16.msra.mxu0 0
    %6771 = vmatprep.subr.bf16.mxu0 0
    %6772 = vmatpush2.bf16.msra.mxu0 0
    %6773 = vmatprep.subr.bf16.mxu0 0
    %6774 = vmatpush2.bf16.msra.mxu0 0
    %6775 = vmatprep.subr.bf16.mxu0 0
    %6776 = vmatpush2.bf16.msra.mxu0 0
    %6777 = vmatprep.subr.bf16.mxu0 0
    %6778 = vmatpush2.bf16.msra.mxu0 0
    %6779 = vmatprep.mubr.bf16.mxu0 0
    %6780 = vmatmul.mubr.bf16.gmra.mxu0 %v5946
    %v6781 = vpop.f32.mrf.mxu0
    %v6782 = vadd.f32 0.0, %v6781
    %v6783 = vpop.f32.mrf.mxu0
    %v6784 = vadd.f32 0.0, %v6783
    %v6785 = vpop.f32.mrf.mxu0
    %v6786 = vpop.f32.mrf.mxu0
    %6787 = vdwg.mxu0
    %6788 = vmatprep.subr.bf16.mxu0 %v6714
    %6789 = vmatpush1.bf16.msra.mxu0 %v6713
    %6790 = vmatprep.subr.bf16.mxu0 %v6710
    %6791 = vmatpush1.bf16.msra.mxu0 %v6709
    %6792 = vmatprep.subr.bf16.mxu0 %v6706
    %6793 = vmatpush1.bf16.msra.mxu0 %v6705
    %6794 = vmatprep.subr.bf16.mxu0 %v6702
    %6795 = vmatpush1.bf16.msra.mxu0 %v6701
    %6796 = vmatprep.subr.bf16.mxu0 %v6698
    %6797 = vmatpush1.bf16.msra.mxu0 %v6697
    %6798 = vmatprep.subr.bf16.mxu0 %v6694
    %6799 = vmatpush1.bf16.msra.mxu0 %v6693
    %6800 = vmatprep.subr.bf16.mxu0 %v6690
    %6801 = vmatpush1.bf16.msra.mxu0 %v6689
    %6802 = vmatprep.subr.bf16.mxu0 %v6686
    %6803 = vmatpush1.bf16.msra.mxu0 %v6685
    %6804 = vmatprep.subr.bf16.mxu0 0
    %6805 = vmatpush2.bf16.msra.mxu0 0
    %6806 = vmatprep.subr.bf16.mxu0 0
    %6807 = vmatpush2.bf16.msra.mxu0 0
    %6808 = vmatprep.subr.bf16.mxu0 0
    %6809 = vmatpush2.bf16.msra.mxu0 0
    %6810 = vmatprep.subr.bf16.mxu0 0
    %6811 = vmatpush2.bf16.msra.mxu0 0
    %6812 = vmatprep.subr.bf16.mxu0 0
    %6813 = vmatpush2.bf16.msra.mxu0 0
    %6814 = vmatprep.subr.bf16.mxu0 0
    %6815 = vmatpush2.bf16.msra.mxu0 0
    %6816 = vmatprep.subr.bf16.mxu0 0
    %6817 = vmatpush2.bf16.msra.mxu0 0
    %6818 = vmatprep.subr.bf16.mxu0 0
    %6819 = vmatpush2.bf16.msra.mxu0 0
    %6820 = vmatprep.mubr.bf16.mxu0 0
    %6821 = vmatmul.mubr.bf16.gmra.mxu0 %v5946
    %v6822 = vpop.f32.mrf.mxu0
    %v6823 = vadd.f32 0.0, %v6822
    %v6824 = vpop.f32.mrf.mxu0
    %v6825 = vadd.f32 0.0, %v6824
    %v6826 = vpop.f32.mrf.mxu0
    %v6827 = vpop.f32.mrf.mxu0
    %6828 = vdwg.mxu0
    %v6829 = vadd.f32 %v6508, %v6782
    %v6830 = vadd.f32 %v6510, %v6784
    %v6831 = vadd.f32 %v6549, %v6823
    %v6832 = vadd.f32 %v6551, %v6825
    %v6833 = vxor.u32 %v6829, 2147483648
    %v6834 = vmul.f32 %v6833, 1.442695
    %v6835 = vpow.pop %v6834
    %v6836 = vadd.f32 %v6835, 1.0
    %v6837 = vrcp.pop %v6836
    %v6838 = vmul.f32 1.0, %v6837
    %v6839 = vxor.u32 %v6830, 2147483648
    %v6840 = vmul.f32 %v6839, 1.442695
    %v6841 = vpow.pop %v6840
    %v6842 = vadd.f32 %v6841, 1.0
    %v6843 = vrcp.pop %v6842
    %v6844 = vmul.f32 1.0, %v6843
    %v6845 = vtanh.pop %v6831
    %v6846 = vxor.u32 %v6832, 2147483648
    %v6847 = vmul.f32 %v6846, 1.442695
    %v6848 = vpow.pop %v6847
    %v6849 = vadd.f32 %v6848, 1.0
    %v6850 = vrcp.pop %v6849
    %v6851 = vmul.f32 1.0, %v6850
    %v6852 = vmul.f32 %v6844, %v5943
    %v6853 = vmul.f32 %v6838, %v6845
    %v6854 = vadd.f32 %v6852, %v6853
    %v6855 = vtanh.pop %v6854
    %v6856 = vmul.f32 %v6851, %v6855
    %v6857 = vpack.c.bf16 %v6856, %v6856
    %s6858 = scalar_lea.vmem [#allocation6], 24
    %6859 = vst [vmem:[%s6858] sm:$0xf] %v6857
    %s6860 = scalar_lea.vmem [#allocation7], 112
    %v6861 = vld [vmem:[%s6860] sm:$0xff]
    %v6862 = vld [vmem:[%s6860 + $0x8] sm:$0xff]
    %v6863 = vunpack.c.l.bf16 %v6861
    %v6864 = vunpack.c.h.bf16 %v6861
    %v6865 = vunpack.c.l.bf16 %v6862
    %v6866 = vunpack.c.h.bf16 %v6862
    %v6867 = vld [vmem:[#allocation8] sm:$0xff]
    %v6868 = vld [vmem:[#allocation8 + $0x8] sm:$0xff]
    %v6869 = vld [vmem:[#allocation8 + $0x10] sm:$0xff]
    %v6870 = vld [vmem:[#allocation8 + $0x18] sm:$0xff]
    %v6871 = vld [vmem:[#allocation8 + $0x20] sm:$0xff]
    %v6872 = vld [vmem:[#allocation8 + $0x28] sm:$0xff]
    %v6873 = vld [vmem:[#allocation8 + $0x30] sm:$0xff]
    %v6874 = vld [vmem:[#allocation8 + $0x38] sm:$0xff]
    %v6875 = vld [vmem:[#allocation8 + $0x40] sm:$0xff]
    %v6876 = vld [vmem:[#allocation8 + $0x48] sm:$0xff]
    %v6877 = vld [vmem:[#allocation8 + $0x50] sm:$0xff]
    %v6878 = vld [vmem:[#allocation8 + $0x58] sm:$0xff]
    %v6879 = vld [vmem:[#allocation8 + $0x60] sm:$0xff]
    %v6880 = vld [vmem:[#allocation8 + $0x68] sm:$0xff]
    %v6881 = vld [vmem:[#allocation8 + $0x70] sm:$0xff]
    %v6882 = vld [vmem:[#allocation8 + $0x78] sm:$0xff]
    %v6883 = vld [vmem:[#allocation8 + $0x80] sm:$0xff]
    %v6884 = vld [vmem:[#allocation8 + $0x88] sm:$0xff]
    %v6885 = vld [vmem:[#allocation8 + $0x90] sm:$0xff]
    %v6886 = vld [vmem:[#allocation8 + $0x98] sm:$0xff]
    %v6887 = vld [vmem:[#allocation8 + $0xa0] sm:$0xff]
    %v6888 = vld [vmem:[#allocation8 + $0xa8] sm:$0xff]
    %v6889 = vld [vmem:[#allocation8 + $0xb0] sm:$0xff]
    %v6890 = vld [vmem:[#allocation8 + $0xb8] sm:$0xff]
    %v6891 = vld [vmem:[#allocation8 + $0xc0] sm:$0xff]
    %v6892 = vld [vmem:[#allocation8 + $0xc8] sm:$0xff]
    %v6893 = vld [vmem:[#allocation8 + $0xd0] sm:$0xff]
    %v6894 = vld [vmem:[#allocation8 + $0xd8] sm:$0xff]
    %v6895 = vld [vmem:[#allocation8 + $0xe0] sm:$0xff]
    %v6896 = vld [vmem:[#allocation8 + $0xe8] sm:$0xff]
    %v6897 = vld [vmem:[#allocation8 + $0xf0] sm:$0xff]
    %v6898 = vld [vmem:[#allocation8 + $0xf8] sm:$0xff]
    %v6931 = vunpack.c.l.b16 %v6867
    %v6932 = vunpack.c.h.b16 %v6867
    %v6933 = vunpack.c.l.b16 %v6868
    %v6934 = vunpack.c.h.b16 %v6868
    %v6935 = vunpack.c.l.b16 %v6869
    %v6936 = vunpack.c.h.b16 %v6869
    %v6937 = vunpack.c.l.b16 %v6870
    %v6938 = vunpack.c.h.b16 %v6870
    %v6939 = vunpack.c.l.b16 %v6871
    %v6940 = vunpack.c.h.b16 %v6871
    %v6941 = vunpack.c.l.b16 %v6872
    %v6942 = vunpack.c.h.b16 %v6872
    %v6943 = vunpack.c.l.b16 %v6873
    %v6944 = vunpack.c.h.b16 %v6873
    %v6945 = vunpack.c.l.b16 %v6874
    %v6946 = vunpack.c.h.b16 %v6874
    %v6947 = vunpack.c.l.b16 %v6875
    %v6948 = vunpack.c.h.b16 %v6875
    %v6949 = vunpack.c.l.b16 %v6876
    %v6950 = vunpack.c.h.b16 %v6876
    %v6951 = vunpack.c.l.b16 %v6877
    %v6952 = vunpack.c.h.b16 %v6877
    %v6953 = vunpack.c.l.b16 %v6878
    %v6954 = vunpack.c.h.b16 %v6878
    %v6955 = vunpack.c.l.b16 %v6879
    %v6956 = vunpack.c.h.b16 %v6879
    %v6957 = vunpack.c.l.b16 %v6880
    %v6958 = vunpack.c.h.b16 %v6880
    %v6959 = vunpack.c.l.b16 %v6881
    %v6960 = vunpack.c.h.b16 %v6881
    %v6961 = vunpack.c.l.b16 %v6882
    %v6962 = vunpack.c.h.b16 %v6882
    %v6963 = vunpack.c.l.b16 %v6883
    %v6964 = vunpack.c.h.b16 %v6883
    %v6965 = vunpack.c.l.b16 %v6884
    %v6966 = vunpack.c.h.b16 %v6884
    %v6967 = vunpack.c.l.b16 %v6885
    %v6968 = vunpack.c.h.b16 %v6885
    %v6969 = vunpack.c.l.b16 %v6886
    %v6970 = vunpack.c.h.b16 %v6886
    %v6971 = vunpack.c.l.b16 %v6887
    %v6972 = vunpack.c.h.b16 %v6887
    %v6973 = vunpack.c.l.b16 %v6888
    %v6974 = vunpack.c.h.b16 %v6888
    %v6975 = vunpack.c.l.b16 %v6889
    %v6976 = vunpack.c.h.b16 %v6889
    %v6977 = vunpack.c.l.b16 %v6890
    %v6978 = vunpack.c.h.b16 %v6890
    %v6979 = vunpack.c.l.b16 %v6891
    %v6980 = vunpack.c.h.b16 %v6891
    %v6981 = vunpack.c.l.b16 %v6892
    %v6982 = vunpack.c.h.b16 %v6892
    %v6983 = vunpack.c.l.b16 %v6893
    %v6984 = vunpack.c.h.b16 %v6893
    %v6985 = vunpack.c.l.b16 %v6894
    %v6986 = vunpack.c.h.b16 %v6894
    %v6987 = vunpack.c.l.b16 %v6895
    %v6988 = vunpack.c.h.b16 %v6895
    %v6989 = vunpack.c.l.b16 %v6896
    %v6990 = vunpack.c.h.b16 %v6896
    %v6991 = vunpack.c.l.b16 %v6897
    %v6992 = vunpack.c.h.b16 %v6897
    %v6993 = vunpack.c.l.b16 %v6898
    %v6994 = vunpack.c.h.b16 %v6898
    %v6995 = vpack.c.b16 %v6935, %v6931
    %v6996 = vpack.c.b16 %v6936, %v6932
    %v6997 = vpack.c.b16 %v6937, %v6933
    %v6998 = vpack.c.b16 %v6938, %v6934
    %v6999 = vpack.c.b16 %v6943, %v6939
    %v7000 = vpack.c.b16 %v6944, %v6940
    %v7001 = vpack.c.b16 %v6945, %v6941
    %v7002 = vpack.c.b16 %v6946, %v6942
    %v7003 = vpack.c.b16 %v6951, %v6947
    %v7004 = vpack.c.b16 %v6952, %v6948
    %v7005 = vpack.c.b16 %v6953, %v6949
    %v7006 = vpack.c.b16 %v6954, %v6950
    %v7007 = vpack.c.b16 %v6959, %v6955
    %v7008 = vpack.c.b16 %v6960, %v6956
    %v7009 = vpack.c.b16 %v6961, %v6957
    %v7010 = vpack.c.b16 %v6962, %v6958
    %v7011 = vpack.c.b16 %v6967, %v6963
    %v7012 = vpack.c.b16 %v6968, %v6964
    %v7013 = vpack.c.b16 %v6969, %v6965
    %v7014 = vpack.c.b16 %v6970, %v6966
    %v7015 = vpack.c.b16 %v6975, %v6971
    %v7016 = vpack.c.b16 %v6976, %v6972
    %v7017 = vpack.c.b16 %v6977, %v6973
    %v7018 = vpack.c.b16 %v6978, %v6974
    %v7019 = vpack.c.b16 %v6983, %v6979
    %v7020 = vpack.c.b16 %v6984, %v6980
    %v7021 = vpack.c.b16 %v6985, %v6981
    %v7022 = vpack.c.b16 %v6986, %v6982
    %v7023 = vpack.c.b16 %v6991, %v6987
    %v7024 = vpack.c.b16 %v6992, %v6988
    %v7025 = vpack.c.b16 %v6993, %v6989
    %v7026 = vpack.c.b16 %v6994, %v6990
    %7059 = vmatprep.subr.bf16.mxu0 %v7024
    %7060 = vmatpush1.bf16.msra.mxu0 %v7023
    %7061 = vmatprep.subr.bf16.mxu0 %v7020
    %7062 = vmatpush1.bf16.msra.mxu0 %v7019
    %7063 = vmatprep.subr.bf16.mxu0 %v7016
    %7064 = vmatpush1.bf16.msra.mxu0 %v7015
    %7065 = vmatprep.subr.bf16.mxu0 %v7012
    %7066 = vmatpush1.bf16.msra.mxu0 %v7011
    %7067 = vmatprep.subr.bf16.mxu0 %v7008
    %7068 = vmatpush1.bf16.msra.mxu0 %v7007
    %7069 = vmatprep.subr.bf16.mxu0 %v7004
    %7070 = vmatpush1.bf16.msra.mxu0 %v7003
    %7071 = vmatprep.subr.bf16.mxu0 %v7000
    %7072 = vmatpush1.bf16.msra.mxu0 %v6999
    %7073 = vmatprep.subr.bf16.mxu0 %v6996
    %7074 = vmatpush1.bf16.msra.mxu0 %v6995
    %7075 = vmatprep.subr.bf16.mxu0 0
    %7076 = vmatpush2.bf16.msra.mxu0 0
    %7077 = vmatprep.subr.bf16.mxu0 0
    %7078 = vmatpush2.bf16.msra.mxu0 0
    %7079 = vmatprep.subr.bf16.mxu0 0
    %7080 = vmatpush2.bf16.msra.mxu0 0
    %7081 = vmatprep.subr.bf16.mxu0 0
    %7082 = vmatpush2.bf16.msra.mxu0 0
    %7083 = vmatprep.subr.bf16.mxu0 0
    %7084 = vmatpush2.bf16.msra.mxu0 0
    %7085 = vmatprep.subr.bf16.mxu0 0
    %7086 = vmatpush2.bf16.msra.mxu0 0
    %7087 = vmatprep.subr.bf16.mxu0 0
    %7088 = vmatpush2.bf16.msra.mxu0 0
    %7089 = vmatprep.subr.bf16.mxu0 0
    %7090 = vmatpush2.bf16.msra.mxu0 0
    %7091 = vmatprep.mubr.bf16.mxu0 0
    %7092 = vmatmul.mubr.bf16.gmra.mxu0 %v6290
    %v7093 = vpop.f32.mrf.mxu0
    %v7094 = vadd.f32 0.0, %v7093
    %v7095 = vpop.f32.mrf.mxu0
    %v7096 = vadd.f32 0.0, %v7095
    %v7097 = vpop.f32.mrf.mxu0
    %v7098 = vpop.f32.mrf.mxu0
    %7099 = vdwg.mxu0
    %7100 = vmatprep.subr.bf16.mxu0 %v7026
    %7101 = vmatpush1.bf16.msra.mxu0 %v7025
    %7102 = vmatprep.subr.bf16.mxu0 %v7022
    %7103 = vmatpush1.bf16.msra.mxu0 %v7021
    %7104 = vmatprep.subr.bf16.mxu0 %v7018
    %7105 = vmatpush1.bf16.msra.mxu0 %v7017
    %7106 = vmatprep.subr.bf16.mxu0 %v7014
    %7107 = vmatpush1.bf16.msra.mxu0 %v7013
    %7108 = vmatprep.subr.bf16.mxu0 %v7010
    %7109 = vmatpush1.bf16.msra.mxu0 %v7009
    %7110 = vmatprep.subr.bf16.mxu0 %v7006
    %7111 = vmatpush1.bf16.msra.mxu0 %v7005
    %7112 = vmatprep.subr.bf16.mxu0 %v7002
    %7113 = vmatpush1.bf16.msra.mxu0 %v7001
    %7114 = vmatprep.subr.bf16.mxu0 %v6998
    %7115 = vmatpush1.bf16.msra.mxu0 %v6997
    %7116 = vmatprep.subr.bf16.mxu0 0
    %7117 = vmatpush2.bf16.msra.mxu0 0
    %7118 = vmatprep.subr.bf16.mxu0 0
    %7119 = vmatpush2.bf16.msra.mxu0 0
    %7120 = vmatprep.subr.bf16.mxu0 0
    %7121 = vmatpush2.bf16.msra.mxu0 0
    %7122 = vmatprep.subr.bf16.mxu0 0
    %7123 = vmatpush2.bf16.msra.mxu0 0
    %7124 = vmatprep.subr.bf16.mxu0 0
    %7125 = vmatpush2.bf16.msra.mxu0 0
    %7126 = vmatprep.subr.bf16.mxu0 0
    %7127 = vmatpush2.bf16.msra.mxu0 0
    %7128 = vmatprep.subr.bf16.mxu0 0
    %7129 = vmatpush2.bf16.msra.mxu0 0
    %7130 = vmatprep.subr.bf16.mxu0 0
    %7131 = vmatpush2.bf16.msra.mxu0 0
    %7132 = vmatprep.mubr.bf16.mxu0 0
    %7133 = vmatmul.mubr.bf16.gmra.mxu0 %v6290
    %v7134 = vpop.f32.mrf.mxu0
    %v7135 = vadd.f32 0.0, %v7134
    %v7136 = vpop.f32.mrf.mxu0
    %v7137 = vadd.f32 0.0, %v7136
    %v7138 = vpop.f32.mrf.mxu0
    %v7139 = vpop.f32.mrf.mxu0
    %7140 = vdwg.mxu0
    %v7141 = vadd.f32 %v6863, %v7094
    %v7142 = vadd.f32 %v6864, %v7096
    %v7143 = vadd.f32 %v6865, %v7135
    %v7144 = vadd.f32 %v6866, %v7137
    %v7145 = vxor.u32 %v7141, 2147483648
    %v7146 = vmul.f32 %v7145, 1.442695
    %v7147 = vpow.pop %v7146
    %v7148 = vadd.f32 %v7147, 1.0
    %v7149 = vrcp.pop %v7148
    %v7150 = vmul.f32 1.0, %v7149
    %v7151 = vxor.u32 %v7142, 2147483648
    %v7152 = vmul.f32 %v7151, 1.442695
    %v7153 = vpow.pop %v7152
    %v7154 = vadd.f32 %v7153, 1.0
    %v7155 = vrcp.pop %v7154
    %v7156 = vmul.f32 1.0, %v7155
    %v7157 = vtanh.pop %v7143
    %v7158 = vxor.u32 %v7144, 2147483648
    %v7159 = vmul.f32 %v7158, 1.442695
    %v7160 = vpow.pop %v7159
    %v7161 = vadd.f32 %v7160, 1.0
    %v7162 = vrcp.pop %v7161
    %v7163 = vmul.f32 1.0, %v7162
    %v7164 = vmul.f32 %v7156, %v6255
    %v7165 = vmul.f32 %v7150, %v7157
    %v7166 = vadd.f32 %v7164, %v7165
    %v7167 = vtanh.pop %v7166
    %v7168 = vmul.f32 %v7163, %v7167
    %v7169 = vld [vmem:[#allocation10] sm:$0xff]
    %v7170 = vld [vmem:[#allocation10 + $0x8] sm:$0xff]
    %v7171 = vld [vmem:[#allocation10 + $0x10] sm:$0xff]
    %v7172 = vld [vmem:[#allocation10 + $0x18] sm:$0xff]
    %v7173 = vld [vmem:[#allocation10 + $0x20] sm:$0xff]
    %v7174 = vld [vmem:[#allocation10 + $0x28] sm:$0xff]
    %v7175 = vld [vmem:[#allocation10 + $0x30] sm:$0xff]
    %v7176 = vld [vmem:[#allocation10 + $0x38] sm:$0xff]
    %v7177 = vld [vmem:[#allocation10 + $0x40] sm:$0xff]
    %v7178 = vld [vmem:[#allocation10 + $0x48] sm:$0xff]
    %v7179 = vld [vmem:[#allocation10 + $0x50] sm:$0xff]
    %v7180 = vld [vmem:[#allocation10 + $0x58] sm:$0xff]
    %v7181 = vld [vmem:[#allocation10 + $0x60] sm:$0xff]
    %v7182 = vld [vmem:[#allocation10 + $0x68] sm:$0xff]
    %v7183 = vld [vmem:[#allocation10 + $0x70] sm:$0xff]
    %v7184 = vld [vmem:[#allocation10 + $0x78] sm:$0xff]
    %v7185 = vld [vmem:[#allocation10 + $0x80] sm:$0xff]
    %v7186 = vld [vmem:[#allocation10 + $0x88] sm:$0xff]
    %v7187 = vld [vmem:[#allocation10 + $0x90] sm:$0xff]
    %v7188 = vld [vmem:[#allocation10 + $0x98] sm:$0xff]
    %v7189 = vld [vmem:[#allocation10 + $0xa0] sm:$0xff]
    %v7190 = vld [vmem:[#allocation10 + $0xa8] sm:$0xff]
    %v7191 = vld [vmem:[#allocation10 + $0xb0] sm:$0xff]
    %v7192 = vld [vmem:[#allocation10 + $0xb8] sm:$0xff]
    %v7193 = vld [vmem:[#allocation10 + $0xc0] sm:$0xff]
    %v7194 = vld [vmem:[#allocation10 + $0xc8] sm:$0xff]
    %v7195 = vld [vmem:[#allocation10 + $0xd0] sm:$0xff]
    %v7196 = vld [vmem:[#allocation10 + $0xd8] sm:$0xff]
    %v7197 = vld [vmem:[#allocation10 + $0xe0] sm:$0xff]
    %v7198 = vld [vmem:[#allocation10 + $0xe8] sm:$0xff]
    %v7199 = vld [vmem:[#allocation10 + $0xf0] sm:$0xff]
    %v7200 = vld [vmem:[#allocation10 + $0xf8] sm:$0xff]
    %v7201 = vpack.c.bf16 %v7168, %v7168
    %v7202 = vld [vmem:[%s6] sm:$0xf]
    %v7204 = vlaneseq
    %v7205 = vshrl.u32 %v7204, 7
    %v7206 = vsub.s32 0, %v7205
    %v7207 = vrot.slane %v7202, %v7206
    %v7208 = vlaneseq
    %v7209 = vshrl.u32 %v7208, 7
    %v7210 = vsub.s32 1, %v7209
    %v7211 = vrot.slane %v7202, %v7210
    %v7212 = vlaneseq
    %v7213 = vshrl.u32 %v7212, 7
    %v7214 = vsub.s32 2, %v7213
    %v7215 = vrot.slane %v7202, %v7214
    %v7216 = vlaneseq
    %v7217 = vshrl.u32 %v7216, 7
    %v7218 = vsub.s32 3, %v7217
    %v7219 = vrot.slane %v7202, %v7218
    %v7256 = vunpack.c.l.b16 %v7169
    %v7257 = vunpack.c.h.b16 %v7169
    %v7258 = vunpack.c.l.b16 %v7170
    %v7259 = vunpack.c.h.b16 %v7170
    %v7260 = vunpack.c.l.b16 %v7171
    %v7261 = vunpack.c.h.b16 %v7171
    %v7262 = vunpack.c.l.b16 %v7172
    %v7263 = vunpack.c.h.b16 %v7172
    %v7264 = vunpack.c.l.b16 %v7173
    %v7265 = vunpack.c.h.b16 %v7173
    %v7266 = vunpack.c.l.b16 %v7174
    %v7267 = vunpack.c.h.b16 %v7174
    %v7268 = vunpack.c.l.b16 %v7175
    %v7269 = vunpack.c.h.b16 %v7175
    %v7270 = vunpack.c.l.b16 %v7176
    %v7271 = vunpack.c.h.b16 %v7176
    %v7272 = vunpack.c.l.b16 %v7177
    %v7273 = vunpack.c.h.b16 %v7177
    %v7274 = vunpack.c.l.b16 %v7178
    %v7275 = vunpack.c.h.b16 %v7178
    %v7276 = vunpack.c.l.b16 %v7179
    %v7277 = vunpack.c.h.b16 %v7179
    %v7278 = vunpack.c.l.b16 %v7180
    %v7279 = vunpack.c.h.b16 %v7180
    %v7280 = vunpack.c.l.b16 %v7181
    %v7281 = vunpack.c.h.b16 %v7181
    %v7282 = vunpack.c.l.b16 %v7182
    %v7283 = vunpack.c.h.b16 %v7182
    %v7284 = vunpack.c.l.b16 %v7183
    %v7285 = vunpack.c.h.b16 %v7183
    %v7286 = vunpack.c.l.b16 %v7184
    %v7287 = vunpack.c.h.b16 %v7184
    %v7288 = vunpack.c.l.b16 %v7185
    %v7289 = vunpack.c.h.b16 %v7185
    %v7290 = vunpack.c.l.b16 %v7186
    %v7291 = vunpack.c.h.b16 %v7186
    %v7292 = vunpack.c.l.b16 %v7187
    %v7293 = vunpack.c.h.b16 %v7187
    %v7294 = vunpack.c.l.b16 %v7188
    %v7295 = vunpack.c.h.b16 %v7188
    %v7296 = vunpack.c.l.b16 %v7189
    %v7297 = vunpack.c.h.b16 %v7189
    %v7298 = vunpack.c.l.b16 %v7190
    %v7299 = vunpack.c.h.b16 %v7190
    %v7300 = vunpack.c.l.b16 %v7191
    %v7301 = vunpack.c.h.b16 %v7191
    %v7302 = vunpack.c.l.b16 %v7192
    %v7303 = vunpack.c.h.b16 %v7192
    %v7304 = vunpack.c.l.b16 %v7193
    %v7305 = vunpack.c.h.b16 %v7193
    %v7306 = vunpack.c.l.b16 %v7194
    %v7307 = vunpack.c.h.b16 %v7194
    %v7308 = vunpack.c.l.b16 %v7195
    %v7309 = vunpack.c.h.b16 %v7195
    %v7310 = vunpack.c.l.b16 %v7196
    %v7311 = vunpack.c.h.b16 %v7196
    %v7312 = vunpack.c.l.b16 %v7197
    %v7313 = vunpack.c.h.b16 %v7197
    %v7314 = vunpack.c.l.b16 %v7198
    %v7315 = vunpack.c.h.b16 %v7198
    %v7316 = vunpack.c.l.b16 %v7199
    %v7317 = vunpack.c.h.b16 %v7199
    %v7318 = vunpack.c.l.b16 %v7200
    %v7319 = vunpack.c.h.b16 %v7200
    %v7320 = vpack.c.b16 %v7260, %v7256
    %v7321 = vpack.c.b16 %v7261, %v7257
    %v7322 = vpack.c.b16 %v7262, %v7258
    %v7323 = vpack.c.b16 %v7263, %v7259
    %v7324 = vpack.c.b16 %v7268, %v7264
    %v7325 = vpack.c.b16 %v7269, %v7265
    %v7326 = vpack.c.b16 %v7270, %v7266
    %v7327 = vpack.c.b16 %v7271, %v7267
    %v7328 = vpack.c.b16 %v7276, %v7272
    %v7329 = vpack.c.b16 %v7277, %v7273
    %v7330 = vpack.c.b16 %v7278, %v7274
    %v7331 = vpack.c.b16 %v7279, %v7275
    %v7332 = vpack.c.b16 %v7284, %v7280
    %v7333 = vpack.c.b16 %v7285, %v7281
    %v7334 = vpack.c.b16 %v7286, %v7282
    %v7335 = vpack.c.b16 %v7287, %v7283
    %v7336 = vpack.c.b16 %v7292, %v7288
    %v7337 = vpack.c.b16 %v7293, %v7289
    %v7338 = vpack.c.b16 %v7294, %v7290
    %v7339 = vpack.c.b16 %v7295, %v7291
    %v7340 = vpack.c.b16 %v7300, %v7296
    %v7341 = vpack.c.b16 %v7301, %v7297
    %v7342 = vpack.c.b16 %v7302, %v7298
    %v7343 = vpack.c.b16 %v7303, %v7299
    %v7344 = vpack.c.b16 %v7308, %v7304
    %v7345 = vpack.c.b16 %v7309, %v7305
    %v7346 = vpack.c.b16 %v7310, %v7306
    %v7347 = vpack.c.b16 %v7311, %v7307
    %v7348 = vpack.c.b16 %v7316, %v7312
    %v7349 = vpack.c.b16 %v7317, %v7313
    %v7350 = vpack.c.b16 %v7318, %v7314
    %v7351 = vpack.c.b16 %v7319, %v7315
    %7384 = vmatprep.subr.bf16.mxu0 %v7349
    %7385 = vmatpush1.bf16.msra.mxu0 %v7348
    %7386 = vmatprep.subr.bf16.mxu0 %v7345
    %7387 = vmatpush1.bf16.msra.mxu0 %v7344
    %7388 = vmatprep.subr.bf16.mxu0 %v7341
    %7389 = vmatpush1.bf16.msra.mxu0 %v7340
    %7390 = vmatprep.subr.bf16.mxu0 %v7337
    %7391 = vmatpush1.bf16.msra.mxu0 %v7336
    %7392 = vmatprep.subr.bf16.mxu0 %v7333
    %7393 = vmatpush1.bf16.msra.mxu0 %v7332
    %7394 = vmatprep.subr.bf16.mxu0 %v7329
    %7395 = vmatpush1.bf16.msra.mxu0 %v7328
    %7396 = vmatprep.subr.bf16.mxu0 %v7325
    %7397 = vmatpush1.bf16.msra.mxu0 %v7324
    %7398 = vmatprep.subr.bf16.mxu0 %v7321
    %7399 = vmatpush1.bf16.msra.mxu0 %v7320
    %7400 = vmatprep.subr.bf16.mxu0 0
    %7401 = vmatpush2.bf16.msra.mxu0 0
    %7402 = vmatprep.subr.bf16.mxu0 0
    %7403 = vmatpush2.bf16.msra.mxu0 0
    %7404 = vmatprep.subr.bf16.mxu0 0
    %7405 = vmatpush2.bf16.msra.mxu0 0
    %7406 = vmatprep.subr.bf16.mxu0 0
    %7407 = vmatpush2.bf16.msra.mxu0 0
    %7408 = vmatprep.subr.bf16.mxu0 0
    %7409 = vmatpush2.bf16.msra.mxu0 0
    %7410 = vmatprep.subr.bf16.mxu0 0
    %7411 = vmatpush2.bf16.msra.mxu0 0
    %7412 = vmatprep.subr.bf16.mxu0 0
    %7413 = vmatpush2.bf16.msra.mxu0 0
    %7414 = vmatprep.subr.bf16.mxu0 0
    %7415 = vmatpush2.bf16.msra.mxu0 0
    %7416 = vmatprep.mubr.bf16.mxu0 0
    %7417 = vmatmul.mubr.bf16.gmra.mxu0 %v7201
    %v7418 = vpop.f32.mrf.mxu0
    %v7419 = vadd.f32 %v7207, %v7418
    %v7420 = vpop.f32.mrf.mxu0
    %v7421 = vadd.f32 %v7211, %v7420
    %v7422 = vpop.f32.mrf.mxu0
    %v7423 = vpop.f32.mrf.mxu0
    %7424 = vdwg.mxu0
    %7425 = vmatprep.subr.bf16.mxu0 %v7351
    %7426 = vmatpush1.bf16.msra.mxu0 %v7350
    %7427 = vmatprep.subr.bf16.mxu0 %v7347
    %7428 = vmatpush1.bf16.msra.mxu0 %v7346
    %7429 = vmatprep.subr.bf16.mxu0 %v7343
    %7430 = vmatpush1.bf16.msra.mxu0 %v7342
    %7431 = vmatprep.subr.bf16.mxu0 %v7339
    %7432 = vmatpush1.bf16.msra.mxu0 %v7338
    %7433 = vmatprep.subr.bf16.mxu0 %v7335
    %7434 = vmatpush1.bf16.msra.mxu0 %v7334
    %7435 = vmatprep.subr.bf16.mxu0 %v7331
    %7436 = vmatpush1.bf16.msra.mxu0 %v7330
    %7437 = vmatprep.subr.bf16.mxu0 %v7327
    %7438 = vmatpush1.bf16.msra.mxu0 %v7326
    %7439 = vmatprep.subr.bf16.mxu0 %v7323
    %7440 = vmatpush1.bf16.msra.mxu0 %v7322
    %7441 = vmatprep.subr.bf16.mxu0 0
    %7442 = vmatpush2.bf16.msra.mxu0 0
    %7443 = vmatprep.subr.bf16.mxu0 0
    %7444 = vmatpush2.bf16.msra.mxu0 0
    %7445 = vmatprep.subr.bf16.mxu0 0
    %7446 = vmatpush2.bf16.msra.mxu0 0
    %7447 = vmatprep.subr.bf16.mxu0 0
    %7448 = vmatpush2.bf16.msra.mxu0 0
    %7449 = vmatprep.subr.bf16.mxu0 0
    %7450 = vmatpush2.bf16.msra.mxu0 0
    %7451 = vmatprep.subr.bf16.mxu0 0
    %7452 = vmatpush2.bf16.msra.mxu0 0
    %7453 = vmatprep.subr.bf16.mxu0 0
    %7454 = vmatpush2.bf16.msra.mxu0 0
    %7455 = vmatprep.subr.bf16.mxu0 0
    %7456 = vmatpush2.bf16.msra.mxu0 0
    %7457 = vmatprep.mubr.bf16.mxu0 0
    %7458 = vmatmul.mubr.bf16.gmra.mxu0 %v7201
    %v7459 = vpop.f32.mrf.mxu0
    %v7460 = vadd.f32 %v7215, %v7459
    %v7461 = vpop.f32.mrf.mxu0
    %v7462 = vadd.f32 %v7219, %v7461
    %v7463 = vpop.f32.mrf.mxu0
    %v7464 = vpop.f32.mrf.mxu0
    %7465 = vdwg.mxu0
    %v7466 = vld [vmem:[#allocation12] sm:$0xff]
    %v7467 = vld [vmem:[#allocation12 + $0x8] sm:$0xff]
    %v7468 = vld [vmem:[#allocation12 + $0x10] sm:$0xff]
    %v7469 = vld [vmem:[#allocation12 + $0x18] sm:$0xff]
    %v7470 = vld [vmem:[#allocation12 + $0x20] sm:$0xff]
    %v7471 = vld [vmem:[#allocation12 + $0x28] sm:$0xff]
    %v7472 = vld [vmem:[#allocation12 + $0x30] sm:$0xff]
    %v7473 = vld [vmem:[#allocation12 + $0x38] sm:$0xff]
    %v7474 = vld [vmem:[#allocation12 + $0x40] sm:$0xff]
    %v7475 = vld [vmem:[#allocation12 + $0x48] sm:$0xff]
    %v7476 = vld [vmem:[#allocation12 + $0x50] sm:$0xff]
    %v7477 = vld [vmem:[#allocation12 + $0x58] sm:$0xff]
    %v7478 = vld [vmem:[#allocation12 + $0x60] sm:$0xff]
    %v7479 = vld [vmem:[#allocation12 + $0x68] sm:$0xff]
    %v7480 = vld [vmem:[#allocation12 + $0x70] sm:$0xff]
    %v7481 = vld [vmem:[#allocation12 + $0x78] sm:$0xff]
    %v7482 = vld [vmem:[#allocation12 + $0x80] sm:$0xff]
    %v7483 = vld [vmem:[#allocation12 + $0x88] sm:$0xff]
    %v7484 = vld [vmem:[#allocation12 + $0x90] sm:$0xff]
    %v7485 = vld [vmem:[#allocation12 + $0x98] sm:$0xff]
    %v7486 = vld [vmem:[#allocation12 + $0xa0] sm:$0xff]
    %v7487 = vld [vmem:[#allocation12 + $0xa8] sm:$0xff]
    %v7488 = vld [vmem:[#allocation12 + $0xb0] sm:$0xff]
    %v7489 = vld [vmem:[#allocation12 + $0xb8] sm:$0xff]
    %v7490 = vld [vmem:[#allocation12 + $0xc0] sm:$0xff]
    %v7491 = vld [vmem:[#allocation12 + $0xc8] sm:$0xff]
    %v7492 = vld [vmem:[#allocation12 + $0xd0] sm:$0xff]
    %v7493 = vld [vmem:[#allocation12 + $0xd8] sm:$0xff]
    %v7494 = vld [vmem:[#allocation12 + $0xe0] sm:$0xff]
    %v7495 = vld [vmem:[#allocation12 + $0xe8] sm:$0xff]
    %v7496 = vld [vmem:[#allocation12 + $0xf0] sm:$0xff]
    %v7497 = vld [vmem:[#allocation12 + $0xf8] sm:$0xff]
    %v7530 = vunpack.c.l.b16 %v7466
    %v7531 = vunpack.c.h.b16 %v7466
    %v7532 = vunpack.c.l.b16 %v7467
    %v7533 = vunpack.c.h.b16 %v7467
    %v7534 = vunpack.c.l.b16 %v7468
    %v7535 = vunpack.c.h.b16 %v7468
    %v7536 = vunpack.c.l.b16 %v7469
    %v7537 = vunpack.c.h.b16 %v7469
    %v7538 = vunpack.c.l.b16 %v7470
    %v7539 = vunpack.c.h.b16 %v7470
    %v7540 = vunpack.c.l.b16 %v7471
    %v7541 = vunpack.c.h.b16 %v7471
    %v7542 = vunpack.c.l.b16 %v7472
    %v7543 = vunpack.c.h.b16 %v7472
    %v7544 = vunpack.c.l.b16 %v7473
    %v7545 = vunpack.c.h.b16 %v7473
    %v7546 = vunpack.c.l.b16 %v7474
    %v7547 = vunpack.c.h.b16 %v7474
    %v7548 = vunpack.c.l.b16 %v7475
    %v7549 = vunpack.c.h.b16 %v7475
    %v7550 = vunpack.c.l.b16 %v7476
    %v7551 = vunpack.c.h.b16 %v7476
    %v7552 = vunpack.c.l.b16 %v7477
    %v7553 = vunpack.c.h.b16 %v7477
    %v7554 = vunpack.c.l.b16 %v7478
    %v7555 = vunpack.c.h.b16 %v7478
    %v7556 = vunpack.c.l.b16 %v7479
    %v7557 = vunpack.c.h.b16 %v7479
    %v7558 = vunpack.c.l.b16 %v7480
    %v7559 = vunpack.c.h.b16 %v7480
    %v7560 = vunpack.c.l.b16 %v7481
    %v7561 = vunpack.c.h.b16 %v7481
    %v7562 = vunpack.c.l.b16 %v7482
    %v7563 = vunpack.c.h.b16 %v7482
    %v7564 = vunpack.c.l.b16 %v7483
    %v7565 = vunpack.c.h.b16 %v7483
    %v7566 = vunpack.c.l.b16 %v7484
    %v7567 = vunpack.c.h.b16 %v7484
    %v7568 = vunpack.c.l.b16 %v7485
    %v7569 = vunpack.c.h.b16 %v7485
    %v7570 = vunpack.c.l.b16 %v7486
    %v7571 = vunpack.c.h.b16 %v7486
    %v7572 = vunpack.c.l.b16 %v7487
    %v7573 = vunpack.c.h.b16 %v7487
    %v7574 = vunpack.c.l.b16 %v7488
    %v7575 = vunpack.c.h.b16 %v7488
    %v7576 = vunpack.c.l.b16 %v7489
    %v7577 = vunpack.c.h.b16 %v7489
    %v7578 = vunpack.c.l.b16 %v7490
    %v7579 = vunpack.c.h.b16 %v7490
    %v7580 = vunpack.c.l.b16 %v7491
    %v7581 = vunpack.c.h.b16 %v7491
    %v7582 = vunpack.c.l.b16 %v7492
    %v7583 = vunpack.c.h.b16 %v7492
    %v7584 = vunpack.c.l.b16 %v7493
    %v7585 = vunpack.c.h.b16 %v7493
    %v7586 = vunpack.c.l.b16 %v7494
    %v7587 = vunpack.c.h.b16 %v7494
    %v7588 = vunpack.c.l.b16 %v7495
    %v7589 = vunpack.c.h.b16 %v7495
    %v7590 = vunpack.c.l.b16 %v7496
    %v7591 = vunpack.c.h.b16 %v7496
    %v7592 = vunpack.c.l.b16 %v7497
    %v7593 = vunpack.c.h.b16 %v7497
    %v7594 = vpack.c.b16 %v7534, %v7530
    %v7595 = vpack.c.b16 %v7535, %v7531
    %v7596 = vpack.c.b16 %v7536, %v7532
    %v7597 = vpack.c.b16 %v7537, %v7533
    %v7598 = vpack.c.b16 %v7542, %v7538
    %v7599 = vpack.c.b16 %v7543, %v7539
    %v7600 = vpack.c.b16 %v7544, %v7540
    %v7601 = vpack.c.b16 %v7545, %v7541
    %v7602 = vpack.c.b16 %v7550, %v7546
    %v7603 = vpack.c.b16 %v7551, %v7547
    %v7604 = vpack.c.b16 %v7552, %v7548
    %v7605 = vpack.c.b16 %v7553, %v7549
    %v7606 = vpack.c.b16 %v7558, %v7554
    %v7607 = vpack.c.b16 %v7559, %v7555
    %v7608 = vpack.c.b16 %v7560, %v7556
    %v7609 = vpack.c.b16 %v7561, %v7557
    %v7610 = vpack.c.b16 %v7566, %v7562
    %v7611 = vpack.c.b16 %v7567, %v7563
    %v7612 = vpack.c.b16 %v7568, %v7564
    %v7613 = vpack.c.b16 %v7569, %v7565
    %v7614 = vpack.c.b16 %v7574, %v7570
    %v7615 = vpack.c.b16 %v7575, %v7571
    %v7616 = vpack.c.b16 %v7576, %v7572
    %v7617 = vpack.c.b16 %v7577, %v7573
    %v7618 = vpack.c.b16 %v7582, %v7578
    %v7619 = vpack.c.b16 %v7583, %v7579
    %v7620 = vpack.c.b16 %v7584, %v7580
    %v7621 = vpack.c.b16 %v7585, %v7581
    %v7622 = vpack.c.b16 %v7590, %v7586
    %v7623 = vpack.c.b16 %v7591, %v7587
    %v7624 = vpack.c.b16 %v7592, %v7588
    %v7625 = vpack.c.b16 %v7593, %v7589
    %7658 = vmatprep.subr.bf16.mxu0 %v7623
    %7659 = vmatpush1.bf16.msra.mxu0 %v7622
    %7660 = vmatprep.subr.bf16.mxu0 %v7619
    %7661 = vmatpush1.bf16.msra.mxu0 %v7618
    %7662 = vmatprep.subr.bf16.mxu0 %v7615
    %7663 = vmatpush1.bf16.msra.mxu0 %v7614
    %7664 = vmatprep.subr.bf16.mxu0 %v7611
    %7665 = vmatpush1.bf16.msra.mxu0 %v7610
    %7666 = vmatprep.subr.bf16.mxu0 %v7607
    %7667 = vmatpush1.bf16.msra.mxu0 %v7606
    %7668 = vmatprep.subr.bf16.mxu0 %v7603
    %7669 = vmatpush1.bf16.msra.mxu0 %v7602
    %7670 = vmatprep.subr.bf16.mxu0 %v7599
    %7671 = vmatpush1.bf16.msra.mxu0 %v7598
    %7672 = vmatprep.subr.bf16.mxu0 %v7595
    %7673 = vmatpush1.bf16.msra.mxu0 %v7594
    %7674 = vmatprep.subr.bf16.mxu0 0
    %7675 = vmatpush2.bf16.msra.mxu0 0
    %7676 = vmatprep.subr.bf16.mxu0 0
    %7677 = vmatpush2.bf16.msra.mxu0 0
    %7678 = vmatprep.subr.bf16.mxu0 0
    %7679 = vmatpush2.bf16.msra.mxu0 0
    %7680 = vmatprep.subr.bf16.mxu0 0
    %7681 = vmatpush2.bf16.msra.mxu0 0
    %7682 = vmatprep.subr.bf16.mxu0 0
    %7683 = vmatpush2.bf16.msra.mxu0 0
    %7684 = vmatprep.subr.bf16.mxu0 0
    %7685 = vmatpush2.bf16.msra.mxu0 0
    %7686 = vmatprep.subr.bf16.mxu0 0
    %7687 = vmatpush2.bf16.msra.mxu0 0
    %7688 = vmatprep.subr.bf16.mxu0 0
    %7689 = vmatpush2.bf16.msra.mxu0 0
    %7690 = vmatprep.mubr.bf16.mxu0 0
    %7691 = vmatmul.mubr.bf16.gmra.mxu0 %v6857
    %v7692 = vpop.f32.mrf.mxu0
    %v7693 = vadd.f32 0.0, %v7692
    %v7694 = vpop.f32.mrf.mxu0
    %v7695 = vadd.f32 0.0, %v7694
    %v7696 = vpop.f32.mrf.mxu0
    %v7697 = vpop.f32.mrf.mxu0
    %7698 = vdwg.mxu0
    %7699 = vmatprep.subr.bf16.mxu0 %v7625
    %7700 = vmatpush1.bf16.msra.mxu0 %v7624
    %7701 = vmatprep.subr.bf16.mxu0 %v7621
    %7702 = vmatpush1.bf16.msra.mxu0 %v7620
    %7703 = vmatprep.subr.bf16.mxu0 %v7617
    %7704 = vmatpush1.bf16.msra.mxu0 %v7616
    %7705 = vmatprep.subr.bf16.mxu0 %v7613
    %7706 = vmatpush1.bf16.msra.mxu0 %v7612
    %7707 = vmatprep.subr.bf16.mxu0 %v7609
    %7708 = vmatpush1.bf16.msra.mxu0 %v7608
    %7709 = vmatprep.subr.bf16.mxu0 %v7605
    %7710 = vmatpush1.bf16.msra.mxu0 %v7604
    %7711 = vmatprep.subr.bf16.mxu0 %v7601
    %7712 = vmatpush1.bf16.msra.mxu0 %v7600
    %7713 = vmatprep.subr.bf16.mxu0 %v7597
    %7714 = vmatpush1.bf16.msra.mxu0 %v7596
    %7715 = vmatprep.subr.bf16.mxu0 0
    %7716 = vmatpush2.bf16.msra.mxu0 0
    %7717 = vmatprep.subr.bf16.mxu0 0
    %7718 = vmatpush2.bf16.msra.mxu0 0
    %7719 = vmatprep.subr.bf16.mxu0 0
    %7720 = vmatpush2.bf16.msra.mxu0 0
    %7721 = vmatprep.subr.bf16.mxu0 0
    %7722 = vmatpush2.bf16.msra.mxu0 0
    %7723 = vmatprep.subr.bf16.mxu0 0
    %7724 = vmatpush2.bf16.msra.mxu0 0
    %7725 = vmatprep.subr.bf16.mxu0 0
    %7726 = vmatpush2.bf16.msra.mxu0 0
    %7727 = vmatprep.subr.bf16.mxu0 0
    %7728 = vmatpush2.bf16.msra.mxu0 0
    %7729 = vmatprep.subr.bf16.mxu0 0
    %7730 = vmatpush2.bf16.msra.mxu0 0
    %7731 = vmatprep.mubr.bf16.mxu0 0
    %7732 = vmatmul.mubr.bf16.gmra.mxu0 %v6857
    %v7733 = vpop.f32.mrf.mxu0
    %v7734 = vadd.f32 0.0, %v7733
    %v7735 = vpop.f32.mrf.mxu0
    %v7736 = vadd.f32 0.0, %v7735
    %v7737 = vpop.f32.mrf.mxu0
    %v7738 = vpop.f32.mrf.mxu0
    %7739 = vdwg.mxu0
    %v7740 = vadd.f32 %v7419, %v7693
    %v7741 = vadd.f32 %v7421, %v7695
    %v7742 = vadd.f32 %v7460, %v7734
    %v7743 = vadd.f32 %v7462, %v7736
    %v7744 = vxor.u32 %v7740, 2147483648
    %v7745 = vmul.f32 %v7744, 1.442695
    %v7746 = vpow.pop %v7745
    %v7747 = vadd.f32 %v7746, 1.0
    %v7748 = vrcp.pop %v7747
    %v7749 = vmul.f32 1.0, %v7748
    %v7750 = vxor.u32 %v7741, 2147483648
    %v7751 = vmul.f32 %v7750, 1.442695
    %v7752 = vpow.pop %v7751
    %v7753 = vadd.f32 %v7752, 1.0
    %v7754 = vrcp.pop %v7753
    %v7755 = vmul.f32 1.0, %v7754
    %v7756 = vtanh.pop %v7742
    %v7757 = vxor.u32 %v7743, 2147483648
    %v7758 = vmul.f32 %v7757, 1.442695
    %v7759 = vpow.pop %v7758
    %v7760 = vadd.f32 %v7759, 1.0
    %v7761 = vrcp.pop %v7760
    %v7762 = vmul.f32 1.0, %v7761
    %v7763 = vmul.f32 %v7755, %v6854
    %v7764 = vmul.f32 %v7749, %v7756
    %v7765 = vadd.f32 %v7763, %v7764
    %v7766 = vtanh.pop %v7765
    %v7767 = vmul.f32 %v7762, %v7766
    %v7768 = vpack.c.bf16 %v7767, %v7767
    %s7769 = scalar_lea.vmem [#allocation6], 28
    %7770 = vst [vmem:[%s7769] sm:$0xf] %v7768
    %7771 = vst [vmem:[#allocation2] sm:$0xff] %v7168
    %7772 = vst [vmem:[#allocation3] sm:$0xff] %v7166
    %7773 = vst [vmem:[#allocation4] sm:$0xff] %v7767
    %7774 = vst [vmem:[#allocation5] sm:$0xff] %v7765
    %v7775 = vld [vmem:[#allocation6] sm:$0xf]
    %v7776 = vld [vmem:[#allocation6 + $0x4] sm:$0xf]
    %v7777 = vld [vmem:[#allocation6 + $0x8] sm:$0xf]
    %v7778 = vld [vmem:[#allocation6 + $0xc] sm:$0xf]
    %v7779 = vld [vmem:[#allocation6 + $0x10] sm:$0xf]
    %v7780 = vld [vmem:[#allocation6 + $0x14] sm:$0xf]
    %v7781 = vld [vmem:[#allocation6 + $0x18] sm:$0xf]
    %v7782 = vld [vmem:[#allocation6 + $0x1c] sm:$0xf]
    %v7783 = vld [vmem:[#allocation13] sm:$0xf]
    %v7784 = vld [vmem:[#allocation13 + $0x4] sm:$0xf]
    %v7785 = vld [vmem:[#allocation13 + $0x8] sm:$0xf]
    %v7786 = vld [vmem:[#allocation13 + $0xc] sm:$0xf]
    %v7787 = vld [vmem:[#allocation13 + $0x10] sm:$0xf]
    %v7788 = vld [vmem:[#allocation13 + $0x14] sm:$0xf]
    %v7789 = vld [vmem:[#allocation13 + $0x18] sm:$0xf]
    %v7790 = vld [vmem:[#allocation13 + $0x1c] sm:$0xf]
    %v7791 = vld [vmem:[#allocation13 + $0x20] sm:$0xf]
    %v7792 = vld [vmem:[#allocation13 + $0x24] sm:$0xf]
    %v7793 = vld [vmem:[#allocation13 + $0x28] sm:$0xf]
    %v7794 = vld [vmem:[#allocation13 + $0x2c] sm:$0xf]
    %v7795 = vld [vmem:[#allocation13 + $0x30] sm:$0xf]
    %v7796 = vld [vmem:[#allocation13 + $0x34] sm:$0xf]
    %v7797 = vld [vmem:[#allocation13 + $0x38] sm:$0xf]
    %v7798 = vld [vmem:[#allocation13 + $0x3c] sm:$0xf]
    %v7799 = vld [vmem:[%s8] sm:$0x1]
    %v7801 = vlaneseq
    %v7802 = vshrl.u32 %v7801, 7
    %v7803 = vsub.s32 0, %v7802
    %v7804 = vrot.slane %v7799, %v7803
    %v7814 = vunpack.c.l.b16 %v7775
    %v7815 = vunpack.c.l.b16 %v7776
    %v7816 = vunpack.c.l.b16 %v7777
    %v7817 = vunpack.c.l.b16 %v7778
    %v7818 = vunpack.c.l.b16 %v7779
    %v7819 = vunpack.c.l.b16 %v7780
    %v7820 = vunpack.c.l.b16 %v7781
    %v7821 = vunpack.c.l.b16 %v7782
    %v7822 = vpack.c.b16 %v7815, %v7814
    %v7823 = vpack.c.b16 %v7817, %v7816
    %v7824 = vpack.c.b16 %v7819, %v7818
    %v7825 = vpack.c.b16 %v7821, %v7820
    %v7846 = vunpack.c.l.b16 %v7783
    %v7847 = vunpack.c.l.b16 %v7784
    %v7848 = vunpack.c.l.b16 %v7785
    %v7849 = vunpack.c.l.b16 %v7786
    %v7850 = vunpack.c.l.b16 %v7787
    %v7851 = vunpack.c.l.b16 %v7788
    %v7852 = vunpack.c.l.b16 %v7789
    %v7853 = vunpack.c.l.b16 %v7790
    %v7854 = vunpack.c.l.b16 %v7791
    %v7855 = vunpack.c.l.b16 %v7792
    %v7856 = vunpack.c.l.b16 %v7793
    %v7857 = vunpack.c.l.b16 %v7794
    %v7858 = vunpack.c.l.b16 %v7795
    %v7859 = vunpack.c.l.b16 %v7796
    %v7860 = vunpack.c.l.b16 %v7797
    %v7861 = vunpack.c.l.b16 %v7798
    %v7862 = vpack.c.b16 %v7847, %v7846
    %v7863 = vpack.c.b16 %v7849, %v7848
    %v7864 = vpack.c.b16 %v7851, %v7850
    %v7865 = vpack.c.b16 %v7853, %v7852
    %v7866 = vpack.c.b16 %v7855, %v7854
    %v7867 = vpack.c.b16 %v7857, %v7856
    %v7868 = vpack.c.b16 %v7859, %v7858
    %v7869 = vpack.c.b16 %v7861, %v7860
    %7878 = vmatprep.subr.bf16.mxu0 0
    %7879 = vmatpush1.bf16.msra.mxu0 %v7869
    %7880 = vmatprep.subr.bf16.mxu0 0
    %7881 = vmatpush1.bf16.msra.mxu0 %v7868
    %7882 = vmatprep.subr.bf16.mxu0 0
    %7883 = vmatpush1.bf16.msra.mxu0 %v7867
    %7884 = vmatprep.subr.bf16.mxu0 0
    %7885 = vmatpush1.bf16.msra.mxu0 %v7866
    %7886 = vmatprep.subr.bf16.mxu0 0
    %7887 = vmatpush1.bf16.msra.mxu0 %v7865
    %7888 = vmatprep.subr.bf16.mxu0 0
    %7889 = vmatpush1.bf16.msra.mxu0 %v7864
    %7890 = vmatprep.subr.bf16.mxu0 0
    %7891 = vmatpush1.bf16.msra.mxu0 %v7863
    %7892 = vmatprep.subr.bf16.mxu0 0
    %7893 = vmatpush1.bf16.msra.mxu0 %v7862
    %7894 = vmatprep.subr.bf16.mxu0 0
    %7895 = vmatpush2.bf16.msra.mxu0 0
    %7896 = vmatprep.subr.bf16.mxu0 0
    %7897 = vmatpush2.bf16.msra.mxu0 0
    %7898 = vmatprep.subr.bf16.mxu0 0
    %7899 = vmatpush2.bf16.msra.mxu0 0
    %7900 = vmatprep.subr.bf16.mxu0 0
    %7901 = vmatpush2.bf16.msra.mxu0 0
    %7902 = vmatprep.subr.bf16.mxu0 0
    %7903 = vmatpush2.bf16.msra.mxu0 0
    %7904 = vmatprep.subr.bf16.mxu0 0
    %7905 = vmatpush2.bf16.msra.mxu0 0
    %7906 = vmatprep.subr.bf16.mxu0 0
    %7907 = vmatpush2.bf16.msra.mxu0 0
    %7908 = vmatprep.subr.bf16.mxu0 0
    %7909 = vmatpush2.bf16.msra.mxu0 0
    %7910 = vmatprep.mubr.bf16.mxu0 0
    %7911 = vmatmul.mubr.bf16.gmra.mxu0 %v7822
    %v7912 = vpop.f32.mrf.mxu0
    %v7913 = vadd.f32 %v7804, %v7912
    %v7914 = vpop.f32.mrf.mxu0
    %v7915 = vpop.f32.mrf.mxu0
    %v7916 = vadd.f32 %v7804, %v7915
    %v7917 = vpop.f32.mrf.mxu0
    %7918 = vmatprep.mubr.bf16.mxu0 0
    %7919 = vmatmul.mubr.bf16.gmra.mxu0 %v7823
    %v7920 = vpop.f32.mrf.mxu0
    %v7921 = vadd.f32 %v7804, %v7920
    %v7922 = vpop.f32.mrf.mxu0
    %v7923 = vpop.f32.mrf.mxu0
    %v7924 = vadd.f32 %v7804, %v7923
    %v7925 = vpop.f32.mrf.mxu0
    %7926 = vmatprep.mubr.bf16.mxu0 0
    %7927 = vmatmul.mubr.bf16.gmra.mxu0 %v7824
    %v7928 = vpop.f32.mrf.mxu0
    %v7929 = vadd.f32 %v7804, %v7928
    %v7930 = vpop.f32.mrf.mxu0
    %v7931 = vpop.f32.mrf.mxu0
    %v7932 = vadd.f32 %v7804, %v7931
    %v7933 = vpop.f32.mrf.mxu0
    %7934 = vmatprep.mubr.bf16.mxu0 0
    %7935 = vmatmul.mubr.bf16.gmra.mxu0 %v7825
    %v7936 = vpop.f32.mrf.mxu0
    %v7937 = vadd.f32 %v7804, %v7936
    %v7938 = vpop.f32.mrf.mxu0
    %v7939 = vpop.f32.mrf.mxu0
    %v7940 = vadd.f32 %v7804, %v7939
    %v7941 = vpop.f32.mrf.mxu0
    %7942 = vdwg.mxu0
    %v7943 = vtanh.pop %v7913
    %v7944 = vtanh.pop %v7916
    %v7945 = vtanh.pop %v7921
    %v7946 = vtanh.pop %v7924
    %v7947 = vtanh.pop %v7929
    %v7948 = vtanh.pop %v7932
    %v7949 = vtanh.pop %v7937
    %v7950 = vtanh.pop %v7940
    %v7951 = vld [vmem:[%s9] sm:$0xf]
    %v7952 = vld [vmem:[%s9 + $0x4] sm:$0xf]
    %v7953 = vld [vmem:[%s9 + $0x8] sm:$0xf]
    %v7954 = vld [vmem:[%s9 + $0xc] sm:$0xf]
    %v7955 = vld [vmem:[%s9 + $0x10] sm:$0xf]
    %v7956 = vld [vmem:[%s9 + $0x14] sm:$0xf]
    %v7957 = vld [vmem:[%s9 + $0x18] sm:$0xf]
    %v7958 = vld [vmem:[%s9 + $0x1c] sm:$0xf]
    %v7959 = vld [vmem:[%s9 + $0x20] sm:$0xf]
    %v7960 = vld [vmem:[%s9 + $0x24] sm:$0xf]
    %v7961 = vld [vmem:[%s9 + $0x28] sm:$0xf]
    %v7962 = vld [vmem:[%s9 + $0x2c] sm:$0xf]
    %v7963 = vld [vmem:[%s9 + $0x30] sm:$0xf]
    %v7964 = vld [vmem:[%s9 + $0x34] sm:$0xf]
    %v7965 = vld [vmem:[%s9 + $0x38] sm:$0xf]
    %v7966 = vld [vmem:[%s9 + $0x3c] sm:$0xf]
    %v7967 = vpack.c.bf16 %v7944, %v7943
    %v7968 = vpack.c.bf16 %v7946, %v7945
    %v7969 = vpack.c.bf16 %v7948, %v7947
    %v7970 = vpack.c.bf16 %v7950, %v7949
    %v7971 = vld [vmem:[%s10] sm:$0x1]
    %v7973 = vlaneseq
    %v7974 = vshrl.u32 %v7973, 7
    %v7975 = vsub.s32 0, %v7974
    %v7976 = vrot.slane %v7971, %v7975
    %v7994 = vunpack.c.l.b16 %v7951
    %v7995 = vunpack.c.l.b16 %v7952
    %v7996 = vunpack.c.l.b16 %v7953
    %v7997 = vunpack.c.l.b16 %v7954
    %v7998 = vunpack.c.l.b16 %v7955
    %v7999 = vunpack.c.l.b16 %v7956
    %v8000 = vunpack.c.l.b16 %v7957
    %v8001 = vunpack.c.l.b16 %v7958
    %v8002 = vunpack.c.l.b16 %v7959
    %v8003 = vunpack.c.l.b16 %v7960
    %v8004 = vunpack.c.l.b16 %v7961
    %v8005 = vunpack.c.l.b16 %v7962
    %v8006 = vunpack.c.l.b16 %v7963
    %v8007 = vunpack.c.l.b16 %v7964
    %v8008 = vunpack.c.l.b16 %v7965
    %v8009 = vunpack.c.l.b16 %v7966
    %v8010 = vpack.c.b16 %v7995, %v7994
    %v8011 = vpack.c.b16 %v7997, %v7996
    %v8012 = vpack.c.b16 %v7999, %v7998
    %v8013 = vpack.c.b16 %v8001, %v8000
    %v8014 = vpack.c.b16 %v8003, %v8002
    %v8015 = vpack.c.b16 %v8005, %v8004
    %v8016 = vpack.c.b16 %v8007, %v8006
    %v8017 = vpack.c.b16 %v8009, %v8008
    %8026 = vmatprep.subr.bf16.mxu0 0
    %8027 = vmatpush1.bf16.msra.mxu0 %v8017
    %8028 = vmatprep.subr.bf16.mxu0 0
    %8029 = vmatpush1.bf16.msra.mxu0 %v8016
    %8030 = vmatprep.subr.bf16.mxu0 0
    %8031 = vmatpush1.bf16.msra.mxu0 %v8015
    %8032 = vmatprep.subr.bf16.mxu0 0
    %8033 = vmatpush1.bf16.msra.mxu0 %v8014
    %8034 = vmatprep.subr.bf16.mxu0 0
    %8035 = vmatpush1.bf16.msra.mxu0 %v8013
    %8036 = vmatprep.subr.bf16.mxu0 0
    %8037 = vmatpush1.bf16.msra.mxu0 %v8012
    %8038 = vmatprep.subr.bf16.mxu0 0
    %8039 = vmatpush1.bf16.msra.mxu0 %v8011
    %8040 = vmatprep.subr.bf16.mxu0 0
    %8041 = vmatpush1.bf16.msra.mxu0 %v8010
    %8042 = vmatprep.subr.bf16.mxu0 0
    %8043 = vmatpush2.bf16.msra.mxu0 0
    %8044 = vmatprep.subr.bf16.mxu0 0
    %8045 = vmatpush2.bf16.msra.mxu0 0
    %8046 = vmatprep.subr.bf16.mxu0 0
    %8047 = vmatpush2.bf16.msra.mxu0 0
    %8048 = vmatprep.subr.bf16.mxu0 0
    %8049 = vmatpush2.bf16.msra.mxu0 0
    %8050 = vmatprep.subr.bf16.mxu0 0
    %8051 = vmatpush2.bf16.msra.mxu0 0
    %8052 = vmatprep.subr.bf16.mxu0 0
    %8053 = vmatpush2.bf16.msra.mxu0 0
    %8054 = vmatprep.subr.bf16.mxu0 0
    %8055 = vmatpush2.bf16.msra.mxu0 0
    %8056 = vmatprep.subr.bf16.mxu0 0
    %8057 = vmatpush2.bf16.msra.mxu0 0
    %8058 = vmatprep.mubr.bf16.mxu0 0
    %8059 = vmatmul.mubr.bf16.gmra.mxu0 %v7967
    %v8060 = vpop.f32.mrf.mxu0
    %v8061 = vadd.f32 %v7976, %v8060
    %v8062 = vpop.f32.mrf.mxu0
    %v8063 = vpop.f32.mrf.mxu0
    %v8064 = vadd.f32 %v7976, %v8063
    %v8065 = vpop.f32.mrf.mxu0
    %8066 = vmatprep.mubr.bf16.mxu0 0
    %8067 = vmatmul.mubr.bf16.gmra.mxu0 %v7968
    %v8068 = vpop.f32.mrf.mxu0
    %v8069 = vadd.f32 %v7976, %v8068
    %v8070 = vpop.f32.mrf.mxu0
    %v8071 = vpop.f32.mrf.mxu0
    %v8072 = vadd.f32 %v7976, %v8071
    %v8073 = vpop.f32.mrf.mxu0
    %8074 = vmatprep.mubr.bf16.mxu0 0
    %8075 = vmatmul.mubr.bf16.gmra.mxu0 %v7969
    %v8076 = vpop.f32.mrf.mxu0
    %v8077 = vadd.f32 %v7976, %v8076
    %v8078 = vpop.f32.mrf.mxu0
    %v8079 = vpop.f32.mrf.mxu0
    %v8080 = vadd.f32 %v7976, %v8079
    %v8081 = vpop.f32.mrf.mxu0
    %8082 = vmatprep.mubr.bf16.mxu0 0
    %8083 = vmatmul.mubr.bf16.gmra.mxu0 %v7970
    %v8084 = vpop.f32.mrf.mxu0
    %v8085 = vadd.f32 %v7976, %v8084
    %v8086 = vpop.f32.mrf.mxu0
    %v8087 = vpop.f32.mrf.mxu0
    %v8088 = vadd.f32 %v7976, %v8087
    %v8089 = vpop.f32.mrf.mxu0
    %8090 = vdwg.mxu0
    %8091 = vst [vmem:[%s11] sm:$0xff] %v8061
    %8092 = vst [vmem:[%s11 + $0x8] sm:$0xff] %v8064
    %8093 = vst [vmem:[%s11 + $0x10] sm:$0xff] %v8069
    %8094 = vst [vmem:[%s11 + $0x18] sm:$0xff] %v8072
    %8095 = vst [vmem:[%s11 + $0x20] sm:$0xff] %v8077
    %8096 = vst [vmem:[%s11 + $0x28] sm:$0xff] %v8080
    %8097 = vst [vmem:[%s11 + $0x30] sm:$0xff] %v8085
    %8098 = vst [vmem:[%s11 + $0x38] sm:$0xff] %v8088
    // Predicated region
    $region66: #{lstm_module_forward.1} parent=1 // pred_check
      _
    $region67: #{lstm_module_forward.1} parent=1 // pred_check_branch
      %8100 = sbr.rel (0) target = $region69
    $region68: #{lstm_module_forward.1} parent=1 // pred_region
      _
    $region69: #{lstm_module_forward.1} parent=1 // pred_fallthru
      _
    // Predicated region
    $region70: #{lstm_module_forward.1} parent=1 // pred_check
      _
    $region71: #{lstm_module_forward.1} parent=1 // pred_check_branch
      %8102 = sbr.rel (0) target = $region73
    $region72: #{lstm_module_forward.1} parent=1 // pred_region
      _
    $region73: #{lstm_module_forward.1} parent=1 // pred_fallthru
      _
    %8103 = vsyncpa [#allocation9], 1
    %8104 = vsyncpa [#allocation11], 1
    %8105 = vsyncpa [#allocation14], 1

</llo_original>
